<compile_context>
chip_gen: v6e
topology: v6e:2x2x1
jax: 0.10.0
libtpu: 0.0.40
codegen_flags: <defaults>
</compile_context>

<pallas_src>
import functools
import numpy as np
import jax
import jax.numpy as jnp
from jax import lax
from jax.experimental import pallas as pl

START_TAG = "<START>"
STOP_TAG = "<STOP>"
PAD_IDX = 0


# ----------------------------------------------------------------------------
# helpers
# ----------------------------------------------------------------------------
def _layer_norm(x, g, b, eps=1e-5):
    mu = jnp.mean(x, axis=-1, keepdims=True)
    var = jnp.mean((x - mu) ** 2, axis=-1, keepdims=True)
    return (x - mu) * lax.rsqrt(var + eps) * g + b


# ----------------------------------------------------------------------------
# Fused forward kernel: encoder layers + emission projection + full Viterbi
# (forward recursion AND backtracking).  Everything resident in VMEM.
# ----------------------------------------------------------------------------
def fused_forward_kernel(h_ref, mask_ref,
                         wqkv_ref, bqkv_ref, wo_ref, ev_ref,
                         w1_ref, c1_ref, w2_ref,
                         fcw_ref, fcb_ref, crf_ref,
                         score_ref, path_ref,
                         *, num_heads, num_layers):
    B, S, E = h_ref.shape
    T = crf_ref.shape[1]
    hd = E // num_heads
    scale = 1.0 / float(np.sqrt(hd))

    # token-major activations (B*S, E); stays a traced VMEM value across layers
    h = h_ref[...].reshape(B * S, E)

    # ---------------- transformer encoder layers (post-norm, ReLU FFN) ------
    for l in range(num_layers):                         # static layer loop
        attn = jnp.zeros((B * S, E), jnp.float32)
        for hi in range(num_heads):                     # static head loop
            iq = (l * 3 + 0) * num_heads + hi
            ik = (l * 3 + 1) * num_heads + hi
            iv = (l * 3 + 2) * num_heads + hi
            # per-head projections from pre-split weights -> no lane slicing
            qh = (jnp.dot(h, wqkv_ref[iq], preferred_element_type=jnp.float32)
                  + bqkv_ref[iq]) * scale               # (B*S, hd)
            kh = (jnp.dot(h, wqkv_ref[ik], preferred_element_type=jnp.float32)
                  + bqkv_ref[ik])
            vh = (jnp.dot(h, wqkv_ref[iv], preferred_element_type=jnp.float32)
                  + bqkv_ref[iv])
            q3 = qh.reshape(B, S, hd)
            k3 = kh.reshape(B, S, hd)
            v3 = vh.reshape(B, S, hd)
            s = jnp.einsum('bqd,bkd->bqk', q3, k3,
                           preferred_element_type=jnp.float32)      # (B,S,S)
            s = s - jnp.max(s, axis=-1, keepdims=True)
            p = jnp.exp(s)
            p = p / jnp.sum(p, axis=-1, keepdims=True)              # exact softmax
            ctx = jnp.einsum('bqk,bkd->bqd', p, v3,
                             preferred_element_type=jnp.float32)    # (B,S,hd)
            attn = attn + jnp.dot(ctx.reshape(B * S, hd),
                                  wo_ref[l * num_heads + hi],
                                  preferred_element_type=jnp.float32)

        bo = ev_ref[l * 6 + 0]
        g1 = ev_ref[l * 6 + 1]
        be1 = ev_ref[l * 6 + 2]
        c2 = ev_ref[l * 6 + 3]
        g2 = ev_ref[l * 6 + 4]
        be2 = ev_ref[l * 6 + 5]

        attn = attn + bo
        y = _layer_norm(h + attn, g1, be1)
        ff = jnp.maximum(
            jnp.dot(y, w1_ref[l], preferred_element_type=jnp.float32) + c1_ref[l],
            0.0)
        ff = jnp.dot(ff, w2_ref[l], preferred_element_type=jnp.float32) + c2
        h = _layer_norm(y + ff, g2, be2)

    # ---------------- emission projection -----------------------------------
    em = jnp.dot(h, fcw_ref[...], preferred_element_type=jnp.float32) + fcb_ref[...]
    em3 = em.reshape(B, S, T)                           # (B, S, T)

    # ---------------- CRF: packed transition data ----------------------------
    crf = crf_ref[...]                                  # (T+2, T)
    trans_t = crf[0:T, :]                               # (T_cur, T_prev)
    bos = crf[T:T + 1, :]                               # (1, T)  BOS -> tag
    eos = crf[T + 1:T + 2, :]                           # (1, T)  tag -> EOS

    maskf = mask_ref[...]                               # (S, B, 1) float
    inv_maskf = 1.0 - maskf                             # hoisted complement
    lens_i = jnp.sum(maskf, axis=0).astype(jnp.int32)   # (B, 1) sequence lengths

    prev_iota = lax.broadcasted_iota(jnp.int32, (B, T, T), 2)
    tag_iota = lax.broadcasted_iota(jnp.int32, (B, T), 1)

    # ---------------- Viterbi forward recursion (unrolled, transpose-free) ---
    alphas = bos + em3[:, 0, :]                         # (B, T)
    bp_list = [None] * S                                # backpointers stay in VMEM
    for i in range(1, S):
        # scores[b, cur, prev] = alphas[b, prev] + trans[prev, cur]
        scores = alphas[:, None, :] + trans_t[None, :, :]           # (B, T, T)
        best = jnp.max(scores, axis=-1)                             # (B, T)
        bp_list[i] = jnp.min(
            jnp.where(scores == best[:, :, None], prev_iota, T),
            axis=-1).astype(jnp.int32)                              # first argmax
        new_alphas = best + em3[:, i, :]
        alphas = maskf[i] * new_alphas + inv_maskf[i] * alphas

    end = alphas + eos                                  # (B, T)
    best_end = jnp.max(end, axis=-1, keepdims=True)     # (B, 1)
    score_ref[...] = best_end
    last_tag = jnp.min(jnp.where(end == best_end, tag_iota, T),
                       axis=-1, keepdims=True).astype(jnp.int32)    # (B, 1)

    # ---------------- Viterbi backtracking (fused, unrolled) -----------------
    pos_iota = lax.broadcasted_iota(jnp.int32, (B, S), 1)
    path = jnp.full((B, S), -1, jnp.int32)
    cur = last_tag
    for t in range(S - 1, -1, -1):
        if t < S - 1:
            onehot = tag_iota == cur                                # (B, T)
            from_bp = jnp.sum(jnp.where(onehot, bp_list[t + 1], 0),
                              axis=-1, keepdims=True)               # (B, 1)
        else:
            from_bp = cur                                           # unused slot
        is_last = lens_i == (t + 1)                     # t == len-1
        is_inner = lens_i > (t + 1)                     # t <  len-1
        new = jnp.where(is_last, last_tag, jnp.where(is_inner, from_bp, cur))
        col = jnp.where(lens_i > t, new, -1)            # -1 padding past length
        path = jnp.where(pos_iota == t, col, path)
        cur = new
    path_ref[...] = path                                # single full store


# ----------------------------------------------------------------------------
# Parameters (deterministic synthetic init, mirrors the PyTorch module layout)
# ----------------------------------------------------------------------------
def init_params(key, vocab_size, tag_to_idx, E, H, num_layers, max_len):
    T = len(tag_to_idx)
    keys = jax.random.split(key, 3 + num_layers)
    params = {}
    params["embedding"] = 0.1 * jax.random.normal(keys[0], (vocab_size, E), jnp.float32)

    # sinusoidal positional encoding
    pos = np.arange(max_len)[:, None].astype(np.float32)
    i = np.arange(E)[None, :].astype(np.float32)
    angle = pos / np.power(10000.0, 2.0 * np.floor(i / 2.0) / E)
    pe = np.where((np.arange(E)[None, :] % 2) == 0, np.sin(angle), np.cos(angle))
    params["pos_enc"] = jnp.asarray(pe, jnp.float32)

    layers = []
    for l in range(num_layers):
        lk = jax.random.split(keys[1 + l], 6)
        layers.append(dict(
            wq=0.02 * jax.random.normal(lk[0], (E, E), jnp.float32),
            bq=jnp.zeros((1, E), jnp.float32),
            wk=0.02 * jax.random.normal(lk[1], (E, E), jnp.float32),
            bk=jnp.zeros((1, E), jnp.float32),
            wv=0.02 * jax.random.normal(lk[2], (E, E), jnp.float32),
            bv=jnp.zeros((1, E), jnp.float32),
            wo=0.02 * jax.random.normal(lk[3], (E, E), jnp.float32),
            bo=jnp.zeros((1, E), jnp.float32),
            g1=jnp.ones((1, E), jnp.float32), be1=jnp.zeros((1, E), jnp.float32),
            w1=0.02 * jax.random.normal(lk[4], (E, H), jnp.float32),
            c1=jnp.zeros((1, H), jnp.float32),
            w2=0.02 * jax.random.normal(lk[5], (H, E), jnp.float32),
            c2=jnp.zeros((1, E), jnp.float32),
            g2=jnp.ones((1, E), jnp.float32), be2=jnp.zeros((1, E), jnp.float32),
        ))
    params["layers"] = layers

    params["fc_w"] = 0.02 * jax.random.normal(keys[1 + num_layers], (E, T), jnp.float32)
    params["fc_b"] = jnp.zeros((1, T), jnp.float32)

    # CRF transitions with BOS/EOS/PAD constraints ([prev_tag, cur_tag])
    trans = jax.random.uniform(keys[2 + num_layers], (T, T), jnp.float32, -0.1, 0.1)
    bos = tag_to_idx[START_TAG]; eos = tag_to_idx[STOP_TAG]; pad = PAD_IDX
    trans = trans.at[:, bos].set(-10000.0)
    trans = trans.at[eos, :].set(-10000.0)
    trans = trans.at[pad, :].set(-10000.0)
    trans = trans.at[:, pad].set(-10000.0)
    trans = trans.at[pad, eos].set(0.0)
    trans = trans.at[pad, pad].set(0.0)
    params["transitions"] = trans
    return params


# ----------------------------------------------------------------------------
# One-time parameter preparation (OUTSIDE the per-call hot path):
# pre-split per-head weights, pack small vectors, pack CRF tables.
# ----------------------------------------------------------------------------
def prepare_params(params, num_heads, bos_id, eos_id):
    E = params["embedding"].shape[1]
    hd = E // num_heads
    layers = params["layers"]

    def split_in(w):        # (E, E) -> (H, E, hd): per-head output-column blocks
        return jnp.transpose(w.reshape(E, num_heads, hd), (1, 0, 2))

    wqkv = jnp.concatenate(
        [jnp.concatenate([split_in(l["wq"]), split_in(l["wk"]), split_in(l["wv"])],
                         axis=0) for l in layers], axis=0)          # (L*3*H, E, hd)
    bqkv = jnp.concatenate(
        [jnp.concatenate([l["bq"].reshape(num_heads, 1, hd),
                          l["bk"].reshape(num_heads, 1, hd),
                          l["bv"].reshape(num_heads, 1, hd)],
                         axis=0) for l in layers], axis=0)          # (L*3*H, 1, hd)
    wo = jnp.concatenate([l["wo"].reshape(num_heads, hd, E) for l in layers],
                         axis=0)                                    # (L*H, hd, E)
    ev = jnp.concatenate(
        [jnp.stack([l["bo"], l["g1"], l["be1"], l["c2"], l["g2"], l["be2"]], axis=0)
         for l in layers], axis=0)                                  # (L*6, 1, E)
    w1 = jnp.stack([l["w1"] for l in layers])                       # (L, E, Hf)
    c1 = jnp.stack([l["c1"] for l in layers])                       # (L, 1, Hf)
    w2 = jnp.stack([l["w2"] for l in layers])                       # (L, Hf, E)

    trans = params["transitions"]
    crf = jnp.concatenate([trans.T,                                 # (T, T) pre-transposed
                           trans[bos_id][None, :],                  # (1, T) BOS row
                           trans[:, eos_id][None, :]], axis=0)      # (1, T) EOS col

    return dict(embedding=params["embedding"], pos_enc=params["pos_enc"],
                wqkv=wqkv, bqkv=bqkv, wo=wo, ev=ev, w1=w1, c1=c1, w2=w2,
                fc_w=params["fc_w"], fc_b=params["fc_b"], crf=crf)


# ----------------------------------------------------------------------------
# Forward pass (jitted); returns (score (B,), path (B,S) with -1 padding)
# ----------------------------------------------------------------------------
@functools.partial(jax.jit, static_argnames=("num_heads",))
def transformer_crf_forward(x_tokens, fused, *, num_heads):
    B, S = x_tokens.shape
    E = fused["embedding"].shape[1]
    T = fused["crf"].shape[1]
    num_layers = fused["w1"].shape[0]

    maskf = (x_tokens != PAD_IDX).astype(jnp.float32)      # x.ne(pad_idx).float()

    # embedding gather + positional encoding (tiny XLA gather, outside kernel)
    h = jnp.take(fused["embedding"], x_tokens, axis=0) * jnp.sqrt(jnp.float32(E))
    h = h + fused["pos_enc"][None, :S, :]
    mask_sb = jnp.transpose(maskf)[:, :, None]              # (S, B, 1)

    score2, path = pl.pallas_call(
        functools.partial(fused_forward_kernel,
                          num_heads=num_heads, num_layers=num_layers),
        out_shape=(jax.ShapeDtypeStruct((B, 1), jnp.float32),
                   jax.ShapeDtypeStruct((B, S), jnp.int32)),
    )(h, mask_sb, fused["wqkv"], fused["bqkv"], fused["wo"], fused["ev"],
      fused["w1"], fused["c1"], fused["w2"],
      fused["fc_w"], fused["fc_b"], fused["crf"])

    return score2[:, 0], path


# ----------------------------------------------------------------------------
if __name__ == "__main__":
    vocab_size = 50
    tag_to_idx = {"<pad>": 0, "B": 1, "I": 2, "O": 3, START_TAG: 4, STOP_TAG: 5}
    embedding_dim, hidden_dim, head_size, layer_size = 32, 64, 4, 2
    B, S = 2, 8

    key = jax.random.PRNGKey(0)
    pkey, xkey = jax.random.split(key)
    params = init_params(pkey, vocab_size, tag_to_idx, embedding_dim,
                         hidden_dim, layer_size, max_len=S)
    fused = prepare_params(params, head_size,
                           tag_to_idx[START_TAG], tag_to_idx[STOP_TAG])

    x = jax.random.randint(xkey, (B, S), 1, vocab_size, dtype=jnp.int32)
    x = x.at[1, 6:].set(PAD_IDX)   # trailing padding in the second sequence

    score, path = transformer_crf_forward(x, fused, num_heads=head_size)
    jax.block_until_ready(score)
    jax.block_until_ready(path)
    print("KERNEL_OK")
</pallas_src>

<mosaic_0001>
module attributes {stable_mosaic.version = 11 : i64} {
  func.func @fused_forward_kernel(%arg0: memref<2x8x32xf32, #tpu.memory_space<vmem>>, %arg1: memref<8x2x1xf32, #tpu.memory_space<vmem>>, %arg2: memref<24x32x8xf32, #tpu.memory_space<vmem>>, %arg3: memref<24x1x8xf32, #tpu.memory_space<vmem>>, %arg4: memref<8x8x32xf32, #tpu.memory_space<vmem>>, %arg5: memref<12x1x32xf32, #tpu.memory_space<vmem>>, %arg6: memref<2x32x64xf32, #tpu.memory_space<vmem>>, %arg7: memref<2x1x64xf32, #tpu.memory_space<vmem>>, %arg8: memref<2x64x32xf32, #tpu.memory_space<vmem>>, %arg9: memref<32x6xf32, #tpu.memory_space<vmem>>, %arg10: memref<1x6xf32, #tpu.memory_space<vmem>>, %arg11: memref<8x6xf32, #tpu.memory_space<vmem>>, %arg12: memref<2x1xf32, #tpu.memory_space<vmem>>, %arg13: memref<2x8xi32, #tpu.memory_space<vmem>>) attributes {dimension_semantics = [], scalar_prefetch = 0 : i64, scratch_operands = 0 : i64, tpu.core_type = #tpu.core_type<tc>} {
    %c0 = arith.constant 0 : index
    %c0_0 = arith.constant 0 : index
    %c0_1 = arith.constant 0 : index
    %0 = vector.load %arg0[%c0, %c0_0, %c0_1] : memref<2x8x32xf32, #tpu.memory_space<vmem>>, vector<2x8x32xf32>
    %1 = vector.shape_cast %0 : vector<2x8x32xf32> to vector<16x32xf32>
    %cst = arith.constant 0.000000e+00 : f32
    %2 = vector.broadcast %cst : f32 to vector<16x32xf32>
    %c0_2 = arith.constant 0 : index
    %c0_3 = arith.constant 0 : index
    %c0_4 = arith.constant 0 : index
    %3 = vector.load %arg2[%c0_2, %c0_3, %c0_4] : memref<24x32x8xf32, #tpu.memory_space<vmem>>, vector<1x32x8xf32>
    %4 = vector.shape_cast %3 : vector<1x32x8xf32> to vector<32x8xf32>
    %cst_5 = arith.constant dense<0.000000e+00> : vector<16x8xf32>
    %5 = tpu.matmul %1, %4, %cst_5 {dimension_numbers = #tpu.dot_dimension_numbers<[1], [0], [0], [1], [0, 0, 1, 1], [], []>} : vector<16x32xf32>, vector<32x8xf32>, vector<16x8xf32> -> vector<16x8xf32>
    %c0_6 = arith.constant 0 : index
    %c0_7 = arith.constant 0 : index
    %c0_8 = arith.constant 0 : index
    %6 = vector.load %arg3[%c0_6, %c0_7, %c0_8] : memref<24x1x8xf32, #tpu.memory_space<vmem>>, vector<1x1x8xf32>
    %7 = vector.shape_cast %6 : vector<1x1x8xf32> to vector<1x8xf32>
    %8 = vector.broadcast %7 : vector<1x8xf32> to vector<16x8xf32>
    %9 = arith.addf %5, %8 : vector<16x8xf32>
    %cst_9 = arith.constant 0.353553385 : f32
    %10 = vector.broadcast %cst_9 : f32 to vector<16x8xf32>
    %11 = arith.mulf %9, %10 : vector<16x8xf32>
    %c4 = arith.constant 4 : index
    %c0_10 = arith.constant 0 : index
    %c0_11 = arith.constant 0 : index
    %12 = vector.load %arg2[%c4, %c0_10, %c0_11] : memref<24x32x8xf32, #tpu.memory_space<vmem>>, vector<1x32x8xf32>
    %13 = vector.shape_cast %12 : vector<1x32x8xf32> to vector<32x8xf32>
    %cst_12 = arith.constant dense<0.000000e+00> : vector<16x8xf32>
    %14 = tpu.matmul %1, %13, %cst_12 {dimension_numbers = #tpu.dot_dimension_numbers<[1], [0], [0], [1], [0, 0, 1, 1], [], []>} : vector<16x32xf32>, vector<32x8xf32>, vector<16x8xf32> -> vector<16x8xf32>
    %c4_13 = arith.constant 4 : index
    %c0_14 = arith.constant 0 : index
    %c0_15 = arith.constant 0 : index
    %15 = vector.load %arg3[%c4_13, %c0_14, %c0_15] : memref<24x1x8xf32, #tpu.memory_space<vmem>>, vector<1x1x8xf32>
    %16 = vector.shape_cast %15 : vector<1x1x8xf32> to vector<1x8xf32>
    %17 = vector.broadcast %16 : vector<1x8xf32> to vector<16x8xf32>
    %18 = arith.addf %14, %17 : vector<16x8xf32>
    %c8 = arith.constant 8 : index
    %c0_16 = arith.constant 0 : index
    %c0_17 = arith.constant 0 : index
    %19 = vector.load %arg2[%c8, %c0_16, %c0_17] : memref<24x32x8xf32, #tpu.memory_space<vmem>>, vector<1x32x8xf32>
    %20 = vector.shape_cast %19 : vector<1x32x8xf32> to vector<32x8xf32>
    %cst_18 = arith.constant dense<0.000000e+00> : vector<16x8xf32>
    %21 = tpu.matmul %1, %20, %cst_18 {dimension_numbers = #tpu.dot_dimension_numbers<[1], [0], [0], [1], [0, 0, 1, 1], [], []>} : vector<16x32xf32>, vector<32x8xf32>, vector<16x8xf32> -> vector<16x8xf32>
    %c8_19 = arith.constant 8 : index
    %c0_20 = arith.constant 0 : index
    %c0_21 = arith.constant 0 : index
    %22 = vector.load %arg3[%c8_19, %c0_20, %c0_21] : memref<24x1x8xf32, #tpu.memory_space<vmem>>, vector<1x1x8xf32>
    %23 = vector.shape_cast %22 : vector<1x1x8xf32> to vector<1x8xf32>
    %24 = vector.broadcast %23 : vector<1x8xf32> to vector<16x8xf32>
    %25 = arith.addf %21, %24 : vector<16x8xf32>
    %26 = vector.shape_cast %11 : vector<16x8xf32> to vector<2x8x8xf32>
    %27 = vector.shape_cast %18 : vector<16x8xf32> to vector<2x8x8xf32>
    %28 = vector.shape_cast %25 : vector<16x8xf32> to vector<2x8x8xf32>
    "tpu.trace_start"() <{level = 10 : i32, message = "bqd,bkd->bqk"}> : () -> ()
    %cst_22 = arith.constant dense<0.000000e+00> : vector<2x8x8xf32>
    %29 = tpu.matmul %26, %27, %cst_22 {dimension_numbers = #tpu.dot_dimension_numbers<[2], [2], [1], [1], [0, 0, 0, 1, 1, 1], [0], [0]>} : vector<2x8x8xf32>, vector<2x8x8xf32>, vector<2x8x8xf32> -> vector<2x8x8xf32>
    "tpu.trace_stop"() : () -> ()
    %cst_23 = arith.constant dense<0xFF800000> : vector<2x8xf32>
    %30 = vector.multi_reduction <maximumf>, %29, %cst_23 [2] : vector<2x8x8xf32> to vector<2x8xf32>
    %31 = vector.shape_cast %30 : vector<2x8xf32> to vector<2x8x1xf32>
    %32 = vector.broadcast %31 : vector<2x8x1xf32> to vector<2x8x8xf32>
    %33 = arith.subf %29, %32 : vector<2x8x8xf32>
    %34 = math.exp %33 : vector<2x8x8xf32>
    %cst_24 = arith.constant dense<0.000000e+00> : vector<2x8xf32>
    %35 = vector.multi_reduction <add>, %34, %cst_24 [2] : vector<2x8x8xf32> to vector<2x8xf32>
    %36 = vector.shape_cast %35 : vector<2x8xf32> to vector<2x8x1xf32>
    %37 = vector.broadcast %36 : vector<2x8x1xf32> to vector<2x8x8xf32>
    %38 = arith.divf %34, %37 : vector<2x8x8xf32>
    "tpu.trace_start"() <{level = 10 : i32, message = "bqk,bkd->bqd"}> : () -> ()
    %cst_25 = arith.constant dense<0.000000e+00> : vector<2x8x8xf32>
    %39 = tpu.matmul %38, %28, %cst_25 {dimension_numbers = #tpu.dot_dimension_numbers<[2], [1], [1], [2], [0, 0, 0, 1, 1, 2], [0], [0]>} : vector<2x8x8xf32>, vector<2x8x8xf32>, vector<2x8x8xf32> -> vector<2x8x8xf32>
    "tpu.trace_stop"() : () -> ()
    %40 = vector.shape_cast %39 : vector<2x8x8xf32> to vector<16x8xf32>
    %c0_26 = arith.constant 0 : index
    %c0_27 = arith.constant 0 : index
    %c0_28 = arith.constant 0 : index
    %41 = vector.load %arg4[%c0_26, %c0_27, %c0_28] : memref<8x8x32xf32, #tpu.memory_space<vmem>>, vector<1x8x32xf32>
    %42 = vector.shape_cast %41 : vector<1x8x32xf32> to vector<8x32xf32>
    %cst_29 = arith.constant dense<0.000000e+00> : vector<16x32xf32>
    %43 = tpu.matmul %40, %42, %cst_29 {dimension_numbers = #tpu.dot_dimension_numbers<[1], [0], [0], [1], [0, 0, 1, 1], [], []>} : vector<16x8xf32>, vector<8x32xf32>, vector<16x32xf32> -> vector<16x32xf32>
    %44 = arith.addf %2, %43 : vector<16x32xf32>
    %c1 = arith.constant 1 : index
    %c0_30 = arith.constant 0 : index
    %c0_31 = arith.constant 0 : index
    %45 = vector.load %arg2[%c1, %c0_30, %c0_31] : memref<24x32x8xf32, #tpu.memory_space<vmem>>, vector<1x32x8xf32>
    %46 = vector.shape_cast %45 : vector<1x32x8xf32> to vector<32x8xf32>
    %cst_32 = arith.constant dense<0.000000e+00> : vector<16x8xf32>
    %47 = tpu.matmul %1, %46, %cst_32 {dimension_numbers = #tpu.dot_dimension_numbers<[1], [0], [0], [1], [0, 0, 1, 1], [], []>} : vector<16x32xf32>, vector<32x8xf32>, vector<16x8xf32> -> vector<16x8xf32>
    %c1_33 = arith.constant 1 : index
    %c0_34 = arith.constant 0 : index
    %c0_35 = arith.constant 0 : index
    %48 = vector.load %arg3[%c1_33, %c0_34, %c0_35] : memref<24x1x8xf32, #tpu.memory_space<vmem>>, vector<1x1x8xf32>
    %49 = vector.shape_cast %48 : vector<1x1x8xf32> to vector<1x8xf32>
    %50 = vector.broadcast %49 : vector<1x8xf32> to vector<16x8xf32>
    %51 = arith.addf %47, %50 : vector<16x8xf32>
    %cst_36 = arith.constant 0.353553385 : f32
    %52 = vector.broadcast %cst_36 : f32 to vector<16x8xf32>
    %53 = arith.mulf %51, %52 : vector<16x8xf32>
    %c5 = arith.constant 5 : index
    %c0_37 = arith.constant 0 : index
    %c0_38 = arith.constant 0 : index
    %54 = vector.load %arg2[%c5, %c0_37, %c0_38] : memref<24x32x8xf32, #tpu.memory_space<vmem>>, vector<1x32x8xf32>
    %55 = vector.shape_cast %54 : vector<1x32x8xf32> to vector<32x8xf32>
    %cst_39 = arith.constant dense<0.000000e+00> : vector<16x8xf32>
    %56 = tpu.matmul %1, %55, %cst_39 {dimension_numbers = #tpu.dot_dimension_numbers<[1], [0], [0], [1], [0, 0, 1, 1], [], []>} : vector<16x32xf32>, vector<32x8xf32>, vector<16x8xf32> -> vector<16x8xf32>
    %c5_40 = arith.constant 5 : index
    %c0_41 = arith.constant 0 : index
    %c0_42 = arith.constant 0 : index
    %57 = vector.load %arg3[%c5_40, %c0_41, %c0_42] : memref<24x1x8xf32, #tpu.memory_space<vmem>>, vector<1x1x8xf32>
    %58 = vector.shape_cast %57 : vector<1x1x8xf32> to vector<1x8xf32>
    %59 = vector.broadcast %58 : vector<1x8xf32> to vector<16x8xf32>
    %60 = arith.addf %56, %59 : vector<16x8xf32>
    %c9 = arith.constant 9 : index
    %c0_43 = arith.constant 0 : index
    %c0_44 = arith.constant 0 : index
    %61 = vector.load %arg2[%c9, %c0_43, %c0_44] : memref<24x32x8xf32, #tpu.memory_space<vmem>>, vector<1x32x8xf32>
    %62 = vector.shape_cast %61 : vector<1x32x8xf32> to vector<32x8xf32>
    %cst_45 = arith.constant dense<0.000000e+00> : vector<16x8xf32>
    %63 = tpu.matmul %1, %62, %cst_45 {dimension_numbers = #tpu.dot_dimension_numbers<[1], [0], [0], [1], [0, 0, 1, 1], [], []>} : vector<16x32xf32>, vector<32x8xf32>, vector<16x8xf32> -> vector<16x8xf32>
    %c9_46 = arith.constant 9 : index
    %c0_47 = arith.constant 0 : index
    %c0_48 = arith.constant 0 : index
    %64 = vector.load %arg3[%c9_46, %c0_47, %c0_48] : memref<24x1x8xf32, #tpu.memory_space<vmem>>, vector<1x1x8xf32>
    %65 = vector.shape_cast %64 : vector<1x1x8xf32> to vector<1x8xf32>
    %66 = vector.broadcast %65 : vector<1x8xf32> to vector<16x8xf32>
    %67 = arith.addf %63, %66 : vector<16x8xf32>
    %68 = vector.shape_cast %53 : vector<16x8xf32> to vector<2x8x8xf32>
    %69 = vector.shape_cast %60 : vector<16x8xf32> to vector<2x8x8xf32>
    %70 = vector.shape_cast %67 : vector<16x8xf32> to vector<2x8x8xf32>
    "tpu.trace_start"() <{level = 10 : i32, message = "bqd,bkd->bqk"}> : () -> ()
    %cst_49 = arith.constant dense<0.000000e+00> : vector<2x8x8xf32>
    %71 = tpu.matmul %68, %69, %cst_49 {dimension_numbers = #tpu.dot_dimension_numbers<[2], [2], [1], [1], [0, 0, 0, 1, 1, 1], [0], [0]>} : vector<2x8x8xf32>, vector<2x8x8xf32>, vector<2x8x8xf32> -> vector<2x8x8xf32>
    "tpu.trace_stop"() : () -> ()
    %cst_50 = arith.constant dense<0xFF800000> : vector<2x8xf32>
    %72 = vector.multi_reduction <maximumf>, %71, %cst_50 [2] : vector<2x8x8xf32> to vector<2x8xf32>
    %73 = vector.shape_cast %72 : vector<2x8xf32> to vector<2x8x1xf32>
    %74 = vector.broadcast %73 : vector<2x8x1xf32> to vector<2x8x8xf32>
    %75 = arith.subf %71, %74 : vector<2x8x8xf32>
    %76 = math.exp %75 : vector<2x8x8xf32>
    %cst_51 = arith.constant dense<0.000000e+00> : vector<2x8xf32>
    %77 = vector.multi_reduction <add>, %76, %cst_51 [2] : vector<2x8x8xf32> to vector<2x8xf32>
    %78 = vector.shape_cast %77 : vector<2x8xf32> to vector<2x8x1xf32>
    %79 = vector.broadcast %78 : vector<2x8x1xf32> to vector<2x8x8xf32>
    %80 = arith.divf %76, %79 : vector<2x8x8xf32>
    "tpu.trace_start"() <{level = 10 : i32, message = "bqk,bkd->bqd"}> : () -> ()
    %cst_52 = arith.constant dense<0.000000e+00> : vector<2x8x8xf32>
    %81 = tpu.matmul %80, %70, %cst_52 {dimension_numbers = #tpu.dot_dimension_numbers<[2], [1], [1], [2], [0, 0, 0, 1, 1, 2], [0], [0]>} : vector<2x8x8xf32>, vector<2x8x8xf32>, vector<2x8x8xf32> -> vector<2x8x8xf32>
    "tpu.trace_stop"() : () -> ()
    %82 = vector.shape_cast %81 : vector<2x8x8xf32> to vector<16x8xf32>
    %c1_53 = arith.constant 1 : index
    %c0_54 = arith.constant 0 : index
    %c0_55 = arith.constant 0 : index
    %83 = vector.load %arg4[%c1_53, %c0_54, %c0_55] : memref<8x8x32xf32, #tpu.memory_space<vmem>>, vector<1x8x32xf32>
    %84 = vector.shape_cast %83 : vector<1x8x32xf32> to vector<8x32xf32>
    %cst_56 = arith.constant dense<0.000000e+00> : vector<16x32xf32>
    %85 = tpu.matmul %82, %84, %cst_56 {dimension_numbers = #tpu.dot_dimension_numbers<[1], [0], [0], [1], [0, 0, 1, 1], [], []>} : vector<16x8xf32>, vector<8x32xf32>, vector<16x32xf32> -> vector<16x32xf32>
    %86 = arith.addf %44, %85 : vector<16x32xf32>
    %c2 = arith.constant 2 : index
    %c0_57 = arith.constant 0 : index
    %c0_58 = arith.constant 0 : index
    %87 = vector.load %arg2[%c2, %c0_57, %c0_58] : memref<24x32x8xf32, #tpu.memory_space<vmem>>, vector<1x32x8xf32>
    %88 = vector.shape_cast %87 : vector<1x32x8xf32> to vector<32x8xf32>
    %cst_59 = arith.constant dense<0.000000e+00> : vector<16x8xf32>
    %89 = tpu.matmul %1, %88, %cst_59 {dimension_numbers = #tpu.dot_dimension_numbers<[1], [0], [0], [1], [0, 0, 1, 1], [], []>} : vector<16x32xf32>, vector<32x8xf32>, vector<16x8xf32> -> vector<16x8xf32>
    %c2_60 = arith.constant 2 : index
    %c0_61 = arith.constant 0 : index
    %c0_62 = arith.constant 0 : index
    %90 = vector.load %arg3[%c2_60, %c0_61, %c0_62] : memref<24x1x8xf32, #tpu.memory_space<vmem>>, vector<1x1x8xf32>
    %91 = vector.shape_cast %90 : vector<1x1x8xf32> to vector<1x8xf32>
    %92 = vector.broadcast %91 : vector<1x8xf32> to vector<16x8xf32>
    %93 = arith.addf %89, %92 : vector<16x8xf32>
    %cst_63 = arith.constant 0.353553385 : f32
    %94 = vector.broadcast %cst_63 : f32 to vector<16x8xf32>
    %95 = arith.mulf %93, %94 : vector<16x8xf32>
    %c6 = arith.constant 6 : index
    %c0_64 = arith.constant 0 : index
    %c0_65 = arith.constant 0 : index
    %96 = vector.load %arg2[%c6, %c0_64, %c0_65] : memref<24x32x8xf32, #tpu.memory_space<vmem>>, vector<1x32x8xf32>
    %97 = vector.shape_cast %96 : vector<1x32x8xf32> to vector<32x8xf32>
    %cst_66 = arith.constant dense<0.000000e+00> : vector<16x8xf32>
    %98 = tpu.matmul %1, %97, %cst_66 {dimension_numbers = #tpu.dot_dimension_numbers<[1], [0], [0], [1], [0, 0, 1, 1], [], []>} : vector<16x32xf32>, vector<32x8xf32>, vector<16x8xf32> -> vector<16x8xf32>
    %c6_67 = arith.constant 6 : index
    %c0_68 = arith.constant 0 : index
    %c0_69 = arith.constant 0 : index
    %99 = vector.load %arg3[%c6_67, %c0_68, %c0_69] : memref<24x1x8xf32, #tpu.memory_space<vmem>>, vector<1x1x8xf32>
    %100 = vector.shape_cast %99 : vector<1x1x8xf32> to vector<1x8xf32>
    %101 = vector.broadcast %100 : vector<1x8xf32> to vector<16x8xf32>
    %102 = arith.addf %98, %101 : vector<16x8xf32>
    %c10 = arith.constant 10 : index
    %c0_70 = arith.constant 0 : index
    %c0_71 = arith.constant 0 : index
    %103 = vector.load %arg2[%c10, %c0_70, %c0_71] : memref<24x32x8xf32, #tpu.memory_space<vmem>>, vector<1x32x8xf32>
    %104 = vector.shape_cast %103 : vector<1x32x8xf32> to vector<32x8xf32>
    %cst_72 = arith.constant dense<0.000000e+00> : vector<16x8xf32>
    %105 = tpu.matmul %1, %104, %cst_72 {dimension_numbers = #tpu.dot_dimension_numbers<[1], [0], [0], [1], [0, 0, 1, 1], [], []>} : vector<16x32xf32>, vector<32x8xf32>, vector<16x8xf32> -> vector<16x8xf32>
    %c10_73 = arith.constant 10 : index
    %c0_74 = arith.constant 0 : index
    %c0_75 = arith.constant 0 : index
    %106 = vector.load %arg3[%c10_73, %c0_74, %c0_75] : memref<24x1x8xf32, #tpu.memory_space<vmem>>, vector<1x1x8xf32>
    %107 = vector.shape_cast %106 : vector<1x1x8xf32> to vector<1x8xf32>
    %108 = vector.broadcast %107 : vector<1x8xf32> to vector<16x8xf32>
    %109 = arith.addf %105, %108 : vector<16x8xf32>
    %110 = vector.shape_cast %95 : vector<16x8xf32> to vector<2x8x8xf32>
    %111 = vector.shape_cast %102 : vector<16x8xf32> to vector<2x8x8xf32>
    %112 = vector.shape_cast %109 : vector<16x8xf32> to vector<2x8x8xf32>
    "tpu.trace_start"() <{level = 10 : i32, message = "bqd,bkd->bqk"}> : () -> ()
    %cst_76 = arith.constant dense<0.000000e+00> : vector<2x8x8xf32>
    %113 = tpu.matmul %110, %111, %cst_76 {dimension_numbers = #tpu.dot_dimension_numbers<[2], [2], [1], [1], [0, 0, 0, 1, 1, 1], [0], [0]>} : vector<2x8x8xf32>, vector<2x8x8xf32>, vector<2x8x8xf32> -> vector<2x8x8xf32>
    "tpu.trace_stop"() : () -> ()
    %cst_77 = arith.constant dense<0xFF800000> : vector<2x8xf32>
    %114 = vector.multi_reduction <maximumf>, %113, %cst_77 [2] : vector<2x8x8xf32> to vector<2x8xf32>
    %115 = vector.shape_cast %114 : vector<2x8xf32> to vector<2x8x1xf32>
    %116 = vector.broadcast %115 : vector<2x8x1xf32> to vector<2x8x8xf32>
    %117 = arith.subf %113, %116 : vector<2x8x8xf32>
    %118 = math.exp %117 : vector<2x8x8xf32>
    %cst_78 = arith.constant dense<0.000000e+00> : vector<2x8xf32>
    %119 = vector.multi_reduction <add>, %118, %cst_78 [2] : vector<2x8x8xf32> to vector<2x8xf32>
    %120 = vector.shape_cast %119 : vector<2x8xf32> to vector<2x8x1xf32>
    %121 = vector.broadcast %120 : vector<2x8x1xf32> to vector<2x8x8xf32>
    %122 = arith.divf %118, %121 : vector<2x8x8xf32>
    "tpu.trace_start"() <{level = 10 : i32, message = "bqk,bkd->bqd"}> : () -> ()
    %cst_79 = arith.constant dense<0.000000e+00> : vector<2x8x8xf32>
    %123 = tpu.matmul %122, %112, %cst_79 {dimension_numbers = #tpu.dot_dimension_numbers<[2], [1], [1], [2], [0, 0, 0, 1, 1, 2], [0], [0]>} : vector<2x8x8xf32>, vector<2x8x8xf32>, vector<2x8x8xf32> -> vector<2x8x8xf32>
    "tpu.trace_stop"() : () -> ()
    %124 = vector.shape_cast %123 : vector<2x8x8xf32> to vector<16x8xf32>
    %c2_80 = arith.constant 2 : index
    %c0_81 = arith.constant 0 : index
    %c0_82 = arith.constant 0 : index
    %125 = vector.load %arg4[%c2_80, %c0_81, %c0_82] : memref<8x8x32xf32, #tpu.memory_space<vmem>>, vector<1x8x32xf32>
    %126 = vector.shape_cast %125 : vector<1x8x32xf32> to vector<8x32xf32>
    %cst_83 = arith.constant dense<0.000000e+00> : vector<16x32xf32>
    %127 = tpu.matmul %124, %126, %cst_83 {dimension_numbers = #tpu.dot_dimension_numbers<[1], [0], [0], [1], [0, 0, 1, 1], [], []>} : vector<16x8xf32>, vector<8x32xf32>, vector<16x32xf32> -> vector<16x32xf32>
    %128 = arith.addf %86, %127 : vector<16x32xf32>
    %c3 = arith.constant 3 : index
    %c0_84 = arith.constant 0 : index
    %c0_85 = arith.constant 0 : index
    %129 = vector.load %arg2[%c3, %c0_84, %c0_85] : memref<24x32x8xf32, #tpu.memory_space<vmem>>, vector<1x32x8xf32>
    %130 = vector.shape_cast %129 : vector<1x32x8xf32> to vector<32x8xf32>
    %cst_86 = arith.constant dense<0.000000e+00> : vector<16x8xf32>
    %131 = tpu.matmul %1, %130, %cst_86 {dimension_numbers = #tpu.dot_dimension_numbers<[1], [0], [0], [1], [0, 0, 1, 1], [], []>} : vector<16x32xf32>, vector<32x8xf32>, vector<16x8xf32> -> vector<16x8xf32>
    %c3_87 = arith.constant 3 : index
    %c0_88 = arith.constant 0 : index
    %c0_89 = arith.constant 0 : index
    %132 = vector.load %arg3[%c3_87, %c0_88, %c0_89] : memref<24x1x8xf32, #tpu.memory_space<vmem>>, vector<1x1x8xf32>
    %133 = vector.shape_cast %132 : vector<1x1x8xf32> to vector<1x8xf32>
    %134 = vector.broadcast %133 : vector<1x8xf32> to vector<16x8xf32>
    %135 = arith.addf %131, %134 : vector<16x8xf32>
    %cst_90 = arith.constant 0.353553385 : f32
    %136 = vector.broadcast %cst_90 : f32 to vector<16x8xf32>
    %137 = arith.mulf %135, %136 : vector<16x8xf32>
    %c7 = arith.constant 7 : index
    %c0_91 = arith.constant 0 : index
    %c0_92 = arith.constant 0 : index
    %138 = vector.load %arg2[%c7, %c0_91, %c0_92] : memref<24x32x8xf32, #tpu.memory_space<vmem>>, vector<1x32x8xf32>
    %139 = vector.shape_cast %138 : vector<1x32x8xf32> to vector<32x8xf32>
    %cst_93 = arith.constant dense<0.000000e+00> : vector<16x8xf32>
    %140 = tpu.matmul %1, %139, %cst_93 {dimension_numbers = #tpu.dot_dimension_numbers<[1], [0], [0], [1], [0, 0, 1, 1], [], []>} : vector<16x32xf32>, vector<32x8xf32>, vector<16x8xf32> -> vector<16x8xf32>
    %c7_94 = arith.constant 7 : index
    %c0_95 = arith.constant 0 : index
    %c0_96 = arith.constant 0 : index
    %141 = vector.load %arg3[%c7_94, %c0_95, %c0_96] : memref<24x1x8xf32, #tpu.memory_space<vmem>>, vector<1x1x8xf32>
    %142 = vector.shape_cast %141 : vector<1x1x8xf32> to vector<1x8xf32>
    %143 = vector.broadcast %142 : vector<1x8xf32> to vector<16x8xf32>
    %144 = arith.addf %140, %143 : vector<16x8xf32>
    %c11 = arith.constant 11 : index
    %c0_97 = arith.constant 0 : index
    %c0_98 = arith.constant 0 : index
    %145 = vector.load %arg2[%c11, %c0_97, %c0_98] : memref<24x32x8xf32, #tpu.memory_space<vmem>>, vector<1x32x8xf32>
    %146 = vector.shape_cast %145 : vector<1x32x8xf32> to vector<32x8xf32>
    %cst_99 = arith.constant dense<0.000000e+00> : vector<16x8xf32>
    %147 = tpu.matmul %1, %146, %cst_99 {dimension_numbers = #tpu.dot_dimension_numbers<[1], [0], [0], [1], [0, 0, 1, 1], [], []>} : vector<16x32xf32>, vector<32x8xf32>, vector<16x8xf32> -> vector<16x8xf32>
    %c11_100 = arith.constant 11 : index
    %c0_101 = arith.constant 0 : index
    %c0_102 = arith.constant 0 : index
    %148 = vector.load %arg3[%c11_100, %c0_101, %c0_102] : memref<24x1x8xf32, #tpu.memory_space<vmem>>, vector<1x1x8xf32>
    %149 = vector.shape_cast %148 : vector<1x1x8xf32> to vector<1x8xf32>
    %150 = vector.broadcast %149 : vector<1x8xf32> to vector<16x8xf32>
    %151 = arith.addf %147, %150 : vector<16x8xf32>
    %152 = vector.shape_cast %137 : vector<16x8xf32> to vector<2x8x8xf32>
    %153 = vector.shape_cast %144 : vector<16x8xf32> to vector<2x8x8xf32>
    %154 = vector.shape_cast %151 : vector<16x8xf32> to vector<2x8x8xf32>
    "tpu.trace_start"() <{level = 10 : i32, message = "bqd,bkd->bqk"}> : () -> ()
    %cst_103 = arith.constant dense<0.000000e+00> : vector<2x8x8xf32>
    %155 = tpu.matmul %152, %153, %cst_103 {dimension_numbers = #tpu.dot_dimension_numbers<[2], [2], [1], [1], [0, 0, 0, 1, 1, 1], [0], [0]>} : vector<2x8x8xf32>, vector<2x8x8xf32>, vector<2x8x8xf32> -> vector<2x8x8xf32>
    "tpu.trace_stop"() : () -> ()
    %cst_104 = arith.constant dense<0xFF800000> : vector<2x8xf32>
    %156 = vector.multi_reduction <maximumf>, %155, %cst_104 [2] : vector<2x8x8xf32> to vector<2x8xf32>
    %157 = vector.shape_cast %156 : vector<2x8xf32> to vector<2x8x1xf32>
    %158 = vector.broadcast %157 : vector<2x8x1xf32> to vector<2x8x8xf32>
    %159 = arith.subf %155, %158 : vector<2x8x8xf32>
    %160 = math.exp %159 : vector<2x8x8xf32>
    %cst_105 = arith.constant dense<0.000000e+00> : vector<2x8xf32>
    %161 = vector.multi_reduction <add>, %160, %cst_105 [2] : vector<2x8x8xf32> to vector<2x8xf32>
    %162 = vector.shape_cast %161 : vector<2x8xf32> to vector<2x8x1xf32>
    %163 = vector.broadcast %162 : vector<2x8x1xf32> to vector<2x8x8xf32>
    %164 = arith.divf %160, %163 : vector<2x8x8xf32>
    "tpu.trace_start"() <{level = 10 : i32, message = "bqk,bkd->bqd"}> : () -> ()
    %cst_106 = arith.constant dense<0.000000e+00> : vector<2x8x8xf32>
    %165 = tpu.matmul %164, %154, %cst_106 {dimension_numbers = #tpu.dot_dimension_numbers<[2], [1], [1], [2], [0, 0, 0, 1, 1, 2], [0], [0]>} : vector<2x8x8xf32>, vector<2x8x8xf32>, vector<2x8x8xf32> -> vector<2x8x8xf32>
    "tpu.trace_stop"() : () -> ()
    %166 = vector.shape_cast %165 : vector<2x8x8xf32> to vector<16x8xf32>
    %c3_107 = arith.constant 3 : index
    %c0_108 = arith.constant 0 : index
    %c0_109 = arith.constant 0 : index
    %167 = vector.load %arg4[%c3_107, %c0_108, %c0_109] : memref<8x8x32xf32, #tpu.memory_space<vmem>>, vector<1x8x32xf32>
    %168 = vector.shape_cast %167 : vector<1x8x32xf32> to vector<8x32xf32>
    %cst_110 = arith.constant dense<0.000000e+00> : vector<16x32xf32>
    %169 = tpu.matmul %166, %168, %cst_110 {dimension_numbers = #tpu.dot_dimension_numbers<[1], [0], [0], [1], [0, 0, 1, 1], [], []>} : vector<16x8xf32>, vector<8x32xf32>, vector<16x32xf32> -> vector<16x32xf32>
    %170 = arith.addf %128, %169 : vector<16x32xf32>
    %c0_111 = arith.constant 0 : index
    %c0_112 = arith.constant 0 : index
    %c0_113 = arith.constant 0 : index
    %171 = vector.load %arg5[%c0_111, %c0_112, %c0_113] : memref<12x1x32xf32, #tpu.memory_space<vmem>>, vector<1x1x32xf32>
    %172 = vector.shape_cast %171 : vector<1x1x32xf32> to vector<1x32xf32>
    %c1_114 = arith.constant 1 : index
    %c0_115 = arith.constant 0 : index
    %c0_116 = arith.constant 0 : index
    %173 = vector.load %arg5[%c1_114, %c0_115, %c0_116] : memref<12x1x32xf32, #tpu.memory_space<vmem>>, vector<1x1x32xf32>
    %174 = vector.shape_cast %173 : vector<1x1x32xf32> to vector<1x32xf32>
    %c2_117 = arith.constant 2 : index
    %c0_118 = arith.constant 0 : index
    %c0_119 = arith.constant 0 : index
    %175 = vector.load %arg5[%c2_117, %c0_118, %c0_119] : memref<12x1x32xf32, #tpu.memory_space<vmem>>, vector<1x1x32xf32>
    %176 = vector.shape_cast %175 : vector<1x1x32xf32> to vector<1x32xf32>
    %c3_120 = arith.constant 3 : index
    %c0_121 = arith.constant 0 : index
    %c0_122 = arith.constant 0 : index
    %177 = vector.load %arg5[%c3_120, %c0_121, %c0_122] : memref<12x1x32xf32, #tpu.memory_space<vmem>>, vector<1x1x32xf32>
    %178 = vector.shape_cast %177 : vector<1x1x32xf32> to vector<1x32xf32>
    %c4_123 = arith.constant 4 : index
    %c0_124 = arith.constant 0 : index
    %c0_125 = arith.constant 0 : index
    %179 = vector.load %arg5[%c4_123, %c0_124, %c0_125] : memref<12x1x32xf32, #tpu.memory_space<vmem>>, vector<1x1x32xf32>
    %180 = vector.shape_cast %179 : vector<1x1x32xf32> to vector<1x32xf32>
    %c5_126 = arith.constant 5 : index
    %c0_127 = arith.constant 0 : index
    %c0_128 = arith.constant 0 : index
    %181 = vector.load %arg5[%c5_126, %c0_127, %c0_128] : memref<12x1x32xf32, #tpu.memory_space<vmem>>, vector<1x1x32xf32>
    %182 = vector.shape_cast %181 : vector<1x1x32xf32> to vector<1x32xf32>
    %183 = vector.broadcast %172 : vector<1x32xf32> to vector<16x32xf32>
    %184 = arith.addf %170, %183 : vector<16x32xf32>
    %185 = arith.addf %1, %184 : vector<16x32xf32>
    %cst_129 = arith.constant dense<0.000000e+00> : vector<16xf32>
    %186 = vector.multi_reduction <add>, %185, %cst_129 [1] : vector<16x32xf32> to vector<16xf32>
    %187 = vector.shape_cast %186 : vector<16xf32> to vector<16x1xf32>
    %cst_130 = arith.constant 3.200000e+01 : f32
    %188 = vector.broadcast %cst_130 : f32 to vector<16x1xf32>
    %189 = arith.divf %187, %188 : vector<16x1xf32>
    %190 = vector.broadcast %189 : vector<16x1xf32> to vector<16x32xf32>
    %191 = arith.subf %185, %190 : vector<16x32xf32>
    %192 = arith.mulf %191, %191 : vector<16x32xf32>
    %cst_131 = arith.constant dense<0.000000e+00> : vector<16xf32>
    %193 = vector.multi_reduction <add>, %192, %cst_131 [1] : vector<16x32xf32> to vector<16xf32>
    %194 = vector.shape_cast %193 : vector<16xf32> to vector<16x1xf32>
    %cst_132 = arith.constant 3.200000e+01 : f32
    %195 = vector.broadcast %cst_132 : f32 to vector<16x1xf32>
    %196 = arith.divf %194, %195 : vector<16x1xf32>
    %197 = vector.broadcast %189 : vector<16x1xf32> to vector<16x32xf32>
    %198 = arith.subf %185, %197 : vector<16x32xf32>
    %cst_133 = arith.constant 9.99999974E-6 : f32
    %199 = vector.broadcast %cst_133 : f32 to vector<16x1xf32>
    %200 = arith.addf %196, %199 : vector<16x1xf32>
    %201 = math.rsqrt %200 : vector<16x1xf32>
    %202 = vector.broadcast %201 : vector<16x1xf32> to vector<16x32xf32>
    %203 = arith.mulf %198, %202 : vector<16x32xf32>
    %204 = vector.broadcast %174 : vector<1x32xf32> to vector<16x32xf32>
    %205 = arith.mulf %203, %204 : vector<16x32xf32>
    %206 = vector.broadcast %176 : vector<1x32xf32> to vector<16x32xf32>
    %207 = arith.addf %205, %206 : vector<16x32xf32>
    %c0_134 = arith.constant 0 : index
    %c0_135 = arith.constant 0 : index
    %c0_136 = arith.constant 0 : index
    %208 = vector.load %arg6[%c0_134, %c0_135, %c0_136] : memref<2x32x64xf32, #tpu.memory_space<vmem>>, vector<1x32x64xf32>
    %209 = vector.shape_cast %208 : vector<1x32x64xf32> to vector<32x64xf32>
    %cst_137 = arith.constant dense<0.000000e+00> : vector<16x64xf32>
    %210 = tpu.matmul %207, %209, %cst_137 {dimension_numbers = #tpu.dot_dimension_numbers<[1], [0], [0], [1], [0, 0, 1, 1], [], []>} : vector<16x32xf32>, vector<32x64xf32>, vector<16x64xf32> -> vector<16x64xf32>
    %c0_138 = arith.constant 0 : index
    %c0_139 = arith.constant 0 : index
    %c0_140 = arith.constant 0 : index
    %211 = vector.load %arg7[%c0_138, %c0_139, %c0_140] : memref<2x1x64xf32, #tpu.memory_space<vmem>>, vector<1x1x64xf32>
    %212 = vector.shape_cast %211 : vector<1x1x64xf32> to vector<1x64xf32>
    %213 = vector.broadcast %212 : vector<1x64xf32> to vector<16x64xf32>
    %214 = arith.addf %210, %213 : vector<16x64xf32>
    %cst_141 = arith.constant 0.000000e+00 : f32
    %215 = vector.broadcast %cst_141 : f32 to vector<16x64xf32>
    %216 = arith.maximumf %214, %215 : vector<16x64xf32>
    %c0_142 = arith.constant 0 : index
    %c0_143 = arith.constant 0 : index
    %c0_144 = arith.constant 0 : index
    %217 = vector.load %arg8[%c0_142, %c0_143, %c0_144] : memref<2x64x32xf32, #tpu.memory_space<vmem>>, vector<1x64x32xf32>
    %218 = vector.shape_cast %217 : vector<1x64x32xf32> to vector<64x32xf32>
    %cst_145 = arith.constant dense<0.000000e+00> : vector<16x32xf32>
    %219 = tpu.matmul %216, %218, %cst_145 {dimension_numbers = #tpu.dot_dimension_numbers<[1], [0], [0], [1], [0, 0, 1, 1], [], []>} : vector<16x64xf32>, vector<64x32xf32>, vector<16x32xf32> -> vector<16x32xf32>
    %220 = vector.broadcast %178 : vector<1x32xf32> to vector<16x32xf32>
    %221 = arith.addf %219, %220 : vector<16x32xf32>
    %222 = arith.addf %207, %221 : vector<16x32xf32>
    %cst_146 = arith.constant dense<0.000000e+00> : vector<16xf32>
    %223 = vector.multi_reduction <add>, %222, %cst_146 [1] : vector<16x32xf32> to vector<16xf32>
    %224 = vector.shape_cast %223 : vector<16xf32> to vector<16x1xf32>
    %cst_147 = arith.constant 3.200000e+01 : f32
    %225 = vector.broadcast %cst_147 : f32 to vector<16x1xf32>
    %226 = arith.divf %224, %225 : vector<16x1xf32>
    %227 = vector.broadcast %226 : vector<16x1xf32> to vector<16x32xf32>
    %228 = arith.subf %222, %227 : vector<16x32xf32>
    %229 = arith.mulf %228, %228 : vector<16x32xf32>
    %cst_148 = arith.constant dense<0.000000e+00> : vector<16xf32>
    %230 = vector.multi_reduction <add>, %229, %cst_148 [1] : vector<16x32xf32> to vector<16xf32>
    %231 = vector.shape_cast %230 : vector<16xf32> to vector<16x1xf32>
    %cst_149 = arith.constant 3.200000e+01 : f32
    %232 = vector.broadcast %cst_149 : f32 to vector<16x1xf32>
    %233 = arith.divf %231, %232 : vector<16x1xf32>
    %234 = vector.broadcast %226 : vector<16x1xf32> to vector<16x32xf32>
    %235 = arith.subf %222, %234 : vector<16x32xf32>
    %cst_150 = arith.constant 9.99999974E-6 : f32
    %236 = vector.broadcast %cst_150 : f32 to vector<16x1xf32>
    %237 = arith.addf %233, %236 : vector<16x1xf32>
    %238 = math.rsqrt %237 : vector<16x1xf32>
    %239 = vector.broadcast %238 : vector<16x1xf32> to vector<16x32xf32>
    %240 = arith.mulf %235, %239 : vector<16x32xf32>
    %241 = vector.broadcast %180 : vector<1x32xf32> to vector<16x32xf32>
    %242 = arith.mulf %240, %241 : vector<16x32xf32>
    %243 = vector.broadcast %182 : vector<1x32xf32> to vector<16x32xf32>
    %244 = arith.addf %242, %243 : vector<16x32xf32>
    %cst_151 = arith.constant 0.000000e+00 : f32
    %245 = vector.broadcast %cst_151 : f32 to vector<16x32xf32>
    %c12 = arith.constant 12 : index
    %c0_152 = arith.constant 0 : index
    %c0_153 = arith.constant 0 : index
    %246 = vector.load %arg2[%c12, %c0_152, %c0_153] : memref<24x32x8xf32, #tpu.memory_space<vmem>>, vector<1x32x8xf32>
    %247 = vector.shape_cast %246 : vector<1x32x8xf32> to vector<32x8xf32>
    %cst_154 = arith.constant dense<0.000000e+00> : vector<16x8xf32>
    %248 = tpu.matmul %244, %247, %cst_154 {dimension_numbers = #tpu.dot_dimension_numbers<[1], [0], [0], [1], [0, 0, 1, 1], [], []>} : vector<16x32xf32>, vector<32x8xf32>, vector<16x8xf32> -> vector<16x8xf32>
    %c12_155 = arith.constant 12 : index
    %c0_156 = arith.constant 0 : index
    %c0_157 = arith.constant 0 : index
    %249 = vector.load %arg3[%c12_155, %c0_156, %c0_157] : memref<24x1x8xf32, #tpu.memory_space<vmem>>, vector<1x1x8xf32>
    %250 = vector.shape_cast %249 : vector<1x1x8xf32> to vector<1x8xf32>
    %251 = vector.broadcast %250 : vector<1x8xf32> to vector<16x8xf32>
    %252 = arith.addf %248, %251 : vector<16x8xf32>
    %cst_158 = arith.constant 0.353553385 : f32
    %253 = vector.broadcast %cst_158 : f32 to vector<16x8xf32>
    %254 = arith.mulf %252, %253 : vector<16x8xf32>
    %c16 = arith.constant 16 : index
    %c0_159 = arith.constant 0 : index
    %c0_160 = arith.constant 0 : index
    %255 = vector.load %arg2[%c16, %c0_159, %c0_160] : memref<24x32x8xf32, #tpu.memory_space<vmem>>, vector<1x32x8xf32>
    %256 = vector.shape_cast %255 : vector<1x32x8xf32> to vector<32x8xf32>
    %cst_161 = arith.constant dense<0.000000e+00> : vector<16x8xf32>
    %257 = tpu.matmul %244, %256, %cst_161 {dimension_numbers = #tpu.dot_dimension_numbers<[1], [0], [0], [1], [0, 0, 1, 1], [], []>} : vector<16x32xf32>, vector<32x8xf32>, vector<16x8xf32> -> vector<16x8xf32>
    %c16_162 = arith.constant 16 : index
    %c0_163 = arith.constant 0 : index
    %c0_164 = arith.constant 0 : index
    %258 = vector.load %arg3[%c16_162, %c0_163, %c0_164] : memref<24x1x8xf32, #tpu.memory_space<vmem>>, vector<1x1x8xf32>
    %259 = vector.shape_cast %258 : vector<1x1x8xf32> to vector<1x8xf32>
    %260 = vector.broadcast %259 : vector<1x8xf32> to vector<16x8xf32>
    %261 = arith.addf %257, %260 : vector<16x8xf32>
    %c20 = arith.constant 20 : index
    %c0_165 = arith.constant 0 : index
    %c0_166 = arith.constant 0 : index
    %262 = vector.load %arg2[%c20, %c0_165, %c0_166] : memref<24x32x8xf32, #tpu.memory_space<vmem>>, vector<1x32x8xf32>
    %263 = vector.shape_cast %262 : vector<1x32x8xf32> to vector<32x8xf32>
    %cst_167 = arith.constant dense<0.000000e+00> : vector<16x8xf32>
    %264 = tpu.matmul %244, %263, %cst_167 {dimension_numbers = #tpu.dot_dimension_numbers<[1], [0], [0], [1], [0, 0, 1, 1], [], []>} : vector<16x32xf32>, vector<32x8xf32>, vector<16x8xf32> -> vector<16x8xf32>
    %c20_168 = arith.constant 20 : index
    %c0_169 = arith.constant 0 : index
    %c0_170 = arith.constant 0 : index
    %265 = vector.load %arg3[%c20_168, %c0_169, %c0_170] : memref<24x1x8xf32, #tpu.memory_space<vmem>>, vector<1x1x8xf32>
    %266 = vector.shape_cast %265 : vector<1x1x8xf32> to vector<1x8xf32>
    %267 = vector.broadcast %266 : vector<1x8xf32> to vector<16x8xf32>
    %268 = arith.addf %264, %267 : vector<16x8xf32>
    %269 = vector.shape_cast %254 : vector<16x8xf32> to vector<2x8x8xf32>
    %270 = vector.shape_cast %261 : vector<16x8xf32> to vector<2x8x8xf32>
    %271 = vector.shape_cast %268 : vector<16x8xf32> to vector<2x8x8xf32>
    "tpu.trace_start"() <{level = 10 : i32, message = "bqd,bkd->bqk"}> : () -> ()
    %cst_171 = arith.constant dense<0.000000e+00> : vector<2x8x8xf32>
    %272 = tpu.matmul %269, %270, %cst_171 {dimension_numbers = #tpu.dot_dimension_numbers<[2], [2], [1], [1], [0, 0, 0, 1, 1, 1], [0], [0]>} : vector<2x8x8xf32>, vector<2x8x8xf32>, vector<2x8x8xf32> -> vector<2x8x8xf32>
    "tpu.trace_stop"() : () -> ()
    %cst_172 = arith.constant dense<0xFF800000> : vector<2x8xf32>
    %273 = vector.multi_reduction <maximumf>, %272, %cst_172 [2] : vector<2x8x8xf32> to vector<2x8xf32>
    %274 = vector.shape_cast %273 : vector<2x8xf32> to vector<2x8x1xf32>
    %275 = vector.broadcast %274 : vector<2x8x1xf32> to vector<2x8x8xf32>
    %276 = arith.subf %272, %275 : vector<2x8x8xf32>
    %277 = math.exp %276 : vector<2x8x8xf32>
    %cst_173 = arith.constant dense<0.000000e+00> : vector<2x8xf32>
    %278 = vector.multi_reduction <add>, %277, %cst_173 [2] : vector<2x8x8xf32> to vector<2x8xf32>
    %279 = vector.shape_cast %278 : vector<2x8xf32> to vector<2x8x1xf32>
    %280 = vector.broadcast %279 : vector<2x8x1xf32> to vector<2x8x8xf32>
    %281 = arith.divf %277, %280 : vector<2x8x8xf32>
    "tpu.trace_start"() <{level = 10 : i32, message = "bqk,bkd->bqd"}> : () -> ()
    %cst_174 = arith.constant dense<0.000000e+00> : vector<2x8x8xf32>
    %282 = tpu.matmul %281, %271, %cst_174 {dimension_numbers = #tpu.dot_dimension_numbers<[2], [1], [1], [2], [0, 0, 0, 1, 1, 2], [0], [0]>} : vector<2x8x8xf32>, vector<2x8x8xf32>, vector<2x8x8xf32> -> vector<2x8x8xf32>
    "tpu.trace_stop"() : () -> ()
    %283 = vector.shape_cast %282 : vector<2x8x8xf32> to vector<16x8xf32>
    %c4_175 = arith.constant 4 : index
    %c0_176 = arith.constant 0 : index
    %c0_177 = arith.constant 0 : index
    %284 = vector.load %arg4[%c4_175, %c0_176, %c0_177] : memref<8x8x32xf32, #tpu.memory_space<vmem>>, vector<1x8x32xf32>
    %285 = vector.shape_cast %284 : vector<1x8x32xf32> to vector<8x32xf32>
    %cst_178 = arith.constant dense<0.000000e+00> : vector<16x32xf32>
    %286 = tpu.matmul %283, %285, %cst_178 {dimension_numbers = #tpu.dot_dimension_numbers<[1], [0], [0], [1], [0, 0, 1, 1], [], []>} : vector<16x8xf32>, vector<8x32xf32>, vector<16x32xf32> -> vector<16x32xf32>
    %287 = arith.addf %245, %286 : vector<16x32xf32>
    %c13 = arith.constant 13 : index
    %c0_179 = arith.constant 0 : index
    %c0_180 = arith.constant 0 : index
    %288 = vector.load %arg2[%c13, %c0_179, %c0_180] : memref<24x32x8xf32, #tpu.memory_space<vmem>>, vector<1x32x8xf32>
    %289 = vector.shape_cast %288 : vector<1x32x8xf32> to vector<32x8xf32>
    %cst_181 = arith.constant dense<0.000000e+00> : vector<16x8xf32>
    %290 = tpu.matmul %244, %289, %cst_181 {dimension_numbers = #tpu.dot_dimension_numbers<[1], [0], [0], [1], [0, 0, 1, 1], [], []>} : vector<16x32xf32>, vector<32x8xf32>, vector<16x8xf32> -> vector<16x8xf32>
    %c13_182 = arith.constant 13 : index
    %c0_183 = arith.constant 0 : index
    %c0_184 = arith.constant 0 : index
    %291 = vector.load %arg3[%c13_182, %c0_183, %c0_184] : memref<24x1x8xf32, #tpu.memory_space<vmem>>, vector<1x1x8xf32>
    %292 = vector.shape_cast %291 : vector<1x1x8xf32> to vector<1x8xf32>
    %293 = vector.broadcast %292 : vector<1x8xf32> to vector<16x8xf32>
    %294 = arith.addf %290, %293 : vector<16x8xf32>
    %cst_185 = arith.constant 0.353553385 : f32
    %295 = vector.broadcast %cst_185 : f32 to vector<16x8xf32>
    %296 = arith.mulf %294, %295 : vector<16x8xf32>
    %c17 = arith.constant 17 : index
    %c0_186 = arith.constant 0 : index
    %c0_187 = arith.constant 0 : index
    %297 = vector.load %arg2[%c17, %c0_186, %c0_187] : memref<24x32x8xf32, #tpu.memory_space<vmem>>, vector<1x32x8xf32>
    %298 = vector.shape_cast %297 : vector<1x32x8xf32> to vector<32x8xf32>
    %cst_188 = arith.constant dense<0.000000e+00> : vector<16x8xf32>
    %299 = tpu.matmul %244, %298, %cst_188 {dimension_numbers = #tpu.dot_dimension_numbers<[1], [0], [0], [1], [0, 0, 1, 1], [], []>} : vector<16x32xf32>, vector<32x8xf32>, vector<16x8xf32> -> vector<16x8xf32>
    %c17_189 = arith.constant 17 : index
    %c0_190 = arith.constant 0 : index
    %c0_191 = arith.constant 0 : index
    %300 = vector.load %arg3[%c17_189, %c0_190, %c0_191] : memref<24x1x8xf32, #tpu.memory_space<vmem>>, vector<1x1x8xf32>
    %301 = vector.shape_cast %300 : vector<1x1x8xf32> to vector<1x8xf32>
    %302 = vector.broadcast %301 : vector<1x8xf32> to vector<16x8xf32>
    %303 = arith.addf %299, %302 : vector<16x8xf32>
    %c21 = arith.constant 21 : index
    %c0_192 = arith.constant 0 : index
    %c0_193 = arith.constant 0 : index
    %304 = vector.load %arg2[%c21, %c0_192, %c0_193] : memref<24x32x8xf32, #tpu.memory_space<vmem>>, vector<1x32x8xf32>
    %305 = vector.shape_cast %304 : vector<1x32x8xf32> to vector<32x8xf32>
    %cst_194 = arith.constant dense<0.000000e+00> : vector<16x8xf32>
    %306 = tpu.matmul %244, %305, %cst_194 {dimension_numbers = #tpu.dot_dimension_numbers<[1], [0], [0], [1], [0, 0, 1, 1], [], []>} : vector<16x32xf32>, vector<32x8xf32>, vector<16x8xf32> -> vector<16x8xf32>
    %c21_195 = arith.constant 21 : index
    %c0_196 = arith.constant 0 : index
    %c0_197 = arith.constant 0 : index
    %307 = vector.load %arg3[%c21_195, %c0_196, %c0_197] : memref<24x1x8xf32, #tpu.memory_space<vmem>>, vector<1x1x8xf32>
    %308 = vector.shape_cast %307 : vector<1x1x8xf32> to vector<1x8xf32>
    %309 = vector.broadcast %308 : vector<1x8xf32> to vector<16x8xf32>
    %310 = arith.addf %306, %309 : vector<16x8xf32>
    %311 = vector.shape_cast %296 : vector<16x8xf32> to vector<2x8x8xf32>
    %312 = vector.shape_cast %303 : vector<16x8xf32> to vector<2x8x8xf32>
    %313 = vector.shape_cast %310 : vector<16x8xf32> to vector<2x8x8xf32>
    "tpu.trace_start"() <{level = 10 : i32, message = "bqd,bkd->bqk"}> : () -> ()
    %cst_198 = arith.constant dense<0.000000e+00> : vector<2x8x8xf32>
    %314 = tpu.matmul %311, %312, %cst_198 {dimension_numbers = #tpu.dot_dimension_numbers<[2], [2], [1], [1], [0, 0, 0, 1, 1, 1], [0], [0]>} : vector<2x8x8xf32>, vector<2x8x8xf32>, vector<2x8x8xf32> -> vector<2x8x8xf32>
    "tpu.trace_stop"() : () -> ()
    %cst_199 = arith.constant dense<0xFF800000> : vector<2x8xf32>
    %315 = vector.multi_reduction <maximumf>, %314, %cst_199 [2] : vector<2x8x8xf32> to vector<2x8xf32>
    %316 = vector.shape_cast %315 : vector<2x8xf32> to vector<2x8x1xf32>
    %317 = vector.broadcast %316 : vector<2x8x1xf32> to vector<2x8x8xf32>
    %318 = arith.subf %314, %317 : vector<2x8x8xf32>
    %319 = math.exp %318 : vector<2x8x8xf32>
    %cst_200 = arith.constant dense<0.000000e+00> : vector<2x8xf32>
    %320 = vector.multi_reduction <add>, %319, %cst_200 [2] : vector<2x8x8xf32> to vector<2x8xf32>
    %321 = vector.shape_cast %320 : vector<2x8xf32> to vector<2x8x1xf32>
    %322 = vector.broadcast %321 : vector<2x8x1xf32> to vector<2x8x8xf32>
    %323 = arith.divf %319, %322 : vector<2x8x8xf32>
    "tpu.trace_start"() <{level = 10 : i32, message = "bqk,bkd->bqd"}> : () -> ()
    %cst_201 = arith.constant dense<0.000000e+00> : vector<2x8x8xf32>
    %324 = tpu.matmul %323, %313, %cst_201 {dimension_numbers = #tpu.dot_dimension_numbers<[2], [1], [1], [2], [0, 0, 0, 1, 1, 2], [0], [0]>} : vector<2x8x8xf32>, vector<2x8x8xf32>, vector<2x8x8xf32> -> vector<2x8x8xf32>
    "tpu.trace_stop"() : () -> ()
    %325 = vector.shape_cast %324 : vector<2x8x8xf32> to vector<16x8xf32>
    %c5_202 = arith.constant 5 : index
    %c0_203 = arith.constant 0 : index
    %c0_204 = arith.constant 0 : index
    %326 = vector.load %arg4[%c5_202, %c0_203, %c0_204] : memref<8x8x32xf32, #tpu.memory_space<vmem>>, vector<1x8x32xf32>
    %327 = vector.shape_cast %326 : vector<1x8x32xf32> to vector<8x32xf32>
    %cst_205 = arith.constant dense<0.000000e+00> : vector<16x32xf32>
    %328 = tpu.matmul %325, %327, %cst_205 {dimension_numbers = #tpu.dot_dimension_numbers<[1], [0], [0], [1], [0, 0, 1, 1], [], []>} : vector<16x8xf32>, vector<8x32xf32>, vector<16x32xf32> -> vector<16x32xf32>
    %329 = arith.addf %287, %328 : vector<16x32xf32>
    %c14 = arith.constant 14 : index
    %c0_206 = arith.constant 0 : index
    %c0_207 = arith.constant 0 : index
    %330 = vector.load %arg2[%c14, %c0_206, %c0_207] : memref<24x32x8xf32, #tpu.memory_space<vmem>>, vector<1x32x8xf32>
    %331 = vector.shape_cast %330 : vector<1x32x8xf32> to vector<32x8xf32>
    %cst_208 = arith.constant dense<0.000000e+00> : vector<16x8xf32>
    %332 = tpu.matmul %244, %331, %cst_208 {dimension_numbers = #tpu.dot_dimension_numbers<[1], [0], [0], [1], [0, 0, 1, 1], [], []>} : vector<16x32xf32>, vector<32x8xf32>, vector<16x8xf32> -> vector<16x8xf32>
    %c14_209 = arith.constant 14 : index
    %c0_210 = arith.constant 0 : index
    %c0_211 = arith.constant 0 : index
    %333 = vector.load %arg3[%c14_209, %c0_210, %c0_211] : memref<24x1x8xf32, #tpu.memory_space<vmem>>, vector<1x1x8xf32>
    %334 = vector.shape_cast %333 : vector<1x1x8xf32> to vector<1x8xf32>
    %335 = vector.broadcast %334 : vector<1x8xf32> to vector<16x8xf32>
    %336 = arith.addf %332, %335 : vector<16x8xf32>
    %cst_212 = arith.constant 0.353553385 : f32
    %337 = vector.broadcast %cst_212 : f32 to vector<16x8xf32>
    %338 = arith.mulf %336, %337 : vector<16x8xf32>
    %c18 = arith.constant 18 : index
    %c0_213 = arith.constant 0 : index
    %c0_214 = arith.constant 0 : index
    %339 = vector.load %arg2[%c18, %c0_213, %c0_214] : memref<24x32x8xf32, #tpu.memory_space<vmem>>, vector<1x32x8xf32>
    %340 = vector.shape_cast %339 : vector<1x32x8xf32> to vector<32x8xf32>
    %cst_215 = arith.constant dense<0.000000e+00> : vector<16x8xf32>
    %341 = tpu.matmul %244, %340, %cst_215 {dimension_numbers = #tpu.dot_dimension_numbers<[1], [0], [0], [1], [0, 0, 1, 1], [], []>} : vector<16x32xf32>, vector<32x8xf32>, vector<16x8xf32> -> vector<16x8xf32>
    %c18_216 = arith.constant 18 : index
    %c0_217 = arith.constant 0 : index
    %c0_218 = arith.constant 0 : index
    %342 = vector.load %arg3[%c18_216, %c0_217, %c0_218] : memref<24x1x8xf32, #tpu.memory_space<vmem>>, vector<1x1x8xf32>
    %343 = vector.shape_cast %342 : vector<1x1x8xf32> to vector<1x8xf32>
    %344 = vector.broadcast %343 : vector<1x8xf32> to vector<16x8xf32>
    %345 = arith.addf %341, %344 : vector<16x8xf32>
    %c22 = arith.constant 22 : index
    %c0_219 = arith.constant 0 : index
    %c0_220 = arith.constant 0 : index
    %346 = vector.load %arg2[%c22, %c0_219, %c0_220] : memref<24x32x8xf32, #tpu.memory_space<vmem>>, vector<1x32x8xf32>
    %347 = vector.shape_cast %346 : vector<1x32x8xf32> to vector<32x8xf32>
    %cst_221 = arith.constant dense<0.000000e+00> : vector<16x8xf32>
    %348 = tpu.matmul %244, %347, %cst_221 {dimension_numbers = #tpu.dot_dimension_numbers<[1], [0], [0], [1], [0, 0, 1, 1], [], []>} : vector<16x32xf32>, vector<32x8xf32>, vector<16x8xf32> -> vector<16x8xf32>
    %c22_222 = arith.constant 22 : index
    %c0_223 = arith.constant 0 : index
    %c0_224 = arith.constant 0 : index
    %349 = vector.load %arg3[%c22_222, %c0_223, %c0_224] : memref<24x1x8xf32, #tpu.memory_space<vmem>>, vector<1x1x8xf32>
    %350 = vector.shape_cast %349 : vector<1x1x8xf32> to vector<1x8xf32>
    %351 = vector.broadcast %350 : vector<1x8xf32> to vector<16x8xf32>
    %352 = arith.addf %348, %351 : vector<16x8xf32>
    %353 = vector.shape_cast %338 : vector<16x8xf32> to vector<2x8x8xf32>
    %354 = vector.shape_cast %345 : vector<16x8xf32> to vector<2x8x8xf32>
    %355 = vector.shape_cast %352 : vector<16x8xf32> to vector<2x8x8xf32>
    "tpu.trace_start"() <{level = 10 : i32, message = "bqd,bkd->bqk"}> : () -> ()
    %cst_225 = arith.constant dense<0.000000e+00> : vector<2x8x8xf32>
    %356 = tpu.matmul %353, %354, %cst_225 {dimension_numbers = #tpu.dot_dimension_numbers<[2], [2], [1], [1], [0, 0, 0, 1, 1, 1], [0], [0]>} : vector<2x8x8xf32>, vector<2x8x8xf32>, vector<2x8x8xf32> -> vector<2x8x8xf32>
    "tpu.trace_stop"() : () -> ()
    %cst_226 = arith.constant dense<0xFF800000> : vector<2x8xf32>
    %357 = vector.multi_reduction <maximumf>, %356, %cst_226 [2] : vector<2x8x8xf32> to vector<2x8xf32>
    %358 = vector.shape_cast %357 : vector<2x8xf32> to vector<2x8x1xf32>
    %359 = vector.broadcast %358 : vector<2x8x1xf32> to vector<2x8x8xf32>
    %360 = arith.subf %356, %359 : vector<2x8x8xf32>
    %361 = math.exp %360 : vector<2x8x8xf32>
    %cst_227 = arith.constant dense<0.000000e+00> : vector<2x8xf32>
    %362 = vector.multi_reduction <add>, %361, %cst_227 [2] : vector<2x8x8xf32> to vector<2x8xf32>
    %363 = vector.shape_cast %362 : vector<2x8xf32> to vector<2x8x1xf32>
    %364 = vector.broadcast %363 : vector<2x8x1xf32> to vector<2x8x8xf32>
    %365 = arith.divf %361, %364 : vector<2x8x8xf32>
    "tpu.trace_start"() <{level = 10 : i32, message = "bqk,bkd->bqd"}> : () -> ()
    %cst_228 = arith.constant dense<0.000000e+00> : vector<2x8x8xf32>
    %366 = tpu.matmul %365, %355, %cst_228 {dimension_numbers = #tpu.dot_dimension_numbers<[2], [1], [1], [2], [0, 0, 0, 1, 1, 2], [0], [0]>} : vector<2x8x8xf32>, vector<2x8x8xf32>, vector<2x8x8xf32> -> vector<2x8x8xf32>
    "tpu.trace_stop"() : () -> ()
    %367 = vector.shape_cast %366 : vector<2x8x8xf32> to vector<16x8xf32>
    %c6_229 = arith.constant 6 : index
    %c0_230 = arith.constant 0 : index
    %c0_231 = arith.constant 0 : index
    %368 = vector.load %arg4[%c6_229, %c0_230, %c0_231] : memref<8x8x32xf32, #tpu.memory_space<vmem>>, vector<1x8x32xf32>
    %369 = vector.shape_cast %368 : vector<1x8x32xf32> to vector<8x32xf32>
    %cst_232 = arith.constant dense<0.000000e+00> : vector<16x32xf32>
    %370 = tpu.matmul %367, %369, %cst_232 {dimension_numbers = #tpu.dot_dimension_numbers<[1], [0], [0], [1], [0, 0, 1, 1], [], []>} : vector<16x8xf32>, vector<8x32xf32>, vector<16x32xf32> -> vector<16x32xf32>
    %371 = arith.addf %329, %370 : vector<16x32xf32>
    %c15 = arith.constant 15 : index
    %c0_233 = arith.constant 0 : index
    %c0_234 = arith.constant 0 : index
    %372 = vector.load %arg2[%c15, %c0_233, %c0_234] : memref<24x32x8xf32, #tpu.memory_space<vmem>>, vector<1x32x8xf32>
    %373 = vector.shape_cast %372 : vector<1x32x8xf32> to vector<32x8xf32>
    %cst_235 = arith.constant dense<0.000000e+00> : vector<16x8xf32>
    %374 = tpu.matmul %244, %373, %cst_235 {dimension_numbers = #tpu.dot_dimension_numbers<[1], [0], [0], [1], [0, 0, 1, 1], [], []>} : vector<16x32xf32>, vector<32x8xf32>, vector<16x8xf32> -> vector<16x8xf32>
    %c15_236 = arith.constant 15 : index
    %c0_237 = arith.constant 0 : index
    %c0_238 = arith.constant 0 : index
    %375 = vector.load %arg3[%c15_236, %c0_237, %c0_238] : memref<24x1x8xf32, #tpu.memory_space<vmem>>, vector<1x1x8xf32>
    %376 = vector.shape_cast %375 : vector<1x1x8xf32> to vector<1x8xf32>
    %377 = vector.broadcast %376 : vector<1x8xf32> to vector<16x8xf32>
    %378 = arith.addf %374, %377 : vector<16x8xf32>
    %cst_239 = arith.constant 0.353553385 : f32
    %379 = vector.broadcast %cst_239 : f32 to vector<16x8xf32>
    %380 = arith.mulf %378, %379 : vector<16x8xf32>
    %c19 = arith.constant 19 : index
    %c0_240 = arith.constant 0 : index
    %c0_241 = arith.constant 0 : index
    %381 = vector.load %arg2[%c19, %c0_240, %c0_241] : memref<24x32x8xf32, #tpu.memory_space<vmem>>, vector<1x32x8xf32>
    %382 = vector.shape_cast %381 : vector<1x32x8xf32> to vector<32x8xf32>
    %cst_242 = arith.constant dense<0.000000e+00> : vector<16x8xf32>
    %383 = tpu.matmul %244, %382, %cst_242 {dimension_numbers = #tpu.dot_dimension_numbers<[1], [0], [0], [1], [0, 0, 1, 1], [], []>} : vector<16x32xf32>, vector<32x8xf32>, vector<16x8xf32> -> vector<16x8xf32>
    %c19_243 = arith.constant 19 : index
    %c0_244 = arith.constant 0 : index
    %c0_245 = arith.constant 0 : index
    %384 = vector.load %arg3[%c19_243, %c0_244, %c0_245] : memref<24x1x8xf32, #tpu.memory_space<vmem>>, vector<1x1x8xf32>
    %385 = vector.shape_cast %384 : vector<1x1x8xf32> to vector<1x8xf32>
    %386 = vector.broadcast %385 : vector<1x8xf32> to vector<16x8xf32>
    %387 = arith.addf %383, %386 : vector<16x8xf32>
    %c23 = arith.constant 23 : index
    %c0_246 = arith.constant 0 : index
    %c0_247 = arith.constant 0 : index
    %388 = vector.load %arg2[%c23, %c0_246, %c0_247] : memref<24x32x8xf32, #tpu.memory_space<vmem>>, vector<1x32x8xf32>
    %389 = vector.shape_cast %388 : vector<1x32x8xf32> to vector<32x8xf32>
    %cst_248 = arith.constant dense<0.000000e+00> : vector<16x8xf32>
    %390 = tpu.matmul %244, %389, %cst_248 {dimension_numbers = #tpu.dot_dimension_numbers<[1], [0], [0], [1], [0, 0, 1, 1], [], []>} : vector<16x32xf32>, vector<32x8xf32>, vector<16x8xf32> -> vector<16x8xf32>
    %c23_249 = arith.constant 23 : index
    %c0_250 = arith.constant 0 : index
    %c0_251 = arith.constant 0 : index
    %391 = vector.load %arg3[%c23_249, %c0_250, %c0_251] : memref<24x1x8xf32, #tpu.memory_space<vmem>>, vector<1x1x8xf32>
    %392 = vector.shape_cast %391 : vector<1x1x8xf32> to vector<1x8xf32>
    %393 = vector.broadcast %392 : vector<1x8xf32> to vector<16x8xf32>
    %394 = arith.addf %390, %393 : vector<16x8xf32>
    %395 = vector.shape_cast %380 : vector<16x8xf32> to vector<2x8x8xf32>
    %396 = vector.shape_cast %387 : vector<16x8xf32> to vector<2x8x8xf32>
    %397 = vector.shape_cast %394 : vector<16x8xf32> to vector<2x8x8xf32>
    "tpu.trace_start"() <{level = 10 : i32, message = "bqd,bkd->bqk"}> : () -> ()
    %cst_252 = arith.constant dense<0.000000e+00> : vector<2x8x8xf32>
    %398 = tpu.matmul %395, %396, %cst_252 {dimension_numbers = #tpu.dot_dimension_numbers<[2], [2], [1], [1], [0, 0, 0, 1, 1, 1], [0], [0]>} : vector<2x8x8xf32>, vector<2x8x8xf32>, vector<2x8x8xf32> -> vector<2x8x8xf32>
    "tpu.trace_stop"() : () -> ()
    %cst_253 = arith.constant dense<0xFF800000> : vector<2x8xf32>
    %399 = vector.multi_reduction <maximumf>, %398, %cst_253 [2] : vector<2x8x8xf32> to vector<2x8xf32>
    %400 = vector.shape_cast %399 : vector<2x8xf32> to vector<2x8x1xf32>
    %401 = vector.broadcast %400 : vector<2x8x1xf32> to vector<2x8x8xf32>
    %402 = arith.subf %398, %401 : vector<2x8x8xf32>
    %403 = math.exp %402 : vector<2x8x8xf32>
    %cst_254 = arith.constant dense<0.000000e+00> : vector<2x8xf32>
    %404 = vector.multi_reduction <add>, %403, %cst_254 [2] : vector<2x8x8xf32> to vector<2x8xf32>
    %405 = vector.shape_cast %404 : vector<2x8xf32> to vector<2x8x1xf32>
    %406 = vector.broadcast %405 : vector<2x8x1xf32> to vector<2x8x8xf32>
    %407 = arith.divf %403, %406 : vector<2x8x8xf32>
    "tpu.trace_start"() <{level = 10 : i32, message = "bqk,bkd->bqd"}> : () -> ()
    %cst_255 = arith.constant dense<0.000000e+00> : vector<2x8x8xf32>
    %408 = tpu.matmul %407, %397, %cst_255 {dimension_numbers = #tpu.dot_dimension_numbers<[2], [1], [1], [2], [0, 0, 0, 1, 1, 2], [0], [0]>} : vector<2x8x8xf32>, vector<2x8x8xf32>, vector<2x8x8xf32> -> vector<2x8x8xf32>
    "tpu.trace_stop"() : () -> ()
    %409 = vector.shape_cast %408 : vector<2x8x8xf32> to vector<16x8xf32>
    %c7_256 = arith.constant 7 : index
    %c0_257 = arith.constant 0 : index
    %c0_258 = arith.constant 0 : index
    %410 = vector.load %arg4[%c7_256, %c0_257, %c0_258] : memref<8x8x32xf32, #tpu.memory_space<vmem>>, vector<1x8x32xf32>
    %411 = vector.shape_cast %410 : vector<1x8x32xf32> to vector<8x32xf32>
    %cst_259 = arith.constant dense<0.000000e+00> : vector<16x32xf32>
    %412 = tpu.matmul %409, %411, %cst_259 {dimension_numbers = #tpu.dot_dimension_numbers<[1], [0], [0], [1], [0, 0, 1, 1], [], []>} : vector<16x8xf32>, vector<8x32xf32>, vector<16x32xf32> -> vector<16x32xf32>
    %413 = arith.addf %371, %412 : vector<16x32xf32>
    %c6_260 = arith.constant 6 : index
    %c0_261 = arith.constant 0 : index
    %c0_262 = arith.constant 0 : index
    %414 = vector.load %arg5[%c6_260, %c0_261, %c0_262] : memref<12x1x32xf32, #tpu.memory_space<vmem>>, vector<1x1x32xf32>
    %415 = vector.shape_cast %414 : vector<1x1x32xf32> to vector<1x32xf32>
    %c7_263 = arith.constant 7 : index
    %c0_264 = arith.constant 0 : index
    %c0_265 = arith.constant 0 : index
    %416 = vector.load %arg5[%c7_263, %c0_264, %c0_265] : memref<12x1x32xf32, #tpu.memory_space<vmem>>, vector<1x1x32xf32>
    %417 = vector.shape_cast %416 : vector<1x1x32xf32> to vector<1x32xf32>
    %c8_266 = arith.constant 8 : index
    %c0_267 = arith.constant 0 : index
    %c0_268 = arith.constant 0 : index
    %418 = vector.load %arg5[%c8_266, %c0_267, %c0_268] : memref<12x1x32xf32, #tpu.memory_space<vmem>>, vector<1x1x32xf32>
    %419 = vector.shape_cast %418 : vector<1x1x32xf32> to vector<1x32xf32>
    %c9_269 = arith.constant 9 : index
    %c0_270 = arith.constant 0 : index
    %c0_271 = arith.constant 0 : index
    %420 = vector.load %arg5[%c9_269, %c0_270, %c0_271] : memref<12x1x32xf32, #tpu.memory_space<vmem>>, vector<1x1x32xf32>
    %421 = vector.shape_cast %420 : vector<1x1x32xf32> to vector<1x32xf32>
    %c10_272 = arith.constant 10 : index
    %c0_273 = arith.constant 0 : index
    %c0_274 = arith.constant 0 : index
    %422 = vector.load %arg5[%c10_272, %c0_273, %c0_274] : memref<12x1x32xf32, #tpu.memory_space<vmem>>, vector<1x1x32xf32>
    %423 = vector.shape_cast %422 : vector<1x1x32xf32> to vector<1x32xf32>
    %c11_275 = arith.constant 11 : index
    %c0_276 = arith.constant 0 : index
    %c0_277 = arith.constant 0 : index
    %424 = vector.load %arg5[%c11_275, %c0_276, %c0_277] : memref<12x1x32xf32, #tpu.memory_space<vmem>>, vector<1x1x32xf32>
    %425 = vector.shape_cast %424 : vector<1x1x32xf32> to vector<1x32xf32>
    %426 = vector.broadcast %415 : vector<1x32xf32> to vector<16x32xf32>
    %427 = arith.addf %413, %426 : vector<16x32xf32>
    %428 = arith.addf %244, %427 : vector<16x32xf32>
    %cst_278 = arith.constant dense<0.000000e+00> : vector<16xf32>
    %429 = vector.multi_reduction <add>, %428, %cst_278 [1] : vector<16x32xf32> to vector<16xf32>
    %430 = vector.shape_cast %429 : vector<16xf32> to vector<16x1xf32>
    %cst_279 = arith.constant 3.200000e+01 : f32
    %431 = vector.broadcast %cst_279 : f32 to vector<16x1xf32>
    %432 = arith.divf %430, %431 : vector<16x1xf32>
    %433 = vector.broadcast %432 : vector<16x1xf32> to vector<16x32xf32>
    %434 = arith.subf %428, %433 : vector<16x32xf32>
    %435 = arith.mulf %434, %434 : vector<16x32xf32>
    %cst_280 = arith.constant dense<0.000000e+00> : vector<16xf32>
    %436 = vector.multi_reduction <add>, %435, %cst_280 [1] : vector<16x32xf32> to vector<16xf32>
    %437 = vector.shape_cast %436 : vector<16xf32> to vector<16x1xf32>
    %cst_281 = arith.constant 3.200000e+01 : f32
    %438 = vector.broadcast %cst_281 : f32 to vector<16x1xf32>
    %439 = arith.divf %437, %438 : vector<16x1xf32>
    %440 = vector.broadcast %432 : vector<16x1xf32> to vector<16x32xf32>
    %441 = arith.subf %428, %440 : vector<16x32xf32>
    %cst_282 = arith.constant 9.99999974E-6 : f32
    %442 = vector.broadcast %cst_282 : f32 to vector<16x1xf32>
    %443 = arith.addf %439, %442 : vector<16x1xf32>
    %444 = math.rsqrt %443 : vector<16x1xf32>
    %445 = vector.broadcast %444 : vector<16x1xf32> to vector<16x32xf32>
    %446 = arith.mulf %441, %445 : vector<16x32xf32>
    %447 = vector.broadcast %417 : vector<1x32xf32> to vector<16x32xf32>
    %448 = arith.mulf %446, %447 : vector<16x32xf32>
    %449 = vector.broadcast %419 : vector<1x32xf32> to vector<16x32xf32>
    %450 = arith.addf %448, %449 : vector<16x32xf32>
    %c1_283 = arith.constant 1 : index
    %c0_284 = arith.constant 0 : index
    %c0_285 = arith.constant 0 : index
    %451 = vector.load %arg6[%c1_283, %c0_284, %c0_285] : memref<2x32x64xf32, #tpu.memory_space<vmem>>, vector<1x32x64xf32>
    %452 = vector.shape_cast %451 : vector<1x32x64xf32> to vector<32x64xf32>
    %cst_286 = arith.constant dense<0.000000e+00> : vector<16x64xf32>
    %453 = tpu.matmul %450, %452, %cst_286 {dimension_numbers = #tpu.dot_dimension_numbers<[1], [0], [0], [1], [0, 0, 1, 1], [], []>} : vector<16x32xf32>, vector<32x64xf32>, vector<16x64xf32> -> vector<16x64xf32>
    %c1_287 = arith.constant 1 : index
    %c0_288 = arith.constant 0 : index
    %c0_289 = arith.constant 0 : index
    %454 = vector.load %arg7[%c1_287, %c0_288, %c0_289] : memref<2x1x64xf32, #tpu.memory_space<vmem>>, vector<1x1x64xf32>
    %455 = vector.shape_cast %454 : vector<1x1x64xf32> to vector<1x64xf32>
    %456 = vector.broadcast %455 : vector<1x64xf32> to vector<16x64xf32>
    %457 = arith.addf %453, %456 : vector<16x64xf32>
    %cst_290 = arith.constant 0.000000e+00 : f32
    %458 = vector.broadcast %cst_290 : f32 to vector<16x64xf32>
    %459 = arith.maximumf %457, %458 : vector<16x64xf32>
    %c1_291 = arith.constant 1 : index
    %c0_292 = arith.constant 0 : index
    %c0_293 = arith.constant 0 : index
    %460 = vector.load %arg8[%c1_291, %c0_292, %c0_293] : memref<2x64x32xf32, #tpu.memory_space<vmem>>, vector<1x64x32xf32>
    %461 = vector.shape_cast %460 : vector<1x64x32xf32> to vector<64x32xf32>
    %cst_294 = arith.constant dense<0.000000e+00> : vector<16x32xf32>
    %462 = tpu.matmul %459, %461, %cst_294 {dimension_numbers = #tpu.dot_dimension_numbers<[1], [0], [0], [1], [0, 0, 1, 1], [], []>} : vector<16x64xf32>, vector<64x32xf32>, vector<16x32xf32> -> vector<16x32xf32>
    %463 = vector.broadcast %421 : vector<1x32xf32> to vector<16x32xf32>
    %464 = arith.addf %462, %463 : vector<16x32xf32>
    %465 = arith.addf %450, %464 : vector<16x32xf32>
    %cst_295 = arith.constant dense<0.000000e+00> : vector<16xf32>
    %466 = vector.multi_reduction <add>, %465, %cst_295 [1] : vector<16x32xf32> to vector<16xf32>
    %467 = vector.shape_cast %466 : vector<16xf32> to vector<16x1xf32>
    %cst_296 = arith.constant 3.200000e+01 : f32
    %468 = vector.broadcast %cst_296 : f32 to vector<16x1xf32>
    %469 = arith.divf %467, %468 : vector<16x1xf32>
    %470 = vector.broadcast %469 : vector<16x1xf32> to vector<16x32xf32>
    %471 = arith.subf %465, %470 : vector<16x32xf32>
    %472 = arith.mulf %471, %471 : vector<16x32xf32>
    %cst_297 = arith.constant dense<0.000000e+00> : vector<16xf32>
    %473 = vector.multi_reduction <add>, %472, %cst_297 [1] : vector<16x32xf32> to vector<16xf32>
    %474 = vector.shape_cast %473 : vector<16xf32> to vector<16x1xf32>
    %cst_298 = arith.constant 3.200000e+01 : f32
    %475 = vector.broadcast %cst_298 : f32 to vector<16x1xf32>
    %476 = arith.divf %474, %475 : vector<16x1xf32>
    %477 = vector.broadcast %469 : vector<16x1xf32> to vector<16x32xf32>
    %478 = arith.subf %465, %477 : vector<16x32xf32>
    %cst_299 = arith.constant 9.99999974E-6 : f32
    %479 = vector.broadcast %cst_299 : f32 to vector<16x1xf32>
    %480 = arith.addf %476, %479 : vector<16x1xf32>
    %481 = math.rsqrt %480 : vector<16x1xf32>
    %482 = vector.broadcast %481 : vector<16x1xf32> to vector<16x32xf32>
    %483 = arith.mulf %478, %482 : vector<16x32xf32>
    %484 = vector.broadcast %423 : vector<1x32xf32> to vector<16x32xf32>
    %485 = arith.mulf %483, %484 : vector<16x32xf32>
    %486 = vector.broadcast %425 : vector<1x32xf32> to vector<16x32xf32>
    %487 = arith.addf %485, %486 : vector<16x32xf32>
    %c0_300 = arith.constant 0 : index
    %c0_301 = arith.constant 0 : index
    %488 = vector.load %arg9[%c0_300, %c0_301] : memref<32x6xf32, #tpu.memory_space<vmem>>, vector<32x6xf32>
    %cst_302 = arith.constant dense<0.000000e+00> : vector<16x6xf32>
    %489 = tpu.matmul %487, %488, %cst_302 {dimension_numbers = #tpu.dot_dimension_numbers<[1], [0], [0], [1], [0, 0, 1, 1], [], []>} : vector<16x32xf32>, vector<32x6xf32>, vector<16x6xf32> -> vector<16x6xf32>
    %c0_303 = arith.constant 0 : index
    %c0_304 = arith.constant 0 : index
    %490 = vector.load %arg10[%c0_303, %c0_304] : memref<1x6xf32, #tpu.memory_space<vmem>>, vector<1x6xf32>
    %491 = vector.broadcast %490 : vector<1x6xf32> to vector<16x6xf32>
    %492 = arith.addf %489, %491 : vector<16x6xf32>
    %493 = vector.shape_cast %492 : vector<16x6xf32> to vector<2x8x6xf32>
    %c0_305 = arith.constant 0 : index
    %c0_306 = arith.constant 0 : index
    %494 = vector.load %arg11[%c0_305, %c0_306] : memref<8x6xf32, #tpu.memory_space<vmem>>, vector<8x6xf32>
    %495 = vector.extract_strided_slice %494 {offsets = [0, 0], sizes = [6, 6], strides = [1, 1]} : vector<8x6xf32> to vector<6x6xf32>
    %496 = vector.extract_strided_slice %494 {offsets = [6, 0], sizes = [1, 6], strides = [1, 1]} : vector<8x6xf32> to vector<1x6xf32>
    %497 = vector.extract_strided_slice %494 {offsets = [7, 0], sizes = [1, 6], strides = [1, 1]} : vector<8x6xf32> to vector<1x6xf32>
    %c0_307 = arith.constant 0 : index
    %c0_308 = arith.constant 0 : index
    %c0_309 = arith.constant 0 : index
    %498 = vector.load %arg1[%c0_307, %c0_308, %c0_309] : memref<8x2x1xf32, #tpu.memory_space<vmem>>, vector<8x2x1xf32>
    %cst_310 = arith.constant 1.000000e+00 : f32
    %499 = vector.broadcast %cst_310 : f32 to vector<8x2x1xf32>
    %500 = arith.subf %499, %498 : vector<8x2x1xf32>
    %cst_311 = arith.constant dense<0.000000e+00> : vector<2x1xf32>
    %501 = vector.multi_reduction <add>, %498, %cst_311 [0] : vector<8x2x1xf32> to vector<2x1xf32>
    %502 = arith.fptosi %501 : vector<2x1xf32> to vector<2x1xi32>
    %503 = tpu.iota {dimensions = array<i32: 2>} : vector<2x6x6xi32>
    %504 = tpu.iota {dimensions = array<i32: 1>} : vector<2x6xi32>
    %505 = vector.extract_strided_slice %493 {offsets = [0, 0, 0], sizes = [2, 1, 6], strides = [1, 1, 1]} : vector<2x8x6xf32> to vector<2x1x6xf32>
    %506 = vector.shape_cast %505 : vector<2x1x6xf32> to vector<2x6xf32>
    %507 = vector.broadcast %496 : vector<1x6xf32> to vector<2x6xf32>
    %508 = arith.addf %507, %506 : vector<2x6xf32>
    %509 = vector.shape_cast %508 : vector<2x6xf32> to vector<2x1x6xf32>
    %510 = vector.shape_cast %495 : vector<6x6xf32> to vector<1x6x6xf32>
    %511 = vector.broadcast %509 : vector<2x1x6xf32> to vector<2x6x6xf32>
    %512 = vector.broadcast %510 : vector<1x6x6xf32> to vector<2x6x6xf32>
    %513 = arith.addf %511, %512 : vector<2x6x6xf32>
    %cst_312 = arith.constant dense<0xFF800000> : vector<2x6xf32>
    %514 = vector.multi_reduction <maximumf>, %513, %cst_312 [2] : vector<2x6x6xf32> to vector<2x6xf32>
    %515 = vector.shape_cast %514 : vector<2x6xf32> to vector<2x6x1xf32>
    %516 = vector.broadcast %515 : vector<2x6x1xf32> to vector<2x6x6xf32>
    %517 = arith.cmpf oeq, %513, %516 : vector<2x6x6xf32>
    %c6_i32 = arith.constant 6 : i32
    %518 = vector.broadcast %c6_i32 : i32 to vector<2x6x6xi32>
    %519 = arith.select %517, %503, %518 : vector<2x6x6xi1>, vector<2x6x6xi32>
    %cst_313 = arith.constant dense<2147483647> : vector<2x6xi32>
    %520 = vector.multi_reduction <minsi>, %519, %cst_313 [2] : vector<2x6x6xi32> to vector<2x6xi32>
    %521 = vector.extract_strided_slice %493 {offsets = [0, 1, 0], sizes = [2, 1, 6], strides = [1, 1, 1]} : vector<2x8x6xf32> to vector<2x1x6xf32>
    %522 = vector.shape_cast %521 : vector<2x1x6xf32> to vector<2x6xf32>
    %523 = arith.addf %514, %522 : vector<2x6xf32>
    %524 = vector.extract_strided_slice %498 {offsets = [1, 0, 0], sizes = [1, 2, 1], strides = [1, 1, 1]} : vector<8x2x1xf32> to vector<1x2x1xf32>
    %525 = vector.shape_cast %524 : vector<1x2x1xf32> to vector<2x1xf32>
    %526 = vector.broadcast %525 : vector<2x1xf32> to vector<2x6xf32>
    %527 = arith.mulf %526, %523 : vector<2x6xf32>
    %528 = vector.extract_strided_slice %500 {offsets = [1, 0, 0], sizes = [1, 2, 1], strides = [1, 1, 1]} : vector<8x2x1xf32> to vector<1x2x1xf32>
    %529 = vector.shape_cast %528 : vector<1x2x1xf32> to vector<2x1xf32>
    %530 = vector.broadcast %529 : vector<2x1xf32> to vector<2x6xf32>
    %531 = arith.mulf %530, %508 : vector<2x6xf32>
    %532 = arith.addf %527, %531 : vector<2x6xf32>
    %533 = vector.shape_cast %532 : vector<2x6xf32> to vector<2x1x6xf32>
    %534 = vector.shape_cast %495 : vector<6x6xf32> to vector<1x6x6xf32>
    %535 = vector.broadcast %533 : vector<2x1x6xf32> to vector<2x6x6xf32>
    %536 = vector.broadcast %534 : vector<1x6x6xf32> to vector<2x6x6xf32>
    %537 = arith.addf %535, %536 : vector<2x6x6xf32>
    %cst_314 = arith.constant dense<0xFF800000> : vector<2x6xf32>
    %538 = vector.multi_reduction <maximumf>, %537, %cst_314 [2] : vector<2x6x6xf32> to vector<2x6xf32>
    %539 = vector.shape_cast %538 : vector<2x6xf32> to vector<2x6x1xf32>
    %540 = vector.broadcast %539 : vector<2x6x1xf32> to vector<2x6x6xf32>
    %541 = arith.cmpf oeq, %537, %540 : vector<2x6x6xf32>
    %c6_i32_315 = arith.constant 6 : i32
    %542 = vector.broadcast %c6_i32_315 : i32 to vector<2x6x6xi32>
    %543 = arith.select %541, %503, %542 : vector<2x6x6xi1>, vector<2x6x6xi32>
    %cst_316 = arith.constant dense<2147483647> : vector<2x6xi32>
    %544 = vector.multi_reduction <minsi>, %543, %cst_316 [2] : vector<2x6x6xi32> to vector<2x6xi32>
    %545 = vector.extract_strided_slice %493 {offsets = [0, 2, 0], sizes = [2, 1, 6], strides = [1, 1, 1]} : vector<2x8x6xf32> to vector<2x1x6xf32>
    %546 = vector.shape_cast %545 : vector<2x1x6xf32> to vector<2x6xf32>
    %547 = arith.addf %538, %546 : vector<2x6xf32>
    %548 = vector.extract_strided_slice %498 {offsets = [2, 0, 0], sizes = [1, 2, 1], strides = [1, 1, 1]} : vector<8x2x1xf32> to vector<1x2x1xf32>
    %549 = vector.shape_cast %548 : vector<1x2x1xf32> to vector<2x1xf32>
    %550 = vector.broadcast %549 : vector<2x1xf32> to vector<2x6xf32>
    %551 = arith.mulf %550, %547 : vector<2x6xf32>
    %552 = vector.extract_strided_slice %500 {offsets = [2, 0, 0], sizes = [1, 2, 1], strides = [1, 1, 1]} : vector<8x2x1xf32> to vector<1x2x1xf32>
    %553 = vector.shape_cast %552 : vector<1x2x1xf32> to vector<2x1xf32>
    %554 = vector.broadcast %553 : vector<2x1xf32> to vector<2x6xf32>
    %555 = arith.mulf %554, %532 : vector<2x6xf32>
    %556 = arith.addf %551, %555 : vector<2x6xf32>
    %557 = vector.shape_cast %556 : vector<2x6xf32> to vector<2x1x6xf32>
    %558 = vector.shape_cast %495 : vector<6x6xf32> to vector<1x6x6xf32>
    %559 = vector.broadcast %557 : vector<2x1x6xf32> to vector<2x6x6xf32>
    %560 = vector.broadcast %558 : vector<1x6x6xf32> to vector<2x6x6xf32>
    %561 = arith.addf %559, %560 : vector<2x6x6xf32>
    %cst_317 = arith.constant dense<0xFF800000> : vector<2x6xf32>
    %562 = vector.multi_reduction <maximumf>, %561, %cst_317 [2] : vector<2x6x6xf32> to vector<2x6xf32>
    %563 = vector.shape_cast %562 : vector<2x6xf32> to vector<2x6x1xf32>
    %564 = vector.broadcast %563 : vector<2x6x1xf32> to vector<2x6x6xf32>
    %565 = arith.cmpf oeq, %561, %564 : vector<2x6x6xf32>
    %c6_i32_318 = arith.constant 6 : i32
    %566 = vector.broadcast %c6_i32_318 : i32 to vector<2x6x6xi32>
    %567 = arith.select %565, %503, %566 : vector<2x6x6xi1>, vector<2x6x6xi32>
    %cst_319 = arith.constant dense<2147483647> : vector<2x6xi32>
    %568 = vector.multi_reduction <minsi>, %567, %cst_319 [2] : vector<2x6x6xi32> to vector<2x6xi32>
    %569 = vector.extract_strided_slice %493 {offsets = [0, 3, 0], sizes = [2, 1, 6], strides = [1, 1, 1]} : vector<2x8x6xf32> to vector<2x1x6xf32>
    %570 = vector.shape_cast %569 : vector<2x1x6xf32> to vector<2x6xf32>
    %571 = arith.addf %562, %570 : vector<2x6xf32>
    %572 = vector.extract_strided_slice %498 {offsets = [3, 0, 0], sizes = [1, 2, 1], strides = [1, 1, 1]} : vector<8x2x1xf32> to vector<1x2x1xf32>
    %573 = vector.shape_cast %572 : vector<1x2x1xf32> to vector<2x1xf32>
    %574 = vector.broadcast %573 : vector<2x1xf32> to vector<2x6xf32>
    %575 = arith.mulf %574, %571 : vector<2x6xf32>
    %576 = vector.extract_strided_slice %500 {offsets = [3, 0, 0], sizes = [1, 2, 1], strides = [1, 1, 1]} : vector<8x2x1xf32> to vector<1x2x1xf32>
    %577 = vector.shape_cast %576 : vector<1x2x1xf32> to vector<2x1xf32>
    %578 = vector.broadcast %577 : vector<2x1xf32> to vector<2x6xf32>
    %579 = arith.mulf %578, %556 : vector<2x6xf32>
    %580 = arith.addf %575, %579 : vector<2x6xf32>
    %581 = vector.shape_cast %580 : vector<2x6xf32> to vector<2x1x6xf32>
    %582 = vector.shape_cast %495 : vector<6x6xf32> to vector<1x6x6xf32>
    %583 = vector.broadcast %581 : vector<2x1x6xf32> to vector<2x6x6xf32>
    %584 = vector.broadcast %582 : vector<1x6x6xf32> to vector<2x6x6xf32>
    %585 = arith.addf %583, %584 : vector<2x6x6xf32>
    %cst_320 = arith.constant dense<0xFF800000> : vector<2x6xf32>
    %586 = vector.multi_reduction <maximumf>, %585, %cst_320 [2] : vector<2x6x6xf32> to vector<2x6xf32>
    %587 = vector.shape_cast %586 : vector<2x6xf32> to vector<2x6x1xf32>
    %588 = vector.broadcast %587 : vector<2x6x1xf32> to vector<2x6x6xf32>
    %589 = arith.cmpf oeq, %585, %588 : vector<2x6x6xf32>
    %c6_i32_321 = arith.constant 6 : i32
    %590 = vector.broadcast %c6_i32_321 : i32 to vector<2x6x6xi32>
    %591 = arith.select %589, %503, %590 : vector<2x6x6xi1>, vector<2x6x6xi32>
    %cst_322 = arith.constant dense<2147483647> : vector<2x6xi32>
    %592 = vector.multi_reduction <minsi>, %591, %cst_322 [2] : vector<2x6x6xi32> to vector<2x6xi32>
    %593 = vector.extract_strided_slice %493 {offsets = [0, 4, 0], sizes = [2, 1, 6], strides = [1, 1, 1]} : vector<2x8x6xf32> to vector<2x1x6xf32>
    %594 = vector.shape_cast %593 : vector<2x1x6xf32> to vector<2x6xf32>
    %595 = arith.addf %586, %594 : vector<2x6xf32>
    %596 = vector.extract_strided_slice %498 {offsets = [4, 0, 0], sizes = [1, 2, 1], strides = [1, 1, 1]} : vector<8x2x1xf32> to vector<1x2x1xf32>
    %597 = vector.shape_cast %596 : vector<1x2x1xf32> to vector<2x1xf32>
    %598 = vector.broadcast %597 : vector<2x1xf32> to vector<2x6xf32>
    %599 = arith.mulf %598, %595 : vector<2x6xf32>
    %600 = vector.extract_strided_slice %500 {offsets = [4, 0, 0], sizes = [1, 2, 1], strides = [1, 1, 1]} : vector<8x2x1xf32> to vector<1x2x1xf32>
    %601 = vector.shape_cast %600 : vector<1x2x1xf32> to vector<2x1xf32>
    %602 = vector.broadcast %601 : vector<2x1xf32> to vector<2x6xf32>
    %603 = arith.mulf %602, %580 : vector<2x6xf32>
    %604 = arith.addf %599, %603 : vector<2x6xf32>
    %605 = vector.shape_cast %604 : vector<2x6xf32> to vector<2x1x6xf32>
    %606 = vector.shape_cast %495 : vector<6x6xf32> to vector<1x6x6xf32>
    %607 = vector.broadcast %605 : vector<2x1x6xf32> to vector<2x6x6xf32>
    %608 = vector.broadcast %606 : vector<1x6x6xf32> to vector<2x6x6xf32>
    %609 = arith.addf %607, %608 : vector<2x6x6xf32>
    %cst_323 = arith.constant dense<0xFF800000> : vector<2x6xf32>
    %610 = vector.multi_reduction <maximumf>, %609, %cst_323 [2] : vector<2x6x6xf32> to vector<2x6xf32>
    %611 = vector.shape_cast %610 : vector<2x6xf32> to vector<2x6x1xf32>
    %612 = vector.broadcast %611 : vector<2x6x1xf32> to vector<2x6x6xf32>
    %613 = arith.cmpf oeq, %609, %612 : vector<2x6x6xf32>
    %c6_i32_324 = arith.constant 6 : i32
    %614 = vector.broadcast %c6_i32_324 : i32 to vector<2x6x6xi32>
    %615 = arith.select %613, %503, %614 : vector<2x6x6xi1>, vector<2x6x6xi32>
    %cst_325 = arith.constant dense<2147483647> : vector<2x6xi32>
    %616 = vector.multi_reduction <minsi>, %615, %cst_325 [2] : vector<2x6x6xi32> to vector<2x6xi32>
    %617 = vector.extract_strided_slice %493 {offsets = [0, 5, 0], sizes = [2, 1, 6], strides = [1, 1, 1]} : vector<2x8x6xf32> to vector<2x1x6xf32>
    %618 = vector.shape_cast %617 : vector<2x1x6xf32> to vector<2x6xf32>
    %619 = arith.addf %610, %618 : vector<2x6xf32>
    %620 = vector.extract_strided_slice %498 {offsets = [5, 0, 0], sizes = [1, 2, 1], strides = [1, 1, 1]} : vector<8x2x1xf32> to vector<1x2x1xf32>
    %621 = vector.shape_cast %620 : vector<1x2x1xf32> to vector<2x1xf32>
    %622 = vector.broadcast %621 : vector<2x1xf32> to vector<2x6xf32>
    %623 = arith.mulf %622, %619 : vector<2x6xf32>
    %624 = vector.extract_strided_slice %500 {offsets = [5, 0, 0], sizes = [1, 2, 1], strides = [1, 1, 1]} : vector<8x2x1xf32> to vector<1x2x1xf32>
    %625 = vector.shape_cast %624 : vector<1x2x1xf32> to vector<2x1xf32>
    %626 = vector.broadcast %625 : vector<2x1xf32> to vector<2x6xf32>
    %627 = arith.mulf %626, %604 : vector<2x6xf32>
    %628 = arith.addf %623, %627 : vector<2x6xf32>
    %629 = vector.shape_cast %628 : vector<2x6xf32> to vector<2x1x6xf32>
    %630 = vector.shape_cast %495 : vector<6x6xf32> to vector<1x6x6xf32>
    %631 = vector.broadcast %629 : vector<2x1x6xf32> to vector<2x6x6xf32>
    %632 = vector.broadcast %630 : vector<1x6x6xf32> to vector<2x6x6xf32>
    %633 = arith.addf %631, %632 : vector<2x6x6xf32>
    %cst_326 = arith.constant dense<0xFF800000> : vector<2x6xf32>
    %634 = vector.multi_reduction <maximumf>, %633, %cst_326 [2] : vector<2x6x6xf32> to vector<2x6xf32>
    %635 = vector.shape_cast %634 : vector<2x6xf32> to vector<2x6x1xf32>
    %636 = vector.broadcast %635 : vector<2x6x1xf32> to vector<2x6x6xf32>
    %637 = arith.cmpf oeq, %633, %636 : vector<2x6x6xf32>
    %c6_i32_327 = arith.constant 6 : i32
    %638 = vector.broadcast %c6_i32_327 : i32 to vector<2x6x6xi32>
    %639 = arith.select %637, %503, %638 : vector<2x6x6xi1>, vector<2x6x6xi32>
    %cst_328 = arith.constant dense<2147483647> : vector<2x6xi32>
    %640 = vector.multi_reduction <minsi>, %639, %cst_328 [2] : vector<2x6x6xi32> to vector<2x6xi32>
    %641 = vector.extract_strided_slice %493 {offsets = [0, 6, 0], sizes = [2, 1, 6], strides = [1, 1, 1]} : vector<2x8x6xf32> to vector<2x1x6xf32>
    %642 = vector.shape_cast %641 : vector<2x1x6xf32> to vector<2x6xf32>
    %643 = arith.addf %634, %642 : vector<2x6xf32>
    %644 = vector.extract_strided_slice %498 {offsets = [6, 0, 0], sizes = [1, 2, 1], strides = [1, 1, 1]} : vector<8x2x1xf32> to vector<1x2x1xf32>
    %645 = vector.shape_cast %644 : vector<1x2x1xf32> to vector<2x1xf32>
    %646 = vector.broadcast %645 : vector<2x1xf32> to vector<2x6xf32>
    %647 = arith.mulf %646, %643 : vector<2x6xf32>
    %648 = vector.extract_strided_slice %500 {offsets = [6, 0, 0], sizes = [1, 2, 1], strides = [1, 1, 1]} : vector<8x2x1xf32> to vector<1x2x1xf32>
    %649 = vector.shape_cast %648 : vector<1x2x1xf32> to vector<2x1xf32>
    %650 = vector.broadcast %649 : vector<2x1xf32> to vector<2x6xf32>
    %651 = arith.mulf %650, %628 : vector<2x6xf32>
    %652 = arith.addf %647, %651 : vector<2x6xf32>
    %653 = vector.shape_cast %652 : vector<2x6xf32> to vector<2x1x6xf32>
    %654 = vector.shape_cast %495 : vector<6x6xf32> to vector<1x6x6xf32>
    %655 = vector.broadcast %653 : vector<2x1x6xf32> to vector<2x6x6xf32>
    %656 = vector.broadcast %654 : vector<1x6x6xf32> to vector<2x6x6xf32>
    %657 = arith.addf %655, %656 : vector<2x6x6xf32>
    %cst_329 = arith.constant dense<0xFF800000> : vector<2x6xf32>
    %658 = vector.multi_reduction <maximumf>, %657, %cst_329 [2] : vector<2x6x6xf32> to vector<2x6xf32>
    %659 = vector.shape_cast %658 : vector<2x6xf32> to vector<2x6x1xf32>
    %660 = vector.broadcast %659 : vector<2x6x1xf32> to vector<2x6x6xf32>
    %661 = arith.cmpf oeq, %657, %660 : vector<2x6x6xf32>
    %c6_i32_330 = arith.constant 6 : i32
    %662 = vector.broadcast %c6_i32_330 : i32 to vector<2x6x6xi32>
    %663 = arith.select %661, %503, %662 : vector<2x6x6xi1>, vector<2x6x6xi32>
    %cst_331 = arith.constant dense<2147483647> : vector<2x6xi32>
    %664 = vector.multi_reduction <minsi>, %663, %cst_331 [2] : vector<2x6x6xi32> to vector<2x6xi32>
    %665 = vector.extract_strided_slice %493 {offsets = [0, 7, 0], sizes = [2, 1, 6], strides = [1, 1, 1]} : vector<2x8x6xf32> to vector<2x1x6xf32>
    %666 = vector.shape_cast %665 : vector<2x1x6xf32> to vector<2x6xf32>
    %667 = arith.addf %658, %666 : vector<2x6xf32>
    %668 = vector.extract_strided_slice %498 {offsets = [7, 0, 0], sizes = [1, 2, 1], strides = [1, 1, 1]} : vector<8x2x1xf32> to vector<1x2x1xf32>
    %669 = vector.shape_cast %668 : vector<1x2x1xf32> to vector<2x1xf32>
    %670 = vector.broadcast %669 : vector<2x1xf32> to vector<2x6xf32>
    %671 = arith.mulf %670, %667 : vector<2x6xf32>
    %672 = vector.extract_strided_slice %500 {offsets = [7, 0, 0], sizes = [1, 2, 1], strides = [1, 1, 1]} : vector<8x2x1xf32> to vector<1x2x1xf32>
    %673 = vector.shape_cast %672 : vector<1x2x1xf32> to vector<2x1xf32>
    %674 = vector.broadcast %673 : vector<2x1xf32> to vector<2x6xf32>
    %675 = arith.mulf %674, %652 : vector<2x6xf32>
    %676 = arith.addf %671, %675 : vector<2x6xf32>
    %677 = vector.broadcast %497 : vector<1x6xf32> to vector<2x6xf32>
    %678 = arith.addf %676, %677 : vector<2x6xf32>
    %cst_332 = arith.constant dense<0xFF800000> : vector<2xf32>
    %679 = vector.multi_reduction <maximumf>, %678, %cst_332 [1] : vector<2x6xf32> to vector<2xf32>
    %680 = vector.shape_cast %679 : vector<2xf32> to vector<2x1xf32>
    %c0_333 = arith.constant 0 : index
    %c0_334 = arith.constant 0 : index
    %681 = vector.load %arg12[%c0_333, %c0_334] : memref<2x1xf32, #tpu.memory_space<vmem>>, vector<2x1xf32>
    tpu.vector_store %arg12[%c0_333, %c0_334], %680 {strides = array<i32>} : memref<2x1xf32, #tpu.memory_space<vmem>>, vector<2x1xf32>,
    %682 = vector.broadcast %680 : vector<2x1xf32> to vector<2x6xf32>
    %683 = arith.cmpf oeq, %678, %682 : vector<2x6xf32>
    %c6_i32_335 = arith.constant 6 : i32
    %684 = vector.broadcast %c6_i32_335 : i32 to vector<2x6xi32>
    %685 = arith.select %683, %504, %684 : vector<2x6xi1>, vector<2x6xi32>
    %cst_336 = arith.constant dense<2147483647> : vector<2xi32>
    %686 = vector.multi_reduction <minsi>, %685, %cst_336 [1] : vector<2x6xi32> to vector<2xi32>
    %687 = vector.shape_cast %686 : vector<2xi32> to vector<2x1xi32>
    %688 = tpu.iota {dimensions = array<i32: 1>} : vector<2x8xi32>
    %c-1_i32 = arith.constant -1 : i32
    %689 = vector.broadcast %c-1_i32 : i32 to vector<2x8xi32>
    %c8_i32 = arith.constant 8 : i32
    %690 = vector.broadcast %c8_i32 : i32 to vector<2x1xi32>
    %691 = arith.cmpi eq, %502, %690 : vector<2x1xi32>
    %c8_i32_337 = arith.constant 8 : i32
    %692 = vector.broadcast %c8_i32_337 : i32 to vector<2x1xi32>
    %693 = arith.cmpi sgt, %502, %692 : vector<2x1xi32>
    %694 = arith.select %693, %687, %687 : vector<2x1xi1>, vector<2x1xi32>
    %695 = arith.select %691, %687, %694 : vector<2x1xi1>, vector<2x1xi32>
    %c7_i32 = arith.constant 7 : i32
    %696 = vector.broadcast %c7_i32 : i32 to vector<2x1xi32>
    %697 = arith.cmpi sgt, %502, %696 : vector<2x1xi32>
    %c-1_i32_338 = arith.constant -1 : i32
    %698 = vector.broadcast %c-1_i32_338 : i32 to vector<2x1xi32>
    %699 = arith.select %697, %695, %698 : vector<2x1xi1>, vector<2x1xi32>
    %c7_i32_339 = arith.constant 7 : i32
    %700 = vector.broadcast %c7_i32_339 : i32 to vector<2x8xi32>
    %701 = arith.cmpi eq, %688, %700 : vector<2x8xi32>
    %702 = vector.shape_cast %699 : vector<2x1xi32> to vector<2x1xi32>
    %703 = vector.broadcast %702 : vector<2x1xi32> to vector<2x8xi32>
    %704 = arith.select %701, %703, %689 : vector<2x8xi1>, vector<2x8xi32>
    %705 = vector.broadcast %695 : vector<2x1xi32> to vector<2x6xi32>
    %706 = arith.cmpi eq, %504, %705 : vector<2x6xi32>
    %c0_i32 = arith.constant 0 : i32
    %707 = vector.broadcast %c0_i32 : i32 to vector<2x6xi32>
    %708 = arith.select %706, %664, %707 : vector<2x6xi1>, vector<2x6xi32>
    %cst_340 = arith.constant dense<0> : vector<2xi32>
    %709 = vector.multi_reduction <add>, %708, %cst_340 [1] : vector<2x6xi32> to vector<2xi32>
    %710 = vector.shape_cast %709 : vector<2xi32> to vector<2x1xi32>
    %c7_i32_341 = arith.constant 7 : i32
    %711 = vector.broadcast %c7_i32_341 : i32 to vector<2x1xi32>
    %712 = arith.cmpi eq, %502, %711 : vector<2x1xi32>
    %c7_i32_342 = arith.constant 7 : i32
    %713 = vector.broadcast %c7_i32_342 : i32 to vector<2x1xi32>
    %714 = arith.cmpi sgt, %502, %713 : vector<2x1xi32>
    %715 = arith.select %714, %710, %695 : vector<2x1xi1>, vector<2x1xi32>
    %716 = arith.select %712, %687, %715 : vector<2x1xi1>, vector<2x1xi32>
    %c6_i32_343 = arith.constant 6 : i32
    %717 = vector.broadcast %c6_i32_343 : i32 to vector<2x1xi32>
    %718 = arith.cmpi sgt, %502, %717 : vector<2x1xi32>
    %c-1_i32_344 = arith.constant -1 : i32
    %719 = vector.broadcast %c-1_i32_344 : i32 to vector<2x1xi32>
    %720 = arith.select %718, %716, %719 : vector<2x1xi1>, vector<2x1xi32>
    %c6_i32_345 = arith.constant 6 : i32
    %721 = vector.broadcast %c6_i32_345 : i32 to vector<2x8xi32>
    %722 = arith.cmpi eq, %688, %721 : vector<2x8xi32>
    %723 = vector.shape_cast %720 : vector<2x1xi32> to vector<2x1xi32>
    %724 = vector.broadcast %723 : vector<2x1xi32> to vector<2x8xi32>
    %725 = arith.select %722, %724, %704 : vector<2x8xi1>, vector<2x8xi32>
    %726 = vector.broadcast %716 : vector<2x1xi32> to vector<2x6xi32>
    %727 = arith.cmpi eq, %504, %726 : vector<2x6xi32>
    %c0_i32_346 = arith.constant 0 : i32
    %728 = vector.broadcast %c0_i32_346 : i32 to vector<2x6xi32>
    %729 = arith.select %727, %640, %728 : vector<2x6xi1>, vector<2x6xi32>
    %cst_347 = arith.constant dense<0> : vector<2xi32>
    %730 = vector.multi_reduction <add>, %729, %cst_347 [1] : vector<2x6xi32> to vector<2xi32>
    %731 = vector.shape_cast %730 : vector<2xi32> to vector<2x1xi32>
    %c6_i32_348 = arith.constant 6 : i32
    %732 = vector.broadcast %c6_i32_348 : i32 to vector<2x1xi32>
    %733 = arith.cmpi eq, %502, %732 : vector<2x1xi32>
    %c6_i32_349 = arith.constant 6 : i32
    %734 = vector.broadcast %c6_i32_349 : i32 to vector<2x1xi32>
    %735 = arith.cmpi sgt, %502, %734 : vector<2x1xi32>
    %736 = arith.select %735, %731, %716 : vector<2x1xi1>, vector<2x1xi32>
    %737 = arith.select %733, %687, %736 : vector<2x1xi1>, vector<2x1xi32>
    %c5_i32 = arith.constant 5 : i32
    %738 = vector.broadcast %c5_i32 : i32 to vector<2x1xi32>
    %739 = arith.cmpi sgt, %502, %738 : vector<2x1xi32>
    %c-1_i32_350 = arith.constant -1 : i32
    %740 = vector.broadcast %c-1_i32_350 : i32 to vector<2x1xi32>
    %741 = arith.select %739, %737, %740 : vector<2x1xi1>, vector<2x1xi32>
    %c5_i32_351 = arith.constant 5 : i32
    %742 = vector.broadcast %c5_i32_351 : i32 to vector<2x8xi32>
    %743 = arith.cmpi eq, %688, %742 : vector<2x8xi32>
    %744 = vector.shape_cast %741 : vector<2x1xi32> to vector<2x1xi32>
    %745 = vector.broadcast %744 : vector<2x1xi32> to vector<2x8xi32>
    %746 = arith.select %743, %745, %725 : vector<2x8xi1>, vector<2x8xi32>
    %747 = vector.broadcast %737 : vector<2x1xi32> to vector<2x6xi32>
    %748 = arith.cmpi eq, %504, %747 : vector<2x6xi32>
    %c0_i32_352 = arith.constant 0 : i32
    %749 = vector.broadcast %c0_i32_352 : i32 to vector<2x6xi32>
    %750 = arith.select %748, %616, %749 : vector<2x6xi1>, vector<2x6xi32>
    %cst_353 = arith.constant dense<0> : vector<2xi32>
    %751 = vector.multi_reduction <add>, %750, %cst_353 [1] : vector<2x6xi32> to vector<2xi32>
    %752 = vector.shape_cast %751 : vector<2xi32> to vector<2x1xi32>
    %c5_i32_354 = arith.constant 5 : i32
    %753 = vector.broadcast %c5_i32_354 : i32 to vector<2x1xi32>
    %754 = arith.cmpi eq, %502, %753 : vector<2x1xi32>
    %c5_i32_355 = arith.constant 5 : i32
    %755 = vector.broadcast %c5_i32_355 : i32 to vector<2x1xi32>
    %756 = arith.cmpi sgt, %502, %755 : vector<2x1xi32>
    %757 = arith.select %756, %752, %737 : vector<2x1xi1>, vector<2x1xi32>
    %758 = arith.select %754, %687, %757 : vector<2x1xi1>, vector<2x1xi32>
    %c4_i32 = arith.constant 4 : i32
    %759 = vector.broadcast %c4_i32 : i32 to vector<2x1xi32>
    %760 = arith.cmpi sgt, %502, %759 : vector<2x1xi32>
    %c-1_i32_356 = arith.constant -1 : i32
    %761 = vector.broadcast %c-1_i32_356 : i32 to vector<2x1xi32>
    %762 = arith.select %760, %758, %761 : vector<2x1xi1>, vector<2x1xi32>
    %c4_i32_357 = arith.constant 4 : i32
    %763 = vector.broadcast %c4_i32_357 : i32 to vector<2x8xi32>
    %764 = arith.cmpi eq, %688, %763 : vector<2x8xi32>
    %765 = vector.shape_cast %762 : vector<2x1xi32> to vector<2x1xi32>
    %766 = vector.broadcast %765 : vector<2x1xi32> to vector<2x8xi32>
    %767 = arith.select %764, %766, %746 : vector<2x8xi1>, vector<2x8xi32>
    %768 = vector.broadcast %758 : vector<2x1xi32> to vector<2x6xi32>
    %769 = arith.cmpi eq, %504, %768 : vector<2x6xi32>
    %c0_i32_358 = arith.constant 0 : i32
    %770 = vector.broadcast %c0_i32_358 : i32 to vector<2x6xi32>
    %771 = arith.select %769, %592, %770 : vector<2x6xi1>, vector<2x6xi32>
    %cst_359 = arith.constant dense<0> : vector<2xi32>
    %772 = vector.multi_reduction <add>, %771, %cst_359 [1] : vector<2x6xi32> to vector<2xi32>
    %773 = vector.shape_cast %772 : vector<2xi32> to vector<2x1xi32>
    %c4_i32_360 = arith.constant 4 : i32
    %774 = vector.broadcast %c4_i32_360 : i32 to vector<2x1xi32>
    %775 = arith.cmpi eq, %502, %774 : vector<2x1xi32>
    %c4_i32_361 = arith.constant 4 : i32
    %776 = vector.broadcast %c4_i32_361 : i32 to vector<2x1xi32>
    %777 = arith.cmpi sgt, %502, %776 : vector<2x1xi32>
    %778 = arith.select %777, %773, %758 : vector<2x1xi1>, vector<2x1xi32>
    %779 = arith.select %775, %687, %778 : vector<2x1xi1>, vector<2x1xi32>
    %c3_i32 = arith.constant 3 : i32
    %780 = vector.broadcast %c3_i32 : i32 to vector<2x1xi32>
    %781 = arith.cmpi sgt, %502, %780 : vector<2x1xi32>
    %c-1_i32_362 = arith.constant -1 : i32
    %782 = vector.broadcast %c-1_i32_362 : i32 to vector<2x1xi32>
    %783 = arith.select %781, %779, %782 : vector<2x1xi1>, vector<2x1xi32>
    %c3_i32_363 = arith.constant 3 : i32
    %784 = vector.broadcast %c3_i32_363 : i32 to vector<2x8xi32>
    %785 = arith.cmpi eq, %688, %784 : vector<2x8xi32>
    %786 = vector.shape_cast %783 : vector<2x1xi32> to vector<2x1xi32>
    %787 = vector.broadcast %786 : vector<2x1xi32> to vector<2x8xi32>
    %788 = arith.select %785, %787, %767 : vector<2x8xi1>, vector<2x8xi32>
    %789 = vector.broadcast %779 : vector<2x1xi32> to vector<2x6xi32>
    %790 = arith.cmpi eq, %504, %789 : vector<2x6xi32>
    %c0_i32_364 = arith.constant 0 : i32
    %791 = vector.broadcast %c0_i32_364 : i32 to vector<2x6xi32>
    %792 = arith.select %790, %568, %791 : vector<2x6xi1>, vector<2x6xi32>
    %cst_365 = arith.constant dense<0> : vector<2xi32>
    %793 = vector.multi_reduction <add>, %792, %cst_365 [1] : vector<2x6xi32> to vector<2xi32>
    %794 = vector.shape_cast %793 : vector<2xi32> to vector<2x1xi32>
    %c3_i32_366 = arith.constant 3 : i32
    %795 = vector.broadcast %c3_i32_366 : i32 to vector<2x1xi32>
    %796 = arith.cmpi eq, %502, %795 : vector<2x1xi32>
    %c3_i32_367 = arith.constant 3 : i32
    %797 = vector.broadcast %c3_i32_367 : i32 to vector<2x1xi32>
    %798 = arith.cmpi sgt, %502, %797 : vector<2x1xi32>
    %799 = arith.select %798, %794, %779 : vector<2x1xi1>, vector<2x1xi32>
    %800 = arith.select %796, %687, %799 : vector<2x1xi1>, vector<2x1xi32>
    %c2_i32 = arith.constant 2 : i32
    %801 = vector.broadcast %c2_i32 : i32 to vector<2x1xi32>
    %802 = arith.cmpi sgt, %502, %801 : vector<2x1xi32>
    %c-1_i32_368 = arith.constant -1 : i32
    %803 = vector.broadcast %c-1_i32_368 : i32 to vector<2x1xi32>
    %804 = arith.select %802, %800, %803 : vector<2x1xi1>, vector<2x1xi32>
    %c2_i32_369 = arith.constant 2 : i32
    %805 = vector.broadcast %c2_i32_369 : i32 to vector<2x8xi32>
    %806 = arith.cmpi eq, %688, %805 : vector<2x8xi32>
    %807 = vector.shape_cast %804 : vector<2x1xi32> to vector<2x1xi32>
    %808 = vector.broadcast %807 : vector<2x1xi32> to vector<2x8xi32>
    %809 = arith.select %806, %808, %788 : vector<2x8xi1>, vector<2x8xi32>
    %810 = vector.broadcast %800 : vector<2x1xi32> to vector<2x6xi32>
    %811 = arith.cmpi eq, %504, %810 : vector<2x6xi32>
    %c0_i32_370 = arith.constant 0 : i32
    %812 = vector.broadcast %c0_i32_370 : i32 to vector<2x6xi32>
    %813 = arith.select %811, %544, %812 : vector<2x6xi1>, vector<2x6xi32>
    %cst_371 = arith.constant dense<0> : vector<2xi32>
    %814 = vector.multi_reduction <add>, %813, %cst_371 [1] : vector<2x6xi32> to vector<2xi32>
    %815 = vector.shape_cast %814 : vector<2xi32> to vector<2x1xi32>
    %c2_i32_372 = arith.constant 2 : i32
    %816 = vector.broadcast %c2_i32_372 : i32 to vector<2x1xi32>
    %817 = arith.cmpi eq, %502, %816 : vector<2x1xi32>
    %c2_i32_373 = arith.constant 2 : i32
    %818 = vector.broadcast %c2_i32_373 : i32 to vector<2x1xi32>
    %819 = arith.cmpi sgt, %502, %818 : vector<2x1xi32>
    %820 = arith.select %819, %815, %800 : vector<2x1xi1>, vector<2x1xi32>
    %821 = arith.select %817, %687, %820 : vector<2x1xi1>, vector<2x1xi32>
    %c1_i32 = arith.constant 1 : i32
    %822 = vector.broadcast %c1_i32 : i32 to vector<2x1xi32>
    %823 = arith.cmpi sgt, %502, %822 : vector<2x1xi32>
    %c-1_i32_374 = arith.constant -1 : i32
    %824 = vector.broadcast %c-1_i32_374 : i32 to vector<2x1xi32>
    %825 = arith.select %823, %821, %824 : vector<2x1xi1>, vector<2x1xi32>
    %c1_i32_375 = arith.constant 1 : i32
    %826 = vector.broadcast %c1_i32_375 : i32 to vector<2x8xi32>
    %827 = arith.cmpi eq, %688, %826 : vector<2x8xi32>
    %828 = vector.shape_cast %825 : vector<2x1xi32> to vector<2x1xi32>
    %829 = vector.broadcast %828 : vector<2x1xi32> to vector<2x8xi32>
    %830 = arith.select %827, %829, %809 : vector<2x8xi1>, vector<2x8xi32>
    %831 = vector.broadcast %821 : vector<2x1xi32> to vector<2x6xi32>
    %832 = arith.cmpi eq, %504, %831 : vector<2x6xi32>
    %c0_i32_376 = arith.constant 0 : i32
    %833 = vector.broadcast %c0_i32_376 : i32 to vector<2x6xi32>
    %834 = arith.select %832, %520, %833 : vector<2x6xi1>, vector<2x6xi32>
    %cst_377 = arith.constant dense<0> : vector<2xi32>
    %835 = vector.multi_reduction <add>, %834, %cst_377 [1] : vector<2x6xi32> to vector<2xi32>
    %836 = vector.shape_cast %835 : vector<2xi32> to vector<2x1xi32>
    %c1_i32_378 = arith.constant 1 : i32
    %837 = vector.broadcast %c1_i32_378 : i32 to vector<2x1xi32>
    %838 = arith.cmpi eq, %502, %837 : vector<2x1xi32>
    %c1_i32_379 = arith.constant 1 : i32
    %839 = vector.broadcast %c1_i32_379 : i32 to vector<2x1xi32>
    %840 = arith.cmpi sgt, %502, %839 : vector<2x1xi32>
    %841 = arith.select %840, %836, %821 : vector<2x1xi1>, vector<2x1xi32>
    %842 = arith.select %838, %687, %841 : vector<2x1xi1>, vector<2x1xi32>
    %c0_i32_380 = arith.constant 0 : i32
    %843 = vector.broadcast %c0_i32_380 : i32 to vector<2x1xi32>
    %844 = arith.cmpi sgt, %502, %843 : vector<2x1xi32>
    %c-1_i32_381 = arith.constant -1 : i32
    %845 = vector.broadcast %c-1_i32_381 : i32 to vector<2x1xi32>
    %846 = arith.select %844, %842, %845 : vector<2x1xi1>, vector<2x1xi32>
    %c0_i32_382 = arith.constant 0 : i32
    %847 = vector.broadcast %c0_i32_382 : i32 to vector<2x8xi32>
    %848 = arith.cmpi eq, %688, %847 : vector<2x8xi32>
    %849 = vector.shape_cast %846 : vector<2x1xi32> to vector<2x1xi32>
    %850 = vector.broadcast %849 : vector<2x1xi32> to vector<2x8xi32>
    %851 = arith.select %848, %850, %830 : vector<2x8xi1>, vector<2x8xi32>
    %c0_383 = arith.constant 0 : index
    %c0_384 = arith.constant 0 : index
    %852 = vector.load %arg13[%c0_383, %c0_384] : memref<2x8xi32, #tpu.memory_space<vmem>>, vector<2x8xi32>
    tpu.vector_store %arg13[%c0_383, %c0_384], %851 {strides = array<i32>} : memref<2x8xi32, #tpu.memory_space<vmem>>, vector<2x8xi32>,
    return
  }
}

</mosaic_0001>

<llo_original>
// kernel: transformer_crf_forward.1
$region0: #{transformer_crf_forward.1}
  #allocation0 [shape = 'u32[]', space=smem, size = 0x4, offset = 0x4, fixed_abs, tag = 'smem constant byte address 0x4 - core index']
  #allocation1 [shape = 'u32[144,128]{1,0:T(1,128)}', space=vmem, size = 0x12000, scoped, tag = 'internal scratch']
  %s0 = inlined_call_operand.vmem [shape: f32[2,8,32], index: 0, kind: input, shape index: {}]
  %s1 = inlined_call_operand.vmem [shape: f32[8,2,1], index: 1, kind: input, shape index: {}]
  %s2 = inlined_call_operand.vmem [shape: f32[24,32,8], index: 2, kind: input, shape index: {}]
  %s3 = inlined_call_operand.vmem [shape: f32[24,1,8], index: 3, kind: input, shape index: {}]
  %s4 = inlined_call_operand.vmem [shape: f32[8,8,32], index: 4, kind: input, shape index: {}]
  %s5 = inlined_call_operand.vmem [shape: f32[12,1,32], index: 5, kind: input, shape index: {}]
  %s6 = inlined_call_operand.vmem [shape: f32[2,32,64], index: 6, kind: input, shape index: {}]
  %s7 = inlined_call_operand.vmem [shape: f32[2,1,64], index: 7, kind: input, shape index: {}]
  %s8 = inlined_call_operand.vmem [shape: f32[2,64,32], index: 8, kind: input, shape index: {}]
  %s9 = inlined_call_operand.vmem [shape: f32[32,6], index: 9, kind: input, shape index: {}]
  %s10 = inlined_call_operand.vmem [shape: f32[1,6], index: 10, kind: input, shape index: {}]
  %s11 = inlined_call_operand.vmem [shape: f32[8,6], index: 11, kind: input, shape index: {}]
  %s12 = inlined_call_operand.vmem [shape: f32[2,1], index: 12, kind: output, shape index: {0}]
  %s13 = inlined_call_operand.hbm [shape: s32[2,8], index: 13, kind: output, shape index: {1}]
  %14 = xla_tuple %s12, %s13
  %s15 = sld [smem:[#allocation0]]
  $region66: #{transformer_crf_forward.1} parent=0
    _
  %s17 = ssub.s32 1, %s15
  %s18 = scalar_select 0, %s17, %s15
  $region1: #{transformer_crf_forward.1} parent=0
    #allocation2 [shape = 'u8[1024]{0}', space=vmem, size = 0x400, scoped, tag = 'output window, operand 1, single buffered']
    #allocation3 [shape = 's32[1]{0}', space=sflag, size = 0x4, scoped, tag = 'scoped memory for transformer_crf_forward.1']
    %19 = vsyncpa [#allocation3], 0
    // Predicated region
    $region2: #{transformer_crf_forward.1} parent=1 // pred_check
      _
    $region3: #{transformer_crf_forward.1} parent=1 // pred_check_branch
      %21 = sbr.rel (0) target = $region5
    $region4: #{transformer_crf_forward.1} parent=1 // pred_region
      _
    $region5: #{transformer_crf_forward.1} parent=1 // pred_fallthru
      _
    // Predicated region
    $region6: #{transformer_crf_forward.1} parent=1 // pred_check
      _
    $region7: #{transformer_crf_forward.1} parent=1 // pred_check_branch
      %23 = sbr.rel (0) target = $region9
    $region8: #{transformer_crf_forward.1} parent=1 // pred_region
      _
    $region9: #{transformer_crf_forward.1} parent=1 // pred_fallthru
      _
    // Predicated region
    $region10: #{transformer_crf_forward.1} parent=1 // pred_check
      _
    $region11: #{transformer_crf_forward.1} parent=1 // pred_check_branch
      %25 = sbr.rel (0) target = $region13
    $region12: #{transformer_crf_forward.1} parent=1 // pred_region
      _
    $region13: #{transformer_crf_forward.1} parent=1 // pred_fallthru
      _
    // Predicated region
    $region14: #{transformer_crf_forward.1} parent=1 // pred_check
      _
    $region15: #{transformer_crf_forward.1} parent=1 // pred_check_branch
      %27 = sbr.rel (0) target = $region17
    $region16: #{transformer_crf_forward.1} parent=1 // pred_region
      _
    $region17: #{transformer_crf_forward.1} parent=1 // pred_fallthru
      _
    // Predicated region
    $region18: #{transformer_crf_forward.1} parent=1 // pred_check
      _
    $region19: #{transformer_crf_forward.1} parent=1 // pred_check_branch
      %29 = sbr.rel (0) target = $region21
    $region20: #{transformer_crf_forward.1} parent=1 // pred_region
      _
    $region21: #{transformer_crf_forward.1} parent=1 // pred_fallthru
      _
    // Predicated region
    $region22: #{transformer_crf_forward.1} parent=1 // pred_check
      _
    $region23: #{transformer_crf_forward.1} parent=1 // pred_check_branch
      %31 = sbr.rel (0) target = $region25
    $region24: #{transformer_crf_forward.1} parent=1 // pred_region
      _
    $region25: #{transformer_crf_forward.1} parent=1 // pred_fallthru
      _
    // Predicated region
    $region26: #{transformer_crf_forward.1} parent=1 // pred_check
      _
    $region27: #{transformer_crf_forward.1} parent=1 // pred_check_branch
      %33 = sbr.rel (0) target = $region29
    $region28: #{transformer_crf_forward.1} parent=1 // pred_region
      _
    $region29: #{transformer_crf_forward.1} parent=1 // pred_fallthru
      _
    // Predicated region
    $region30: #{transformer_crf_forward.1} parent=1 // pred_check
      _
    $region31: #{transformer_crf_forward.1} parent=1 // pred_check_branch
      %35 = sbr.rel (0) target = $region33
    $region32: #{transformer_crf_forward.1} parent=1 // pred_region
      _
    $region33: #{transformer_crf_forward.1} parent=1 // pred_fallthru
      _
    // Predicated region
    $region34: #{transformer_crf_forward.1} parent=1 // pred_check
      _
    $region35: #{transformer_crf_forward.1} parent=1 // pred_check_branch
      %37 = sbr.rel (0) target = $region37
    $region36: #{transformer_crf_forward.1} parent=1 // pred_region
      _
    $region37: #{transformer_crf_forward.1} parent=1 // pred_fallthru
      _
    // Predicated region
    $region38: #{transformer_crf_forward.1} parent=1 // pred_check
      _
    $region39: #{transformer_crf_forward.1} parent=1 // pred_check_branch
      %39 = sbr.rel (0) target = $region41
    $region40: #{transformer_crf_forward.1} parent=1 // pred_region
      _
    $region41: #{transformer_crf_forward.1} parent=1 // pred_fallthru
      _
    // Predicated region
    $region42: #{transformer_crf_forward.1} parent=1 // pred_check
      _
    $region43: #{transformer_crf_forward.1} parent=1 // pred_check_branch
      %41 = sbr.rel (0) target = $region45
    $region44: #{transformer_crf_forward.1} parent=1 // pred_region
      _
    $region45: #{transformer_crf_forward.1} parent=1 // pred_fallthru
      _
    // Predicated region
    $region46: #{transformer_crf_forward.1} parent=1 // pred_check
      _
    $region47: #{transformer_crf_forward.1} parent=1 // pred_check_branch
      %43 = sbr.rel (0) target = $region49
    $region48: #{transformer_crf_forward.1} parent=1 // pred_region
      _
    $region49: #{transformer_crf_forward.1} parent=1 // pred_fallthru
      _
    %v44 = vld [vmem:[%s0] sm:$0xff]
    %v45 = vld [vmem:[%s0 + $0x8] sm:$0xff]
    %v46 = vld [vmem:[%s2] sm:$0xff]
    %v47 = vld [vmem:[%s2 + $0x8] sm:$0xff]
    %v48 = vld [vmem:[%s2 + $0x10] sm:$0xff]
    %v49 = vld [vmem:[%s2 + $0x18] sm:$0xff]
    %v50 = vld [vmem:[%s3] sm:$0x1]
    %v52 = vlaneseq
    %v53 = vshrl.u32 %v52, 7
    %v54 = vsub.s32 0, %v53
    %v55 = vrot.slane %v50, %v54
    %vm57 = vcmask 261120
    %v59 = vsel %vm57, %v44, 0
    %v62 = vsel %vm57, %v45, 0
    %64 = vmatprep.subr.mxu0 0.0
    %65 = vmatpush1.msra.mxu0 0.0
    %66 = vmatprep.subr.mxu0 0.0
    %67 = vmatpush1.msra.mxu0 0.0
    %68 = vmatprep.subr.mxu0 0.0
    %69 = vmatpush1.msra.mxu0 0.0
    %70 = vmatprep.subr.mxu0 0.0
    %71 = vmatpush1.msra.mxu0 0.0
    %72 = vmatprep.subr.mxu0 0.0
    %73 = vmatpush1.msra.mxu0 0.0
    %74 = vmatprep.subr.mxu0 0.0
    %75 = vmatpush1.msra.mxu0 0.0
    %76 = vmatprep.subr.mxu0 0.0
    %77 = vmatpush1.msra.mxu0 0.0
    %78 = vmatprep.subr.mxu0 0.0
    %79 = vmatpush1.msra.mxu0 0.0
    %80 = vmatprep.subr.mxu0 0.0
    %81 = vmatpush1.msra.mxu0 0.0
    %82 = vmatprep.subr.mxu0 0.0
    %83 = vmatpush1.msra.mxu0 0.0
    %84 = vmatprep.subr.mxu0 0.0
    %85 = vmatpush1.msra.mxu0 0.0
    %86 = vmatprep.subr.mxu0 0.0
    %87 = vmatpush1.msra.mxu0 0.0
    %88 = vmatprep.subr.mxu0 0.0
    %89 = vmatpush1.msra.mxu0 %v49
    %90 = vmatprep.subr.mxu0 0.0
    %91 = vmatpush1.msra.mxu0 %v48
    %92 = vmatprep.subr.mxu0 0.0
    %93 = vmatpush1.msra.mxu0 %v47
    %94 = vmatprep.subr.mxu0 0.0
    %95 = vmatpush1.msra.mxu0 %v46
    %96 = vmatprep.subr.mxu0 0.0
    %97 = vmatpush2.msra.mxu0 0.0
    %98 = vmatprep.subr.mxu0 0.0
    %99 = vmatpush2.msra.mxu0 0.0
    %100 = vmatprep.subr.mxu0 0.0
    %101 = vmatpush2.msra.mxu0 0.0
    %102 = vmatprep.subr.mxu0 0.0
    %103 = vmatpush2.msra.mxu0 0.0
    %104 = vmatprep.subr.mxu0 0.0
    %105 = vmatpush2.msra.mxu0 0.0
    %106 = vmatprep.subr.mxu0 0.0
    %107 = vmatpush2.msra.mxu0 0.0
    %108 = vmatprep.subr.mxu0 0.0
    %109 = vmatpush2.msra.mxu0 0.0
    %110 = vmatprep.subr.mxu0 0.0
    %111 = vmatpush2.msra.mxu0 0.0
    %112 = vmatprep.subr.mxu0 0.0
    %113 = vmatpush2.msra.mxu0 0.0
    %114 = vmatprep.subr.mxu0 0.0
    %115 = vmatpush2.msra.mxu0 0.0
    %116 = vmatprep.subr.mxu0 0.0
    %117 = vmatpush2.msra.mxu0 0.0
    %118 = vmatprep.subr.mxu0 0.0
    %119 = vmatpush2.msra.mxu0 0.0
    %120 = vmatprep.subr.mxu0 0.0
    %121 = vmatpush2.msra.mxu0 0.0
    %122 = vmatprep.subr.mxu0 0.0
    %123 = vmatpush2.msra.mxu0 0.0
    %124 = vmatprep.subr.mxu0 0.0
    %125 = vmatpush2.msra.mxu0 0.0
    %126 = vmatprep.subr.mxu0 0.0
    %127 = vmatpush2.msra.mxu0 0.0
    %128 = vmatprep.mubr.f32.mxu0 0.0
    %129 = vmatmul.mubr.f32.gmra.mxu0 %v59
    %v130 = vpop.f32.mrf.mxu0
    %v131 = vadd.f32 %v55, %v130
    %v132 = vpop.f32.mrf.mxu0
    %133 = vmatprep.mubr.f32.mxu0 0.0
    %134 = vmatmul.mubr.f32.gmra.mxu0 %v62
    %v135 = vpop.f32.mrf.mxu0
    %v136 = vadd.f32 %v55, %v135
    %v137 = vpop.f32.mrf.mxu0
    %138 = vdwg.mxu0
    %v139 = vmul.f32 %v131, 0.35355338
    %v140 = vmul.f32 %v136, 0.35355338
    %s141 = scalar_lea.vmem %s2, 128
    %v142 = vld [vmem:[%s141] sm:$0xff]
    %v143 = vld [vmem:[%s141 + $0x8] sm:$0xff]
    %v144 = vld [vmem:[%s141 + $0x10] sm:$0xff]
    %v145 = vld [vmem:[%s141 + $0x18] sm:$0xff]
    %s146 = scalar_lea.vmem %s3, 4
    %v147 = vld [vmem:[%s146] sm:$0x1]
    %v149 = vlaneseq
    %v150 = vshrl.u32 %v149, 7
    %v151 = vsub.s32 0, %v150
    %v152 = vrot.slane %v147, %v151
    %154 = vmatprep.subr.mxu0 0.0
    %155 = vmatpush1.msra.mxu0 0.0
    %156 = vmatprep.subr.mxu0 0.0
    %157 = vmatpush1.msra.mxu0 0.0
    %158 = vmatprep.subr.mxu0 0.0
    %159 = vmatpush1.msra.mxu0 0.0
    %160 = vmatprep.subr.mxu0 0.0
    %161 = vmatpush1.msra.mxu0 0.0
    %162 = vmatprep.subr.mxu0 0.0
    %163 = vmatpush1.msra.mxu0 0.0
    %164 = vmatprep.subr.mxu0 0.0
    %165 = vmatpush1.msra.mxu0 0.0
    %166 = vmatprep.subr.mxu0 0.0
    %167 = vmatpush1.msra.mxu0 0.0
    %168 = vmatprep.subr.mxu0 0.0
    %169 = vmatpush1.msra.mxu0 0.0
    %170 = vmatprep.subr.mxu0 0.0
    %171 = vmatpush1.msra.mxu0 0.0
    %172 = vmatprep.subr.mxu0 0.0
    %173 = vmatpush1.msra.mxu0 0.0
    %174 = vmatprep.subr.mxu0 0.0
    %175 = vmatpush1.msra.mxu0 0.0
    %176 = vmatprep.subr.mxu0 0.0
    %177 = vmatpush1.msra.mxu0 0.0
    %178 = vmatprep.subr.mxu0 0.0
    %179 = vmatpush1.msra.mxu0 %v145
    %180 = vmatprep.subr.mxu0 0.0
    %181 = vmatpush1.msra.mxu0 %v144
    %182 = vmatprep.subr.mxu0 0.0
    %183 = vmatpush1.msra.mxu0 %v143
    %184 = vmatprep.subr.mxu0 0.0
    %185 = vmatpush1.msra.mxu0 %v142
    %186 = vmatprep.subr.mxu0 0.0
    %187 = vmatpush2.msra.mxu0 0.0
    %188 = vmatprep.subr.mxu0 0.0
    %189 = vmatpush2.msra.mxu0 0.0
    %190 = vmatprep.subr.mxu0 0.0
    %191 = vmatpush2.msra.mxu0 0.0
    %192 = vmatprep.subr.mxu0 0.0
    %193 = vmatpush2.msra.mxu0 0.0
    %194 = vmatprep.subr.mxu0 0.0
    %195 = vmatpush2.msra.mxu0 0.0
    %196 = vmatprep.subr.mxu0 0.0
    %197 = vmatpush2.msra.mxu0 0.0
    %198 = vmatprep.subr.mxu0 0.0
    %199 = vmatpush2.msra.mxu0 0.0
    %200 = vmatprep.subr.mxu0 0.0
    %201 = vmatpush2.msra.mxu0 0.0
    %202 = vmatprep.subr.mxu0 0.0
    %203 = vmatpush2.msra.mxu0 0.0
    %204 = vmatprep.subr.mxu0 0.0
    %205 = vmatpush2.msra.mxu0 0.0
    %206 = vmatprep.subr.mxu0 0.0
    %207 = vmatpush2.msra.mxu0 0.0
    %208 = vmatprep.subr.mxu0 0.0
    %209 = vmatpush2.msra.mxu0 0.0
    %210 = vmatprep.subr.mxu0 0.0
    %211 = vmatpush2.msra.mxu0 0.0
    %212 = vmatprep.subr.mxu0 0.0
    %213 = vmatpush2.msra.mxu0 0.0
    %214 = vmatprep.subr.mxu0 0.0
    %215 = vmatpush2.msra.mxu0 0.0
    %216 = vmatprep.subr.mxu0 0.0
    %217 = vmatpush2.msra.mxu0 0.0
    %218 = vmatprep.mubr.f32.mxu0 0.0
    %219 = vmatmul.mubr.f32.gmra.mxu0 %v59
    %v220 = vpop.f32.mrf.mxu0
    %v221 = vadd.f32 %v152, %v220
    %v222 = vpop.f32.mrf.mxu0
    %223 = vmatprep.mubr.f32.mxu0 0.0
    %224 = vmatmul.mubr.f32.gmra.mxu0 %v62
    %v225 = vpop.f32.mrf.mxu0
    %v226 = vadd.f32 %v152, %v225
    %v227 = vpop.f32.mrf.mxu0
    %228 = vdwg.mxu0
    %s229 = scalar_lea.vmem %s2, 256
    %v230 = vld [vmem:[%s229] sm:$0xff]
    %v231 = vld [vmem:[%s229 + $0x8] sm:$0xff]
    %v232 = vld [vmem:[%s229 + $0x10] sm:$0xff]
    %v233 = vld [vmem:[%s229 + $0x18] sm:$0xff]
    %s234 = scalar_lea.vmem %s3, 8
    %v235 = vld [vmem:[%s234] sm:$0x1]
    %v237 = vlaneseq
    %v238 = vshrl.u32 %v237, 7
    %v239 = vsub.s32 0, %v238
    %v240 = vrot.slane %v235, %v239
    %242 = vmatprep.subr.mxu0 0.0
    %243 = vmatpush1.msra.mxu0 0.0
    %244 = vmatprep.subr.mxu0 0.0
    %245 = vmatpush1.msra.mxu0 0.0
    %246 = vmatprep.subr.mxu0 0.0
    %247 = vmatpush1.msra.mxu0 0.0
    %248 = vmatprep.subr.mxu0 0.0
    %249 = vmatpush1.msra.mxu0 0.0
    %250 = vmatprep.subr.mxu0 0.0
    %251 = vmatpush1.msra.mxu0 0.0
    %252 = vmatprep.subr.mxu0 0.0
    %253 = vmatpush1.msra.mxu0 0.0
    %254 = vmatprep.subr.mxu0 0.0
    %255 = vmatpush1.msra.mxu0 0.0
    %256 = vmatprep.subr.mxu0 0.0
    %257 = vmatpush1.msra.mxu0 0.0
    %258 = vmatprep.subr.mxu0 0.0
    %259 = vmatpush1.msra.mxu0 0.0
    %260 = vmatprep.subr.mxu0 0.0
    %261 = vmatpush1.msra.mxu0 0.0
    %262 = vmatprep.subr.mxu0 0.0
    %263 = vmatpush1.msra.mxu0 0.0
    %264 = vmatprep.subr.mxu0 0.0
    %265 = vmatpush1.msra.mxu0 0.0
    %266 = vmatprep.subr.mxu0 0.0
    %267 = vmatpush1.msra.mxu0 %v233
    %268 = vmatprep.subr.mxu0 0.0
    %269 = vmatpush1.msra.mxu0 %v232
    %270 = vmatprep.subr.mxu0 0.0
    %271 = vmatpush1.msra.mxu0 %v231
    %272 = vmatprep.subr.mxu0 0.0
    %273 = vmatpush1.msra.mxu0 %v230
    %274 = vmatprep.subr.mxu0 0.0
    %275 = vmatpush2.msra.mxu0 0.0
    %276 = vmatprep.subr.mxu0 0.0
    %277 = vmatpush2.msra.mxu0 0.0
    %278 = vmatprep.subr.mxu0 0.0
    %279 = vmatpush2.msra.mxu0 0.0
    %280 = vmatprep.subr.mxu0 0.0
    %281 = vmatpush2.msra.mxu0 0.0
    %282 = vmatprep.subr.mxu0 0.0
    %283 = vmatpush2.msra.mxu0 0.0
    %284 = vmatprep.subr.mxu0 0.0
    %285 = vmatpush2.msra.mxu0 0.0
    %286 = vmatprep.subr.mxu0 0.0
    %287 = vmatpush2.msra.mxu0 0.0
    %288 = vmatprep.subr.mxu0 0.0
    %289 = vmatpush2.msra.mxu0 0.0
    %290 = vmatprep.subr.mxu0 0.0
    %291 = vmatpush2.msra.mxu0 0.0
    %292 = vmatprep.subr.mxu0 0.0
    %293 = vmatpush2.msra.mxu0 0.0
    %294 = vmatprep.subr.mxu0 0.0
    %295 = vmatpush2.msra.mxu0 0.0
    %296 = vmatprep.subr.mxu0 0.0
    %297 = vmatpush2.msra.mxu0 0.0
    %298 = vmatprep.subr.mxu0 0.0
    %299 = vmatpush2.msra.mxu0 0.0
    %300 = vmatprep.subr.mxu0 0.0
    %301 = vmatpush2.msra.mxu0 0.0
    %302 = vmatprep.subr.mxu0 0.0
    %303 = vmatpush2.msra.mxu0 0.0
    %304 = vmatprep.subr.mxu0 0.0
    %305 = vmatpush2.msra.mxu0 0.0
    %306 = vmatprep.mubr.f32.mxu0 0.0
    %307 = vmatmul.mubr.f32.gmra.mxu0 %v59
    %v308 = vpop.f32.mrf.mxu0
    %v309 = vadd.f32 %v240, %v308
    %v310 = vpop.f32.mrf.mxu0
    %311 = vmatprep.mubr.f32.mxu0 0.0
    %312 = vmatmul.mubr.f32.gmra.mxu0 %v62
    %v313 = vpop.f32.mrf.mxu0
    %v314 = vadd.f32 %v240, %v313
    %v315 = vpop.f32.mrf.mxu0
    %316 = vdwg.mxu0
    %vm317 = vcmask 64512
    %v319 = vsel %vm317, %v139, 0
    %v322 = vsel %vm317, %v221, 0
    %324 = vmatprep.subr.mxu0 0.0
    %325 = vmatpush1.xpose.msra.mxu0 0.0
    %326 = vmatprep.subr.mxu0 0.0
    %327 = vmatpush1.xpose.msra.mxu0 0.0
    %328 = vmatprep.subr.mxu0 0.0
    %329 = vmatpush1.xpose.msra.mxu0 0.0
    %330 = vmatprep.subr.mxu0 0.0
    %331 = vmatpush1.xpose.msra.mxu0 0.0
    %332 = vmatprep.subr.mxu0 0.0
    %333 = vmatpush1.xpose.msra.mxu0 0.0
    %334 = vmatprep.subr.mxu0 0.0
    %335 = vmatpush1.xpose.msra.mxu0 0.0
    %336 = vmatprep.subr.mxu0 0.0
    %337 = vmatpush1.xpose.msra.mxu0 0.0
    %338 = vmatprep.subr.mxu0 0.0
    %339 = vmatpush1.xpose.msra.mxu0 0.0
    %340 = vmatprep.subr.mxu0 0.0
    %341 = vmatpush1.xpose.msra.mxu0 0.0
    %342 = vmatprep.subr.mxu0 0.0
    %343 = vmatpush1.xpose.msra.mxu0 0.0
    %344 = vmatprep.subr.mxu0 0.0
    %345 = vmatpush1.xpose.msra.mxu0 0.0
    %346 = vmatprep.subr.mxu0 0.0
    %347 = vmatpush1.xpose.msra.mxu0 0.0
    %348 = vmatprep.subr.mxu0 0.0
    %349 = vmatpush1.xpose.msra.mxu0 0.0
    %350 = vmatprep.subr.mxu0 0.0
    %351 = vmatpush1.xpose.msra.mxu0 0.0
    %352 = vmatprep.subr.mxu0 0.0
    %353 = vmatpush1.xpose.msra.mxu0 0.0
    %354 = vmatprep.subr.mxu0 0.0
    %355 = vmatpush1.xpose.msra.mxu0 %v322
    %356 = vmatprep.subr.mxu0 0.0
    %357 = vmatpush2.xpose.msra.mxu0 0.0
    %358 = vmatprep.subr.mxu0 0.0
    %359 = vmatpush2.xpose.msra.mxu0 0.0
    %360 = vmatprep.subr.mxu0 0.0
    %361 = vmatpush2.xpose.msra.mxu0 0.0
    %362 = vmatprep.subr.mxu0 0.0
    %363 = vmatpush2.xpose.msra.mxu0 0.0
    %364 = vmatprep.subr.mxu0 0.0
    %365 = vmatpush2.xpose.msra.mxu0 0.0
    %366 = vmatprep.subr.mxu0 0.0
    %367 = vmatpush2.xpose.msra.mxu0 0.0
    %368 = vmatprep.subr.mxu0 0.0
    %369 = vmatpush2.xpose.msra.mxu0 0.0
    %370 = vmatprep.subr.mxu0 0.0
    %371 = vmatpush2.xpose.msra.mxu0 0.0
    %372 = vmatprep.subr.mxu0 0.0
    %373 = vmatpush2.xpose.msra.mxu0 0.0
    %374 = vmatprep.subr.mxu0 0.0
    %375 = vmatpush2.xpose.msra.mxu0 0.0
    %376 = vmatprep.subr.mxu0 0.0
    %377 = vmatpush2.xpose.msra.mxu0 0.0
    %378 = vmatprep.subr.mxu0 0.0
    %379 = vmatpush2.xpose.msra.mxu0 0.0
    %380 = vmatprep.subr.mxu0 0.0
    %381 = vmatpush2.xpose.msra.mxu0 0.0
    %382 = vmatprep.subr.mxu0 0.0
    %383 = vmatpush2.xpose.msra.mxu0 0.0
    %384 = vmatprep.subr.mxu0 0.0
    %385 = vmatpush2.xpose.msra.mxu0 0.0
    %386 = vmatprep.subr.mxu0 0.0
    %387 = vmatpush2.xpose.msra.mxu0 0.0
    %388 = vmatprep.mubr.f32.mxu0 0.0
    %389 = vmatmul.mubr.f32.gmra.mxu0 %v319
    %v390 = vpop.f32.mrf.mxu0
    %v391 = vadd.f32 0.0, %v390
    %v392 = vpop.f32.mrf.mxu0
    %393 = vdwg.mxu0
    %v395 = vsel %vm317, %v140, 0
    %v398 = vsel %vm317, %v226, 0
    %400 = vmatprep.subr.mxu0 0.0
    %401 = vmatpush1.xpose.msra.mxu0 0.0
    %402 = vmatprep.subr.mxu0 0.0
    %403 = vmatpush1.xpose.msra.mxu0 0.0
    %404 = vmatprep.subr.mxu0 0.0
    %405 = vmatpush1.xpose.msra.mxu0 0.0
    %406 = vmatprep.subr.mxu0 0.0
    %407 = vmatpush1.xpose.msra.mxu0 0.0
    %408 = vmatprep.subr.mxu0 0.0
    %409 = vmatpush1.xpose.msra.mxu0 0.0
    %410 = vmatprep.subr.mxu0 0.0
    %411 = vmatpush1.xpose.msra.mxu0 0.0
    %412 = vmatprep.subr.mxu0 0.0
    %413 = vmatpush1.xpose.msra.mxu0 0.0
    %414 = vmatprep.subr.mxu0 0.0
    %415 = vmatpush1.xpose.msra.mxu0 0.0
    %416 = vmatprep.subr.mxu0 0.0
    %417 = vmatpush1.xpose.msra.mxu0 0.0
    %418 = vmatprep.subr.mxu0 0.0
    %419 = vmatpush1.xpose.msra.mxu0 0.0
    %420 = vmatprep.subr.mxu0 0.0
    %421 = vmatpush1.xpose.msra.mxu0 0.0
    %422 = vmatprep.subr.mxu0 0.0
    %423 = vmatpush1.xpose.msra.mxu0 0.0
    %424 = vmatprep.subr.mxu0 0.0
    %425 = vmatpush1.xpose.msra.mxu0 0.0
    %426 = vmatprep.subr.mxu0 0.0
    %427 = vmatpush1.xpose.msra.mxu0 0.0
    %428 = vmatprep.subr.mxu0 0.0
    %429 = vmatpush1.xpose.msra.mxu0 0.0
    %430 = vmatprep.subr.mxu0 0.0
    %431 = vmatpush1.xpose.msra.mxu0 %v398
    %432 = vmatprep.subr.mxu0 0.0
    %433 = vmatpush2.xpose.msra.mxu0 0.0
    %434 = vmatprep.subr.mxu0 0.0
    %435 = vmatpush2.xpose.msra.mxu0 0.0
    %436 = vmatprep.subr.mxu0 0.0
    %437 = vmatpush2.xpose.msra.mxu0 0.0
    %438 = vmatprep.subr.mxu0 0.0
    %439 = vmatpush2.xpose.msra.mxu0 0.0
    %440 = vmatprep.subr.mxu0 0.0
    %441 = vmatpush2.xpose.msra.mxu0 0.0
    %442 = vmatprep.subr.mxu0 0.0
    %443 = vmatpush2.xpose.msra.mxu0 0.0
    %444 = vmatprep.subr.mxu0 0.0
    %445 = vmatpush2.xpose.msra.mxu0 0.0
    %446 = vmatprep.subr.mxu0 0.0
    %447 = vmatpush2.xpose.msra.mxu0 0.0
    %448 = vmatprep.subr.mxu0 0.0
    %449 = vmatpush2.xpose.msra.mxu0 0.0
    %450 = vmatprep.subr.mxu0 0.0
    %451 = vmatpush2.xpose.msra.mxu0 0.0
    %452 = vmatprep.subr.mxu0 0.0
    %453 = vmatpush2.xpose.msra.mxu0 0.0
    %454 = vmatprep.subr.mxu0 0.0
    %455 = vmatpush2.xpose.msra.mxu0 0.0
    %456 = vmatprep.subr.mxu0 0.0
    %457 = vmatpush2.xpose.msra.mxu0 0.0
    %458 = vmatprep.subr.mxu0 0.0
    %459 = vmatpush2.xpose.msra.mxu0 0.0
    %460 = vmatprep.subr.mxu0 0.0
    %461 = vmatpush2.xpose.msra.mxu0 0.0
    %462 = vmatprep.subr.mxu0 0.0
    %463 = vmatpush2.xpose.msra.mxu0 0.0
    %464 = vmatprep.mubr.f32.mxu0 0.0
    %465 = vmatmul.mubr.f32.gmra.mxu0 %v395
    %v466 = vpop.f32.mrf.mxu0
    %v467 = vadd.f32 0.0, %v466
    %v468 = vpop.f32.mrf.mxu0
    %469 = vdwg.mxu0
    %v470 = vsel %vm317, %v391, -inf
    %471 = vmax.xlane.f32.xlu0 %v470
    %v472 = vpop.xlane.xlu0 %471
    %v473 = vsel %vm317, %v467, -inf
    %474 = vmax.xlane.f32.xlu0 %v473
    %v475 = vpop.xlane.xlu0 %474
    %v476 = vsub.f32 %v391, %v472
    %v477 = vsub.f32 %v467, %v475
    %v478 = vmul.f32 %v476, 1.442695
    %v479 = vpow.pop %v478
    %v480 = vmul.f32 %v477, 1.442695
    %v481 = vpow.pop %v480
    %v482 = vsel %vm317, %v479, 0.0
    %483 = vadd.xlane.f32.xlu0 %v482
    %v484 = vpop.xlane.xlu0 %483
    %v485 = vsel %vm317, %v481, 0.0
    %486 = vadd.xlane.f32.xlu0 %v485
    %v487 = vpop.xlane.xlu0 %486
    %v488 = vrcp.pop %v484
    %v489 = vmul.f32 %v479, %v488
    %v490 = vrcp.pop %v487
    %v491 = vmul.f32 %v481, %v490
    %v493 = vsel %vm317, %v489, 0
    %495 = vmatprep.subr.mxu0 0.0
    %496 = vmatpush1.msra.mxu0 0.0
    %497 = vmatprep.subr.mxu0 0.0
    %498 = vmatpush1.msra.mxu0 0.0
    %499 = vmatprep.subr.mxu0 0.0
    %500 = vmatpush1.msra.mxu0 0.0
    %501 = vmatprep.subr.mxu0 0.0
    %502 = vmatpush1.msra.mxu0 0.0
    %503 = vmatprep.subr.mxu0 0.0
    %504 = vmatpush1.msra.mxu0 0.0
    %505 = vmatprep.subr.mxu0 0.0
    %506 = vmatpush1.msra.mxu0 0.0
    %507 = vmatprep.subr.mxu0 0.0
    %508 = vmatpush1.msra.mxu0 0.0
    %509 = vmatprep.subr.mxu0 0.0
    %510 = vmatpush1.msra.mxu0 0.0
    %511 = vmatprep.subr.mxu0 0.0
    %512 = vmatpush1.msra.mxu0 0.0
    %513 = vmatprep.subr.mxu0 0.0
    %514 = vmatpush1.msra.mxu0 0.0
    %515 = vmatprep.subr.mxu0 0.0
    %516 = vmatpush1.msra.mxu0 0.0
    %517 = vmatprep.subr.mxu0 0.0
    %518 = vmatpush1.msra.mxu0 0.0
    %519 = vmatprep.subr.mxu0 0.0
    %520 = vmatpush1.msra.mxu0 0.0
    %521 = vmatprep.subr.mxu0 0.0
    %522 = vmatpush1.msra.mxu0 0.0
    %523 = vmatprep.subr.mxu0 0.0
    %524 = vmatpush1.msra.mxu0 0.0
    %525 = vmatprep.subr.mxu0 0.0
    %526 = vmatpush1.msra.mxu0 %v309
    %527 = vmatprep.subr.mxu0 0.0
    %528 = vmatpush2.msra.mxu0 0.0
    %529 = vmatprep.subr.mxu0 0.0
    %530 = vmatpush2.msra.mxu0 0.0
    %531 = vmatprep.subr.mxu0 0.0
    %532 = vmatpush2.msra.mxu0 0.0
    %533 = vmatprep.subr.mxu0 0.0
    %534 = vmatpush2.msra.mxu0 0.0
    %535 = vmatprep.subr.mxu0 0.0
    %536 = vmatpush2.msra.mxu0 0.0
    %537 = vmatprep.subr.mxu0 0.0
    %538 = vmatpush2.msra.mxu0 0.0
    %539 = vmatprep.subr.mxu0 0.0
    %540 = vmatpush2.msra.mxu0 0.0
    %541 = vmatprep.subr.mxu0 0.0
    %542 = vmatpush2.msra.mxu0 0.0
    %543 = vmatprep.subr.mxu0 0.0
    %544 = vmatpush2.msra.mxu0 0.0
    %545 = vmatprep.subr.mxu0 0.0
    %546 = vmatpush2.msra.mxu0 0.0
    %547 = vmatprep.subr.mxu0 0.0
    %548 = vmatpush2.msra.mxu0 0.0
    %549 = vmatprep.subr.mxu0 0.0
    %550 = vmatpush2.msra.mxu0 0.0
    %551 = vmatprep.subr.mxu0 0.0
    %552 = vmatpush2.msra.mxu0 0.0
    %553 = vmatprep.subr.mxu0 0.0
    %554 = vmatpush2.msra.mxu0 0.0
    %555 = vmatprep.subr.mxu0 0.0
    %556 = vmatpush2.msra.mxu0 0.0
    %557 = vmatprep.subr.mxu0 0.0
    %558 = vmatpush2.msra.mxu0 0.0
    %559 = vmatprep.mubr.f32.mxu0 0.0
    %560 = vmatmul.mubr.f32.gmra.mxu0 %v493
    %v561 = vpop.f32.mrf.mxu0
    %v562 = vadd.f32 0.0, %v561
    %v563 = vpop.f32.mrf.mxu0
    %564 = vdwg.mxu0
    %v566 = vsel %vm317, %v491, 0
    %568 = vmatprep.subr.mxu0 0.0
    %569 = vmatpush1.msra.mxu0 0.0
    %570 = vmatprep.subr.mxu0 0.0
    %571 = vmatpush1.msra.mxu0 0.0
    %572 = vmatprep.subr.mxu0 0.0
    %573 = vmatpush1.msra.mxu0 0.0
    %574 = vmatprep.subr.mxu0 0.0
    %575 = vmatpush1.msra.mxu0 0.0
    %576 = vmatprep.subr.mxu0 0.0
    %577 = vmatpush1.msra.mxu0 0.0
    %578 = vmatprep.subr.mxu0 0.0
    %579 = vmatpush1.msra.mxu0 0.0
    %580 = vmatprep.subr.mxu0 0.0
    %581 = vmatpush1.msra.mxu0 0.0
    %582 = vmatprep.subr.mxu0 0.0
    %583 = vmatpush1.msra.mxu0 0.0
    %584 = vmatprep.subr.mxu0 0.0
    %585 = vmatpush1.msra.mxu0 0.0
    %586 = vmatprep.subr.mxu0 0.0
    %587 = vmatpush1.msra.mxu0 0.0
    %588 = vmatprep.subr.mxu0 0.0
    %589 = vmatpush1.msra.mxu0 0.0
    %590 = vmatprep.subr.mxu0 0.0
    %591 = vmatpush1.msra.mxu0 0.0
    %592 = vmatprep.subr.mxu0 0.0
    %593 = vmatpush1.msra.mxu0 0.0
    %594 = vmatprep.subr.mxu0 0.0
    %595 = vmatpush1.msra.mxu0 0.0
    %596 = vmatprep.subr.mxu0 0.0
    %597 = vmatpush1.msra.mxu0 0.0
    %598 = vmatprep.subr.mxu0 0.0
    %599 = vmatpush1.msra.mxu0 %v314
    %600 = vmatprep.subr.mxu0 0.0
    %601 = vmatpush2.msra.mxu0 0.0
    %602 = vmatprep.subr.mxu0 0.0
    %603 = vmatpush2.msra.mxu0 0.0
    %604 = vmatprep.subr.mxu0 0.0
    %605 = vmatpush2.msra.mxu0 0.0
    %606 = vmatprep.subr.mxu0 0.0
    %607 = vmatpush2.msra.mxu0 0.0
    %608 = vmatprep.subr.mxu0 0.0
    %609 = vmatpush2.msra.mxu0 0.0
    %610 = vmatprep.subr.mxu0 0.0
    %611 = vmatpush2.msra.mxu0 0.0
    %612 = vmatprep.subr.mxu0 0.0
    %613 = vmatpush2.msra.mxu0 0.0
    %614 = vmatprep.subr.mxu0 0.0
    %615 = vmatpush2.msra.mxu0 0.0
    %616 = vmatprep.subr.mxu0 0.0
    %617 = vmatpush2.msra.mxu0 0.0
    %618 = vmatprep.subr.mxu0 0.0
    %619 = vmatpush2.msra.mxu0 0.0
    %620 = vmatprep.subr.mxu0 0.0
    %621 = vmatpush2.msra.mxu0 0.0
    %622 = vmatprep.subr.mxu0 0.0
    %623 = vmatpush2.msra.mxu0 0.0
    %624 = vmatprep.subr.mxu0 0.0
    %625 = vmatpush2.msra.mxu0 0.0
    %626 = vmatprep.subr.mxu0 0.0
    %627 = vmatpush2.msra.mxu0 0.0
    %628 = vmatprep.subr.mxu0 0.0
    %629 = vmatpush2.msra.mxu0 0.0
    %630 = vmatprep.subr.mxu0 0.0
    %631 = vmatpush2.msra.mxu0 0.0
    %632 = vmatprep.mubr.f32.mxu0 0.0
    %633 = vmatmul.mubr.f32.gmra.mxu0 %v566
    %v634 = vpop.f32.mrf.mxu0
    %v635 = vadd.f32 0.0, %v634
    %v636 = vpop.f32.mrf.mxu0
    %637 = vdwg.mxu0
    %v638 = vld [vmem:[%s4] sm:$0xff]
    %s639 = scalar_lea.vmem %s2, 32
    %v640 = vld [vmem:[%s639] sm:$0xff]
    %v641 = vld [vmem:[%s639 + $0x8] sm:$0xff]
    %v642 = vld [vmem:[%s639 + $0x10] sm:$0xff]
    %v643 = vld [vmem:[%s639 + $0x18] sm:$0xff]
    %s644 = scalar_lea.vmem %s3, 1
    %v645 = vld [vmem:[%s644] sm:$0x1]
    %v647 = vlaneseq
    %v648 = vshrl.u32 %v647, 7
    %v649 = vsub.s32 0, %v648
    %v650 = vrot.slane %v645, %v649
    %652 = vmatprep.subr.mxu0 0.0
    %653 = vmatpush1.msra.mxu0 0.0
    %654 = vmatprep.subr.mxu0 0.0
    %655 = vmatpush1.msra.mxu0 0.0
    %656 = vmatprep.subr.mxu0 0.0
    %657 = vmatpush1.msra.mxu0 0.0
    %658 = vmatprep.subr.mxu0 0.0
    %659 = vmatpush1.msra.mxu0 0.0
    %660 = vmatprep.subr.mxu0 0.0
    %661 = vmatpush1.msra.mxu0 0.0
    %662 = vmatprep.subr.mxu0 0.0
    %663 = vmatpush1.msra.mxu0 0.0
    %664 = vmatprep.subr.mxu0 0.0
    %665 = vmatpush1.msra.mxu0 0.0
    %666 = vmatprep.subr.mxu0 0.0
    %667 = vmatpush1.msra.mxu0 0.0
    %668 = vmatprep.subr.mxu0 0.0
    %669 = vmatpush1.msra.mxu0 0.0
    %670 = vmatprep.subr.mxu0 0.0
    %671 = vmatpush1.msra.mxu0 0.0
    %672 = vmatprep.subr.mxu0 0.0
    %673 = vmatpush1.msra.mxu0 0.0
    %674 = vmatprep.subr.mxu0 0.0
    %675 = vmatpush1.msra.mxu0 0.0
    %676 = vmatprep.subr.mxu0 0.0
    %677 = vmatpush1.msra.mxu0 %v643
    %678 = vmatprep.subr.mxu0 0.0
    %679 = vmatpush1.msra.mxu0 %v642
    %680 = vmatprep.subr.mxu0 0.0
    %681 = vmatpush1.msra.mxu0 %v641
    %682 = vmatprep.subr.mxu0 0.0
    %683 = vmatpush1.msra.mxu0 %v640
    %684 = vmatprep.subr.mxu0 0.0
    %685 = vmatpush2.msra.mxu0 0.0
    %686 = vmatprep.subr.mxu0 0.0
    %687 = vmatpush2.msra.mxu0 0.0
    %688 = vmatprep.subr.mxu0 0.0
    %689 = vmatpush2.msra.mxu0 0.0
    %690 = vmatprep.subr.mxu0 0.0
    %691 = vmatpush2.msra.mxu0 0.0
    %692 = vmatprep.subr.mxu0 0.0
    %693 = vmatpush2.msra.mxu0 0.0
    %694 = vmatprep.subr.mxu0 0.0
    %695 = vmatpush2.msra.mxu0 0.0
    %696 = vmatprep.subr.mxu0 0.0
    %697 = vmatpush2.msra.mxu0 0.0
    %698 = vmatprep.subr.mxu0 0.0
    %699 = vmatpush2.msra.mxu0 0.0
    %700 = vmatprep.subr.mxu0 0.0
    %701 = vmatpush2.msra.mxu0 0.0
    %702 = vmatprep.subr.mxu0 0.0
    %703 = vmatpush2.msra.mxu0 0.0
    %704 = vmatprep.subr.mxu0 0.0
    %705 = vmatpush2.msra.mxu0 0.0
    %706 = vmatprep.subr.mxu0 0.0
    %707 = vmatpush2.msra.mxu0 0.0
    %708 = vmatprep.subr.mxu0 0.0
    %709 = vmatpush2.msra.mxu0 0.0
    %710 = vmatprep.subr.mxu0 0.0
    %711 = vmatpush2.msra.mxu0 0.0
    %712 = vmatprep.subr.mxu0 0.0
    %713 = vmatpush2.msra.mxu0 0.0
    %714 = vmatprep.subr.mxu0 0.0
    %715 = vmatpush2.msra.mxu0 0.0
    %716 = vmatprep.mubr.f32.mxu0 0.0
    %717 = vmatmul.mubr.f32.gmra.mxu0 %v59
    %v718 = vpop.f32.mrf.mxu0
    %v719 = vadd.f32 %v650, %v718
    %v720 = vpop.f32.mrf.mxu0
    %721 = vmatprep.mubr.f32.mxu0 0.0
    %722 = vmatmul.mubr.f32.gmra.mxu0 %v62
    %v723 = vpop.f32.mrf.mxu0
    %v724 = vadd.f32 %v650, %v723
    %v725 = vpop.f32.mrf.mxu0
    %726 = vdwg.mxu0
    %v727 = vmul.f32 %v719, 0.35355338
    %v728 = vmul.f32 %v724, 0.35355338
    %s729 = scalar_lea.vmem %s2, 160
    %v730 = vld [vmem:[%s729] sm:$0xff]
    %v731 = vld [vmem:[%s729 + $0x8] sm:$0xff]
    %v732 = vld [vmem:[%s729 + $0x10] sm:$0xff]
    %v733 = vld [vmem:[%s729 + $0x18] sm:$0xff]
    %s734 = scalar_lea.vmem %s3, 5
    %v735 = vld [vmem:[%s734] sm:$0x1]
    %v737 = vlaneseq
    %v738 = vshrl.u32 %v737, 7
    %v739 = vsub.s32 0, %v738
    %v740 = vrot.slane %v735, %v739
    %742 = vmatprep.subr.mxu0 0.0
    %743 = vmatpush1.msra.mxu0 0.0
    %744 = vmatprep.subr.mxu0 0.0
    %745 = vmatpush1.msra.mxu0 0.0
    %746 = vmatprep.subr.mxu0 0.0
    %747 = vmatpush1.msra.mxu0 0.0
    %748 = vmatprep.subr.mxu0 0.0
    %749 = vmatpush1.msra.mxu0 0.0
    %750 = vmatprep.subr.mxu0 0.0
    %751 = vmatpush1.msra.mxu0 0.0
    %752 = vmatprep.subr.mxu0 0.0
    %753 = vmatpush1.msra.mxu0 0.0
    %754 = vmatprep.subr.mxu0 0.0
    %755 = vmatpush1.msra.mxu0 0.0
    %756 = vmatprep.subr.mxu0 0.0
    %757 = vmatpush1.msra.mxu0 0.0
    %758 = vmatprep.subr.mxu0 0.0
    %759 = vmatpush1.msra.mxu0 0.0
    %760 = vmatprep.subr.mxu0 0.0
    %761 = vmatpush1.msra.mxu0 0.0
    %762 = vmatprep.subr.mxu0 0.0
    %763 = vmatpush1.msra.mxu0 0.0
    %764 = vmatprep.subr.mxu0 0.0
    %765 = vmatpush1.msra.mxu0 0.0
    %766 = vmatprep.subr.mxu0 0.0
    %767 = vmatpush1.msra.mxu0 %v733
    %768 = vmatprep.subr.mxu0 0.0
    %769 = vmatpush1.msra.mxu0 %v732
    %770 = vmatprep.subr.mxu0 0.0
    %771 = vmatpush1.msra.mxu0 %v731
    %772 = vmatprep.subr.mxu0 0.0
    %773 = vmatpush1.msra.mxu0 %v730
    %774 = vmatprep.subr.mxu0 0.0
    %775 = vmatpush2.msra.mxu0 0.0
    %776 = vmatprep.subr.mxu0 0.0
    %777 = vmatpush2.msra.mxu0 0.0
    %778 = vmatprep.subr.mxu0 0.0
    %779 = vmatpush2.msra.mxu0 0.0
    %780 = vmatprep.subr.mxu0 0.0
    %781 = vmatpush2.msra.mxu0 0.0
    %782 = vmatprep.subr.mxu0 0.0
    %783 = vmatpush2.msra.mxu0 0.0
    %784 = vmatprep.subr.mxu0 0.0
    %785 = vmatpush2.msra.mxu0 0.0
    %786 = vmatprep.subr.mxu0 0.0
    %787 = vmatpush2.msra.mxu0 0.0
    %788 = vmatprep.subr.mxu0 0.0
    %789 = vmatpush2.msra.mxu0 0.0
    %790 = vmatprep.subr.mxu0 0.0
    %791 = vmatpush2.msra.mxu0 0.0
    %792 = vmatprep.subr.mxu0 0.0
    %793 = vmatpush2.msra.mxu0 0.0
    %794 = vmatprep.subr.mxu0 0.0
    %795 = vmatpush2.msra.mxu0 0.0
    %796 = vmatprep.subr.mxu0 0.0
    %797 = vmatpush2.msra.mxu0 0.0
    %798 = vmatprep.subr.mxu0 0.0
    %799 = vmatpush2.msra.mxu0 0.0
    %800 = vmatprep.subr.mxu0 0.0
    %801 = vmatpush2.msra.mxu0 0.0
    %802 = vmatprep.subr.mxu0 0.0
    %803 = vmatpush2.msra.mxu0 0.0
    %804 = vmatprep.subr.mxu0 0.0
    %805 = vmatpush2.msra.mxu0 0.0
    %806 = vmatprep.mubr.f32.mxu0 0.0
    %807 = vmatmul.mubr.f32.gmra.mxu0 %v59
    %v808 = vpop.f32.mrf.mxu0
    %v809 = vadd.f32 %v740, %v808
    %v810 = vpop.f32.mrf.mxu0
    %811 = vmatprep.mubr.f32.mxu0 0.0
    %812 = vmatmul.mubr.f32.gmra.mxu0 %v62
    %v813 = vpop.f32.mrf.mxu0
    %v814 = vadd.f32 %v740, %v813
    %v815 = vpop.f32.mrf.mxu0
    %816 = vdwg.mxu0
    %s817 = scalar_lea.vmem %s2, 288
    %v818 = vld [vmem:[%s817] sm:$0xff]
    %v819 = vld [vmem:[%s817 + $0x8] sm:$0xff]
    %v820 = vld [vmem:[%s817 + $0x10] sm:$0xff]
    %v821 = vld [vmem:[%s817 + $0x18] sm:$0xff]
    %s822 = scalar_lea.vmem %s3, 9
    %v823 = vld [vmem:[%s822] sm:$0x1]
    %v825 = vlaneseq
    %v826 = vshrl.u32 %v825, 7
    %v827 = vsub.s32 0, %v826
    %v828 = vrot.slane %v823, %v827
    %830 = vmatprep.subr.mxu0 0.0
    %831 = vmatpush1.msra.mxu0 0.0
    %832 = vmatprep.subr.mxu0 0.0
    %833 = vmatpush1.msra.mxu0 0.0
    %834 = vmatprep.subr.mxu0 0.0
    %835 = vmatpush1.msra.mxu0 0.0
    %836 = vmatprep.subr.mxu0 0.0
    %837 = vmatpush1.msra.mxu0 0.0
    %838 = vmatprep.subr.mxu0 0.0
    %839 = vmatpush1.msra.mxu0 0.0
    %840 = vmatprep.subr.mxu0 0.0
    %841 = vmatpush1.msra.mxu0 0.0
    %842 = vmatprep.subr.mxu0 0.0
    %843 = vmatpush1.msra.mxu0 0.0
    %844 = vmatprep.subr.mxu0 0.0
    %845 = vmatpush1.msra.mxu0 0.0
    %846 = vmatprep.subr.mxu0 0.0
    %847 = vmatpush1.msra.mxu0 0.0
    %848 = vmatprep.subr.mxu0 0.0
    %849 = vmatpush1.msra.mxu0 0.0
    %850 = vmatprep.subr.mxu0 0.0
    %851 = vmatpush1.msra.mxu0 0.0
    %852 = vmatprep.subr.mxu0 0.0
    %853 = vmatpush1.msra.mxu0 0.0
    %854 = vmatprep.subr.mxu0 0.0
    %855 = vmatpush1.msra.mxu0 %v821
    %856 = vmatprep.subr.mxu0 0.0
    %857 = vmatpush1.msra.mxu0 %v820
    %858 = vmatprep.subr.mxu0 0.0
    %859 = vmatpush1.msra.mxu0 %v819
    %860 = vmatprep.subr.mxu0 0.0
    %861 = vmatpush1.msra.mxu0 %v818
    %862 = vmatprep.subr.mxu0 0.0
    %863 = vmatpush2.msra.mxu0 0.0
    %864 = vmatprep.subr.mxu0 0.0
    %865 = vmatpush2.msra.mxu0 0.0
    %866 = vmatprep.subr.mxu0 0.0
    %867 = vmatpush2.msra.mxu0 0.0
    %868 = vmatprep.subr.mxu0 0.0
    %869 = vmatpush2.msra.mxu0 0.0
    %870 = vmatprep.subr.mxu0 0.0
    %871 = vmatpush2.msra.mxu0 0.0
    %872 = vmatprep.subr.mxu0 0.0
    %873 = vmatpush2.msra.mxu0 0.0
    %874 = vmatprep.subr.mxu0 0.0
    %875 = vmatpush2.msra.mxu0 0.0
    %876 = vmatprep.subr.mxu0 0.0
    %877 = vmatpush2.msra.mxu0 0.0
    %878 = vmatprep.subr.mxu0 0.0
    %879 = vmatpush2.msra.mxu0 0.0
    %880 = vmatprep.subr.mxu0 0.0
    %881 = vmatpush2.msra.mxu0 0.0
    %882 = vmatprep.subr.mxu0 0.0
    %883 = vmatpush2.msra.mxu0 0.0
    %884 = vmatprep.subr.mxu0 0.0
    %885 = vmatpush2.msra.mxu0 0.0
    %886 = vmatprep.subr.mxu0 0.0
    %887 = vmatpush2.msra.mxu0 0.0
    %888 = vmatprep.subr.mxu0 0.0
    %889 = vmatpush2.msra.mxu0 0.0
    %890 = vmatprep.subr.mxu0 0.0
    %891 = vmatpush2.msra.mxu0 0.0
    %892 = vmatprep.subr.mxu0 0.0
    %893 = vmatpush2.msra.mxu0 0.0
    %894 = vmatprep.mubr.f32.mxu0 0.0
    %895 = vmatmul.mubr.f32.gmra.mxu0 %v59
    %v896 = vpop.f32.mrf.mxu0
    %v897 = vadd.f32 %v828, %v896
    %v898 = vpop.f32.mrf.mxu0
    %899 = vmatprep.mubr.f32.mxu0 0.0
    %900 = vmatmul.mubr.f32.gmra.mxu0 %v62
    %v901 = vpop.f32.mrf.mxu0
    %v902 = vadd.f32 %v828, %v901
    %v903 = vpop.f32.mrf.mxu0
    %904 = vdwg.mxu0
    %v906 = vsel %vm317, %v727, 0
    %v909 = vsel %vm317, %v809, 0
    %911 = vmatprep.subr.mxu0 0.0
    %912 = vmatpush1.xpose.msra.mxu0 0.0
    %913 = vmatprep.subr.mxu0 0.0
    %914 = vmatpush1.xpose.msra.mxu0 0.0
    %915 = vmatprep.subr.mxu0 0.0
    %916 = vmatpush1.xpose.msra.mxu0 0.0
    %917 = vmatprep.subr.mxu0 0.0
    %918 = vmatpush1.xpose.msra.mxu0 0.0
    %919 = vmatprep.subr.mxu0 0.0
    %920 = vmatpush1.xpose.msra.mxu0 0.0
    %921 = vmatprep.subr.mxu0 0.0
    %922 = vmatpush1.xpose.msra.mxu0 0.0
    %923 = vmatprep.subr.mxu0 0.0
    %924 = vmatpush1.xpose.msra.mxu0 0.0
    %925 = vmatprep.subr.mxu0 0.0
    %926 = vmatpush1.xpose.msra.mxu0 0.0
    %927 = vmatprep.subr.mxu0 0.0
    %928 = vmatpush1.xpose.msra.mxu0 0.0
    %929 = vmatprep.subr.mxu0 0.0
    %930 = vmatpush1.xpose.msra.mxu0 0.0
    %931 = vmatprep.subr.mxu0 0.0
    %932 = vmatpush1.xpose.msra.mxu0 0.0
    %933 = vmatprep.subr.mxu0 0.0
    %934 = vmatpush1.xpose.msra.mxu0 0.0
    %935 = vmatprep.subr.mxu0 0.0
    %936 = vmatpush1.xpose.msra.mxu0 0.0
    %937 = vmatprep.subr.mxu0 0.0
    %938 = vmatpush1.xpose.msra.mxu0 0.0
    %939 = vmatprep.subr.mxu0 0.0
    %940 = vmatpush1.xpose.msra.mxu0 0.0
    %941 = vmatprep.subr.mxu0 0.0
    %942 = vmatpush1.xpose.msra.mxu0 %v909
    %943 = vmatprep.subr.mxu0 0.0
    %944 = vmatpush2.xpose.msra.mxu0 0.0
    %945 = vmatprep.subr.mxu0 0.0
    %946 = vmatpush2.xpose.msra.mxu0 0.0
    %947 = vmatprep.subr.mxu0 0.0
    %948 = vmatpush2.xpose.msra.mxu0 0.0
    %949 = vmatprep.subr.mxu0 0.0
    %950 = vmatpush2.xpose.msra.mxu0 0.0
    %951 = vmatprep.subr.mxu0 0.0
    %952 = vmatpush2.xpose.msra.mxu0 0.0
    %953 = vmatprep.subr.mxu0 0.0
    %954 = vmatpush2.xpose.msra.mxu0 0.0
    %955 = vmatprep.subr.mxu0 0.0
    %956 = vmatpush2.xpose.msra.mxu0 0.0
    %957 = vmatprep.subr.mxu0 0.0
    %958 = vmatpush2.xpose.msra.mxu0 0.0
    %959 = vmatprep.subr.mxu0 0.0
    %960 = vmatpush2.xpose.msra.mxu0 0.0
    %961 = vmatprep.subr.mxu0 0.0
    %962 = vmatpush2.xpose.msra.mxu0 0.0
    %963 = vmatprep.subr.mxu0 0.0
    %964 = vmatpush2.xpose.msra.mxu0 0.0
    %965 = vmatprep.subr.mxu0 0.0
    %966 = vmatpush2.xpose.msra.mxu0 0.0
    %967 = vmatprep.subr.mxu0 0.0
    %968 = vmatpush2.xpose.msra.mxu0 0.0
    %969 = vmatprep.subr.mxu0 0.0
    %970 = vmatpush2.xpose.msra.mxu0 0.0
    %971 = vmatprep.subr.mxu0 0.0
    %972 = vmatpush2.xpose.msra.mxu0 0.0
    %973 = vmatprep.subr.mxu0 0.0
    %974 = vmatpush2.xpose.msra.mxu0 0.0
    %975 = vmatprep.mubr.f32.mxu0 0.0
    %976 = vmatmul.mubr.f32.gmra.mxu0 %v906
    %v977 = vpop.f32.mrf.mxu0
    %v978 = vadd.f32 0.0, %v977
    %v979 = vpop.f32.mrf.mxu0
    %980 = vdwg.mxu0
    %v982 = vsel %vm317, %v728, 0
    %v985 = vsel %vm317, %v814, 0
    %987 = vmatprep.subr.mxu0 0.0
    %988 = vmatpush1.xpose.msra.mxu0 0.0
    %989 = vmatprep.subr.mxu0 0.0
    %990 = vmatpush1.xpose.msra.mxu0 0.0
    %991 = vmatprep.subr.mxu0 0.0
    %992 = vmatpush1.xpose.msra.mxu0 0.0
    %993 = vmatprep.subr.mxu0 0.0
    %994 = vmatpush1.xpose.msra.mxu0 0.0
    %995 = vmatprep.subr.mxu0 0.0
    %996 = vmatpush1.xpose.msra.mxu0 0.0
    %997 = vmatprep.subr.mxu0 0.0
    %998 = vmatpush1.xpose.msra.mxu0 0.0
    %999 = vmatprep.subr.mxu0 0.0
    %1000 = vmatpush1.xpose.msra.mxu0 0.0
    %1001 = vmatprep.subr.mxu0 0.0
    %1002 = vmatpush1.xpose.msra.mxu0 0.0
    %1003 = vmatprep.subr.mxu0 0.0
    %1004 = vmatpush1.xpose.msra.mxu0 0.0
    %1005 = vmatprep.subr.mxu0 0.0
    %1006 = vmatpush1.xpose.msra.mxu0 0.0
    %1007 = vmatprep.subr.mxu0 0.0
    %1008 = vmatpush1.xpose.msra.mxu0 0.0
    %1009 = vmatprep.subr.mxu0 0.0
    %1010 = vmatpush1.xpose.msra.mxu0 0.0
    %1011 = vmatprep.subr.mxu0 0.0
    %1012 = vmatpush1.xpose.msra.mxu0 0.0
    %1013 = vmatprep.subr.mxu0 0.0
    %1014 = vmatpush1.xpose.msra.mxu0 0.0
    %1015 = vmatprep.subr.mxu0 0.0
    %1016 = vmatpush1.xpose.msra.mxu0 0.0
    %1017 = vmatprep.subr.mxu0 0.0
    %1018 = vmatpush1.xpose.msra.mxu0 %v985
    %1019 = vmatprep.subr.mxu0 0.0
    %1020 = vmatpush2.xpose.msra.mxu0 0.0
    %1021 = vmatprep.subr.mxu0 0.0
    %1022 = vmatpush2.xpose.msra.mxu0 0.0
    %1023 = vmatprep.subr.mxu0 0.0
    %1024 = vmatpush2.xpose.msra.mxu0 0.0
    %1025 = vmatprep.subr.mxu0 0.0
    %1026 = vmatpush2.xpose.msra.mxu0 0.0
    %1027 = vmatprep.subr.mxu0 0.0
    %1028 = vmatpush2.xpose.msra.mxu0 0.0
    %1029 = vmatprep.subr.mxu0 0.0
    %1030 = vmatpush2.xpose.msra.mxu0 0.0
    %1031 = vmatprep.subr.mxu0 0.0
    %1032 = vmatpush2.xpose.msra.mxu0 0.0
    %1033 = vmatprep.subr.mxu0 0.0
    %1034 = vmatpush2.xpose.msra.mxu0 0.0
    %1035 = vmatprep.subr.mxu0 0.0
    %1036 = vmatpush2.xpose.msra.mxu0 0.0
    %1037 = vmatprep.subr.mxu0 0.0
    %1038 = vmatpush2.xpose.msra.mxu0 0.0
    %1039 = vmatprep.subr.mxu0 0.0
    %1040 = vmatpush2.xpose.msra.mxu0 0.0
    %1041 = vmatprep.subr.mxu0 0.0
    %1042 = vmatpush2.xpose.msra.mxu0 0.0
    %1043 = vmatprep.subr.mxu0 0.0
    %1044 = vmatpush2.xpose.msra.mxu0 0.0
    %1045 = vmatprep.subr.mxu0 0.0
    %1046 = vmatpush2.xpose.msra.mxu0 0.0
    %1047 = vmatprep.subr.mxu0 0.0
    %1048 = vmatpush2.xpose.msra.mxu0 0.0
    %1049 = vmatprep.subr.mxu0 0.0
    %1050 = vmatpush2.xpose.msra.mxu0 0.0
    %1051 = vmatprep.mubr.f32.mxu0 0.0
    %1052 = vmatmul.mubr.f32.gmra.mxu0 %v982
    %v1053 = vpop.f32.mrf.mxu0
    %v1054 = vadd.f32 0.0, %v1053
    %v1055 = vpop.f32.mrf.mxu0
    %1056 = vdwg.mxu0
    %v1057 = vsel %vm317, %v978, -inf
    %1058 = vmax.xlane.f32.xlu0 %v1057
    %v1059 = vpop.xlane.xlu0 %1058
    %v1060 = vsel %vm317, %v1054, -inf
    %1061 = vmax.xlane.f32.xlu0 %v1060
    %v1062 = vpop.xlane.xlu0 %1061
    %v1063 = vsub.f32 %v978, %v1059
    %v1064 = vsub.f32 %v1054, %v1062
    %v1065 = vmul.f32 %v1063, 1.442695
    %v1066 = vpow.pop %v1065
    %v1067 = vmul.f32 %v1064, 1.442695
    %v1068 = vpow.pop %v1067
    %v1069 = vsel %vm317, %v1066, 0.0
    %1070 = vadd.xlane.f32.xlu0 %v1069
    %v1071 = vpop.xlane.xlu0 %1070
    %v1072 = vsel %vm317, %v1068, 0.0
    %1073 = vadd.xlane.f32.xlu0 %v1072
    %v1074 = vpop.xlane.xlu0 %1073
    %v1075 = vrcp.pop %v1071
    %v1076 = vmul.f32 %v1066, %v1075
    %v1077 = vrcp.pop %v1074
    %v1078 = vmul.f32 %v1068, %v1077
    %v1080 = vsel %vm317, %v1076, 0
    %1082 = vmatprep.subr.mxu0 0.0
    %1083 = vmatpush1.msra.mxu0 0.0
    %1084 = vmatprep.subr.mxu0 0.0
    %1085 = vmatpush1.msra.mxu0 0.0
    %1086 = vmatprep.subr.mxu0 0.0
    %1087 = vmatpush1.msra.mxu0 0.0
    %1088 = vmatprep.subr.mxu0 0.0
    %1089 = vmatpush1.msra.mxu0 0.0
    %1090 = vmatprep.subr.mxu0 0.0
    %1091 = vmatpush1.msra.mxu0 0.0
    %1092 = vmatprep.subr.mxu0 0.0
    %1093 = vmatpush1.msra.mxu0 0.0
    %1094 = vmatprep.subr.mxu0 0.0
    %1095 = vmatpush1.msra.mxu0 0.0
    %1096 = vmatprep.subr.mxu0 0.0
    %1097 = vmatpush1.msra.mxu0 0.0
    %1098 = vmatprep.subr.mxu0 0.0
    %1099 = vmatpush1.msra.mxu0 0.0
    %1100 = vmatprep.subr.mxu0 0.0
    %1101 = vmatpush1.msra.mxu0 0.0
    %1102 = vmatprep.subr.mxu0 0.0
    %1103 = vmatpush1.msra.mxu0 0.0
    %1104 = vmatprep.subr.mxu0 0.0
    %1105 = vmatpush1.msra.mxu0 0.0
    %1106 = vmatprep.subr.mxu0 0.0
    %1107 = vmatpush1.msra.mxu0 0.0
    %1108 = vmatprep.subr.mxu0 0.0
    %1109 = vmatpush1.msra.mxu0 0.0
    %1110 = vmatprep.subr.mxu0 0.0
    %1111 = vmatpush1.msra.mxu0 0.0
    %1112 = vmatprep.subr.mxu0 0.0
    %1113 = vmatpush1.msra.mxu0 %v897
    %1114 = vmatprep.subr.mxu0 0.0
    %1115 = vmatpush2.msra.mxu0 0.0
    %1116 = vmatprep.subr.mxu0 0.0
    %1117 = vmatpush2.msra.mxu0 0.0
    %1118 = vmatprep.subr.mxu0 0.0
    %1119 = vmatpush2.msra.mxu0 0.0
    %1120 = vmatprep.subr.mxu0 0.0
    %1121 = vmatpush2.msra.mxu0 0.0
    %1122 = vmatprep.subr.mxu0 0.0
    %1123 = vmatpush2.msra.mxu0 0.0
    %1124 = vmatprep.subr.mxu0 0.0
    %1125 = vmatpush2.msra.mxu0 0.0
    %1126 = vmatprep.subr.mxu0 0.0
    %1127 = vmatpush2.msra.mxu0 0.0
    %1128 = vmatprep.subr.mxu0 0.0
    %1129 = vmatpush2.msra.mxu0 0.0
    %1130 = vmatprep.subr.mxu0 0.0
    %1131 = vmatpush2.msra.mxu0 0.0
    %1132 = vmatprep.subr.mxu0 0.0
    %1133 = vmatpush2.msra.mxu0 0.0
    %1134 = vmatprep.subr.mxu0 0.0
    %1135 = vmatpush2.msra.mxu0 0.0
    %1136 = vmatprep.subr.mxu0 0.0
    %1137 = vmatpush2.msra.mxu0 0.0
    %1138 = vmatprep.subr.mxu0 0.0
    %1139 = vmatpush2.msra.mxu0 0.0
    %1140 = vmatprep.subr.mxu0 0.0
    %1141 = vmatpush2.msra.mxu0 0.0
    %1142 = vmatprep.subr.mxu0 0.0
    %1143 = vmatpush2.msra.mxu0 0.0
    %1144 = vmatprep.subr.mxu0 0.0
    %1145 = vmatpush2.msra.mxu0 0.0
    %1146 = vmatprep.mubr.f32.mxu0 0.0
    %1147 = vmatmul.mubr.f32.gmra.mxu0 %v1080
    %v1148 = vpop.f32.mrf.mxu0
    %v1149 = vadd.f32 0.0, %v1148
    %v1150 = vpop.f32.mrf.mxu0
    %1151 = vdwg.mxu0
    %v1153 = vsel %vm317, %v1078, 0
    %1155 = vmatprep.subr.mxu0 0.0
    %1156 = vmatpush1.msra.mxu0 0.0
    %1157 = vmatprep.subr.mxu0 0.0
    %1158 = vmatpush1.msra.mxu0 0.0
    %1159 = vmatprep.subr.mxu0 0.0
    %1160 = vmatpush1.msra.mxu0 0.0
    %1161 = vmatprep.subr.mxu0 0.0
    %1162 = vmatpush1.msra.mxu0 0.0
    %1163 = vmatprep.subr.mxu0 0.0
    %1164 = vmatpush1.msra.mxu0 0.0
    %1165 = vmatprep.subr.mxu0 0.0
    %1166 = vmatpush1.msra.mxu0 0.0
    %1167 = vmatprep.subr.mxu0 0.0
    %1168 = vmatpush1.msra.mxu0 0.0
    %1169 = vmatprep.subr.mxu0 0.0
    %1170 = vmatpush1.msra.mxu0 0.0
    %1171 = vmatprep.subr.mxu0 0.0
    %1172 = vmatpush1.msra.mxu0 0.0
    %1173 = vmatprep.subr.mxu0 0.0
    %1174 = vmatpush1.msra.mxu0 0.0
    %1175 = vmatprep.subr.mxu0 0.0
    %1176 = vmatpush1.msra.mxu0 0.0
    %1177 = vmatprep.subr.mxu0 0.0
    %1178 = vmatpush1.msra.mxu0 0.0
    %1179 = vmatprep.subr.mxu0 0.0
    %1180 = vmatpush1.msra.mxu0 0.0
    %1181 = vmatprep.subr.mxu0 0.0
    %1182 = vmatpush1.msra.mxu0 0.0
    %1183 = vmatprep.subr.mxu0 0.0
    %1184 = vmatpush1.msra.mxu0 0.0
    %1185 = vmatprep.subr.mxu0 0.0
    %1186 = vmatpush1.msra.mxu0 %v902
    %1187 = vmatprep.subr.mxu0 0.0
    %1188 = vmatpush2.msra.mxu0 0.0
    %1189 = vmatprep.subr.mxu0 0.0
    %1190 = vmatpush2.msra.mxu0 0.0
    %1191 = vmatprep.subr.mxu0 0.0
    %1192 = vmatpush2.msra.mxu0 0.0
    %1193 = vmatprep.subr.mxu0 0.0
    %1194 = vmatpush2.msra.mxu0 0.0
    %1195 = vmatprep.subr.mxu0 0.0
    %1196 = vmatpush2.msra.mxu0 0.0
    %1197 = vmatprep.subr.mxu0 0.0
    %1198 = vmatpush2.msra.mxu0 0.0
    %1199 = vmatprep.subr.mxu0 0.0
    %1200 = vmatpush2.msra.mxu0 0.0
    %1201 = vmatprep.subr.mxu0 0.0
    %1202 = vmatpush2.msra.mxu0 0.0
    %1203 = vmatprep.subr.mxu0 0.0
    %1204 = vmatpush2.msra.mxu0 0.0
    %1205 = vmatprep.subr.mxu0 0.0
    %1206 = vmatpush2.msra.mxu0 0.0
    %1207 = vmatprep.subr.mxu0 0.0
    %1208 = vmatpush2.msra.mxu0 0.0
    %1209 = vmatprep.subr.mxu0 0.0
    %1210 = vmatpush2.msra.mxu0 0.0
    %1211 = vmatprep.subr.mxu0 0.0
    %1212 = vmatpush2.msra.mxu0 0.0
    %1213 = vmatprep.subr.mxu0 0.0
    %1214 = vmatpush2.msra.mxu0 0.0
    %1215 = vmatprep.subr.mxu0 0.0
    %1216 = vmatpush2.msra.mxu0 0.0
    %1217 = vmatprep.subr.mxu0 0.0
    %1218 = vmatpush2.msra.mxu0 0.0
    %1219 = vmatprep.mubr.f32.mxu0 0.0
    %1220 = vmatmul.mubr.f32.gmra.mxu0 %v1153
    %v1221 = vpop.f32.mrf.mxu0
    %v1222 = vadd.f32 0.0, %v1221
    %v1223 = vpop.f32.mrf.mxu0
    %1224 = vdwg.mxu0
    %s1225 = scalar_lea.vmem %s4, 8
    %v1226 = vld [vmem:[%s1225] sm:$0xff]
    %v1228 = vsel %vm317, %v1149, 0
    %v1231 = vsel %vm317, %v1222, 0
    %1233 = vmatprep.subr.mxu0 0.0
    %1234 = vmatpush1.msra.mxu0 0.0
    %1235 = vmatprep.subr.mxu0 0.0
    %1236 = vmatpush1.msra.mxu0 0.0
    %1237 = vmatprep.subr.mxu0 0.0
    %1238 = vmatpush1.msra.mxu0 0.0
    %1239 = vmatprep.subr.mxu0 0.0
    %1240 = vmatpush1.msra.mxu0 0.0
    %1241 = vmatprep.subr.mxu0 0.0
    %1242 = vmatpush1.msra.mxu0 0.0
    %1243 = vmatprep.subr.mxu0 0.0
    %1244 = vmatpush1.msra.mxu0 0.0
    %1245 = vmatprep.subr.mxu0 0.0
    %1246 = vmatpush1.msra.mxu0 0.0
    %1247 = vmatprep.subr.mxu0 0.0
    %1248 = vmatpush1.msra.mxu0 0.0
    %1249 = vmatprep.subr.mxu0 0.0
    %1250 = vmatpush1.msra.mxu0 0.0
    %1251 = vmatprep.subr.mxu0 0.0
    %1252 = vmatpush1.msra.mxu0 0.0
    %1253 = vmatprep.subr.mxu0 0.0
    %1254 = vmatpush1.msra.mxu0 0.0
    %1255 = vmatprep.subr.mxu0 0.0
    %1256 = vmatpush1.msra.mxu0 0.0
    %1257 = vmatprep.subr.mxu0 0.0
    %1258 = vmatpush1.msra.mxu0 0.0
    %1259 = vmatprep.subr.mxu0 0.0
    %1260 = vmatpush1.msra.mxu0 0.0
    %1261 = vmatprep.subr.mxu0 0.0
    %1262 = vmatpush1.msra.mxu0 0.0
    %1263 = vmatprep.subr.mxu0 0.0
    %1264 = vmatpush1.msra.mxu0 %v1226
    %1265 = vmatprep.subr.mxu0 0.0
    %1266 = vmatpush2.msra.mxu0 0.0
    %1267 = vmatprep.subr.mxu0 0.0
    %1268 = vmatpush2.msra.mxu0 0.0
    %1269 = vmatprep.subr.mxu0 0.0
    %1270 = vmatpush2.msra.mxu0 0.0
    %1271 = vmatprep.subr.mxu0 0.0
    %1272 = vmatpush2.msra.mxu0 0.0
    %1273 = vmatprep.subr.mxu0 0.0
    %1274 = vmatpush2.msra.mxu0 0.0
    %1275 = vmatprep.subr.mxu0 0.0
    %1276 = vmatpush2.msra.mxu0 0.0
    %1277 = vmatprep.subr.mxu0 0.0
    %1278 = vmatpush2.msra.mxu0 0.0
    %1279 = vmatprep.subr.mxu0 0.0
    %1280 = vmatpush2.msra.mxu0 0.0
    %1281 = vmatprep.subr.mxu0 0.0
    %1282 = vmatpush2.msra.mxu0 0.0
    %1283 = vmatprep.subr.mxu0 0.0
    %1284 = vmatpush2.msra.mxu0 0.0
    %1285 = vmatprep.subr.mxu0 0.0
    %1286 = vmatpush2.msra.mxu0 0.0
    %1287 = vmatprep.subr.mxu0 0.0
    %1288 = vmatpush2.msra.mxu0 0.0
    %1289 = vmatprep.subr.mxu0 0.0
    %1290 = vmatpush2.msra.mxu0 0.0
    %1291 = vmatprep.subr.mxu0 0.0
    %1292 = vmatpush2.msra.mxu0 0.0
    %1293 = vmatprep.subr.mxu0 0.0
    %1294 = vmatpush2.msra.mxu0 0.0
    %1295 = vmatprep.subr.mxu0 0.0
    %1296 = vmatpush2.msra.mxu0 0.0
    %1297 = vmatprep.mubr.f32.mxu0 0.0
    %1298 = vmatmul.mubr.f32.gmra.mxu0 %v1228
    %v1299 = vpop.f32.mrf.mxu0
    %v1300 = vadd.f32 0.0, %v1299
    %v1301 = vpop.f32.mrf.mxu0
    %1302 = vmatprep.mubr.f32.mxu0 0.0
    %1303 = vmatmul.mubr.f32.gmra.mxu0 %v1231
    %v1304 = vpop.f32.mrf.mxu0
    %v1305 = vadd.f32 0.0, %v1304
    %v1306 = vpop.f32.mrf.mxu0
    %1307 = vdwg.mxu0
    %v1309 = vsel %vm317, %v562, 0
    %v1312 = vsel %vm317, %v635, 0
    %1314 = vmatprep.subr.mxu0 0.0
    %1315 = vmatpush1.msra.mxu0 0.0
    %1316 = vmatprep.subr.mxu0 0.0
    %1317 = vmatpush1.msra.mxu0 0.0
    %1318 = vmatprep.subr.mxu0 0.0
    %1319 = vmatpush1.msra.mxu0 0.0
    %1320 = vmatprep.subr.mxu0 0.0
    %1321 = vmatpush1.msra.mxu0 0.0
    %1322 = vmatprep.subr.mxu0 0.0
    %1323 = vmatpush1.msra.mxu0 0.0
    %1324 = vmatprep.subr.mxu0 0.0
    %1325 = vmatpush1.msra.mxu0 0.0
    %1326 = vmatprep.subr.mxu0 0.0
    %1327 = vmatpush1.msra.mxu0 0.0
    %1328 = vmatprep.subr.mxu0 0.0
    %1329 = vmatpush1.msra.mxu0 0.0
    %1330 = vmatprep.subr.mxu0 0.0
    %1331 = vmatpush1.msra.mxu0 0.0
    %1332 = vmatprep.subr.mxu0 0.0
    %1333 = vmatpush1.msra.mxu0 0.0
    %1334 = vmatprep.subr.mxu0 0.0
    %1335 = vmatpush1.msra.mxu0 0.0
    %1336 = vmatprep.subr.mxu0 0.0
    %1337 = vmatpush1.msra.mxu0 0.0
    %1338 = vmatprep.subr.mxu0 0.0
    %1339 = vmatpush1.msra.mxu0 0.0
    %1340 = vmatprep.subr.mxu0 0.0
    %1341 = vmatpush1.msra.mxu0 0.0
    %1342 = vmatprep.subr.mxu0 0.0
    %1343 = vmatpush1.msra.mxu0 0.0
    %1344 = vmatprep.subr.mxu0 0.0
    %1345 = vmatpush1.msra.mxu0 %v638
    %1346 = vmatprep.subr.mxu0 0.0
    %1347 = vmatpush2.msra.mxu0 0.0
    %1348 = vmatprep.subr.mxu0 0.0
    %1349 = vmatpush2.msra.mxu0 0.0
    %1350 = vmatprep.subr.mxu0 0.0
    %1351 = vmatpush2.msra.mxu0 0.0
    %1352 = vmatprep.subr.mxu0 0.0
    %1353 = vmatpush2.msra.mxu0 0.0
    %1354 = vmatprep.subr.mxu0 0.0
    %1355 = vmatpush2.msra.mxu0 0.0
    %1356 = vmatprep.subr.mxu0 0.0
    %1357 = vmatpush2.msra.mxu0 0.0
    %1358 = vmatprep.subr.mxu0 0.0
    %1359 = vmatpush2.msra.mxu0 0.0
    %1360 = vmatprep.subr.mxu0 0.0
    %1361 = vmatpush2.msra.mxu0 0.0
    %1362 = vmatprep.subr.mxu0 0.0
    %1363 = vmatpush2.msra.mxu0 0.0
    %1364 = vmatprep.subr.mxu0 0.0
    %1365 = vmatpush2.msra.mxu0 0.0
    %1366 = vmatprep.subr.mxu0 0.0
    %1367 = vmatpush2.msra.mxu0 0.0
    %1368 = vmatprep.subr.mxu0 0.0
    %1369 = vmatpush2.msra.mxu0 0.0
    %1370 = vmatprep.subr.mxu0 0.0
    %1371 = vmatpush2.msra.mxu0 0.0
    %1372 = vmatprep.subr.mxu0 0.0
    %1373 = vmatpush2.msra.mxu0 0.0
    %1374 = vmatprep.subr.mxu0 0.0
    %1375 = vmatpush2.msra.mxu0 0.0
    %1376 = vmatprep.subr.mxu0 0.0
    %1377 = vmatpush2.msra.mxu0 0.0
    %1378 = vmatprep.mubr.f32.mxu0 0.0
    %1379 = vmatmul.mubr.f32.gmra.mxu0 %v1309
    %v1380 = vpop.f32.mrf.mxu0
    %v1381 = vadd.f32 %v1300, %v1380
    %v1382 = vpop.f32.mrf.mxu0
    %1383 = vmatprep.mubr.f32.mxu0 0.0
    %1384 = vmatmul.mubr.f32.gmra.mxu0 %v1312
    %v1385 = vpop.f32.mrf.mxu0
    %v1386 = vadd.f32 %v1305, %v1385
    %v1387 = vpop.f32.mrf.mxu0
    %1388 = vdwg.mxu0
    %s1389 = scalar_lea.vmem %s2, 64
    %v1390 = vld [vmem:[%s1389] sm:$0xff]
    %v1391 = vld [vmem:[%s1389 + $0x8] sm:$0xff]
    %v1392 = vld [vmem:[%s1389 + $0x10] sm:$0xff]
    %v1393 = vld [vmem:[%s1389 + $0x18] sm:$0xff]
    %s1394 = scalar_lea.vmem %s3, 2
    %v1395 = vld [vmem:[%s1394] sm:$0x1]
    %v1397 = vlaneseq
    %v1398 = vshrl.u32 %v1397, 7
    %v1399 = vsub.s32 0, %v1398
    %v1400 = vrot.slane %v1395, %v1399
    %1402 = vmatprep.subr.mxu0 0.0
    %1403 = vmatpush1.msra.mxu0 0.0
    %1404 = vmatprep.subr.mxu0 0.0
    %1405 = vmatpush1.msra.mxu0 0.0
    %1406 = vmatprep.subr.mxu0 0.0
    %1407 = vmatpush1.msra.mxu0 0.0
    %1408 = vmatprep.subr.mxu0 0.0
    %1409 = vmatpush1.msra.mxu0 0.0
    %1410 = vmatprep.subr.mxu0 0.0
    %1411 = vmatpush1.msra.mxu0 0.0
    %1412 = vmatprep.subr.mxu0 0.0
    %1413 = vmatpush1.msra.mxu0 0.0
    %1414 = vmatprep.subr.mxu0 0.0
    %1415 = vmatpush1.msra.mxu0 0.0
    %1416 = vmatprep.subr.mxu0 0.0
    %1417 = vmatpush1.msra.mxu0 0.0
    %1418 = vmatprep.subr.mxu0 0.0
    %1419 = vmatpush1.msra.mxu0 0.0
    %1420 = vmatprep.subr.mxu0 0.0
    %1421 = vmatpush1.msra.mxu0 0.0
    %1422 = vmatprep.subr.mxu0 0.0
    %1423 = vmatpush1.msra.mxu0 0.0
    %1424 = vmatprep.subr.mxu0 0.0
    %1425 = vmatpush1.msra.mxu0 0.0
    %1426 = vmatprep.subr.mxu0 0.0
    %1427 = vmatpush1.msra.mxu0 %v1393
    %1428 = vmatprep.subr.mxu0 0.0
    %1429 = vmatpush1.msra.mxu0 %v1392
    %1430 = vmatprep.subr.mxu0 0.0
    %1431 = vmatpush1.msra.mxu0 %v1391
    %1432 = vmatprep.subr.mxu0 0.0
    %1433 = vmatpush1.msra.mxu0 %v1390
    %1434 = vmatprep.subr.mxu0 0.0
    %1435 = vmatpush2.msra.mxu0 0.0
    %1436 = vmatprep.subr.mxu0 0.0
    %1437 = vmatpush2.msra.mxu0 0.0
    %1438 = vmatprep.subr.mxu0 0.0
    %1439 = vmatpush2.msra.mxu0 0.0
    %1440 = vmatprep.subr.mxu0 0.0
    %1441 = vmatpush2.msra.mxu0 0.0
    %1442 = vmatprep.subr.mxu0 0.0
    %1443 = vmatpush2.msra.mxu0 0.0
    %1444 = vmatprep.subr.mxu0 0.0
    %1445 = vmatpush2.msra.mxu0 0.0
    %1446 = vmatprep.subr.mxu0 0.0
    %1447 = vmatpush2.msra.mxu0 0.0
    %1448 = vmatprep.subr.mxu0 0.0
    %1449 = vmatpush2.msra.mxu0 0.0
    %1450 = vmatprep.subr.mxu0 0.0
    %1451 = vmatpush2.msra.mxu0 0.0
    %1452 = vmatprep.subr.mxu0 0.0
    %1453 = vmatpush2.msra.mxu0 0.0
    %1454 = vmatprep.subr.mxu0 0.0
    %1455 = vmatpush2.msra.mxu0 0.0
    %1456 = vmatprep.subr.mxu0 0.0
    %1457 = vmatpush2.msra.mxu0 0.0
    %1458 = vmatprep.subr.mxu0 0.0
    %1459 = vmatpush2.msra.mxu0 0.0
    %1460 = vmatprep.subr.mxu0 0.0
    %1461 = vmatpush2.msra.mxu0 0.0
    %1462 = vmatprep.subr.mxu0 0.0
    %1463 = vmatpush2.msra.mxu0 0.0
    %1464 = vmatprep.subr.mxu0 0.0
    %1465 = vmatpush2.msra.mxu0 0.0
    %1466 = vmatprep.mubr.f32.mxu0 0.0
    %1467 = vmatmul.mubr.f32.gmra.mxu0 %v59
    %v1468 = vpop.f32.mrf.mxu0
    %v1469 = vadd.f32 %v1400, %v1468
    %v1470 = vpop.f32.mrf.mxu0
    %1471 = vmatprep.mubr.f32.mxu0 0.0
    %1472 = vmatmul.mubr.f32.gmra.mxu0 %v62
    %v1473 = vpop.f32.mrf.mxu0
    %v1474 = vadd.f32 %v1400, %v1473
    %v1475 = vpop.f32.mrf.mxu0
    %1476 = vdwg.mxu0
    %v1477 = vmul.f32 %v1469, 0.35355338
    %v1478 = vmul.f32 %v1474, 0.35355338
    %s1479 = scalar_lea.vmem %s2, 192
    %v1480 = vld [vmem:[%s1479] sm:$0xff]
    %v1481 = vld [vmem:[%s1479 + $0x8] sm:$0xff]
    %v1482 = vld [vmem:[%s1479 + $0x10] sm:$0xff]
    %v1483 = vld [vmem:[%s1479 + $0x18] sm:$0xff]
    %s1484 = scalar_lea.vmem %s3, 6
    %v1485 = vld [vmem:[%s1484] sm:$0x1]
    %v1487 = vlaneseq
    %v1488 = vshrl.u32 %v1487, 7
    %v1489 = vsub.s32 0, %v1488
    %v1490 = vrot.slane %v1485, %v1489
    %1492 = vmatprep.subr.mxu0 0.0
    %1493 = vmatpush1.msra.mxu0 0.0
    %1494 = vmatprep.subr.mxu0 0.0
    %1495 = vmatpush1.msra.mxu0 0.0
    %1496 = vmatprep.subr.mxu0 0.0
    %1497 = vmatpush1.msra.mxu0 0.0
    %1498 = vmatprep.subr.mxu0 0.0
    %1499 = vmatpush1.msra.mxu0 0.0
    %1500 = vmatprep.subr.mxu0 0.0
    %1501 = vmatpush1.msra.mxu0 0.0
    %1502 = vmatprep.subr.mxu0 0.0
    %1503 = vmatpush1.msra.mxu0 0.0
    %1504 = vmatprep.subr.mxu0 0.0
    %1505 = vmatpush1.msra.mxu0 0.0
    %1506 = vmatprep.subr.mxu0 0.0
    %1507 = vmatpush1.msra.mxu0 0.0
    %1508 = vmatprep.subr.mxu0 0.0
    %1509 = vmatpush1.msra.mxu0 0.0
    %1510 = vmatprep.subr.mxu0 0.0
    %1511 = vmatpush1.msra.mxu0 0.0
    %1512 = vmatprep.subr.mxu0 0.0
    %1513 = vmatpush1.msra.mxu0 0.0
    %1514 = vmatprep.subr.mxu0 0.0
    %1515 = vmatpush1.msra.mxu0 0.0
    %1516 = vmatprep.subr.mxu0 0.0
    %1517 = vmatpush1.msra.mxu0 %v1483
    %1518 = vmatprep.subr.mxu0 0.0
    %1519 = vmatpush1.msra.mxu0 %v1482
    %1520 = vmatprep.subr.mxu0 0.0
    %1521 = vmatpush1.msra.mxu0 %v1481
    %1522 = vmatprep.subr.mxu0 0.0
    %1523 = vmatpush1.msra.mxu0 %v1480
    %1524 = vmatprep.subr.mxu0 0.0
    %1525 = vmatpush2.msra.mxu0 0.0
    %1526 = vmatprep.subr.mxu0 0.0
    %1527 = vmatpush2.msra.mxu0 0.0
    %1528 = vmatprep.subr.mxu0 0.0
    %1529 = vmatpush2.msra.mxu0 0.0
    %1530 = vmatprep.subr.mxu0 0.0
    %1531 = vmatpush2.msra.mxu0 0.0
    %1532 = vmatprep.subr.mxu0 0.0
    %1533 = vmatpush2.msra.mxu0 0.0
    %1534 = vmatprep.subr.mxu0 0.0
    %1535 = vmatpush2.msra.mxu0 0.0
    %1536 = vmatprep.subr.mxu0 0.0
    %1537 = vmatpush2.msra.mxu0 0.0
    %1538 = vmatprep.subr.mxu0 0.0
    %1539 = vmatpush2.msra.mxu0 0.0
    %1540 = vmatprep.subr.mxu0 0.0
    %1541 = vmatpush2.msra.mxu0 0.0
    %1542 = vmatprep.subr.mxu0 0.0
    %1543 = vmatpush2.msra.mxu0 0.0
    %1544 = vmatprep.subr.mxu0 0.0
    %1545 = vmatpush2.msra.mxu0 0.0
    %1546 = vmatprep.subr.mxu0 0.0
    %1547 = vmatpush2.msra.mxu0 0.0
    %1548 = vmatprep.subr.mxu0 0.0
    %1549 = vmatpush2.msra.mxu0 0.0
    %1550 = vmatprep.subr.mxu0 0.0
    %1551 = vmatpush2.msra.mxu0 0.0
    %1552 = vmatprep.subr.mxu0 0.0
    %1553 = vmatpush2.msra.mxu0 0.0
    %1554 = vmatprep.subr.mxu0 0.0
    %1555 = vmatpush2.msra.mxu0 0.0
    %1556 = vmatprep.mubr.f32.mxu0 0.0
    %1557 = vmatmul.mubr.f32.gmra.mxu0 %v59
    %v1558 = vpop.f32.mrf.mxu0
    %v1559 = vadd.f32 %v1490, %v1558
    %v1560 = vpop.f32.mrf.mxu0
    %1561 = vmatprep.mubr.f32.mxu0 0.0
    %1562 = vmatmul.mubr.f32.gmra.mxu0 %v62
    %v1563 = vpop.f32.mrf.mxu0
    %v1564 = vadd.f32 %v1490, %v1563
    %v1565 = vpop.f32.mrf.mxu0
    %1566 = vdwg.mxu0
    %s1567 = scalar_lea.vmem %s2, 320
    %v1568 = vld [vmem:[%s1567] sm:$0xff]
    %v1569 = vld [vmem:[%s1567 + $0x8] sm:$0xff]
    %v1570 = vld [vmem:[%s1567 + $0x10] sm:$0xff]
    %v1571 = vld [vmem:[%s1567 + $0x18] sm:$0xff]
    %s1572 = scalar_lea.vmem %s3, 10
    %v1573 = vld [vmem:[%s1572] sm:$0x1]
    %v1575 = vlaneseq
    %v1576 = vshrl.u32 %v1575, 7
    %v1577 = vsub.s32 0, %v1576
    %v1578 = vrot.slane %v1573, %v1577
    %1580 = vmatprep.subr.mxu0 0.0
    %1581 = vmatpush1.msra.mxu0 0.0
    %1582 = vmatprep.subr.mxu0 0.0
    %1583 = vmatpush1.msra.mxu0 0.0
    %1584 = vmatprep.subr.mxu0 0.0
    %1585 = vmatpush1.msra.mxu0 0.0
    %1586 = vmatprep.subr.mxu0 0.0
    %1587 = vmatpush1.msra.mxu0 0.0
    %1588 = vmatprep.subr.mxu0 0.0
    %1589 = vmatpush1.msra.mxu0 0.0
    %1590 = vmatprep.subr.mxu0 0.0
    %1591 = vmatpush1.msra.mxu0 0.0
    %1592 = vmatprep.subr.mxu0 0.0
    %1593 = vmatpush1.msra.mxu0 0.0
    %1594 = vmatprep.subr.mxu0 0.0
    %1595 = vmatpush1.msra.mxu0 0.0
    %1596 = vmatprep.subr.mxu0 0.0
    %1597 = vmatpush1.msra.mxu0 0.0
    %1598 = vmatprep.subr.mxu0 0.0
    %1599 = vmatpush1.msra.mxu0 0.0
    %1600 = vmatprep.subr.mxu0 0.0
    %1601 = vmatpush1.msra.mxu0 0.0
    %1602 = vmatprep.subr.mxu0 0.0
    %1603 = vmatpush1.msra.mxu0 0.0
    %1604 = vmatprep.subr.mxu0 0.0
    %1605 = vmatpush1.msra.mxu0 %v1571
    %1606 = vmatprep.subr.mxu0 0.0
    %1607 = vmatpush1.msra.mxu0 %v1570
    %1608 = vmatprep.subr.mxu0 0.0
    %1609 = vmatpush1.msra.mxu0 %v1569
    %1610 = vmatprep.subr.mxu0 0.0
    %1611 = vmatpush1.msra.mxu0 %v1568
    %1612 = vmatprep.subr.mxu0 0.0
    %1613 = vmatpush2.msra.mxu0 0.0
    %1614 = vmatprep.subr.mxu0 0.0
    %1615 = vmatpush2.msra.mxu0 0.0
    %1616 = vmatprep.subr.mxu0 0.0
    %1617 = vmatpush2.msra.mxu0 0.0
    %1618 = vmatprep.subr.mxu0 0.0
    %1619 = vmatpush2.msra.mxu0 0.0
    %1620 = vmatprep.subr.mxu0 0.0
    %1621 = vmatpush2.msra.mxu0 0.0
    %1622 = vmatprep.subr.mxu0 0.0
    %1623 = vmatpush2.msra.mxu0 0.0
    %1624 = vmatprep.subr.mxu0 0.0
    %1625 = vmatpush2.msra.mxu0 0.0
    %1626 = vmatprep.subr.mxu0 0.0
    %1627 = vmatpush2.msra.mxu0 0.0
    %1628 = vmatprep.subr.mxu0 0.0
    %1629 = vmatpush2.msra.mxu0 0.0
    %1630 = vmatprep.subr.mxu0 0.0
    %1631 = vmatpush2.msra.mxu0 0.0
    %1632 = vmatprep.subr.mxu0 0.0
    %1633 = vmatpush2.msra.mxu0 0.0
    %1634 = vmatprep.subr.mxu0 0.0
    %1635 = vmatpush2.msra.mxu0 0.0
    %1636 = vmatprep.subr.mxu0 0.0
    %1637 = vmatpush2.msra.mxu0 0.0
    %1638 = vmatprep.subr.mxu0 0.0
    %1639 = vmatpush2.msra.mxu0 0.0
    %1640 = vmatprep.subr.mxu0 0.0
    %1641 = vmatpush2.msra.mxu0 0.0
    %1642 = vmatprep.subr.mxu0 0.0
    %1643 = vmatpush2.msra.mxu0 0.0
    %1644 = vmatprep.mubr.f32.mxu0 0.0
    %1645 = vmatmul.mubr.f32.gmra.mxu0 %v59
    %v1646 = vpop.f32.mrf.mxu0
    %v1647 = vadd.f32 %v1578, %v1646
    %v1648 = vpop.f32.mrf.mxu0
    %1649 = vmatprep.mubr.f32.mxu0 0.0
    %1650 = vmatmul.mubr.f32.gmra.mxu0 %v62
    %v1651 = vpop.f32.mrf.mxu0
    %v1652 = vadd.f32 %v1578, %v1651
    %v1653 = vpop.f32.mrf.mxu0
    %1654 = vdwg.mxu0
    %v1656 = vsel %vm317, %v1477, 0
    %v1659 = vsel %vm317, %v1559, 0
    %1661 = vmatprep.subr.mxu0 0.0
    %1662 = vmatpush1.xpose.msra.mxu0 0.0
    %1663 = vmatprep.subr.mxu0 0.0
    %1664 = vmatpush1.xpose.msra.mxu0 0.0
    %1665 = vmatprep.subr.mxu0 0.0
    %1666 = vmatpush1.xpose.msra.mxu0 0.0
    %1667 = vmatprep.subr.mxu0 0.0
    %1668 = vmatpush1.xpose.msra.mxu0 0.0
    %1669 = vmatprep.subr.mxu0 0.0
    %1670 = vmatpush1.xpose.msra.mxu0 0.0
    %1671 = vmatprep.subr.mxu0 0.0
    %1672 = vmatpush1.xpose.msra.mxu0 0.0
    %1673 = vmatprep.subr.mxu0 0.0
    %1674 = vmatpush1.xpose.msra.mxu0 0.0
    %1675 = vmatprep.subr.mxu0 0.0
    %1676 = vmatpush1.xpose.msra.mxu0 0.0
    %1677 = vmatprep.subr.mxu0 0.0
    %1678 = vmatpush1.xpose.msra.mxu0 0.0
    %1679 = vmatprep.subr.mxu0 0.0
    %1680 = vmatpush1.xpose.msra.mxu0 0.0
    %1681 = vmatprep.subr.mxu0 0.0
    %1682 = vmatpush1.xpose.msra.mxu0 0.0
    %1683 = vmatprep.subr.mxu0 0.0
    %1684 = vmatpush1.xpose.msra.mxu0 0.0
    %1685 = vmatprep.subr.mxu0 0.0
    %1686 = vmatpush1.xpose.msra.mxu0 0.0
    %1687 = vmatprep.subr.mxu0 0.0
    %1688 = vmatpush1.xpose.msra.mxu0 0.0
    %1689 = vmatprep.subr.mxu0 0.0
    %1690 = vmatpush1.xpose.msra.mxu0 0.0
    %1691 = vmatprep.subr.mxu0 0.0
    %1692 = vmatpush1.xpose.msra.mxu0 %v1659
    %1693 = vmatprep.subr.mxu0 0.0
    %1694 = vmatpush2.xpose.msra.mxu0 0.0
    %1695 = vmatprep.subr.mxu0 0.0
    %1696 = vmatpush2.xpose.msra.mxu0 0.0
    %1697 = vmatprep.subr.mxu0 0.0
    %1698 = vmatpush2.xpose.msra.mxu0 0.0
    %1699 = vmatprep.subr.mxu0 0.0
    %1700 = vmatpush2.xpose.msra.mxu0 0.0
    %1701 = vmatprep.subr.mxu0 0.0
    %1702 = vmatpush2.xpose.msra.mxu0 0.0
    %1703 = vmatprep.subr.mxu0 0.0
    %1704 = vmatpush2.xpose.msra.mxu0 0.0
    %1705 = vmatprep.subr.mxu0 0.0
    %1706 = vmatpush2.xpose.msra.mxu0 0.0
    %1707 = vmatprep.subr.mxu0 0.0
    %1708 = vmatpush2.xpose.msra.mxu0 0.0
    %1709 = vmatprep.subr.mxu0 0.0
    %1710 = vmatpush2.xpose.msra.mxu0 0.0
    %1711 = vmatprep.subr.mxu0 0.0
    %1712 = vmatpush2.xpose.msra.mxu0 0.0
    %1713 = vmatprep.subr.mxu0 0.0
    %1714 = vmatpush2.xpose.msra.mxu0 0.0
    %1715 = vmatprep.subr.mxu0 0.0
    %1716 = vmatpush2.xpose.msra.mxu0 0.0
    %1717 = vmatprep.subr.mxu0 0.0
    %1718 = vmatpush2.xpose.msra.mxu0 0.0
    %1719 = vmatprep.subr.mxu0 0.0
    %1720 = vmatpush2.xpose.msra.mxu0 0.0
    %1721 = vmatprep.subr.mxu0 0.0
    %1722 = vmatpush2.xpose.msra.mxu0 0.0
    %1723 = vmatprep.subr.mxu0 0.0
    %1724 = vmatpush2.xpose.msra.mxu0 0.0
    %1725 = vmatprep.mubr.f32.mxu0 0.0
    %1726 = vmatmul.mubr.f32.gmra.mxu0 %v1656
    %v1727 = vpop.f32.mrf.mxu0
    %v1728 = vadd.f32 0.0, %v1727
    %v1729 = vpop.f32.mrf.mxu0
    %1730 = vdwg.mxu0
    %v1732 = vsel %vm317, %v1478, 0
    %v1735 = vsel %vm317, %v1564, 0
    %1737 = vmatprep.subr.mxu0 0.0
    %1738 = vmatpush1.xpose.msra.mxu0 0.0
    %1739 = vmatprep.subr.mxu0 0.0
    %1740 = vmatpush1.xpose.msra.mxu0 0.0
    %1741 = vmatprep.subr.mxu0 0.0
    %1742 = vmatpush1.xpose.msra.mxu0 0.0
    %1743 = vmatprep.subr.mxu0 0.0
    %1744 = vmatpush1.xpose.msra.mxu0 0.0
    %1745 = vmatprep.subr.mxu0 0.0
    %1746 = vmatpush1.xpose.msra.mxu0 0.0
    %1747 = vmatprep.subr.mxu0 0.0
    %1748 = vmatpush1.xpose.msra.mxu0 0.0
    %1749 = vmatprep.subr.mxu0 0.0
    %1750 = vmatpush1.xpose.msra.mxu0 0.0
    %1751 = vmatprep.subr.mxu0 0.0
    %1752 = vmatpush1.xpose.msra.mxu0 0.0
    %1753 = vmatprep.subr.mxu0 0.0
    %1754 = vmatpush1.xpose.msra.mxu0 0.0
    %1755 = vmatprep.subr.mxu0 0.0
    %1756 = vmatpush1.xpose.msra.mxu0 0.0
    %1757 = vmatprep.subr.mxu0 0.0
    %1758 = vmatpush1.xpose.msra.mxu0 0.0
    %1759 = vmatprep.subr.mxu0 0.0
    %1760 = vmatpush1.xpose.msra.mxu0 0.0
    %1761 = vmatprep.subr.mxu0 0.0
    %1762 = vmatpush1.xpose.msra.mxu0 0.0
    %1763 = vmatprep.subr.mxu0 0.0
    %1764 = vmatpush1.xpose.msra.mxu0 0.0
    %1765 = vmatprep.subr.mxu0 0.0
    %1766 = vmatpush1.xpose.msra.mxu0 0.0
    %1767 = vmatprep.subr.mxu0 0.0
    %1768 = vmatpush1.xpose.msra.mxu0 %v1735
    %1769 = vmatprep.subr.mxu0 0.0
    %1770 = vmatpush2.xpose.msra.mxu0 0.0
    %1771 = vmatprep.subr.mxu0 0.0
    %1772 = vmatpush2.xpose.msra.mxu0 0.0
    %1773 = vmatprep.subr.mxu0 0.0
    %1774 = vmatpush2.xpose.msra.mxu0 0.0
    %1775 = vmatprep.subr.mxu0 0.0
    %1776 = vmatpush2.xpose.msra.mxu0 0.0
    %1777 = vmatprep.subr.mxu0 0.0
    %1778 = vmatpush2.xpose.msra.mxu0 0.0
    %1779 = vmatprep.subr.mxu0 0.0
    %1780 = vmatpush2.xpose.msra.mxu0 0.0
    %1781 = vmatprep.subr.mxu0 0.0
    %1782 = vmatpush2.xpose.msra.mxu0 0.0
    %1783 = vmatprep.subr.mxu0 0.0
    %1784 = vmatpush2.xpose.msra.mxu0 0.0
    %1785 = vmatprep.subr.mxu0 0.0
    %1786 = vmatpush2.xpose.msra.mxu0 0.0
    %1787 = vmatprep.subr.mxu0 0.0
    %1788 = vmatpush2.xpose.msra.mxu0 0.0
    %1789 = vmatprep.subr.mxu0 0.0
    %1790 = vmatpush2.xpose.msra.mxu0 0.0
    %1791 = vmatprep.subr.mxu0 0.0
    %1792 = vmatpush2.xpose.msra.mxu0 0.0
    %1793 = vmatprep.subr.mxu0 0.0
    %1794 = vmatpush2.xpose.msra.mxu0 0.0
    %1795 = vmatprep.subr.mxu0 0.0
    %1796 = vmatpush2.xpose.msra.mxu0 0.0
    %1797 = vmatprep.subr.mxu0 0.0
    %1798 = vmatpush2.xpose.msra.mxu0 0.0
    %1799 = vmatprep.subr.mxu0 0.0
    %1800 = vmatpush2.xpose.msra.mxu0 0.0
    %1801 = vmatprep.mubr.f32.mxu0 0.0
    %1802 = vmatmul.mubr.f32.gmra.mxu0 %v1732
    %v1803 = vpop.f32.mrf.mxu0
    %v1804 = vadd.f32 0.0, %v1803
    %v1805 = vpop.f32.mrf.mxu0
    %1806 = vdwg.mxu0
    %v1807 = vsel %vm317, %v1728, -inf
    %1808 = vmax.xlane.f32.xlu0 %v1807
    %v1809 = vpop.xlane.xlu0 %1808
    %v1810 = vsel %vm317, %v1804, -inf
    %1811 = vmax.xlane.f32.xlu0 %v1810
    %v1812 = vpop.xlane.xlu0 %1811
    %v1813 = vsub.f32 %v1728, %v1809
    %v1814 = vsub.f32 %v1804, %v1812
    %v1815 = vmul.f32 %v1813, 1.442695
    %v1816 = vpow.pop %v1815
    %v1817 = vmul.f32 %v1814, 1.442695
    %v1818 = vpow.pop %v1817
    %v1819 = vsel %vm317, %v1816, 0.0
    %1820 = vadd.xlane.f32.xlu0 %v1819
    %v1821 = vpop.xlane.xlu0 %1820
    %v1822 = vsel %vm317, %v1818, 0.0
    %1823 = vadd.xlane.f32.xlu0 %v1822
    %v1824 = vpop.xlane.xlu0 %1823
    %v1825 = vrcp.pop %v1821
    %v1826 = vmul.f32 %v1816, %v1825
    %v1827 = vrcp.pop %v1824
    %v1828 = vmul.f32 %v1818, %v1827
    %v1830 = vsel %vm317, %v1826, 0
    %1832 = vmatprep.subr.mxu0 0.0
    %1833 = vmatpush1.msra.mxu0 0.0
    %1834 = vmatprep.subr.mxu0 0.0
    %1835 = vmatpush1.msra.mxu0 0.0
    %1836 = vmatprep.subr.mxu0 0.0
    %1837 = vmatpush1.msra.mxu0 0.0
    %1838 = vmatprep.subr.mxu0 0.0
    %1839 = vmatpush1.msra.mxu0 0.0
    %1840 = vmatprep.subr.mxu0 0.0
    %1841 = vmatpush1.msra.mxu0 0.0
    %1842 = vmatprep.subr.mxu0 0.0
    %1843 = vmatpush1.msra.mxu0 0.0
    %1844 = vmatprep.subr.mxu0 0.0
    %1845 = vmatpush1.msra.mxu0 0.0
    %1846 = vmatprep.subr.mxu0 0.0
    %1847 = vmatpush1.msra.mxu0 0.0
    %1848 = vmatprep.subr.mxu0 0.0
    %1849 = vmatpush1.msra.mxu0 0.0
    %1850 = vmatprep.subr.mxu0 0.0
    %1851 = vmatpush1.msra.mxu0 0.0
    %1852 = vmatprep.subr.mxu0 0.0
    %1853 = vmatpush1.msra.mxu0 0.0
    %1854 = vmatprep.subr.mxu0 0.0
    %1855 = vmatpush1.msra.mxu0 0.0
    %1856 = vmatprep.subr.mxu0 0.0
    %1857 = vmatpush1.msra.mxu0 0.0
    %1858 = vmatprep.subr.mxu0 0.0
    %1859 = vmatpush1.msra.mxu0 0.0
    %1860 = vmatprep.subr.mxu0 0.0
    %1861 = vmatpush1.msra.mxu0 0.0
    %1862 = vmatprep.subr.mxu0 0.0
    %1863 = vmatpush1.msra.mxu0 %v1647
    %1864 = vmatprep.subr.mxu0 0.0
    %1865 = vmatpush2.msra.mxu0 0.0
    %1866 = vmatprep.subr.mxu0 0.0
    %1867 = vmatpush2.msra.mxu0 0.0
    %1868 = vmatprep.subr.mxu0 0.0
    %1869 = vmatpush2.msra.mxu0 0.0
    %1870 = vmatprep.subr.mxu0 0.0
    %1871 = vmatpush2.msra.mxu0 0.0
    %1872 = vmatprep.subr.mxu0 0.0
    %1873 = vmatpush2.msra.mxu0 0.0
    %1874 = vmatprep.subr.mxu0 0.0
    %1875 = vmatpush2.msra.mxu0 0.0
    %1876 = vmatprep.subr.mxu0 0.0
    %1877 = vmatpush2.msra.mxu0 0.0
    %1878 = vmatprep.subr.mxu0 0.0
    %1879 = vmatpush2.msra.mxu0 0.0
    %1880 = vmatprep.subr.mxu0 0.0
    %1881 = vmatpush2.msra.mxu0 0.0
    %1882 = vmatprep.subr.mxu0 0.0
    %1883 = vmatpush2.msra.mxu0 0.0
    %1884 = vmatprep.subr.mxu0 0.0
    %1885 = vmatpush2.msra.mxu0 0.0
    %1886 = vmatprep.subr.mxu0 0.0
    %1887 = vmatpush2.msra.mxu0 0.0
    %1888 = vmatprep.subr.mxu0 0.0
    %1889 = vmatpush2.msra.mxu0 0.0
    %1890 = vmatprep.subr.mxu0 0.0
    %1891 = vmatpush2.msra.mxu0 0.0
    %1892 = vmatprep.subr.mxu0 0.0
    %1893 = vmatpush2.msra.mxu0 0.0
    %1894 = vmatprep.subr.mxu0 0.0
    %1895 = vmatpush2.msra.mxu0 0.0
    %1896 = vmatprep.mubr.f32.mxu0 0.0
    %1897 = vmatmul.mubr.f32.gmra.mxu0 %v1830
    %v1898 = vpop.f32.mrf.mxu0
    %v1899 = vadd.f32 0.0, %v1898
    %v1900 = vpop.f32.mrf.mxu0
    %1901 = vdwg.mxu0
    %v1903 = vsel %vm317, %v1828, 0
    %1905 = vmatprep.subr.mxu0 0.0
    %1906 = vmatpush1.msra.mxu0 0.0
    %1907 = vmatprep.subr.mxu0 0.0
    %1908 = vmatpush1.msra.mxu0 0.0
    %1909 = vmatprep.subr.mxu0 0.0
    %1910 = vmatpush1.msra.mxu0 0.0
    %1911 = vmatprep.subr.mxu0 0.0
    %1912 = vmatpush1.msra.mxu0 0.0
    %1913 = vmatprep.subr.mxu0 0.0
    %1914 = vmatpush1.msra.mxu0 0.0
    %1915 = vmatprep.subr.mxu0 0.0
    %1916 = vmatpush1.msra.mxu0 0.0
    %1917 = vmatprep.subr.mxu0 0.0
    %1918 = vmatpush1.msra.mxu0 0.0
    %1919 = vmatprep.subr.mxu0 0.0
    %1920 = vmatpush1.msra.mxu0 0.0
    %1921 = vmatprep.subr.mxu0 0.0
    %1922 = vmatpush1.msra.mxu0 0.0
    %1923 = vmatprep.subr.mxu0 0.0
    %1924 = vmatpush1.msra.mxu0 0.0
    %1925 = vmatprep.subr.mxu0 0.0
    %1926 = vmatpush1.msra.mxu0 0.0
    %1927 = vmatprep.subr.mxu0 0.0
    %1928 = vmatpush1.msra.mxu0 0.0
    %1929 = vmatprep.subr.mxu0 0.0
    %1930 = vmatpush1.msra.mxu0 0.0
    %1931 = vmatprep.subr.mxu0 0.0
    %1932 = vmatpush1.msra.mxu0 0.0
    %1933 = vmatprep.subr.mxu0 0.0
    %1934 = vmatpush1.msra.mxu0 0.0
    %1935 = vmatprep.subr.mxu0 0.0
    %1936 = vmatpush1.msra.mxu0 %v1652
    %1937 = vmatprep.subr.mxu0 0.0
    %1938 = vmatpush2.msra.mxu0 0.0
    %1939 = vmatprep.subr.mxu0 0.0
    %1940 = vmatpush2.msra.mxu0 0.0
    %1941 = vmatprep.subr.mxu0 0.0
    %1942 = vmatpush2.msra.mxu0 0.0
    %1943 = vmatprep.subr.mxu0 0.0
    %1944 = vmatpush2.msra.mxu0 0.0
    %1945 = vmatprep.subr.mxu0 0.0
    %1946 = vmatpush2.msra.mxu0 0.0
    %1947 = vmatprep.subr.mxu0 0.0
    %1948 = vmatpush2.msra.mxu0 0.0
    %1949 = vmatprep.subr.mxu0 0.0
    %1950 = vmatpush2.msra.mxu0 0.0
    %1951 = vmatprep.subr.mxu0 0.0
    %1952 = vmatpush2.msra.mxu0 0.0
    %1953 = vmatprep.subr.mxu0 0.0
    %1954 = vmatpush2.msra.mxu0 0.0
    %1955 = vmatprep.subr.mxu0 0.0
    %1956 = vmatpush2.msra.mxu0 0.0
    %1957 = vmatprep.subr.mxu0 0.0
    %1958 = vmatpush2.msra.mxu0 0.0
    %1959 = vmatprep.subr.mxu0 0.0
    %1960 = vmatpush2.msra.mxu0 0.0
    %1961 = vmatprep.subr.mxu0 0.0
    %1962 = vmatpush2.msra.mxu0 0.0
    %1963 = vmatprep.subr.mxu0 0.0
    %1964 = vmatpush2.msra.mxu0 0.0
    %1965 = vmatprep.subr.mxu0 0.0
    %1966 = vmatpush2.msra.mxu0 0.0
    %1967 = vmatprep.subr.mxu0 0.0
    %1968 = vmatpush2.msra.mxu0 0.0
    %1969 = vmatprep.mubr.f32.mxu0 0.0
    %1970 = vmatmul.mubr.f32.gmra.mxu0 %v1903
    %v1971 = vpop.f32.mrf.mxu0
    %v1972 = vadd.f32 0.0, %v1971
    %v1973 = vpop.f32.mrf.mxu0
    %1974 = vdwg.mxu0
    %s1975 = scalar_lea.vmem %s4, 16
    %v1976 = vld [vmem:[%s1975] sm:$0xff]
    %v1978 = vsel %vm317, %v1899, 0
    %v1981 = vsel %vm317, %v1972, 0
    %1983 = vmatprep.subr.mxu0 0.0
    %1984 = vmatpush1.msra.mxu0 0.0
    %1985 = vmatprep.subr.mxu0 0.0
    %1986 = vmatpush1.msra.mxu0 0.0
    %1987 = vmatprep.subr.mxu0 0.0
    %1988 = vmatpush1.msra.mxu0 0.0
    %1989 = vmatprep.subr.mxu0 0.0
    %1990 = vmatpush1.msra.mxu0 0.0
    %1991 = vmatprep.subr.mxu0 0.0
    %1992 = vmatpush1.msra.mxu0 0.0
    %1993 = vmatprep.subr.mxu0 0.0
    %1994 = vmatpush1.msra.mxu0 0.0
    %1995 = vmatprep.subr.mxu0 0.0
    %1996 = vmatpush1.msra.mxu0 0.0
    %1997 = vmatprep.subr.mxu0 0.0
    %1998 = vmatpush1.msra.mxu0 0.0
    %1999 = vmatprep.subr.mxu0 0.0
    %2000 = vmatpush1.msra.mxu0 0.0
    %2001 = vmatprep.subr.mxu0 0.0
    %2002 = vmatpush1.msra.mxu0 0.0
    %2003 = vmatprep.subr.mxu0 0.0
    %2004 = vmatpush1.msra.mxu0 0.0
    %2005 = vmatprep.subr.mxu0 0.0
    %2006 = vmatpush1.msra.mxu0 0.0
    %2007 = vmatprep.subr.mxu0 0.0
    %2008 = vmatpush1.msra.mxu0 0.0
    %2009 = vmatprep.subr.mxu0 0.0
    %2010 = vmatpush1.msra.mxu0 0.0
    %2011 = vmatprep.subr.mxu0 0.0
    %2012 = vmatpush1.msra.mxu0 0.0
    %2013 = vmatprep.subr.mxu0 0.0
    %2014 = vmatpush1.msra.mxu0 %v1976
    %2015 = vmatprep.subr.mxu0 0.0
    %2016 = vmatpush2.msra.mxu0 0.0
    %2017 = vmatprep.subr.mxu0 0.0
    %2018 = vmatpush2.msra.mxu0 0.0
    %2019 = vmatprep.subr.mxu0 0.0
    %2020 = vmatpush2.msra.mxu0 0.0
    %2021 = vmatprep.subr.mxu0 0.0
    %2022 = vmatpush2.msra.mxu0 0.0
    %2023 = vmatprep.subr.mxu0 0.0
    %2024 = vmatpush2.msra.mxu0 0.0
    %2025 = vmatprep.subr.mxu0 0.0
    %2026 = vmatpush2.msra.mxu0 0.0
    %2027 = vmatprep.subr.mxu0 0.0
    %2028 = vmatpush2.msra.mxu0 0.0
    %2029 = vmatprep.subr.mxu0 0.0
    %2030 = vmatpush2.msra.mxu0 0.0
    %2031 = vmatprep.subr.mxu0 0.0
    %2032 = vmatpush2.msra.mxu0 0.0
    %2033 = vmatprep.subr.mxu0 0.0
    %2034 = vmatpush2.msra.mxu0 0.0
    %2035 = vmatprep.subr.mxu0 0.0
    %2036 = vmatpush2.msra.mxu0 0.0
    %2037 = vmatprep.subr.mxu0 0.0
    %2038 = vmatpush2.msra.mxu0 0.0
    %2039 = vmatprep.subr.mxu0 0.0
    %2040 = vmatpush2.msra.mxu0 0.0
    %2041 = vmatprep.subr.mxu0 0.0
    %2042 = vmatpush2.msra.mxu0 0.0
    %2043 = vmatprep.subr.mxu0 0.0
    %2044 = vmatpush2.msra.mxu0 0.0
    %2045 = vmatprep.subr.mxu0 0.0
    %2046 = vmatpush2.msra.mxu0 0.0
    %2047 = vmatprep.mubr.f32.mxu0 0.0
    %2048 = vmatmul.mubr.f32.gmra.mxu0 %v1978
    %v2049 = vpop.f32.mrf.mxu0
    %v2050 = vadd.f32 0.0, %v2049
    %v2051 = vpop.f32.mrf.mxu0
    %2052 = vmatprep.mubr.f32.mxu0 0.0
    %2053 = vmatmul.mubr.f32.gmra.mxu0 %v1981
    %v2054 = vpop.f32.mrf.mxu0
    %v2055 = vadd.f32 0.0, %v2054
    %v2056 = vpop.f32.mrf.mxu0
    %2057 = vdwg.mxu0
    %v2058 = vadd.f32 %v1381, %v2050
    %v2059 = vadd.f32 %v1386, %v2055
    %s2060 = scalar_lea.vmem %s2, 96
    %v2061 = vld [vmem:[%s2060] sm:$0xff]
    %v2062 = vld [vmem:[%s2060 + $0x8] sm:$0xff]
    %v2063 = vld [vmem:[%s2060 + $0x10] sm:$0xff]
    %v2064 = vld [vmem:[%s2060 + $0x18] sm:$0xff]
    %s2065 = scalar_lea.vmem %s3, 3
    %v2066 = vld [vmem:[%s2065] sm:$0x1]
    %v2068 = vlaneseq
    %v2069 = vshrl.u32 %v2068, 7
    %v2070 = vsub.s32 0, %v2069
    %v2071 = vrot.slane %v2066, %v2070
    %2073 = vmatprep.subr.mxu0 0.0
    %2074 = vmatpush1.msra.mxu0 0.0
    %2075 = vmatprep.subr.mxu0 0.0
    %2076 = vmatpush1.msra.mxu0 0.0
    %2077 = vmatprep.subr.mxu0 0.0
    %2078 = vmatpush1.msra.mxu0 0.0
    %2079 = vmatprep.subr.mxu0 0.0
    %2080 = vmatpush1.msra.mxu0 0.0
    %2081 = vmatprep.subr.mxu0 0.0
    %2082 = vmatpush1.msra.mxu0 0.0
    %2083 = vmatprep.subr.mxu0 0.0
    %2084 = vmatpush1.msra.mxu0 0.0
    %2085 = vmatprep.subr.mxu0 0.0
    %2086 = vmatpush1.msra.mxu0 0.0
    %2087 = vmatprep.subr.mxu0 0.0
    %2088 = vmatpush1.msra.mxu0 0.0
    %2089 = vmatprep.subr.mxu0 0.0
    %2090 = vmatpush1.msra.mxu0 0.0
    %2091 = vmatprep.subr.mxu0 0.0
    %2092 = vmatpush1.msra.mxu0 0.0
    %2093 = vmatprep.subr.mxu0 0.0
    %2094 = vmatpush1.msra.mxu0 0.0
    %2095 = vmatprep.subr.mxu0 0.0
    %2096 = vmatpush1.msra.mxu0 0.0
    %2097 = vmatprep.subr.mxu0 0.0
    %2098 = vmatpush1.msra.mxu0 %v2064
    %2099 = vmatprep.subr.mxu0 0.0
    %2100 = vmatpush1.msra.mxu0 %v2063
    %2101 = vmatprep.subr.mxu0 0.0
    %2102 = vmatpush1.msra.mxu0 %v2062
    %2103 = vmatprep.subr.mxu0 0.0
    %2104 = vmatpush1.msra.mxu0 %v2061
    %2105 = vmatprep.subr.mxu0 0.0
    %2106 = vmatpush2.msra.mxu0 0.0
    %2107 = vmatprep.subr.mxu0 0.0
    %2108 = vmatpush2.msra.mxu0 0.0
    %2109 = vmatprep.subr.mxu0 0.0
    %2110 = vmatpush2.msra.mxu0 0.0
    %2111 = vmatprep.subr.mxu0 0.0
    %2112 = vmatpush2.msra.mxu0 0.0
    %2113 = vmatprep.subr.mxu0 0.0
    %2114 = vmatpush2.msra.mxu0 0.0
    %2115 = vmatprep.subr.mxu0 0.0
    %2116 = vmatpush2.msra.mxu0 0.0
    %2117 = vmatprep.subr.mxu0 0.0
    %2118 = vmatpush2.msra.mxu0 0.0
    %2119 = vmatprep.subr.mxu0 0.0
    %2120 = vmatpush2.msra.mxu0 0.0
    %2121 = vmatprep.subr.mxu0 0.0
    %2122 = vmatpush2.msra.mxu0 0.0
    %2123 = vmatprep.subr.mxu0 0.0
    %2124 = vmatpush2.msra.mxu0 0.0
    %2125 = vmatprep.subr.mxu0 0.0
    %2126 = vmatpush2.msra.mxu0 0.0
    %2127 = vmatprep.subr.mxu0 0.0
    %2128 = vmatpush2.msra.mxu0 0.0
    %2129 = vmatprep.subr.mxu0 0.0
    %2130 = vmatpush2.msra.mxu0 0.0
    %2131 = vmatprep.subr.mxu0 0.0
    %2132 = vmatpush2.msra.mxu0 0.0
    %2133 = vmatprep.subr.mxu0 0.0
    %2134 = vmatpush2.msra.mxu0 0.0
    %2135 = vmatprep.subr.mxu0 0.0
    %2136 = vmatpush2.msra.mxu0 0.0
    %2137 = vmatprep.mubr.f32.mxu0 0.0
    %2138 = vmatmul.mubr.f32.gmra.mxu0 %v59
    %v2139 = vpop.f32.mrf.mxu0
    %v2140 = vadd.f32 %v2071, %v2139
    %v2141 = vpop.f32.mrf.mxu0
    %2142 = vmatprep.mubr.f32.mxu0 0.0
    %2143 = vmatmul.mubr.f32.gmra.mxu0 %v62
    %v2144 = vpop.f32.mrf.mxu0
    %v2145 = vadd.f32 %v2071, %v2144
    %v2146 = vpop.f32.mrf.mxu0
    %2147 = vdwg.mxu0
    %v2148 = vmul.f32 %v2140, 0.35355338
    %v2149 = vmul.f32 %v2145, 0.35355338
    %s2150 = scalar_lea.vmem %s2, 224
    %v2151 = vld [vmem:[%s2150] sm:$0xff]
    %v2152 = vld [vmem:[%s2150 + $0x8] sm:$0xff]
    %v2153 = vld [vmem:[%s2150 + $0x10] sm:$0xff]
    %v2154 = vld [vmem:[%s2150 + $0x18] sm:$0xff]
    %s2155 = scalar_lea.vmem %s3, 7
    %v2156 = vld [vmem:[%s2155] sm:$0x1]
    %v2158 = vlaneseq
    %v2159 = vshrl.u32 %v2158, 7
    %v2160 = vsub.s32 0, %v2159
    %v2161 = vrot.slane %v2156, %v2160
    %2163 = vmatprep.subr.mxu0 0.0
    %2164 = vmatpush1.msra.mxu0 0.0
    %2165 = vmatprep.subr.mxu0 0.0
    %2166 = vmatpush1.msra.mxu0 0.0
    %2167 = vmatprep.subr.mxu0 0.0
    %2168 = vmatpush1.msra.mxu0 0.0
    %2169 = vmatprep.subr.mxu0 0.0
    %2170 = vmatpush1.msra.mxu0 0.0
    %2171 = vmatprep.subr.mxu0 0.0
    %2172 = vmatpush1.msra.mxu0 0.0
    %2173 = vmatprep.subr.mxu0 0.0
    %2174 = vmatpush1.msra.mxu0 0.0
    %2175 = vmatprep.subr.mxu0 0.0
    %2176 = vmatpush1.msra.mxu0 0.0
    %2177 = vmatprep.subr.mxu0 0.0
    %2178 = vmatpush1.msra.mxu0 0.0
    %2179 = vmatprep.subr.mxu0 0.0
    %2180 = vmatpush1.msra.mxu0 0.0
    %2181 = vmatprep.subr.mxu0 0.0
    %2182 = vmatpush1.msra.mxu0 0.0
    %2183 = vmatprep.subr.mxu0 0.0
    %2184 = vmatpush1.msra.mxu0 0.0
    %2185 = vmatprep.subr.mxu0 0.0
    %2186 = vmatpush1.msra.mxu0 0.0
    %2187 = vmatprep.subr.mxu0 0.0
    %2188 = vmatpush1.msra.mxu0 %v2154
    %2189 = vmatprep.subr.mxu0 0.0
    %2190 = vmatpush1.msra.mxu0 %v2153
    %2191 = vmatprep.subr.mxu0 0.0
    %2192 = vmatpush1.msra.mxu0 %v2152
    %2193 = vmatprep.subr.mxu0 0.0
    %2194 = vmatpush1.msra.mxu0 %v2151
    %2195 = vmatprep.subr.mxu0 0.0
    %2196 = vmatpush2.msra.mxu0 0.0
    %2197 = vmatprep.subr.mxu0 0.0
    %2198 = vmatpush2.msra.mxu0 0.0
    %2199 = vmatprep.subr.mxu0 0.0
    %2200 = vmatpush2.msra.mxu0 0.0
    %2201 = vmatprep.subr.mxu0 0.0
    %2202 = vmatpush2.msra.mxu0 0.0
    %2203 = vmatprep.subr.mxu0 0.0
    %2204 = vmatpush2.msra.mxu0 0.0
    %2205 = vmatprep.subr.mxu0 0.0
    %2206 = vmatpush2.msra.mxu0 0.0
    %2207 = vmatprep.subr.mxu0 0.0
    %2208 = vmatpush2.msra.mxu0 0.0
    %2209 = vmatprep.subr.mxu0 0.0
    %2210 = vmatpush2.msra.mxu0 0.0
    %2211 = vmatprep.subr.mxu0 0.0
    %2212 = vmatpush2.msra.mxu0 0.0
    %2213 = vmatprep.subr.mxu0 0.0
    %2214 = vmatpush2.msra.mxu0 0.0
    %2215 = vmatprep.subr.mxu0 0.0
    %2216 = vmatpush2.msra.mxu0 0.0
    %2217 = vmatprep.subr.mxu0 0.0
    %2218 = vmatpush2.msra.mxu0 0.0
    %2219 = vmatprep.subr.mxu0 0.0
    %2220 = vmatpush2.msra.mxu0 0.0
    %2221 = vmatprep.subr.mxu0 0.0
    %2222 = vmatpush2.msra.mxu0 0.0
    %2223 = vmatprep.subr.mxu0 0.0
    %2224 = vmatpush2.msra.mxu0 0.0
    %2225 = vmatprep.subr.mxu0 0.0
    %2226 = vmatpush2.msra.mxu0 0.0
    %2227 = vmatprep.mubr.f32.mxu0 0.0
    %2228 = vmatmul.mubr.f32.gmra.mxu0 %v59
    %v2229 = vpop.f32.mrf.mxu0
    %v2230 = vadd.f32 %v2161, %v2229
    %v2231 = vpop.f32.mrf.mxu0
    %2232 = vmatprep.mubr.f32.mxu0 0.0
    %2233 = vmatmul.mubr.f32.gmra.mxu0 %v62
    %v2234 = vpop.f32.mrf.mxu0
    %v2235 = vadd.f32 %v2161, %v2234
    %v2236 = vpop.f32.mrf.mxu0
    %2237 = vdwg.mxu0
    %s2238 = scalar_lea.vmem %s2, 352
    %v2239 = vld [vmem:[%s2238] sm:$0xff]
    %v2240 = vld [vmem:[%s2238 + $0x8] sm:$0xff]
    %v2241 = vld [vmem:[%s2238 + $0x10] sm:$0xff]
    %v2242 = vld [vmem:[%s2238 + $0x18] sm:$0xff]
    %s2243 = scalar_lea.vmem %s3, 11
    %v2244 = vld [vmem:[%s2243] sm:$0x1]
    %v2246 = vlaneseq
    %v2247 = vshrl.u32 %v2246, 7
    %v2248 = vsub.s32 0, %v2247
    %v2249 = vrot.slane %v2244, %v2248
    %2251 = vmatprep.subr.mxu0 0.0
    %2252 = vmatpush1.msra.mxu0 0.0
    %2253 = vmatprep.subr.mxu0 0.0
    %2254 = vmatpush1.msra.mxu0 0.0
    %2255 = vmatprep.subr.mxu0 0.0
    %2256 = vmatpush1.msra.mxu0 0.0
    %2257 = vmatprep.subr.mxu0 0.0
    %2258 = vmatpush1.msra.mxu0 0.0
    %2259 = vmatprep.subr.mxu0 0.0
    %2260 = vmatpush1.msra.mxu0 0.0
    %2261 = vmatprep.subr.mxu0 0.0
    %2262 = vmatpush1.msra.mxu0 0.0
    %2263 = vmatprep.subr.mxu0 0.0
    %2264 = vmatpush1.msra.mxu0 0.0
    %2265 = vmatprep.subr.mxu0 0.0
    %2266 = vmatpush1.msra.mxu0 0.0
    %2267 = vmatprep.subr.mxu0 0.0
    %2268 = vmatpush1.msra.mxu0 0.0
    %2269 = vmatprep.subr.mxu0 0.0
    %2270 = vmatpush1.msra.mxu0 0.0
    %2271 = vmatprep.subr.mxu0 0.0
    %2272 = vmatpush1.msra.mxu0 0.0
    %2273 = vmatprep.subr.mxu0 0.0
    %2274 = vmatpush1.msra.mxu0 0.0
    %2275 = vmatprep.subr.mxu0 0.0
    %2276 = vmatpush1.msra.mxu0 %v2242
    %2277 = vmatprep.subr.mxu0 0.0
    %2278 = vmatpush1.msra.mxu0 %v2241
    %2279 = vmatprep.subr.mxu0 0.0
    %2280 = vmatpush1.msra.mxu0 %v2240
    %2281 = vmatprep.subr.mxu0 0.0
    %2282 = vmatpush1.msra.mxu0 %v2239
    %2283 = vmatprep.subr.mxu0 0.0
    %2284 = vmatpush2.msra.mxu0 0.0
    %2285 = vmatprep.subr.mxu0 0.0
    %2286 = vmatpush2.msra.mxu0 0.0
    %2287 = vmatprep.subr.mxu0 0.0
    %2288 = vmatpush2.msra.mxu0 0.0
    %2289 = vmatprep.subr.mxu0 0.0
    %2290 = vmatpush2.msra.mxu0 0.0
    %2291 = vmatprep.subr.mxu0 0.0
    %2292 = vmatpush2.msra.mxu0 0.0
    %2293 = vmatprep.subr.mxu0 0.0
    %2294 = vmatpush2.msra.mxu0 0.0
    %2295 = vmatprep.subr.mxu0 0.0
    %2296 = vmatpush2.msra.mxu0 0.0
    %2297 = vmatprep.subr.mxu0 0.0
    %2298 = vmatpush2.msra.mxu0 0.0
    %2299 = vmatprep.subr.mxu0 0.0
    %2300 = vmatpush2.msra.mxu0 0.0
    %2301 = vmatprep.subr.mxu0 0.0
    %2302 = vmatpush2.msra.mxu0 0.0
    %2303 = vmatprep.subr.mxu0 0.0
    %2304 = vmatpush2.msra.mxu0 0.0
    %2305 = vmatprep.subr.mxu0 0.0
    %2306 = vmatpush2.msra.mxu0 0.0
    %2307 = vmatprep.subr.mxu0 0.0
    %2308 = vmatpush2.msra.mxu0 0.0
    %2309 = vmatprep.subr.mxu0 0.0
    %2310 = vmatpush2.msra.mxu0 0.0
    %2311 = vmatprep.subr.mxu0 0.0
    %2312 = vmatpush2.msra.mxu0 0.0
    %2313 = vmatprep.subr.mxu0 0.0
    %2314 = vmatpush2.msra.mxu0 0.0
    %2315 = vmatprep.mubr.f32.mxu0 0.0
    %2316 = vmatmul.mubr.f32.gmra.mxu0 %v59
    %v2317 = vpop.f32.mrf.mxu0
    %v2318 = vadd.f32 %v2249, %v2317
    %v2319 = vpop.f32.mrf.mxu0
    %2320 = vmatprep.mubr.f32.mxu0 0.0
    %2321 = vmatmul.mubr.f32.gmra.mxu0 %v62
    %v2322 = vpop.f32.mrf.mxu0
    %v2323 = vadd.f32 %v2249, %v2322
    %v2324 = vpop.f32.mrf.mxu0
    %2325 = vdwg.mxu0
    %v2327 = vsel %vm317, %v2148, 0
    %v2330 = vsel %vm317, %v2230, 0
    %2332 = vmatprep.subr.mxu0 0.0
    %2333 = vmatpush1.xpose.msra.mxu0 0.0
    %2334 = vmatprep.subr.mxu0 0.0
    %2335 = vmatpush1.xpose.msra.mxu0 0.0
    %2336 = vmatprep.subr.mxu0 0.0
    %2337 = vmatpush1.xpose.msra.mxu0 0.0
    %2338 = vmatprep.subr.mxu0 0.0
    %2339 = vmatpush1.xpose.msra.mxu0 0.0
    %2340 = vmatprep.subr.mxu0 0.0
    %2341 = vmatpush1.xpose.msra.mxu0 0.0
    %2342 = vmatprep.subr.mxu0 0.0
    %2343 = vmatpush1.xpose.msra.mxu0 0.0
    %2344 = vmatprep.subr.mxu0 0.0
    %2345 = vmatpush1.xpose.msra.mxu0 0.0
    %2346 = vmatprep.subr.mxu0 0.0
    %2347 = vmatpush1.xpose.msra.mxu0 0.0
    %2348 = vmatprep.subr.mxu0 0.0
    %2349 = vmatpush1.xpose.msra.mxu0 0.0
    %2350 = vmatprep.subr.mxu0 0.0
    %2351 = vmatpush1.xpose.msra.mxu0 0.0
    %2352 = vmatprep.subr.mxu0 0.0
    %2353 = vmatpush1.xpose.msra.mxu0 0.0
    %2354 = vmatprep.subr.mxu0 0.0
    %2355 = vmatpush1.xpose.msra.mxu0 0.0
    %2356 = vmatprep.subr.mxu0 0.0
    %2357 = vmatpush1.xpose.msra.mxu0 0.0
    %2358 = vmatprep.subr.mxu0 0.0
    %2359 = vmatpush1.xpose.msra.mxu0 0.0
    %2360 = vmatprep.subr.mxu0 0.0
    %2361 = vmatpush1.xpose.msra.mxu0 0.0
    %2362 = vmatprep.subr.mxu0 0.0
    %2363 = vmatpush1.xpose.msra.mxu0 %v2330
    %2364 = vmatprep.subr.mxu0 0.0
    %2365 = vmatpush2.xpose.msra.mxu0 0.0
    %2366 = vmatprep.subr.mxu0 0.0
    %2367 = vmatpush2.xpose.msra.mxu0 0.0
    %2368 = vmatprep.subr.mxu0 0.0
    %2369 = vmatpush2.xpose.msra.mxu0 0.0
    %2370 = vmatprep.subr.mxu0 0.0
    %2371 = vmatpush2.xpose.msra.mxu0 0.0
    %2372 = vmatprep.subr.mxu0 0.0
    %2373 = vmatpush2.xpose.msra.mxu0 0.0
    %2374 = vmatprep.subr.mxu0 0.0
    %2375 = vmatpush2.xpose.msra.mxu0 0.0
    %2376 = vmatprep.subr.mxu0 0.0
    %2377 = vmatpush2.xpose.msra.mxu0 0.0
    %2378 = vmatprep.subr.mxu0 0.0
    %2379 = vmatpush2.xpose.msra.mxu0 0.0
    %2380 = vmatprep.subr.mxu0 0.0
    %2381 = vmatpush2.xpose.msra.mxu0 0.0
    %2382 = vmatprep.subr.mxu0 0.0
    %2383 = vmatpush2.xpose.msra.mxu0 0.0
    %2384 = vmatprep.subr.mxu0 0.0
    %2385 = vmatpush2.xpose.msra.mxu0 0.0
    %2386 = vmatprep.subr.mxu0 0.0
    %2387 = vmatpush2.xpose.msra.mxu0 0.0
    %2388 = vmatprep.subr.mxu0 0.0
    %2389 = vmatpush2.xpose.msra.mxu0 0.0
    %2390 = vmatprep.subr.mxu0 0.0
    %2391 = vmatpush2.xpose.msra.mxu0 0.0
    %2392 = vmatprep.subr.mxu0 0.0
    %2393 = vmatpush2.xpose.msra.mxu0 0.0
    %2394 = vmatprep.subr.mxu0 0.0
    %2395 = vmatpush2.xpose.msra.mxu0 0.0
    %2396 = vmatprep.mubr.f32.mxu0 0.0
    %2397 = vmatmul.mubr.f32.gmra.mxu0 %v2327
    %v2398 = vpop.f32.mrf.mxu0
    %v2399 = vadd.f32 0.0, %v2398
    %v2400 = vpop.f32.mrf.mxu0
    %2401 = vdwg.mxu0
    %v2403 = vsel %vm317, %v2149, 0
    %v2406 = vsel %vm317, %v2235, 0
    %2408 = vmatprep.subr.mxu0 0.0
    %2409 = vmatpush1.xpose.msra.mxu0 0.0
    %2410 = vmatprep.subr.mxu0 0.0
    %2411 = vmatpush1.xpose.msra.mxu0 0.0
    %2412 = vmatprep.subr.mxu0 0.0
    %2413 = vmatpush1.xpose.msra.mxu0 0.0
    %2414 = vmatprep.subr.mxu0 0.0
    %2415 = vmatpush1.xpose.msra.mxu0 0.0
    %2416 = vmatprep.subr.mxu0 0.0
    %2417 = vmatpush1.xpose.msra.mxu0 0.0
    %2418 = vmatprep.subr.mxu0 0.0
    %2419 = vmatpush1.xpose.msra.mxu0 0.0
    %2420 = vmatprep.subr.mxu0 0.0
    %2421 = vmatpush1.xpose.msra.mxu0 0.0
    %2422 = vmatprep.subr.mxu0 0.0
    %2423 = vmatpush1.xpose.msra.mxu0 0.0
    %2424 = vmatprep.subr.mxu0 0.0
    %2425 = vmatpush1.xpose.msra.mxu0 0.0
    %2426 = vmatprep.subr.mxu0 0.0
    %2427 = vmatpush1.xpose.msra.mxu0 0.0
    %2428 = vmatprep.subr.mxu0 0.0
    %2429 = vmatpush1.xpose.msra.mxu0 0.0
    %2430 = vmatprep.subr.mxu0 0.0
    %2431 = vmatpush1.xpose.msra.mxu0 0.0
    %2432 = vmatprep.subr.mxu0 0.0
    %2433 = vmatpush1.xpose.msra.mxu0 0.0
    %2434 = vmatprep.subr.mxu0 0.0
    %2435 = vmatpush1.xpose.msra.mxu0 0.0
    %2436 = vmatprep.subr.mxu0 0.0
    %2437 = vmatpush1.xpose.msra.mxu0 0.0
    %2438 = vmatprep.subr.mxu0 0.0
    %2439 = vmatpush1.xpose.msra.mxu0 %v2406
    %2440 = vmatprep.subr.mxu0 0.0
    %2441 = vmatpush2.xpose.msra.mxu0 0.0
    %2442 = vmatprep.subr.mxu0 0.0
    %2443 = vmatpush2.xpose.msra.mxu0 0.0
    %2444 = vmatprep.subr.mxu0 0.0
    %2445 = vmatpush2.xpose.msra.mxu0 0.0
    %2446 = vmatprep.subr.mxu0 0.0
    %2447 = vmatpush2.xpose.msra.mxu0 0.0
    %2448 = vmatprep.subr.mxu0 0.0
    %2449 = vmatpush2.xpose.msra.mxu0 0.0
    %2450 = vmatprep.subr.mxu0 0.0
    %2451 = vmatpush2.xpose.msra.mxu0 0.0
    %2452 = vmatprep.subr.mxu0 0.0
    %2453 = vmatpush2.xpose.msra.mxu0 0.0
    %2454 = vmatprep.subr.mxu0 0.0
    %2455 = vmatpush2.xpose.msra.mxu0 0.0
    %2456 = vmatprep.subr.mxu0 0.0
    %2457 = vmatpush2.xpose.msra.mxu0 0.0
    %2458 = vmatprep.subr.mxu0 0.0
    %2459 = vmatpush2.xpose.msra.mxu0 0.0
    %2460 = vmatprep.subr.mxu0 0.0
    %2461 = vmatpush2.xpose.msra.mxu0 0.0
    %2462 = vmatprep.subr.mxu0 0.0
    %2463 = vmatpush2.xpose.msra.mxu0 0.0
    %2464 = vmatprep.subr.mxu0 0.0
    %2465 = vmatpush2.xpose.msra.mxu0 0.0
    %2466 = vmatprep.subr.mxu0 0.0
    %2467 = vmatpush2.xpose.msra.mxu0 0.0
    %2468 = vmatprep.subr.mxu0 0.0
    %2469 = vmatpush2.xpose.msra.mxu0 0.0
    %2470 = vmatprep.subr.mxu0 0.0
    %2471 = vmatpush2.xpose.msra.mxu0 0.0
    %2472 = vmatprep.mubr.f32.mxu0 0.0
    %2473 = vmatmul.mubr.f32.gmra.mxu0 %v2403
    %v2474 = vpop.f32.mrf.mxu0
    %v2475 = vadd.f32 0.0, %v2474
    %v2476 = vpop.f32.mrf.mxu0
    %2477 = vdwg.mxu0
    %v2478 = vsel %vm317, %v2399, -inf
    %2479 = vmax.xlane.f32.xlu0 %v2478
    %v2480 = vpop.xlane.xlu0 %2479
    %v2481 = vsel %vm317, %v2475, -inf
    %2482 = vmax.xlane.f32.xlu0 %v2481
    %v2483 = vpop.xlane.xlu0 %2482
    %v2484 = vsub.f32 %v2399, %v2480
    %v2485 = vsub.f32 %v2475, %v2483
    %v2486 = vmul.f32 %v2484, 1.442695
    %v2487 = vpow.pop %v2486
    %v2488 = vmul.f32 %v2485, 1.442695
    %v2489 = vpow.pop %v2488
    %v2490 = vsel %vm317, %v2487, 0.0
    %2491 = vadd.xlane.f32.xlu0 %v2490
    %v2492 = vpop.xlane.xlu0 %2491
    %v2493 = vsel %vm317, %v2489, 0.0
    %2494 = vadd.xlane.f32.xlu0 %v2493
    %v2495 = vpop.xlane.xlu0 %2494
    %v2496 = vrcp.pop %v2492
    %v2497 = vmul.f32 %v2487, %v2496
    %v2498 = vrcp.pop %v2495
    %v2499 = vmul.f32 %v2489, %v2498
    %v2501 = vsel %vm317, %v2497, 0
    %2503 = vmatprep.subr.mxu0 0.0
    %2504 = vmatpush1.msra.mxu0 0.0
    %2505 = vmatprep.subr.mxu0 0.0
    %2506 = vmatpush1.msra.mxu0 0.0
    %2507 = vmatprep.subr.mxu0 0.0
    %2508 = vmatpush1.msra.mxu0 0.0
    %2509 = vmatprep.subr.mxu0 0.0
    %2510 = vmatpush1.msra.mxu0 0.0
    %2511 = vmatprep.subr.mxu0 0.0
    %2512 = vmatpush1.msra.mxu0 0.0
    %2513 = vmatprep.subr.mxu0 0.0
    %2514 = vmatpush1.msra.mxu0 0.0
    %2515 = vmatprep.subr.mxu0 0.0
    %2516 = vmatpush1.msra.mxu0 0.0
    %2517 = vmatprep.subr.mxu0 0.0
    %2518 = vmatpush1.msra.mxu0 0.0
    %2519 = vmatprep.subr.mxu0 0.0
    %2520 = vmatpush1.msra.mxu0 0.0
    %2521 = vmatprep.subr.mxu0 0.0
    %2522 = vmatpush1.msra.mxu0 0.0
    %2523 = vmatprep.subr.mxu0 0.0
    %2524 = vmatpush1.msra.mxu0 0.0
    %2525 = vmatprep.subr.mxu0 0.0
    %2526 = vmatpush1.msra.mxu0 0.0
    %2527 = vmatprep.subr.mxu0 0.0
    %2528 = vmatpush1.msra.mxu0 0.0
    %2529 = vmatprep.subr.mxu0 0.0
    %2530 = vmatpush1.msra.mxu0 0.0
    %2531 = vmatprep.subr.mxu0 0.0
    %2532 = vmatpush1.msra.mxu0 0.0
    %2533 = vmatprep.subr.mxu0 0.0
    %2534 = vmatpush1.msra.mxu0 %v2318
    %2535 = vmatprep.subr.mxu0 0.0
    %2536 = vmatpush2.msra.mxu0 0.0
    %2537 = vmatprep.subr.mxu0 0.0
    %2538 = vmatpush2.msra.mxu0 0.0
    %2539 = vmatprep.subr.mxu0 0.0
    %2540 = vmatpush2.msra.mxu0 0.0
    %2541 = vmatprep.subr.mxu0 0.0
    %2542 = vmatpush2.msra.mxu0 0.0
    %2543 = vmatprep.subr.mxu0 0.0
    %2544 = vmatpush2.msra.mxu0 0.0
    %2545 = vmatprep.subr.mxu0 0.0
    %2546 = vmatpush2.msra.mxu0 0.0
    %2547 = vmatprep.subr.mxu0 0.0
    %2548 = vmatpush2.msra.mxu0 0.0
    %2549 = vmatprep.subr.mxu0 0.0
    %2550 = vmatpush2.msra.mxu0 0.0
    %2551 = vmatprep.subr.mxu0 0.0
    %2552 = vmatpush2.msra.mxu0 0.0
    %2553 = vmatprep.subr.mxu0 0.0
    %2554 = vmatpush2.msra.mxu0 0.0
    %2555 = vmatprep.subr.mxu0 0.0
    %2556 = vmatpush2.msra.mxu0 0.0
    %2557 = vmatprep.subr.mxu0 0.0
    %2558 = vmatpush2.msra.mxu0 0.0
    %2559 = vmatprep.subr.mxu0 0.0
    %2560 = vmatpush2.msra.mxu0 0.0
    %2561 = vmatprep.subr.mxu0 0.0
    %2562 = vmatpush2.msra.mxu0 0.0
    %2563 = vmatprep.subr.mxu0 0.0
    %2564 = vmatpush2.msra.mxu0 0.0
    %2565 = vmatprep.subr.mxu0 0.0
    %2566 = vmatpush2.msra.mxu0 0.0
    %2567 = vmatprep.mubr.f32.mxu0 0.0
    %2568 = vmatmul.mubr.f32.gmra.mxu0 %v2501
    %v2569 = vpop.f32.mrf.mxu0
    %v2570 = vadd.f32 0.0, %v2569
    %v2571 = vpop.f32.mrf.mxu0
    %2572 = vdwg.mxu0
    %v2574 = vsel %vm317, %v2499, 0
    %2576 = vmatprep.subr.mxu0 0.0
    %2577 = vmatpush1.msra.mxu0 0.0
    %2578 = vmatprep.subr.mxu0 0.0
    %2579 = vmatpush1.msra.mxu0 0.0
    %2580 = vmatprep.subr.mxu0 0.0
    %2581 = vmatpush1.msra.mxu0 0.0
    %2582 = vmatprep.subr.mxu0 0.0
    %2583 = vmatpush1.msra.mxu0 0.0
    %2584 = vmatprep.subr.mxu0 0.0
    %2585 = vmatpush1.msra.mxu0 0.0
    %2586 = vmatprep.subr.mxu0 0.0
    %2587 = vmatpush1.msra.mxu0 0.0
    %2588 = vmatprep.subr.mxu0 0.0
    %2589 = vmatpush1.msra.mxu0 0.0
    %2590 = vmatprep.subr.mxu0 0.0
    %2591 = vmatpush1.msra.mxu0 0.0
    %2592 = vmatprep.subr.mxu0 0.0
    %2593 = vmatpush1.msra.mxu0 0.0
    %2594 = vmatprep.subr.mxu0 0.0
    %2595 = vmatpush1.msra.mxu0 0.0
    %2596 = vmatprep.subr.mxu0 0.0
    %2597 = vmatpush1.msra.mxu0 0.0
    %2598 = vmatprep.subr.mxu0 0.0
    %2599 = vmatpush1.msra.mxu0 0.0
    %2600 = vmatprep.subr.mxu0 0.0
    %2601 = vmatpush1.msra.mxu0 0.0
    %2602 = vmatprep.subr.mxu0 0.0
    %2603 = vmatpush1.msra.mxu0 0.0
    %2604 = vmatprep.subr.mxu0 0.0
    %2605 = vmatpush1.msra.mxu0 0.0
    %2606 = vmatprep.subr.mxu0 0.0
    %2607 = vmatpush1.msra.mxu0 %v2323
    %2608 = vmatprep.subr.mxu0 0.0
    %2609 = vmatpush2.msra.mxu0 0.0
    %2610 = vmatprep.subr.mxu0 0.0
    %2611 = vmatpush2.msra.mxu0 0.0
    %2612 = vmatprep.subr.mxu0 0.0
    %2613 = vmatpush2.msra.mxu0 0.0
    %2614 = vmatprep.subr.mxu0 0.0
    %2615 = vmatpush2.msra.mxu0 0.0
    %2616 = vmatprep.subr.mxu0 0.0
    %2617 = vmatpush2.msra.mxu0 0.0
    %2618 = vmatprep.subr.mxu0 0.0
    %2619 = vmatpush2.msra.mxu0 0.0
    %2620 = vmatprep.subr.mxu0 0.0
    %2621 = vmatpush2.msra.mxu0 0.0
    %2622 = vmatprep.subr.mxu0 0.0
    %2623 = vmatpush2.msra.mxu0 0.0
    %2624 = vmatprep.subr.mxu0 0.0
    %2625 = vmatpush2.msra.mxu0 0.0
    %2626 = vmatprep.subr.mxu0 0.0
    %2627 = vmatpush2.msra.mxu0 0.0
    %2628 = vmatprep.subr.mxu0 0.0
    %2629 = vmatpush2.msra.mxu0 0.0
    %2630 = vmatprep.subr.mxu0 0.0
    %2631 = vmatpush2.msra.mxu0 0.0
    %2632 = vmatprep.subr.mxu0 0.0
    %2633 = vmatpush2.msra.mxu0 0.0
    %2634 = vmatprep.subr.mxu0 0.0
    %2635 = vmatpush2.msra.mxu0 0.0
    %2636 = vmatprep.subr.mxu0 0.0
    %2637 = vmatpush2.msra.mxu0 0.0
    %2638 = vmatprep.subr.mxu0 0.0
    %2639 = vmatpush2.msra.mxu0 0.0
    %2640 = vmatprep.mubr.f32.mxu0 0.0
    %2641 = vmatmul.mubr.f32.gmra.mxu0 %v2574
    %v2642 = vpop.f32.mrf.mxu0
    %v2643 = vadd.f32 0.0, %v2642
    %v2644 = vpop.f32.mrf.mxu0
    %2645 = vdwg.mxu0
    %s2646 = scalar_lea.vmem %s4, 24
    %v2647 = vld [vmem:[%s2646] sm:$0xff]
    %v2649 = vsel %vm317, %v2570, 0
    %v2652 = vsel %vm317, %v2643, 0
    %2654 = vmatprep.subr.mxu0 0.0
    %2655 = vmatpush1.msra.mxu0 0.0
    %2656 = vmatprep.subr.mxu0 0.0
    %2657 = vmatpush1.msra.mxu0 0.0
    %2658 = vmatprep.subr.mxu0 0.0
    %2659 = vmatpush1.msra.mxu0 0.0
    %2660 = vmatprep.subr.mxu0 0.0
    %2661 = vmatpush1.msra.mxu0 0.0
    %2662 = vmatprep.subr.mxu0 0.0
    %2663 = vmatpush1.msra.mxu0 0.0
    %2664 = vmatprep.subr.mxu0 0.0
    %2665 = vmatpush1.msra.mxu0 0.0
    %2666 = vmatprep.subr.mxu0 0.0
    %2667 = vmatpush1.msra.mxu0 0.0
    %2668 = vmatprep.subr.mxu0 0.0
    %2669 = vmatpush1.msra.mxu0 0.0
    %2670 = vmatprep.subr.mxu0 0.0
    %2671 = vmatpush1.msra.mxu0 0.0
    %2672 = vmatprep.subr.mxu0 0.0
    %2673 = vmatpush1.msra.mxu0 0.0
    %2674 = vmatprep.subr.mxu0 0.0
    %2675 = vmatpush1.msra.mxu0 0.0
    %2676 = vmatprep.subr.mxu0 0.0
    %2677 = vmatpush1.msra.mxu0 0.0
    %2678 = vmatprep.subr.mxu0 0.0
    %2679 = vmatpush1.msra.mxu0 0.0
    %2680 = vmatprep.subr.mxu0 0.0
    %2681 = vmatpush1.msra.mxu0 0.0
    %2682 = vmatprep.subr.mxu0 0.0
    %2683 = vmatpush1.msra.mxu0 0.0
    %2684 = vmatprep.subr.mxu0 0.0
    %2685 = vmatpush1.msra.mxu0 %v2647
    %2686 = vmatprep.subr.mxu0 0.0
    %2687 = vmatpush2.msra.mxu0 0.0
    %2688 = vmatprep.subr.mxu0 0.0
    %2689 = vmatpush2.msra.mxu0 0.0
    %2690 = vmatprep.subr.mxu0 0.0
    %2691 = vmatpush2.msra.mxu0 0.0
    %2692 = vmatprep.subr.mxu0 0.0
    %2693 = vmatpush2.msra.mxu0 0.0
    %2694 = vmatprep.subr.mxu0 0.0
    %2695 = vmatpush2.msra.mxu0 0.0
    %2696 = vmatprep.subr.mxu0 0.0
    %2697 = vmatpush2.msra.mxu0 0.0
    %2698 = vmatprep.subr.mxu0 0.0
    %2699 = vmatpush2.msra.mxu0 0.0
    %2700 = vmatprep.subr.mxu0 0.0
    %2701 = vmatpush2.msra.mxu0 0.0
    %2702 = vmatprep.subr.mxu0 0.0
    %2703 = vmatpush2.msra.mxu0 0.0
    %2704 = vmatprep.subr.mxu0 0.0
    %2705 = vmatpush2.msra.mxu0 0.0
    %2706 = vmatprep.subr.mxu0 0.0
    %2707 = vmatpush2.msra.mxu0 0.0
    %2708 = vmatprep.subr.mxu0 0.0
    %2709 = vmatpush2.msra.mxu0 0.0
    %2710 = vmatprep.subr.mxu0 0.0
    %2711 = vmatpush2.msra.mxu0 0.0
    %2712 = vmatprep.subr.mxu0 0.0
    %2713 = vmatpush2.msra.mxu0 0.0
    %2714 = vmatprep.subr.mxu0 0.0
    %2715 = vmatpush2.msra.mxu0 0.0
    %2716 = vmatprep.subr.mxu0 0.0
    %2717 = vmatpush2.msra.mxu0 0.0
    %2718 = vmatprep.mubr.f32.mxu0 0.0
    %2719 = vmatmul.mubr.f32.gmra.mxu0 %v2649
    %v2720 = vpop.f32.mrf.mxu0
    %v2721 = vadd.f32 0.0, %v2720
    %v2722 = vpop.f32.mrf.mxu0
    %2723 = vmatprep.mubr.f32.mxu0 0.0
    %2724 = vmatmul.mubr.f32.gmra.mxu0 %v2652
    %v2725 = vpop.f32.mrf.mxu0
    %v2726 = vadd.f32 0.0, %v2725
    %v2727 = vpop.f32.mrf.mxu0
    %2728 = vdwg.mxu0
    %v2729 = vadd.f32 %v2058, %v2721
    %v2730 = vadd.f32 %v2059, %v2726
    %v2731 = vld [vmem:[%s5] sm:$0x1]
    %s2732 = scalar_lea.vmem %s5, 1
    %v2733 = vld [vmem:[%s2732] sm:$0x1]
    %s2734 = scalar_lea.vmem %s5, 2
    %v2735 = vld [vmem:[%s2734] sm:$0x1]
    %s2736 = scalar_lea.vmem %s5, 3
    %v2737 = vld [vmem:[%s2736] sm:$0x1]
    %s2738 = scalar_lea.vmem %s5, 4
    %v2739 = vld [vmem:[%s2738] sm:$0x1]
    %s2740 = scalar_lea.vmem %s5, 5
    %v2741 = vld [vmem:[%s2740] sm:$0x1]
    %v2743 = vlaneseq
    %v2744 = vshrl.u32 %v2743, 7
    %v2745 = vsub.s32 0, %v2744
    %v2746 = vrot.slane %v2731, %v2745
    %v2748 = vadd.f32 %v2729, %v2746
    %v2749 = vadd.f32 %v2730, %v2746
    %v2750 = vadd.f32 %v44, %v2748
    %v2751 = vadd.f32 %v45, %v2749
    %v2752 = vsel %vm57, %v2750, 0.0
    %2753 = vadd.xlane.f32.xlu0 %v2752
    %v2754 = vpop.xlane.xlu0 %2753
    %v2755 = vsel %vm57, %v2751, 0.0
    %2756 = vadd.xlane.f32.xlu0 %v2755
    %v2757 = vpop.xlane.xlu0 %2756
    %v2758 = vrcp.pop 32.0
    %v2759 = vmul.f32 %v2754, %v2758
    %v2760 = vmul.f32 %v2757, %v2758
    %v2761 = vsub.f32 %v2750, %v2759
    %v2762 = vsub.f32 %v2751, %v2760
    %v2763 = vmul.f32 %v2761, %v2761
    %v2764 = vmul.f32 %v2762, %v2762
    %v2765 = vsel %vm57, %v2763, 0.0
    %2766 = vadd.xlane.f32.xlu0 %v2765
    %v2767 = vpop.xlane.xlu0 %2766
    %v2768 = vsel %vm57, %v2764, 0.0
    %2769 = vadd.xlane.f32.xlu0 %v2768
    %v2770 = vpop.xlane.xlu0 %2769
    %v2771 = vmul.f32 %v2767, %v2758
    %v2772 = vmul.f32 %v2770, %v2758
    %v2773 = vadd.f32 %v2771, 1e-05
    %v2774 = vadd.f32 %v2772, 1e-05
    %v2775 = vrsqrt.pop %v2773
    %v2776 = vrsqrt.pop %v2774
    %v2777 = vmul.f32 %v2761, %v2775
    %v2778 = vmul.f32 %v2762, %v2776
    %v2780 = vlaneseq
    %v2781 = vshrl.u32 %v2780, 7
    %v2782 = vsub.s32 0, %v2781
    %v2783 = vrot.slane %v2733, %v2782
    %v2785 = vmul.f32 %v2777, %v2783
    %v2786 = vmul.f32 %v2778, %v2783
    %v2788 = vlaneseq
    %v2789 = vshrl.u32 %v2788, 7
    %v2790 = vsub.s32 0, %v2789
    %v2791 = vrot.slane %v2735, %v2790
    %v2793 = vadd.f32 %v2785, %v2791
    %v2794 = vadd.f32 %v2786, %v2791
    %v2795 = vld [vmem:[%s6] sm:$0xff]
    %v2796 = vld [vmem:[%s6 + $0x8] sm:$0xff]
    %v2797 = vld [vmem:[%s6 + $0x10] sm:$0xff]
    %v2798 = vld [vmem:[%s6 + $0x18] sm:$0xff]
    %v2799 = vld [vmem:[%s7] sm:$0x1]
    %v2801 = vlaneseq
    %v2802 = vshrl.u32 %v2801, 7
    %v2803 = vsub.s32 0, %v2802
    %v2804 = vrot.slane %v2799, %v2803
    %v2807 = vsel %vm57, %v2793, 0
    %v2810 = vsel %vm57, %v2794, 0
    %2812 = vmatprep.subr.mxu0 0.0
    %2813 = vmatpush1.msra.mxu0 0.0
    %2814 = vmatprep.subr.mxu0 0.0
    %2815 = vmatpush1.msra.mxu0 0.0
    %2816 = vmatprep.subr.mxu0 0.0
    %2817 = vmatpush1.msra.mxu0 0.0
    %2818 = vmatprep.subr.mxu0 0.0
    %2819 = vmatpush1.msra.mxu0 0.0
    %2820 = vmatprep.subr.mxu0 0.0
    %2821 = vmatpush1.msra.mxu0 0.0
    %2822 = vmatprep.subr.mxu0 0.0
    %2823 = vmatpush1.msra.mxu0 0.0
    %2824 = vmatprep.subr.mxu0 0.0
    %2825 = vmatpush1.msra.mxu0 0.0
    %2826 = vmatprep.subr.mxu0 0.0
    %2827 = vmatpush1.msra.mxu0 0.0
    %2828 = vmatprep.subr.mxu0 0.0
    %2829 = vmatpush1.msra.mxu0 0.0
    %2830 = vmatprep.subr.mxu0 0.0
    %2831 = vmatpush1.msra.mxu0 0.0
    %2832 = vmatprep.subr.mxu0 0.0
    %2833 = vmatpush1.msra.mxu0 0.0
    %2834 = vmatprep.subr.mxu0 0.0
    %2835 = vmatpush1.msra.mxu0 0.0
    %2836 = vmatprep.subr.mxu0 0.0
    %2837 = vmatpush1.msra.mxu0 %v2798
    %2838 = vmatprep.subr.mxu0 0.0
    %2839 = vmatpush1.msra.mxu0 %v2797
    %2840 = vmatprep.subr.mxu0 0.0
    %2841 = vmatpush1.msra.mxu0 %v2796
    %2842 = vmatprep.subr.mxu0 0.0
    %2843 = vmatpush1.msra.mxu0 %v2795
    %2844 = vmatprep.subr.mxu0 0.0
    %2845 = vmatpush2.msra.mxu0 0.0
    %2846 = vmatprep.subr.mxu0 0.0
    %2847 = vmatpush2.msra.mxu0 0.0
    %2848 = vmatprep.subr.mxu0 0.0
    %2849 = vmatpush2.msra.mxu0 0.0
    %2850 = vmatprep.subr.mxu0 0.0
    %2851 = vmatpush2.msra.mxu0 0.0
    %2852 = vmatprep.subr.mxu0 0.0
    %2853 = vmatpush2.msra.mxu0 0.0
    %2854 = vmatprep.subr.mxu0 0.0
    %2855 = vmatpush2.msra.mxu0 0.0
    %2856 = vmatprep.subr.mxu0 0.0
    %2857 = vmatpush2.msra.mxu0 0.0
    %2858 = vmatprep.subr.mxu0 0.0
    %2859 = vmatpush2.msra.mxu0 0.0
    %2860 = vmatprep.subr.mxu0 0.0
    %2861 = vmatpush2.msra.mxu0 0.0
    %2862 = vmatprep.subr.mxu0 0.0
    %2863 = vmatpush2.msra.mxu0 0.0
    %2864 = vmatprep.subr.mxu0 0.0
    %2865 = vmatpush2.msra.mxu0 0.0
    %2866 = vmatprep.subr.mxu0 0.0
    %2867 = vmatpush2.msra.mxu0 0.0
    %2868 = vmatprep.subr.mxu0 0.0
    %2869 = vmatpush2.msra.mxu0 0.0
    %2870 = vmatprep.subr.mxu0 0.0
    %2871 = vmatpush2.msra.mxu0 0.0
    %2872 = vmatprep.subr.mxu0 0.0
    %2873 = vmatpush2.msra.mxu0 0.0
    %2874 = vmatprep.subr.mxu0 0.0
    %2875 = vmatpush2.msra.mxu0 0.0
    %2876 = vmatprep.mubr.f32.mxu0 0.0
    %2877 = vmatmul.mubr.f32.gmra.mxu0 %v2807
    %v2878 = vpop.f32.mrf.mxu0
    %v2879 = vadd.f32 %v2804, %v2878
    %v2880 = vpop.f32.mrf.mxu0
    %2881 = vmatprep.mubr.f32.mxu0 0.0
    %2882 = vmatmul.mubr.f32.gmra.mxu0 %v2810
    %v2883 = vpop.f32.mrf.mxu0
    %v2884 = vadd.f32 %v2804, %v2883
    %v2885 = vpop.f32.mrf.mxu0
    %2886 = vdwg.mxu0
    %v2887 = vmax.f32 %v2879, 0.0
    %v2888 = vmax.f32 %v2884, 0.0
    %v2889 = vld [vmem:[%s8] sm:$0xff]
    %v2890 = vld [vmem:[%s8 + $0x8] sm:$0xff]
    %v2891 = vld [vmem:[%s8 + $0x10] sm:$0xff]
    %v2892 = vld [vmem:[%s8 + $0x18] sm:$0xff]
    %v2893 = vld [vmem:[%s8 + $0x20] sm:$0xff]
    %v2894 = vld [vmem:[%s8 + $0x28] sm:$0xff]
    %v2895 = vld [vmem:[%s8 + $0x30] sm:$0xff]
    %v2896 = vld [vmem:[%s8 + $0x38] sm:$0xff]
    %v2898 = vlaneseq
    %v2899 = vshrl.u32 %v2898, 7
    %v2900 = vsub.s32 0, %v2899
    %v2901 = vrot.slane %v2737, %v2900
    %vm2903 = vcmask 523264
    %v2905 = vsel %vm2903, %v2887, 0
    %v2908 = vsel %vm2903, %v2888, 0
    %2910 = vmatprep.subr.mxu0 0.0
    %2911 = vmatpush1.msra.mxu0 0.0
    %2912 = vmatprep.subr.mxu0 0.0
    %2913 = vmatpush1.msra.mxu0 0.0
    %2914 = vmatprep.subr.mxu0 0.0
    %2915 = vmatpush1.msra.mxu0 0.0
    %2916 = vmatprep.subr.mxu0 0.0
    %2917 = vmatpush1.msra.mxu0 0.0
    %2918 = vmatprep.subr.mxu0 0.0
    %2919 = vmatpush1.msra.mxu0 0.0
    %2920 = vmatprep.subr.mxu0 0.0
    %2921 = vmatpush1.msra.mxu0 0.0
    %2922 = vmatprep.subr.mxu0 0.0
    %2923 = vmatpush1.msra.mxu0 0.0
    %2924 = vmatprep.subr.mxu0 0.0
    %2925 = vmatpush1.msra.mxu0 0.0
    %2926 = vmatprep.subr.mxu0 0.0
    %2927 = vmatpush1.msra.mxu0 %v2896
    %2928 = vmatprep.subr.mxu0 0.0
    %2929 = vmatpush1.msra.mxu0 %v2895
    %2930 = vmatprep.subr.mxu0 0.0
    %2931 = vmatpush1.msra.mxu0 %v2894
    %2932 = vmatprep.subr.mxu0 0.0
    %2933 = vmatpush1.msra.mxu0 %v2893
    %2934 = vmatprep.subr.mxu0 0.0
    %2935 = vmatpush1.msra.mxu0 %v2892
    %2936 = vmatprep.subr.mxu0 0.0
    %2937 = vmatpush1.msra.mxu0 %v2891
    %2938 = vmatprep.subr.mxu0 0.0
    %2939 = vmatpush1.msra.mxu0 %v2890
    %2940 = vmatprep.subr.mxu0 0.0
    %2941 = vmatpush1.msra.mxu0 %v2889
    %2942 = vmatprep.subr.mxu0 0.0
    %2943 = vmatpush2.msra.mxu0 0.0
    %2944 = vmatprep.subr.mxu0 0.0
    %2945 = vmatpush2.msra.mxu0 0.0
    %2946 = vmatprep.subr.mxu0 0.0
    %2947 = vmatpush2.msra.mxu0 0.0
    %2948 = vmatprep.subr.mxu0 0.0
    %2949 = vmatpush2.msra.mxu0 0.0
    %2950 = vmatprep.subr.mxu0 0.0
    %2951 = vmatpush2.msra.mxu0 0.0
    %2952 = vmatprep.subr.mxu0 0.0
    %2953 = vmatpush2.msra.mxu0 0.0
    %2954 = vmatprep.subr.mxu0 0.0
    %2955 = vmatpush2.msra.mxu0 0.0
    %2956 = vmatprep.subr.mxu0 0.0
    %2957 = vmatpush2.msra.mxu0 0.0
    %2958 = vmatprep.subr.mxu0 0.0
    %2959 = vmatpush2.msra.mxu0 0.0
    %2960 = vmatprep.subr.mxu0 0.0
    %2961 = vmatpush2.msra.mxu0 0.0
    %2962 = vmatprep.subr.mxu0 0.0
    %2963 = vmatpush2.msra.mxu0 0.0
    %2964 = vmatprep.subr.mxu0 0.0
    %2965 = vmatpush2.msra.mxu0 0.0
    %2966 = vmatprep.subr.mxu0 0.0
    %2967 = vmatpush2.msra.mxu0 0.0
    %2968 = vmatprep.subr.mxu0 0.0
    %2969 = vmatpush2.msra.mxu0 0.0
    %2970 = vmatprep.subr.mxu0 0.0
    %2971 = vmatpush2.msra.mxu0 0.0
    %2972 = vmatprep.subr.mxu0 0.0
    %2973 = vmatpush2.msra.mxu0 0.0
    %2974 = vmatprep.mubr.f32.mxu0 0.0
    %2975 = vmatmul.mubr.f32.gmra.mxu0 %v2905
    %v2976 = vpop.f32.mrf.mxu0
    %v2977 = vadd.f32 %v2901, %v2976
    %v2978 = vpop.f32.mrf.mxu0
    %2979 = vmatprep.mubr.f32.mxu0 0.0
    %2980 = vmatmul.mubr.f32.gmra.mxu0 %v2908
    %v2981 = vpop.f32.mrf.mxu0
    %v2982 = vadd.f32 %v2901, %v2981
    %v2983 = vpop.f32.mrf.mxu0
    %2984 = vdwg.mxu0
    %v2985 = vadd.f32 %v2793, %v2977
    %v2986 = vadd.f32 %v2794, %v2982
    %v2987 = vsel %vm57, %v2985, 0.0
    %2988 = vadd.xlane.f32.xlu0 %v2987
    %v2989 = vpop.xlane.xlu0 %2988
    %v2990 = vsel %vm57, %v2986, 0.0
    %2991 = vadd.xlane.f32.xlu0 %v2990
    %v2992 = vpop.xlane.xlu0 %2991
    %v2993 = vmul.f32 %v2989, %v2758
    %v2994 = vmul.f32 %v2992, %v2758
    %v2995 = vsub.f32 %v2985, %v2993
    %v2996 = vsub.f32 %v2986, %v2994
    %v2997 = vmul.f32 %v2995, %v2995
    %v2998 = vmul.f32 %v2996, %v2996
    %v2999 = vsel %vm57, %v2997, 0.0
    %3000 = vadd.xlane.f32.xlu0 %v2999
    %v3001 = vpop.xlane.xlu0 %3000
    %v3002 = vsel %vm57, %v2998, 0.0
    %3003 = vadd.xlane.f32.xlu0 %v3002
    %v3004 = vpop.xlane.xlu0 %3003
    %v3005 = vmul.f32 %v3001, %v2758
    %v3006 = vmul.f32 %v3004, %v2758
    %v3007 = vadd.f32 %v3005, 1e-05
    %v3008 = vadd.f32 %v3006, 1e-05
    %v3009 = vrsqrt.pop %v3007
    %v3010 = vrsqrt.pop %v3008
    %v3011 = vmul.f32 %v2995, %v3009
    %v3012 = vmul.f32 %v2996, %v3010
    %v3014 = vlaneseq
    %v3015 = vshrl.u32 %v3014, 7
    %v3016 = vsub.s32 0, %v3015
    %v3017 = vrot.slane %v2739, %v3016
    %v3019 = vmul.f32 %v3011, %v3017
    %v3020 = vmul.f32 %v3012, %v3017
    %v3022 = vlaneseq
    %v3023 = vshrl.u32 %v3022, 7
    %v3024 = vsub.s32 0, %v3023
    %v3025 = vrot.slane %v2741, %v3024
    %v3027 = vadd.f32 %v3019, %v3025
    %v3028 = vadd.f32 %v3020, %v3025
    %s3029 = scalar_lea.vmem %s2, 384
    %v3030 = vld [vmem:[%s3029] sm:$0xff]
    %v3031 = vld [vmem:[%s3029 + $0x8] sm:$0xff]
    %v3032 = vld [vmem:[%s3029 + $0x10] sm:$0xff]
    %v3033 = vld [vmem:[%s3029 + $0x18] sm:$0xff]
    %s3034 = scalar_lea.vmem %s3, 12
    %v3035 = vld [vmem:[%s3034] sm:$0x1]
    %v3037 = vlaneseq
    %v3038 = vshrl.u32 %v3037, 7
    %v3039 = vsub.s32 0, %v3038
    %v3040 = vrot.slane %v3035, %v3039
    %v3043 = vsel %vm57, %v3027, 0
    %v3046 = vsel %vm57, %v3028, 0
    %3048 = vmatprep.subr.mxu0 0.0
    %3049 = vmatpush1.msra.mxu0 0.0
    %3050 = vmatprep.subr.mxu0 0.0
    %3051 = vmatpush1.msra.mxu0 0.0
    %3052 = vmatprep.subr.mxu0 0.0
    %3053 = vmatpush1.msra.mxu0 0.0
    %3054 = vmatprep.subr.mxu0 0.0
    %3055 = vmatpush1.msra.mxu0 0.0
    %3056 = vmatprep.subr.mxu0 0.0
    %3057 = vmatpush1.msra.mxu0 0.0
    %3058 = vmatprep.subr.mxu0 0.0
    %3059 = vmatpush1.msra.mxu0 0.0
    %3060 = vmatprep.subr.mxu0 0.0
    %3061 = vmatpush1.msra.mxu0 0.0
    %3062 = vmatprep.subr.mxu0 0.0
    %3063 = vmatpush1.msra.mxu0 0.0
    %3064 = vmatprep.subr.mxu0 0.0
    %3065 = vmatpush1.msra.mxu0 0.0
    %3066 = vmatprep.subr.mxu0 0.0
    %3067 = vmatpush1.msra.mxu0 0.0
    %3068 = vmatprep.subr.mxu0 0.0
    %3069 = vmatpush1.msra.mxu0 0.0
    %3070 = vmatprep.subr.mxu0 0.0
    %3071 = vmatpush1.msra.mxu0 0.0
    %3072 = vmatprep.subr.mxu0 0.0
    %3073 = vmatpush1.msra.mxu0 %v3033
    %3074 = vmatprep.subr.mxu0 0.0
    %3075 = vmatpush1.msra.mxu0 %v3032
    %3076 = vmatprep.subr.mxu0 0.0
    %3077 = vmatpush1.msra.mxu0 %v3031
    %3078 = vmatprep.subr.mxu0 0.0
    %3079 = vmatpush1.msra.mxu0 %v3030
    %3080 = vmatprep.subr.mxu0 0.0
    %3081 = vmatpush2.msra.mxu0 0.0
    %3082 = vmatprep.subr.mxu0 0.0
    %3083 = vmatpush2.msra.mxu0 0.0
    %3084 = vmatprep.subr.mxu0 0.0
    %3085 = vmatpush2.msra.mxu0 0.0
    %3086 = vmatprep.subr.mxu0 0.0
    %3087 = vmatpush2.msra.mxu0 0.0
    %3088 = vmatprep.subr.mxu0 0.0
    %3089 = vmatpush2.msra.mxu0 0.0
    %3090 = vmatprep.subr.mxu0 0.0
    %3091 = vmatpush2.msra.mxu0 0.0
    %3092 = vmatprep.subr.mxu0 0.0
    %3093 = vmatpush2.msra.mxu0 0.0
    %3094 = vmatprep.subr.mxu0 0.0
    %3095 = vmatpush2.msra.mxu0 0.0
    %3096 = vmatprep.subr.mxu0 0.0
    %3097 = vmatpush2.msra.mxu0 0.0
    %3098 = vmatprep.subr.mxu0 0.0
    %3099 = vmatpush2.msra.mxu0 0.0
    %3100 = vmatprep.subr.mxu0 0.0
    %3101 = vmatpush2.msra.mxu0 0.0
    %3102 = vmatprep.subr.mxu0 0.0
    %3103 = vmatpush2.msra.mxu0 0.0
    %3104 = vmatprep.subr.mxu0 0.0
    %3105 = vmatpush2.msra.mxu0 0.0
    %3106 = vmatprep.subr.mxu0 0.0
    %3107 = vmatpush2.msra.mxu0 0.0
    %3108 = vmatprep.subr.mxu0 0.0
    %3109 = vmatpush2.msra.mxu0 0.0
    %3110 = vmatprep.subr.mxu0 0.0
    %3111 = vmatpush2.msra.mxu0 0.0
    %3112 = vmatprep.mubr.f32.mxu0 0.0
    %3113 = vmatmul.mubr.f32.gmra.mxu0 %v3043
    %v3114 = vpop.f32.mrf.mxu0
    %v3115 = vadd.f32 %v3040, %v3114
    %v3116 = vpop.f32.mrf.mxu0
    %3117 = vmatprep.mubr.f32.mxu0 0.0
    %3118 = vmatmul.mubr.f32.gmra.mxu0 %v3046
    %v3119 = vpop.f32.mrf.mxu0
    %v3120 = vadd.f32 %v3040, %v3119
    %v3121 = vpop.f32.mrf.mxu0
    %3122 = vdwg.mxu0
    %v3123 = vmul.f32 %v3115, 0.35355338
    %v3124 = vmul.f32 %v3120, 0.35355338
    %s3125 = scalar_lea.vmem %s2, 512
    %v3126 = vld [vmem:[%s3125] sm:$0xff]
    %v3127 = vld [vmem:[%s3125 + $0x8] sm:$0xff]
    %v3128 = vld [vmem:[%s3125 + $0x10] sm:$0xff]
    %v3129 = vld [vmem:[%s3125 + $0x18] sm:$0xff]
    %s3130 = scalar_lea.vmem %s3, 16
    %v3131 = vld [vmem:[%s3130] sm:$0x1]
    %v3133 = vlaneseq
    %v3134 = vshrl.u32 %v3133, 7
    %v3135 = vsub.s32 0, %v3134
    %v3136 = vrot.slane %v3131, %v3135
    %3138 = vmatprep.subr.mxu0 0.0
    %3139 = vmatpush1.msra.mxu0 0.0
    %3140 = vmatprep.subr.mxu0 0.0
    %3141 = vmatpush1.msra.mxu0 0.0
    %3142 = vmatprep.subr.mxu0 0.0
    %3143 = vmatpush1.msra.mxu0 0.0
    %3144 = vmatprep.subr.mxu0 0.0
    %3145 = vmatpush1.msra.mxu0 0.0
    %3146 = vmatprep.subr.mxu0 0.0
    %3147 = vmatpush1.msra.mxu0 0.0
    %3148 = vmatprep.subr.mxu0 0.0
    %3149 = vmatpush1.msra.mxu0 0.0
    %3150 = vmatprep.subr.mxu0 0.0
    %3151 = vmatpush1.msra.mxu0 0.0
    %3152 = vmatprep.subr.mxu0 0.0
    %3153 = vmatpush1.msra.mxu0 0.0
    %3154 = vmatprep.subr.mxu0 0.0
    %3155 = vmatpush1.msra.mxu0 0.0
    %3156 = vmatprep.subr.mxu0 0.0
    %3157 = vmatpush1.msra.mxu0 0.0
    %3158 = vmatprep.subr.mxu0 0.0
    %3159 = vmatpush1.msra.mxu0 0.0
    %3160 = vmatprep.subr.mxu0 0.0
    %3161 = vmatpush1.msra.mxu0 0.0
    %3162 = vmatprep.subr.mxu0 0.0
    %3163 = vmatpush1.msra.mxu0 %v3129
    %3164 = vmatprep.subr.mxu0 0.0
    %3165 = vmatpush1.msra.mxu0 %v3128
    %3166 = vmatprep.subr.mxu0 0.0
    %3167 = vmatpush1.msra.mxu0 %v3127
    %3168 = vmatprep.subr.mxu0 0.0
    %3169 = vmatpush1.msra.mxu0 %v3126
    %3170 = vmatprep.subr.mxu0 0.0
    %3171 = vmatpush2.msra.mxu0 0.0
    %3172 = vmatprep.subr.mxu0 0.0
    %3173 = vmatpush2.msra.mxu0 0.0
    %3174 = vmatprep.subr.mxu0 0.0
    %3175 = vmatpush2.msra.mxu0 0.0
    %3176 = vmatprep.subr.mxu0 0.0
    %3177 = vmatpush2.msra.mxu0 0.0
    %3178 = vmatprep.subr.mxu0 0.0
    %3179 = vmatpush2.msra.mxu0 0.0
    %3180 = vmatprep.subr.mxu0 0.0
    %3181 = vmatpush2.msra.mxu0 0.0
    %3182 = vmatprep.subr.mxu0 0.0
    %3183 = vmatpush2.msra.mxu0 0.0
    %3184 = vmatprep.subr.mxu0 0.0
    %3185 = vmatpush2.msra.mxu0 0.0
    %3186 = vmatprep.subr.mxu0 0.0
    %3187 = vmatpush2.msra.mxu0 0.0
    %3188 = vmatprep.subr.mxu0 0.0
    %3189 = vmatpush2.msra.mxu0 0.0
    %3190 = vmatprep.subr.mxu0 0.0
    %3191 = vmatpush2.msra.mxu0 0.0
    %3192 = vmatprep.subr.mxu0 0.0
    %3193 = vmatpush2.msra.mxu0 0.0
    %3194 = vmatprep.subr.mxu0 0.0
    %3195 = vmatpush2.msra.mxu0 0.0
    %3196 = vmatprep.subr.mxu0 0.0
    %3197 = vmatpush2.msra.mxu0 0.0
    %3198 = vmatprep.subr.mxu0 0.0
    %3199 = vmatpush2.msra.mxu0 0.0
    %3200 = vmatprep.subr.mxu0 0.0
    %3201 = vmatpush2.msra.mxu0 0.0
    %3202 = vmatprep.mubr.f32.mxu0 0.0
    %3203 = vmatmul.mubr.f32.gmra.mxu0 %v3043
    %v3204 = vpop.f32.mrf.mxu0
    %v3205 = vadd.f32 %v3136, %v3204
    %v3206 = vpop.f32.mrf.mxu0
    %3207 = vmatprep.mubr.f32.mxu0 0.0
    %3208 = vmatmul.mubr.f32.gmra.mxu0 %v3046
    %v3209 = vpop.f32.mrf.mxu0
    %v3210 = vadd.f32 %v3136, %v3209
    %v3211 = vpop.f32.mrf.mxu0
    %3212 = vdwg.mxu0
    %s3213 = scalar_lea.vmem %s2, 640
    %v3214 = vld [vmem:[%s3213] sm:$0xff]
    %v3215 = vld [vmem:[%s3213 + $0x8] sm:$0xff]
    %v3216 = vld [vmem:[%s3213 + $0x10] sm:$0xff]
    %v3217 = vld [vmem:[%s3213 + $0x18] sm:$0xff]
    %s3218 = scalar_lea.vmem %s3, 20
    %v3219 = vld [vmem:[%s3218] sm:$0x1]
    %v3221 = vlaneseq
    %v3222 = vshrl.u32 %v3221, 7
    %v3223 = vsub.s32 0, %v3222
    %v3224 = vrot.slane %v3219, %v3223
    %3226 = vmatprep.subr.mxu0 0.0
    %3227 = vmatpush1.msra.mxu0 0.0
    %3228 = vmatprep.subr.mxu0 0.0
    %3229 = vmatpush1.msra.mxu0 0.0
    %3230 = vmatprep.subr.mxu0 0.0
    %3231 = vmatpush1.msra.mxu0 0.0
    %3232 = vmatprep.subr.mxu0 0.0
    %3233 = vmatpush1.msra.mxu0 0.0
    %3234 = vmatprep.subr.mxu0 0.0
    %3235 = vmatpush1.msra.mxu0 0.0
    %3236 = vmatprep.subr.mxu0 0.0
    %3237 = vmatpush1.msra.mxu0 0.0
    %3238 = vmatprep.subr.mxu0 0.0
    %3239 = vmatpush1.msra.mxu0 0.0
    %3240 = vmatprep.subr.mxu0 0.0
    %3241 = vmatpush1.msra.mxu0 0.0
    %3242 = vmatprep.subr.mxu0 0.0
    %3243 = vmatpush1.msra.mxu0 0.0
    %3244 = vmatprep.subr.mxu0 0.0
    %3245 = vmatpush1.msra.mxu0 0.0
    %3246 = vmatprep.subr.mxu0 0.0
    %3247 = vmatpush1.msra.mxu0 0.0
    %3248 = vmatprep.subr.mxu0 0.0
    %3249 = vmatpush1.msra.mxu0 0.0
    %3250 = vmatprep.subr.mxu0 0.0
    %3251 = vmatpush1.msra.mxu0 %v3217
    %3252 = vmatprep.subr.mxu0 0.0
    %3253 = vmatpush1.msra.mxu0 %v3216
    %3254 = vmatprep.subr.mxu0 0.0
    %3255 = vmatpush1.msra.mxu0 %v3215
    %3256 = vmatprep.subr.mxu0 0.0
    %3257 = vmatpush1.msra.mxu0 %v3214
    %3258 = vmatprep.subr.mxu0 0.0
    %3259 = vmatpush2.msra.mxu0 0.0
    %3260 = vmatprep.subr.mxu0 0.0
    %3261 = vmatpush2.msra.mxu0 0.0
    %3262 = vmatprep.subr.mxu0 0.0
    %3263 = vmatpush2.msra.mxu0 0.0
    %3264 = vmatprep.subr.mxu0 0.0
    %3265 = vmatpush2.msra.mxu0 0.0
    %3266 = vmatprep.subr.mxu0 0.0
    %3267 = vmatpush2.msra.mxu0 0.0
    %3268 = vmatprep.subr.mxu0 0.0
    %3269 = vmatpush2.msra.mxu0 0.0
    %3270 = vmatprep.subr.mxu0 0.0
    %3271 = vmatpush2.msra.mxu0 0.0
    %3272 = vmatprep.subr.mxu0 0.0
    %3273 = vmatpush2.msra.mxu0 0.0
    %3274 = vmatprep.subr.mxu0 0.0
    %3275 = vmatpush2.msra.mxu0 0.0
    %3276 = vmatprep.subr.mxu0 0.0
    %3277 = vmatpush2.msra.mxu0 0.0
    %3278 = vmatprep.subr.mxu0 0.0
    %3279 = vmatpush2.msra.mxu0 0.0
    %3280 = vmatprep.subr.mxu0 0.0
    %3281 = vmatpush2.msra.mxu0 0.0
    %3282 = vmatprep.subr.mxu0 0.0
    %3283 = vmatpush2.msra.mxu0 0.0
    %3284 = vmatprep.subr.mxu0 0.0
    %3285 = vmatpush2.msra.mxu0 0.0
    %3286 = vmatprep.subr.mxu0 0.0
    %3287 = vmatpush2.msra.mxu0 0.0
    %3288 = vmatprep.subr.mxu0 0.0
    %3289 = vmatpush2.msra.mxu0 0.0
    %3290 = vmatprep.mubr.f32.mxu0 0.0
    %3291 = vmatmul.mubr.f32.gmra.mxu0 %v3043
    %v3292 = vpop.f32.mrf.mxu0
    %v3293 = vadd.f32 %v3224, %v3292
    %v3294 = vpop.f32.mrf.mxu0
    %3295 = vmatprep.mubr.f32.mxu0 0.0
    %3296 = vmatmul.mubr.f32.gmra.mxu0 %v3046
    %v3297 = vpop.f32.mrf.mxu0
    %v3298 = vadd.f32 %v3224, %v3297
    %v3299 = vpop.f32.mrf.mxu0
    %3300 = vdwg.mxu0
    %v3302 = vsel %vm317, %v3123, 0
    %v3305 = vsel %vm317, %v3205, 0
    %3307 = vmatprep.subr.mxu0 0.0
    %3308 = vmatpush1.xpose.msra.mxu0 0.0
    %3309 = vmatprep.subr.mxu0 0.0
    %3310 = vmatpush1.xpose.msra.mxu0 0.0
    %3311 = vmatprep.subr.mxu0 0.0
    %3312 = vmatpush1.xpose.msra.mxu0 0.0
    %3313 = vmatprep.subr.mxu0 0.0
    %3314 = vmatpush1.xpose.msra.mxu0 0.0
    %3315 = vmatprep.subr.mxu0 0.0
    %3316 = vmatpush1.xpose.msra.mxu0 0.0
    %3317 = vmatprep.subr.mxu0 0.0
    %3318 = vmatpush1.xpose.msra.mxu0 0.0
    %3319 = vmatprep.subr.mxu0 0.0
    %3320 = vmatpush1.xpose.msra.mxu0 0.0
    %3321 = vmatprep.subr.mxu0 0.0
    %3322 = vmatpush1.xpose.msra.mxu0 0.0
    %3323 = vmatprep.subr.mxu0 0.0
    %3324 = vmatpush1.xpose.msra.mxu0 0.0
    %3325 = vmatprep.subr.mxu0 0.0
    %3326 = vmatpush1.xpose.msra.mxu0 0.0
    %3327 = vmatprep.subr.mxu0 0.0
    %3328 = vmatpush1.xpose.msra.mxu0 0.0
    %3329 = vmatprep.subr.mxu0 0.0
    %3330 = vmatpush1.xpose.msra.mxu0 0.0
    %3331 = vmatprep.subr.mxu0 0.0
    %3332 = vmatpush1.xpose.msra.mxu0 0.0
    %3333 = vmatprep.subr.mxu0 0.0
    %3334 = vmatpush1.xpose.msra.mxu0 0.0
    %3335 = vmatprep.subr.mxu0 0.0
    %3336 = vmatpush1.xpose.msra.mxu0 0.0
    %3337 = vmatprep.subr.mxu0 0.0
    %3338 = vmatpush1.xpose.msra.mxu0 %v3305
    %3339 = vmatprep.subr.mxu0 0.0
    %3340 = vmatpush2.xpose.msra.mxu0 0.0
    %3341 = vmatprep.subr.mxu0 0.0
    %3342 = vmatpush2.xpose.msra.mxu0 0.0
    %3343 = vmatprep.subr.mxu0 0.0
    %3344 = vmatpush2.xpose.msra.mxu0 0.0
    %3345 = vmatprep.subr.mxu0 0.0
    %3346 = vmatpush2.xpose.msra.mxu0 0.0
    %3347 = vmatprep.subr.mxu0 0.0
    %3348 = vmatpush2.xpose.msra.mxu0 0.0
    %3349 = vmatprep.subr.mxu0 0.0
    %3350 = vmatpush2.xpose.msra.mxu0 0.0
    %3351 = vmatprep.subr.mxu0 0.0
    %3352 = vmatpush2.xpose.msra.mxu0 0.0
    %3353 = vmatprep.subr.mxu0 0.0
    %3354 = vmatpush2.xpose.msra.mxu0 0.0
    %3355 = vmatprep.subr.mxu0 0.0
    %3356 = vmatpush2.xpose.msra.mxu0 0.0
    %3357 = vmatprep.subr.mxu0 0.0
    %3358 = vmatpush2.xpose.msra.mxu0 0.0
    %3359 = vmatprep.subr.mxu0 0.0
    %3360 = vmatpush2.xpose.msra.mxu0 0.0
    %3361 = vmatprep.subr.mxu0 0.0
    %3362 = vmatpush2.xpose.msra.mxu0 0.0
    %3363 = vmatprep.subr.mxu0 0.0
    %3364 = vmatpush2.xpose.msra.mxu0 0.0
    %3365 = vmatprep.subr.mxu0 0.0
    %3366 = vmatpush2.xpose.msra.mxu0 0.0
    %3367 = vmatprep.subr.mxu0 0.0
    %3368 = vmatpush2.xpose.msra.mxu0 0.0
    %3369 = vmatprep.subr.mxu0 0.0
    %3370 = vmatpush2.xpose.msra.mxu0 0.0
    %3371 = vmatprep.mubr.f32.mxu0 0.0
    %3372 = vmatmul.mubr.f32.gmra.mxu0 %v3302
    %v3373 = vpop.f32.mrf.mxu0
    %v3374 = vadd.f32 0.0, %v3373
    %v3375 = vpop.f32.mrf.mxu0
    %3376 = vdwg.mxu0
    %v3378 = vsel %vm317, %v3124, 0
    %v3381 = vsel %vm317, %v3210, 0
    %3383 = vmatprep.subr.mxu0 0.0
    %3384 = vmatpush1.xpose.msra.mxu0 0.0
    %3385 = vmatprep.subr.mxu0 0.0
    %3386 = vmatpush1.xpose.msra.mxu0 0.0
    %3387 = vmatprep.subr.mxu0 0.0
    %3388 = vmatpush1.xpose.msra.mxu0 0.0
    %3389 = vmatprep.subr.mxu0 0.0
    %3390 = vmatpush1.xpose.msra.mxu0 0.0
    %3391 = vmatprep.subr.mxu0 0.0
    %3392 = vmatpush1.xpose.msra.mxu0 0.0
    %3393 = vmatprep.subr.mxu0 0.0
    %3394 = vmatpush1.xpose.msra.mxu0 0.0
    %3395 = vmatprep.subr.mxu0 0.0
    %3396 = vmatpush1.xpose.msra.mxu0 0.0
    %3397 = vmatprep.subr.mxu0 0.0
    %3398 = vmatpush1.xpose.msra.mxu0 0.0
    %3399 = vmatprep.subr.mxu0 0.0
    %3400 = vmatpush1.xpose.msra.mxu0 0.0
    %3401 = vmatprep.subr.mxu0 0.0
    %3402 = vmatpush1.xpose.msra.mxu0 0.0
    %3403 = vmatprep.subr.mxu0 0.0
    %3404 = vmatpush1.xpose.msra.mxu0 0.0
    %3405 = vmatprep.subr.mxu0 0.0
    %3406 = vmatpush1.xpose.msra.mxu0 0.0
    %3407 = vmatprep.subr.mxu0 0.0
    %3408 = vmatpush1.xpose.msra.mxu0 0.0
    %3409 = vmatprep.subr.mxu0 0.0
    %3410 = vmatpush1.xpose.msra.mxu0 0.0
    %3411 = vmatprep.subr.mxu0 0.0
    %3412 = vmatpush1.xpose.msra.mxu0 0.0
    %3413 = vmatprep.subr.mxu0 0.0
    %3414 = vmatpush1.xpose.msra.mxu0 %v3381
    %3415 = vmatprep.subr.mxu0 0.0
    %3416 = vmatpush2.xpose.msra.mxu0 0.0
    %3417 = vmatprep.subr.mxu0 0.0
    %3418 = vmatpush2.xpose.msra.mxu0 0.0
    %3419 = vmatprep.subr.mxu0 0.0
    %3420 = vmatpush2.xpose.msra.mxu0 0.0
    %3421 = vmatprep.subr.mxu0 0.0
    %3422 = vmatpush2.xpose.msra.mxu0 0.0
    %3423 = vmatprep.subr.mxu0 0.0
    %3424 = vmatpush2.xpose.msra.mxu0 0.0
    %3425 = vmatprep.subr.mxu0 0.0
    %3426 = vmatpush2.xpose.msra.mxu0 0.0
    %3427 = vmatprep.subr.mxu0 0.0
    %3428 = vmatpush2.xpose.msra.mxu0 0.0
    %3429 = vmatprep.subr.mxu0 0.0
    %3430 = vmatpush2.xpose.msra.mxu0 0.0
    %3431 = vmatprep.subr.mxu0 0.0
    %3432 = vmatpush2.xpose.msra.mxu0 0.0
    %3433 = vmatprep.subr.mxu0 0.0
    %3434 = vmatpush2.xpose.msra.mxu0 0.0
    %3435 = vmatprep.subr.mxu0 0.0
    %3436 = vmatpush2.xpose.msra.mxu0 0.0
    %3437 = vmatprep.subr.mxu0 0.0
    %3438 = vmatpush2.xpose.msra.mxu0 0.0
    %3439 = vmatprep.subr.mxu0 0.0
    %3440 = vmatpush2.xpose.msra.mxu0 0.0
    %3441 = vmatprep.subr.mxu0 0.0
    %3442 = vmatpush2.xpose.msra.mxu0 0.0
    %3443 = vmatprep.subr.mxu0 0.0
    %3444 = vmatpush2.xpose.msra.mxu0 0.0
    %3445 = vmatprep.subr.mxu0 0.0
    %3446 = vmatpush2.xpose.msra.mxu0 0.0
    %3447 = vmatprep.mubr.f32.mxu0 0.0
    %3448 = vmatmul.mubr.f32.gmra.mxu0 %v3378
    %v3449 = vpop.f32.mrf.mxu0
    %v3450 = vadd.f32 0.0, %v3449
    %v3451 = vpop.f32.mrf.mxu0
    %3452 = vdwg.mxu0
    %v3453 = vsel %vm317, %v3374, -inf
    %3454 = vmax.xlane.f32.xlu0 %v3453
    %v3455 = vpop.xlane.xlu0 %3454
    %v3456 = vsel %vm317, %v3450, -inf
    %3457 = vmax.xlane.f32.xlu0 %v3456
    %v3458 = vpop.xlane.xlu0 %3457
    %v3459 = vsub.f32 %v3374, %v3455
    %v3460 = vsub.f32 %v3450, %v3458
    %v3461 = vmul.f32 %v3459, 1.442695
    %v3462 = vpow.pop %v3461
    %v3463 = vmul.f32 %v3460, 1.442695
    %v3464 = vpow.pop %v3463
    %v3465 = vsel %vm317, %v3462, 0.0
    %3466 = vadd.xlane.f32.xlu0 %v3465
    %v3467 = vpop.xlane.xlu0 %3466
    %v3468 = vsel %vm317, %v3464, 0.0
    %3469 = vadd.xlane.f32.xlu0 %v3468
    %v3470 = vpop.xlane.xlu0 %3469
    %v3471 = vrcp.pop %v3467
    %v3472 = vmul.f32 %v3462, %v3471
    %v3473 = vrcp.pop %v3470
    %v3474 = vmul.f32 %v3464, %v3473
    %v3476 = vsel %vm317, %v3472, 0
    %3478 = vmatprep.subr.mxu0 0.0
    %3479 = vmatpush1.msra.mxu0 0.0
    %3480 = vmatprep.subr.mxu0 0.0
    %3481 = vmatpush1.msra.mxu0 0.0
    %3482 = vmatprep.subr.mxu0 0.0
    %3483 = vmatpush1.msra.mxu0 0.0
    %3484 = vmatprep.subr.mxu0 0.0
    %3485 = vmatpush1.msra.mxu0 0.0
    %3486 = vmatprep.subr.mxu0 0.0
    %3487 = vmatpush1.msra.mxu0 0.0
    %3488 = vmatprep.subr.mxu0 0.0
    %3489 = vmatpush1.msra.mxu0 0.0
    %3490 = vmatprep.subr.mxu0 0.0
    %3491 = vmatpush1.msra.mxu0 0.0
    %3492 = vmatprep.subr.mxu0 0.0
    %3493 = vmatpush1.msra.mxu0 0.0
    %3494 = vmatprep.subr.mxu0 0.0
    %3495 = vmatpush1.msra.mxu0 0.0
    %3496 = vmatprep.subr.mxu0 0.0
    %3497 = vmatpush1.msra.mxu0 0.0
    %3498 = vmatprep.subr.mxu0 0.0
    %3499 = vmatpush1.msra.mxu0 0.0
    %3500 = vmatprep.subr.mxu0 0.0
    %3501 = vmatpush1.msra.mxu0 0.0
    %3502 = vmatprep.subr.mxu0 0.0
    %3503 = vmatpush1.msra.mxu0 0.0
    %3504 = vmatprep.subr.mxu0 0.0
    %3505 = vmatpush1.msra.mxu0 0.0
    %3506 = vmatprep.subr.mxu0 0.0
    %3507 = vmatpush1.msra.mxu0 0.0
    %3508 = vmatprep.subr.mxu0 0.0
    %3509 = vmatpush1.msra.mxu0 %v3293
    %3510 = vmatprep.subr.mxu0 0.0
    %3511 = vmatpush2.msra.mxu0 0.0
    %3512 = vmatprep.subr.mxu0 0.0
    %3513 = vmatpush2.msra.mxu0 0.0
    %3514 = vmatprep.subr.mxu0 0.0
    %3515 = vmatpush2.msra.mxu0 0.0
    %3516 = vmatprep.subr.mxu0 0.0
    %3517 = vmatpush2.msra.mxu0 0.0
    %3518 = vmatprep.subr.mxu0 0.0
    %3519 = vmatpush2.msra.mxu0 0.0
    %3520 = vmatprep.subr.mxu0 0.0
    %3521 = vmatpush2.msra.mxu0 0.0
    %3522 = vmatprep.subr.mxu0 0.0
    %3523 = vmatpush2.msra.mxu0 0.0
    %3524 = vmatprep.subr.mxu0 0.0
    %3525 = vmatpush2.msra.mxu0 0.0
    %3526 = vmatprep.subr.mxu0 0.0
    %3527 = vmatpush2.msra.mxu0 0.0
    %3528 = vmatprep.subr.mxu0 0.0
    %3529 = vmatpush2.msra.mxu0 0.0
    %3530 = vmatprep.subr.mxu0 0.0
    %3531 = vmatpush2.msra.mxu0 0.0
    %3532 = vmatprep.subr.mxu0 0.0
    %3533 = vmatpush2.msra.mxu0 0.0
    %3534 = vmatprep.subr.mxu0 0.0
    %3535 = vmatpush2.msra.mxu0 0.0
    %3536 = vmatprep.subr.mxu0 0.0
    %3537 = vmatpush2.msra.mxu0 0.0
    %3538 = vmatprep.subr.mxu0 0.0
    %3539 = vmatpush2.msra.mxu0 0.0
    %3540 = vmatprep.subr.mxu0 0.0
    %3541 = vmatpush2.msra.mxu0 0.0
    %3542 = vmatprep.mubr.f32.mxu0 0.0
    %3543 = vmatmul.mubr.f32.gmra.mxu0 %v3476
    %v3544 = vpop.f32.mrf.mxu0
    %v3545 = vadd.f32 0.0, %v3544
    %v3546 = vpop.f32.mrf.mxu0
    %3547 = vdwg.mxu0
    %v3549 = vsel %vm317, %v3474, 0
    %3551 = vmatprep.subr.mxu0 0.0
    %3552 = vmatpush1.msra.mxu0 0.0
    %3553 = vmatprep.subr.mxu0 0.0
    %3554 = vmatpush1.msra.mxu0 0.0
    %3555 = vmatprep.subr.mxu0 0.0
    %3556 = vmatpush1.msra.mxu0 0.0
    %3557 = vmatprep.subr.mxu0 0.0
    %3558 = vmatpush1.msra.mxu0 0.0
    %3559 = vmatprep.subr.mxu0 0.0
    %3560 = vmatpush1.msra.mxu0 0.0
    %3561 = vmatprep.subr.mxu0 0.0
    %3562 = vmatpush1.msra.mxu0 0.0
    %3563 = vmatprep.subr.mxu0 0.0
    %3564 = vmatpush1.msra.mxu0 0.0
    %3565 = vmatprep.subr.mxu0 0.0
    %3566 = vmatpush1.msra.mxu0 0.0
    %3567 = vmatprep.subr.mxu0 0.0
    %3568 = vmatpush1.msra.mxu0 0.0
    %3569 = vmatprep.subr.mxu0 0.0
    %3570 = vmatpush1.msra.mxu0 0.0
    %3571 = vmatprep.subr.mxu0 0.0
    %3572 = vmatpush1.msra.mxu0 0.0
    %3573 = vmatprep.subr.mxu0 0.0
    %3574 = vmatpush1.msra.mxu0 0.0
    %3575 = vmatprep.subr.mxu0 0.0
    %3576 = vmatpush1.msra.mxu0 0.0
    %3577 = vmatprep.subr.mxu0 0.0
    %3578 = vmatpush1.msra.mxu0 0.0
    %3579 = vmatprep.subr.mxu0 0.0
    %3580 = vmatpush1.msra.mxu0 0.0
    %3581 = vmatprep.subr.mxu0 0.0
    %3582 = vmatpush1.msra.mxu0 %v3298
    %3583 = vmatprep.subr.mxu0 0.0
    %3584 = vmatpush2.msra.mxu0 0.0
    %3585 = vmatprep.subr.mxu0 0.0
    %3586 = vmatpush2.msra.mxu0 0.0
    %3587 = vmatprep.subr.mxu0 0.0
    %3588 = vmatpush2.msra.mxu0 0.0
    %3589 = vmatprep.subr.mxu0 0.0
    %3590 = vmatpush2.msra.mxu0 0.0
    %3591 = vmatprep.subr.mxu0 0.0
    %3592 = vmatpush2.msra.mxu0 0.0
    %3593 = vmatprep.subr.mxu0 0.0
    %3594 = vmatpush2.msra.mxu0 0.0
    %3595 = vmatprep.subr.mxu0 0.0
    %3596 = vmatpush2.msra.mxu0 0.0
    %3597 = vmatprep.subr.mxu0 0.0
    %3598 = vmatpush2.msra.mxu0 0.0
    %3599 = vmatprep.subr.mxu0 0.0
    %3600 = vmatpush2.msra.mxu0 0.0
    %3601 = vmatprep.subr.mxu0 0.0
    %3602 = vmatpush2.msra.mxu0 0.0
    %3603 = vmatprep.subr.mxu0 0.0
    %3604 = vmatpush2.msra.mxu0 0.0
    %3605 = vmatprep.subr.mxu0 0.0
    %3606 = vmatpush2.msra.mxu0 0.0
    %3607 = vmatprep.subr.mxu0 0.0
    %3608 = vmatpush2.msra.mxu0 0.0
    %3609 = vmatprep.subr.mxu0 0.0
    %3610 = vmatpush2.msra.mxu0 0.0
    %3611 = vmatprep.subr.mxu0 0.0
    %3612 = vmatpush2.msra.mxu0 0.0
    %3613 = vmatprep.subr.mxu0 0.0
    %3614 = vmatpush2.msra.mxu0 0.0
    %3615 = vmatprep.mubr.f32.mxu0 0.0
    %3616 = vmatmul.mubr.f32.gmra.mxu0 %v3549
    %v3617 = vpop.f32.mrf.mxu0
    %v3618 = vadd.f32 0.0, %v3617
    %v3619 = vpop.f32.mrf.mxu0
    %3620 = vdwg.mxu0
    %s3621 = scalar_lea.vmem %s4, 32
    %v3622 = vld [vmem:[%s3621] sm:$0xff]
    %s3623 = scalar_lea.vmem %s2, 416
    %v3624 = vld [vmem:[%s3623] sm:$0xff]
    %v3625 = vld [vmem:[%s3623 + $0x8] sm:$0xff]
    %v3626 = vld [vmem:[%s3623 + $0x10] sm:$0xff]
    %v3627 = vld [vmem:[%s3623 + $0x18] sm:$0xff]
    %s3628 = scalar_lea.vmem %s3, 13
    %v3629 = vld [vmem:[%s3628] sm:$0x1]
    %v3631 = vlaneseq
    %v3632 = vshrl.u32 %v3631, 7
    %v3633 = vsub.s32 0, %v3632
    %v3634 = vrot.slane %v3629, %v3633
    %3636 = vmatprep.subr.mxu0 0.0
    %3637 = vmatpush1.msra.mxu0 0.0
    %3638 = vmatprep.subr.mxu0 0.0
    %3639 = vmatpush1.msra.mxu0 0.0
    %3640 = vmatprep.subr.mxu0 0.0
    %3641 = vmatpush1.msra.mxu0 0.0
    %3642 = vmatprep.subr.mxu0 0.0
    %3643 = vmatpush1.msra.mxu0 0.0
    %3644 = vmatprep.subr.mxu0 0.0
    %3645 = vmatpush1.msra.mxu0 0.0
    %3646 = vmatprep.subr.mxu0 0.0
    %3647 = vmatpush1.msra.mxu0 0.0
    %3648 = vmatprep.subr.mxu0 0.0
    %3649 = vmatpush1.msra.mxu0 0.0
    %3650 = vmatprep.subr.mxu0 0.0
    %3651 = vmatpush1.msra.mxu0 0.0
    %3652 = vmatprep.subr.mxu0 0.0
    %3653 = vmatpush1.msra.mxu0 0.0
    %3654 = vmatprep.subr.mxu0 0.0
    %3655 = vmatpush1.msra.mxu0 0.0
    %3656 = vmatprep.subr.mxu0 0.0
    %3657 = vmatpush1.msra.mxu0 0.0
    %3658 = vmatprep.subr.mxu0 0.0
    %3659 = vmatpush1.msra.mxu0 0.0
    %3660 = vmatprep.subr.mxu0 0.0
    %3661 = vmatpush1.msra.mxu0 %v3627
    %3662 = vmatprep.subr.mxu0 0.0
    %3663 = vmatpush1.msra.mxu0 %v3626
    %3664 = vmatprep.subr.mxu0 0.0
    %3665 = vmatpush1.msra.mxu0 %v3625
    %3666 = vmatprep.subr.mxu0 0.0
    %3667 = vmatpush1.msra.mxu0 %v3624
    %3668 = vmatprep.subr.mxu0 0.0
    %3669 = vmatpush2.msra.mxu0 0.0
    %3670 = vmatprep.subr.mxu0 0.0
    %3671 = vmatpush2.msra.mxu0 0.0
    %3672 = vmatprep.subr.mxu0 0.0
    %3673 = vmatpush2.msra.mxu0 0.0
    %3674 = vmatprep.subr.mxu0 0.0
    %3675 = vmatpush2.msra.mxu0 0.0
    %3676 = vmatprep.subr.mxu0 0.0
    %3677 = vmatpush2.msra.mxu0 0.0
    %3678 = vmatprep.subr.mxu0 0.0
    %3679 = vmatpush2.msra.mxu0 0.0
    %3680 = vmatprep.subr.mxu0 0.0
    %3681 = vmatpush2.msra.mxu0 0.0
    %3682 = vmatprep.subr.mxu0 0.0
    %3683 = vmatpush2.msra.mxu0 0.0
    %3684 = vmatprep.subr.mxu0 0.0
    %3685 = vmatpush2.msra.mxu0 0.0
    %3686 = vmatprep.subr.mxu0 0.0
    %3687 = vmatpush2.msra.mxu0 0.0
    %3688 = vmatprep.subr.mxu0 0.0
    %3689 = vmatpush2.msra.mxu0 0.0
    %3690 = vmatprep.subr.mxu0 0.0
    %3691 = vmatpush2.msra.mxu0 0.0
    %3692 = vmatprep.subr.mxu0 0.0
    %3693 = vmatpush2.msra.mxu0 0.0
    %3694 = vmatprep.subr.mxu0 0.0
    %3695 = vmatpush2.msra.mxu0 0.0
    %3696 = vmatprep.subr.mxu0 0.0
    %3697 = vmatpush2.msra.mxu0 0.0
    %3698 = vmatprep.subr.mxu0 0.0
    %3699 = vmatpush2.msra.mxu0 0.0
    %3700 = vmatprep.mubr.f32.mxu0 0.0
    %3701 = vmatmul.mubr.f32.gmra.mxu0 %v3043
    %v3702 = vpop.f32.mrf.mxu0
    %v3703 = vadd.f32 %v3634, %v3702
    %v3704 = vpop.f32.mrf.mxu0
    %3705 = vmatprep.mubr.f32.mxu0 0.0
    %3706 = vmatmul.mubr.f32.gmra.mxu0 %v3046
    %v3707 = vpop.f32.mrf.mxu0
    %v3708 = vadd.f32 %v3634, %v3707
    %v3709 = vpop.f32.mrf.mxu0
    %3710 = vdwg.mxu0
    %v3711 = vmul.f32 %v3703, 0.35355338
    %v3712 = vmul.f32 %v3708, 0.35355338
    %s3713 = scalar_lea.vmem %s2, 544
    %v3714 = vld [vmem:[%s3713] sm:$0xff]
    %v3715 = vld [vmem:[%s3713 + $0x8] sm:$0xff]
    %v3716 = vld [vmem:[%s3713 + $0x10] sm:$0xff]
    %v3717 = vld [vmem:[%s3713 + $0x18] sm:$0xff]
    %s3718 = scalar_lea.vmem %s3, 17
    %v3719 = vld [vmem:[%s3718] sm:$0x1]
    %v3721 = vlaneseq
    %v3722 = vshrl.u32 %v3721, 7
    %v3723 = vsub.s32 0, %v3722
    %v3724 = vrot.slane %v3719, %v3723
    %3726 = vmatprep.subr.mxu0 0.0
    %3727 = vmatpush1.msra.mxu0 0.0
    %3728 = vmatprep.subr.mxu0 0.0
    %3729 = vmatpush1.msra.mxu0 0.0
    %3730 = vmatprep.subr.mxu0 0.0
    %3731 = vmatpush1.msra.mxu0 0.0
    %3732 = vmatprep.subr.mxu0 0.0
    %3733 = vmatpush1.msra.mxu0 0.0
    %3734 = vmatprep.subr.mxu0 0.0
    %3735 = vmatpush1.msra.mxu0 0.0
    %3736 = vmatprep.subr.mxu0 0.0
    %3737 = vmatpush1.msra.mxu0 0.0
    %3738 = vmatprep.subr.mxu0 0.0
    %3739 = vmatpush1.msra.mxu0 0.0
    %3740 = vmatprep.subr.mxu0 0.0
    %3741 = vmatpush1.msra.mxu0 0.0
    %3742 = vmatprep.subr.mxu0 0.0
    %3743 = vmatpush1.msra.mxu0 0.0
    %3744 = vmatprep.subr.mxu0 0.0
    %3745 = vmatpush1.msra.mxu0 0.0
    %3746 = vmatprep.subr.mxu0 0.0
    %3747 = vmatpush1.msra.mxu0 0.0
    %3748 = vmatprep.subr.mxu0 0.0
    %3749 = vmatpush1.msra.mxu0 0.0
    %3750 = vmatprep.subr.mxu0 0.0
    %3751 = vmatpush1.msra.mxu0 %v3717
    %3752 = vmatprep.subr.mxu0 0.0
    %3753 = vmatpush1.msra.mxu0 %v3716
    %3754 = vmatprep.subr.mxu0 0.0
    %3755 = vmatpush1.msra.mxu0 %v3715
    %3756 = vmatprep.subr.mxu0 0.0
    %3757 = vmatpush1.msra.mxu0 %v3714
    %3758 = vmatprep.subr.mxu0 0.0
    %3759 = vmatpush2.msra.mxu0 0.0
    %3760 = vmatprep.subr.mxu0 0.0
    %3761 = vmatpush2.msra.mxu0 0.0
    %3762 = vmatprep.subr.mxu0 0.0
    %3763 = vmatpush2.msra.mxu0 0.0
    %3764 = vmatprep.subr.mxu0 0.0
    %3765 = vmatpush2.msra.mxu0 0.0
    %3766 = vmatprep.subr.mxu0 0.0
    %3767 = vmatpush2.msra.mxu0 0.0
    %3768 = vmatprep.subr.mxu0 0.0
    %3769 = vmatpush2.msra.mxu0 0.0
    %3770 = vmatprep.subr.mxu0 0.0
    %3771 = vmatpush2.msra.mxu0 0.0
    %3772 = vmatprep.subr.mxu0 0.0
    %3773 = vmatpush2.msra.mxu0 0.0
    %3774 = vmatprep.subr.mxu0 0.0
    %3775 = vmatpush2.msra.mxu0 0.0
    %3776 = vmatprep.subr.mxu0 0.0
    %3777 = vmatpush2.msra.mxu0 0.0
    %3778 = vmatprep.subr.mxu0 0.0
    %3779 = vmatpush2.msra.mxu0 0.0
    %3780 = vmatprep.subr.mxu0 0.0
    %3781 = vmatpush2.msra.mxu0 0.0
    %3782 = vmatprep.subr.mxu0 0.0
    %3783 = vmatpush2.msra.mxu0 0.0
    %3784 = vmatprep.subr.mxu0 0.0
    %3785 = vmatpush2.msra.mxu0 0.0
    %3786 = vmatprep.subr.mxu0 0.0
    %3787 = vmatpush2.msra.mxu0 0.0
    %3788 = vmatprep.subr.mxu0 0.0
    %3789 = vmatpush2.msra.mxu0 0.0
    %3790 = vmatprep.mubr.f32.mxu0 0.0
    %3791 = vmatmul.mubr.f32.gmra.mxu0 %v3043
    %v3792 = vpop.f32.mrf.mxu0
    %v3793 = vadd.f32 %v3724, %v3792
    %v3794 = vpop.f32.mrf.mxu0
    %3795 = vmatprep.mubr.f32.mxu0 0.0
    %3796 = vmatmul.mubr.f32.gmra.mxu0 %v3046
    %v3797 = vpop.f32.mrf.mxu0
    %v3798 = vadd.f32 %v3724, %v3797
    %v3799 = vpop.f32.mrf.mxu0
    %3800 = vdwg.mxu0
    %s3801 = scalar_lea.vmem %s2, 672
    %v3802 = vld [vmem:[%s3801] sm:$0xff]
    %v3803 = vld [vmem:[%s3801 + $0x8] sm:$0xff]
    %v3804 = vld [vmem:[%s3801 + $0x10] sm:$0xff]
    %v3805 = vld [vmem:[%s3801 + $0x18] sm:$0xff]
    %s3806 = scalar_lea.vmem %s3, 21
    %v3807 = vld [vmem:[%s3806] sm:$0x1]
    %v3809 = vlaneseq
    %v3810 = vshrl.u32 %v3809, 7
    %v3811 = vsub.s32 0, %v3810
    %v3812 = vrot.slane %v3807, %v3811
    %3814 = vmatprep.subr.mxu0 0.0
    %3815 = vmatpush1.msra.mxu0 0.0
    %3816 = vmatprep.subr.mxu0 0.0
    %3817 = vmatpush1.msra.mxu0 0.0
    %3818 = vmatprep.subr.mxu0 0.0
    %3819 = vmatpush1.msra.mxu0 0.0
    %3820 = vmatprep.subr.mxu0 0.0
    %3821 = vmatpush1.msra.mxu0 0.0
    %3822 = vmatprep.subr.mxu0 0.0
    %3823 = vmatpush1.msra.mxu0 0.0
    %3824 = vmatprep.subr.mxu0 0.0
    %3825 = vmatpush1.msra.mxu0 0.0
    %3826 = vmatprep.subr.mxu0 0.0
    %3827 = vmatpush1.msra.mxu0 0.0
    %3828 = vmatprep.subr.mxu0 0.0
    %3829 = vmatpush1.msra.mxu0 0.0
    %3830 = vmatprep.subr.mxu0 0.0
    %3831 = vmatpush1.msra.mxu0 0.0
    %3832 = vmatprep.subr.mxu0 0.0
    %3833 = vmatpush1.msra.mxu0 0.0
    %3834 = vmatprep.subr.mxu0 0.0
    %3835 = vmatpush1.msra.mxu0 0.0
    %3836 = vmatprep.subr.mxu0 0.0
    %3837 = vmatpush1.msra.mxu0 0.0
    %3838 = vmatprep.subr.mxu0 0.0
    %3839 = vmatpush1.msra.mxu0 %v3805
    %3840 = vmatprep.subr.mxu0 0.0
    %3841 = vmatpush1.msra.mxu0 %v3804
    %3842 = vmatprep.subr.mxu0 0.0
    %3843 = vmatpush1.msra.mxu0 %v3803
    %3844 = vmatprep.subr.mxu0 0.0
    %3845 = vmatpush1.msra.mxu0 %v3802
    %3846 = vmatprep.subr.mxu0 0.0
    %3847 = vmatpush2.msra.mxu0 0.0
    %3848 = vmatprep.subr.mxu0 0.0
    %3849 = vmatpush2.msra.mxu0 0.0
    %3850 = vmatprep.subr.mxu0 0.0
    %3851 = vmatpush2.msra.mxu0 0.0
    %3852 = vmatprep.subr.mxu0 0.0
    %3853 = vmatpush2.msra.mxu0 0.0
    %3854 = vmatprep.subr.mxu0 0.0
    %3855 = vmatpush2.msra.mxu0 0.0
    %3856 = vmatprep.subr.mxu0 0.0
    %3857 = vmatpush2.msra.mxu0 0.0
    %3858 = vmatprep.subr.mxu0 0.0
    %3859 = vmatpush2.msra.mxu0 0.0
    %3860 = vmatprep.subr.mxu0 0.0
    %3861 = vmatpush2.msra.mxu0 0.0
    %3862 = vmatprep.subr.mxu0 0.0
    %3863 = vmatpush2.msra.mxu0 0.0
    %3864 = vmatprep.subr.mxu0 0.0
    %3865 = vmatpush2.msra.mxu0 0.0
    %3866 = vmatprep.subr.mxu0 0.0
    %3867 = vmatpush2.msra.mxu0 0.0
    %3868 = vmatprep.subr.mxu0 0.0
    %3869 = vmatpush2.msra.mxu0 0.0
    %3870 = vmatprep.subr.mxu0 0.0
    %3871 = vmatpush2.msra.mxu0 0.0
    %3872 = vmatprep.subr.mxu0 0.0
    %3873 = vmatpush2.msra.mxu0 0.0
    %3874 = vmatprep.subr.mxu0 0.0
    %3875 = vmatpush2.msra.mxu0 0.0
    %3876 = vmatprep.subr.mxu0 0.0
    %3877 = vmatpush2.msra.mxu0 0.0
    %3878 = vmatprep.mubr.f32.mxu0 0.0
    %3879 = vmatmul.mubr.f32.gmra.mxu0 %v3043
    %v3880 = vpop.f32.mrf.mxu0
    %v3881 = vadd.f32 %v3812, %v3880
    %v3882 = vpop.f32.mrf.mxu0
    %3883 = vmatprep.mubr.f32.mxu0 0.0
    %3884 = vmatmul.mubr.f32.gmra.mxu0 %v3046
    %v3885 = vpop.f32.mrf.mxu0
    %v3886 = vadd.f32 %v3812, %v3885
    %v3887 = vpop.f32.mrf.mxu0
    %3888 = vdwg.mxu0
    %v3890 = vsel %vm317, %v3711, 0
    %v3893 = vsel %vm317, %v3793, 0
    %3895 = vmatprep.subr.mxu0 0.0
    %3896 = vmatpush1.xpose.msra.mxu0 0.0
    %3897 = vmatprep.subr.mxu0 0.0
    %3898 = vmatpush1.xpose.msra.mxu0 0.0
    %3899 = vmatprep.subr.mxu0 0.0
    %3900 = vmatpush1.xpose.msra.mxu0 0.0
    %3901 = vmatprep.subr.mxu0 0.0
    %3902 = vmatpush1.xpose.msra.mxu0 0.0
    %3903 = vmatprep.subr.mxu0 0.0
    %3904 = vmatpush1.xpose.msra.mxu0 0.0
    %3905 = vmatprep.subr.mxu0 0.0
    %3906 = vmatpush1.xpose.msra.mxu0 0.0
    %3907 = vmatprep.subr.mxu0 0.0
    %3908 = vmatpush1.xpose.msra.mxu0 0.0
    %3909 = vmatprep.subr.mxu0 0.0
    %3910 = vmatpush1.xpose.msra.mxu0 0.0
    %3911 = vmatprep.subr.mxu0 0.0
    %3912 = vmatpush1.xpose.msra.mxu0 0.0
    %3913 = vmatprep.subr.mxu0 0.0
    %3914 = vmatpush1.xpose.msra.mxu0 0.0
    %3915 = vmatprep.subr.mxu0 0.0
    %3916 = vmatpush1.xpose.msra.mxu0 0.0
    %3917 = vmatprep.subr.mxu0 0.0
    %3918 = vmatpush1.xpose.msra.mxu0 0.0
    %3919 = vmatprep.subr.mxu0 0.0
    %3920 = vmatpush1.xpose.msra.mxu0 0.0
    %3921 = vmatprep.subr.mxu0 0.0
    %3922 = vmatpush1.xpose.msra.mxu0 0.0
    %3923 = vmatprep.subr.mxu0 0.0
    %3924 = vmatpush1.xpose.msra.mxu0 0.0
    %3925 = vmatprep.subr.mxu0 0.0
    %3926 = vmatpush1.xpose.msra.mxu0 %v3893
    %3927 = vmatprep.subr.mxu0 0.0
    %3928 = vmatpush2.xpose.msra.mxu0 0.0
    %3929 = vmatprep.subr.mxu0 0.0
    %3930 = vmatpush2.xpose.msra.mxu0 0.0
    %3931 = vmatprep.subr.mxu0 0.0
    %3932 = vmatpush2.xpose.msra.mxu0 0.0
    %3933 = vmatprep.subr.mxu0 0.0
    %3934 = vmatpush2.xpose.msra.mxu0 0.0
    %3935 = vmatprep.subr.mxu0 0.0
    %3936 = vmatpush2.xpose.msra.mxu0 0.0
    %3937 = vmatprep.subr.mxu0 0.0
    %3938 = vmatpush2.xpose.msra.mxu0 0.0
    %3939 = vmatprep.subr.mxu0 0.0
    %3940 = vmatpush2.xpose.msra.mxu0 0.0
    %3941 = vmatprep.subr.mxu0 0.0
    %3942 = vmatpush2.xpose.msra.mxu0 0.0
    %3943 = vmatprep.subr.mxu0 0.0
    %3944 = vmatpush2.xpose.msra.mxu0 0.0
    %3945 = vmatprep.subr.mxu0 0.0
    %3946 = vmatpush2.xpose.msra.mxu0 0.0
    %3947 = vmatprep.subr.mxu0 0.0
    %3948 = vmatpush2.xpose.msra.mxu0 0.0
    %3949 = vmatprep.subr.mxu0 0.0
    %3950 = vmatpush2.xpose.msra.mxu0 0.0
    %3951 = vmatprep.subr.mxu0 0.0
    %3952 = vmatpush2.xpose.msra.mxu0 0.0
    %3953 = vmatprep.subr.mxu0 0.0
    %3954 = vmatpush2.xpose.msra.mxu0 0.0
    %3955 = vmatprep.subr.mxu0 0.0
    %3956 = vmatpush2.xpose.msra.mxu0 0.0
    %3957 = vmatprep.subr.mxu0 0.0
    %3958 = vmatpush2.xpose.msra.mxu0 0.0
    %3959 = vmatprep.mubr.f32.mxu0 0.0
    %3960 = vmatmul.mubr.f32.gmra.mxu0 %v3890
    %v3961 = vpop.f32.mrf.mxu0
    %v3962 = vadd.f32 0.0, %v3961
    %v3963 = vpop.f32.mrf.mxu0
    %3964 = vdwg.mxu0
    %v3966 = vsel %vm317, %v3712, 0
    %v3969 = vsel %vm317, %v3798, 0
    %3971 = vmatprep.subr.mxu0 0.0
    %3972 = vmatpush1.xpose.msra.mxu0 0.0
    %3973 = vmatprep.subr.mxu0 0.0
    %3974 = vmatpush1.xpose.msra.mxu0 0.0
    %3975 = vmatprep.subr.mxu0 0.0
    %3976 = vmatpush1.xpose.msra.mxu0 0.0
    %3977 = vmatprep.subr.mxu0 0.0
    %3978 = vmatpush1.xpose.msra.mxu0 0.0
    %3979 = vmatprep.subr.mxu0 0.0
    %3980 = vmatpush1.xpose.msra.mxu0 0.0
    %3981 = vmatprep.subr.mxu0 0.0
    %3982 = vmatpush1.xpose.msra.mxu0 0.0
    %3983 = vmatprep.subr.mxu0 0.0
    %3984 = vmatpush1.xpose.msra.mxu0 0.0
    %3985 = vmatprep.subr.mxu0 0.0
    %3986 = vmatpush1.xpose.msra.mxu0 0.0
    %3987 = vmatprep.subr.mxu0 0.0
    %3988 = vmatpush1.xpose.msra.mxu0 0.0
    %3989 = vmatprep.subr.mxu0 0.0
    %3990 = vmatpush1.xpose.msra.mxu0 0.0
    %3991 = vmatprep.subr.mxu0 0.0
    %3992 = vmatpush1.xpose.msra.mxu0 0.0
    %3993 = vmatprep.subr.mxu0 0.0
    %3994 = vmatpush1.xpose.msra.mxu0 0.0
    %3995 = vmatprep.subr.mxu0 0.0
    %3996 = vmatpush1.xpose.msra.mxu0 0.0
    %3997 = vmatprep.subr.mxu0 0.0
    %3998 = vmatpush1.xpose.msra.mxu0 0.0
    %3999 = vmatprep.subr.mxu0 0.0
    %4000 = vmatpush1.xpose.msra.mxu0 0.0
    %4001 = vmatprep.subr.mxu0 0.0
    %4002 = vmatpush1.xpose.msra.mxu0 %v3969
    %4003 = vmatprep.subr.mxu0 0.0
    %4004 = vmatpush2.xpose.msra.mxu0 0.0
    %4005 = vmatprep.subr.mxu0 0.0
    %4006 = vmatpush2.xpose.msra.mxu0 0.0
    %4007 = vmatprep.subr.mxu0 0.0
    %4008 = vmatpush2.xpose.msra.mxu0 0.0
    %4009 = vmatprep.subr.mxu0 0.0
    %4010 = vmatpush2.xpose.msra.mxu0 0.0
    %4011 = vmatprep.subr.mxu0 0.0
    %4012 = vmatpush2.xpose.msra.mxu0 0.0
    %4013 = vmatprep.subr.mxu0 0.0
    %4014 = vmatpush2.xpose.msra.mxu0 0.0
    %4015 = vmatprep.subr.mxu0 0.0
    %4016 = vmatpush2.xpose.msra.mxu0 0.0
    %4017 = vmatprep.subr.mxu0 0.0
    %4018 = vmatpush2.xpose.msra.mxu0 0.0
    %4019 = vmatprep.subr.mxu0 0.0
    %4020 = vmatpush2.xpose.msra.mxu0 0.0
    %4021 = vmatprep.subr.mxu0 0.0
    %4022 = vmatpush2.xpose.msra.mxu0 0.0
    %4023 = vmatprep.subr.mxu0 0.0
    %4024 = vmatpush2.xpose.msra.mxu0 0.0
    %4025 = vmatprep.subr.mxu0 0.0
    %4026 = vmatpush2.xpose.msra.mxu0 0.0
    %4027 = vmatprep.subr.mxu0 0.0
    %4028 = vmatpush2.xpose.msra.mxu0 0.0
    %4029 = vmatprep.subr.mxu0 0.0
    %4030 = vmatpush2.xpose.msra.mxu0 0.0
    %4031 = vmatprep.subr.mxu0 0.0
    %4032 = vmatpush2.xpose.msra.mxu0 0.0
    %4033 = vmatprep.subr.mxu0 0.0
    %4034 = vmatpush2.xpose.msra.mxu0 0.0
    %4035 = vmatprep.mubr.f32.mxu0 0.0
    %4036 = vmatmul.mubr.f32.gmra.mxu0 %v3966
    %v4037 = vpop.f32.mrf.mxu0
    %v4038 = vadd.f32 0.0, %v4037
    %v4039 = vpop.f32.mrf.mxu0
    %4040 = vdwg.mxu0
    %v4041 = vsel %vm317, %v3962, -inf
    %4042 = vmax.xlane.f32.xlu0 %v4041
    %v4043 = vpop.xlane.xlu0 %4042
    %v4044 = vsel %vm317, %v4038, -inf
    %4045 = vmax.xlane.f32.xlu0 %v4044
    %v4046 = vpop.xlane.xlu0 %4045
    %v4047 = vsub.f32 %v3962, %v4043
    %v4048 = vsub.f32 %v4038, %v4046
    %v4049 = vmul.f32 %v4047, 1.442695
    %v4050 = vpow.pop %v4049
    %v4051 = vmul.f32 %v4048, 1.442695
    %v4052 = vpow.pop %v4051
    %v4053 = vsel %vm317, %v4050, 0.0
    %4054 = vadd.xlane.f32.xlu0 %v4053
    %v4055 = vpop.xlane.xlu0 %4054
    %v4056 = vsel %vm317, %v4052, 0.0
    %4057 = vadd.xlane.f32.xlu0 %v4056
    %v4058 = vpop.xlane.xlu0 %4057
    %v4059 = vrcp.pop %v4055
    %v4060 = vmul.f32 %v4050, %v4059
    %v4061 = vrcp.pop %v4058
    %v4062 = vmul.f32 %v4052, %v4061
    %v4064 = vsel %vm317, %v4060, 0
    %4066 = vmatprep.subr.mxu0 0.0
    %4067 = vmatpush1.msra.mxu0 0.0
    %4068 = vmatprep.subr.mxu0 0.0
    %4069 = vmatpush1.msra.mxu0 0.0
    %4070 = vmatprep.subr.mxu0 0.0
    %4071 = vmatpush1.msra.mxu0 0.0
    %4072 = vmatprep.subr.mxu0 0.0
    %4073 = vmatpush1.msra.mxu0 0.0
    %4074 = vmatprep.subr.mxu0 0.0
    %4075 = vmatpush1.msra.mxu0 0.0
    %4076 = vmatprep.subr.mxu0 0.0
    %4077 = vmatpush1.msra.mxu0 0.0
    %4078 = vmatprep.subr.mxu0 0.0
    %4079 = vmatpush1.msra.mxu0 0.0
    %4080 = vmatprep.subr.mxu0 0.0
    %4081 = vmatpush1.msra.mxu0 0.0
    %4082 = vmatprep.subr.mxu0 0.0
    %4083 = vmatpush1.msra.mxu0 0.0
    %4084 = vmatprep.subr.mxu0 0.0
    %4085 = vmatpush1.msra.mxu0 0.0
    %4086 = vmatprep.subr.mxu0 0.0
    %4087 = vmatpush1.msra.mxu0 0.0
    %4088 = vmatprep.subr.mxu0 0.0
    %4089 = vmatpush1.msra.mxu0 0.0
    %4090 = vmatprep.subr.mxu0 0.0
    %4091 = vmatpush1.msra.mxu0 0.0
    %4092 = vmatprep.subr.mxu0 0.0
    %4093 = vmatpush1.msra.mxu0 0.0
    %4094 = vmatprep.subr.mxu0 0.0
    %4095 = vmatpush1.msra.mxu0 0.0
    %4096 = vmatprep.subr.mxu0 0.0
    %4097 = vmatpush1.msra.mxu0 %v3881
    %4098 = vmatprep.subr.mxu0 0.0
    %4099 = vmatpush2.msra.mxu0 0.0
    %4100 = vmatprep.subr.mxu0 0.0
    %4101 = vmatpush2.msra.mxu0 0.0
    %4102 = vmatprep.subr.mxu0 0.0
    %4103 = vmatpush2.msra.mxu0 0.0
    %4104 = vmatprep.subr.mxu0 0.0
    %4105 = vmatpush2.msra.mxu0 0.0
    %4106 = vmatprep.subr.mxu0 0.0
    %4107 = vmatpush2.msra.mxu0 0.0
    %4108 = vmatprep.subr.mxu0 0.0
    %4109 = vmatpush2.msra.mxu0 0.0
    %4110 = vmatprep.subr.mxu0 0.0
    %4111 = vmatpush2.msra.mxu0 0.0
    %4112 = vmatprep.subr.mxu0 0.0
    %4113 = vmatpush2.msra.mxu0 0.0
    %4114 = vmatprep.subr.mxu0 0.0
    %4115 = vmatpush2.msra.mxu0 0.0
    %4116 = vmatprep.subr.mxu0 0.0
    %4117 = vmatpush2.msra.mxu0 0.0
    %4118 = vmatprep.subr.mxu0 0.0
    %4119 = vmatpush2.msra.mxu0 0.0
    %4120 = vmatprep.subr.mxu0 0.0
    %4121 = vmatpush2.msra.mxu0 0.0
    %4122 = vmatprep.subr.mxu0 0.0
    %4123 = vmatpush2.msra.mxu0 0.0
    %4124 = vmatprep.subr.mxu0 0.0
    %4125 = vmatpush2.msra.mxu0 0.0
    %4126 = vmatprep.subr.mxu0 0.0
    %4127 = vmatpush2.msra.mxu0 0.0
    %4128 = vmatprep.subr.mxu0 0.0
    %4129 = vmatpush2.msra.mxu0 0.0
    %4130 = vmatprep.mubr.f32.mxu0 0.0
    %4131 = vmatmul.mubr.f32.gmra.mxu0 %v4064
    %v4132 = vpop.f32.mrf.mxu0
    %v4133 = vadd.f32 0.0, %v4132
    %v4134 = vpop.f32.mrf.mxu0
    %4135 = vdwg.mxu0
    %v4137 = vsel %vm317, %v4062, 0
    %4139 = vmatprep.subr.mxu0 0.0
    %4140 = vmatpush1.msra.mxu0 0.0
    %4141 = vmatprep.subr.mxu0 0.0
    %4142 = vmatpush1.msra.mxu0 0.0
    %4143 = vmatprep.subr.mxu0 0.0
    %4144 = vmatpush1.msra.mxu0 0.0
    %4145 = vmatprep.subr.mxu0 0.0
    %4146 = vmatpush1.msra.mxu0 0.0
    %4147 = vmatprep.subr.mxu0 0.0
    %4148 = vmatpush1.msra.mxu0 0.0
    %4149 = vmatprep.subr.mxu0 0.0
    %4150 = vmatpush1.msra.mxu0 0.0
    %4151 = vmatprep.subr.mxu0 0.0
    %4152 = vmatpush1.msra.mxu0 0.0
    %4153 = vmatprep.subr.mxu0 0.0
    %4154 = vmatpush1.msra.mxu0 0.0
    %4155 = vmatprep.subr.mxu0 0.0
    %4156 = vmatpush1.msra.mxu0 0.0
    %4157 = vmatprep.subr.mxu0 0.0
    %4158 = vmatpush1.msra.mxu0 0.0
    %4159 = vmatprep.subr.mxu0 0.0
    %4160 = vmatpush1.msra.mxu0 0.0
    %4161 = vmatprep.subr.mxu0 0.0
    %4162 = vmatpush1.msra.mxu0 0.0
    %4163 = vmatprep.subr.mxu0 0.0
    %4164 = vmatpush1.msra.mxu0 0.0
    %4165 = vmatprep.subr.mxu0 0.0
    %4166 = vmatpush1.msra.mxu0 0.0
    %4167 = vmatprep.subr.mxu0 0.0
    %4168 = vmatpush1.msra.mxu0 0.0
    %4169 = vmatprep.subr.mxu0 0.0
    %4170 = vmatpush1.msra.mxu0 %v3886
    %4171 = vmatprep.subr.mxu0 0.0
    %4172 = vmatpush2.msra.mxu0 0.0
    %4173 = vmatprep.subr.mxu0 0.0
    %4174 = vmatpush2.msra.mxu0 0.0
    %4175 = vmatprep.subr.mxu0 0.0
    %4176 = vmatpush2.msra.mxu0 0.0
    %4177 = vmatprep.subr.mxu0 0.0
    %4178 = vmatpush2.msra.mxu0 0.0
    %4179 = vmatprep.subr.mxu0 0.0
    %4180 = vmatpush2.msra.mxu0 0.0
    %4181 = vmatprep.subr.mxu0 0.0
    %4182 = vmatpush2.msra.mxu0 0.0
    %4183 = vmatprep.subr.mxu0 0.0
    %4184 = vmatpush2.msra.mxu0 0.0
    %4185 = vmatprep.subr.mxu0 0.0
    %4186 = vmatpush2.msra.mxu0 0.0
    %4187 = vmatprep.subr.mxu0 0.0
    %4188 = vmatpush2.msra.mxu0 0.0
    %4189 = vmatprep.subr.mxu0 0.0
    %4190 = vmatpush2.msra.mxu0 0.0
    %4191 = vmatprep.subr.mxu0 0.0
    %4192 = vmatpush2.msra.mxu0 0.0
    %4193 = vmatprep.subr.mxu0 0.0
    %4194 = vmatpush2.msra.mxu0 0.0
    %4195 = vmatprep.subr.mxu0 0.0
    %4196 = vmatpush2.msra.mxu0 0.0
    %4197 = vmatprep.subr.mxu0 0.0
    %4198 = vmatpush2.msra.mxu0 0.0
    %4199 = vmatprep.subr.mxu0 0.0
    %4200 = vmatpush2.msra.mxu0 0.0
    %4201 = vmatprep.subr.mxu0 0.0
    %4202 = vmatpush2.msra.mxu0 0.0
    %4203 = vmatprep.mubr.f32.mxu0 0.0
    %4204 = vmatmul.mubr.f32.gmra.mxu0 %v4137
    %v4205 = vpop.f32.mrf.mxu0
    %v4206 = vadd.f32 0.0, %v4205
    %v4207 = vpop.f32.mrf.mxu0
    %4208 = vdwg.mxu0
    %s4209 = scalar_lea.vmem %s4, 40
    %v4210 = vld [vmem:[%s4209] sm:$0xff]
    %v4212 = vsel %vm317, %v4133, 0
    %v4215 = vsel %vm317, %v4206, 0
    %4217 = vmatprep.subr.mxu0 0.0
    %4218 = vmatpush1.msra.mxu0 0.0
    %4219 = vmatprep.subr.mxu0 0.0
    %4220 = vmatpush1.msra.mxu0 0.0
    %4221 = vmatprep.subr.mxu0 0.0
    %4222 = vmatpush1.msra.mxu0 0.0
    %4223 = vmatprep.subr.mxu0 0.0
    %4224 = vmatpush1.msra.mxu0 0.0
    %4225 = vmatprep.subr.mxu0 0.0
    %4226 = vmatpush1.msra.mxu0 0.0
    %4227 = vmatprep.subr.mxu0 0.0
    %4228 = vmatpush1.msra.mxu0 0.0
    %4229 = vmatprep.subr.mxu0 0.0
    %4230 = vmatpush1.msra.mxu0 0.0
    %4231 = vmatprep.subr.mxu0 0.0
    %4232 = vmatpush1.msra.mxu0 0.0
    %4233 = vmatprep.subr.mxu0 0.0
    %4234 = vmatpush1.msra.mxu0 0.0
    %4235 = vmatprep.subr.mxu0 0.0
    %4236 = vmatpush1.msra.mxu0 0.0
    %4237 = vmatprep.subr.mxu0 0.0
    %4238 = vmatpush1.msra.mxu0 0.0
    %4239 = vmatprep.subr.mxu0 0.0
    %4240 = vmatpush1.msra.mxu0 0.0
    %4241 = vmatprep.subr.mxu0 0.0
    %4242 = vmatpush1.msra.mxu0 0.0
    %4243 = vmatprep.subr.mxu0 0.0
    %4244 = vmatpush1.msra.mxu0 0.0
    %4245 = vmatprep.subr.mxu0 0.0
    %4246 = vmatpush1.msra.mxu0 0.0
    %4247 = vmatprep.subr.mxu0 0.0
    %4248 = vmatpush1.msra.mxu0 %v4210
    %4249 = vmatprep.subr.mxu0 0.0
    %4250 = vmatpush2.msra.mxu0 0.0
    %4251 = vmatprep.subr.mxu0 0.0
    %4252 = vmatpush2.msra.mxu0 0.0
    %4253 = vmatprep.subr.mxu0 0.0
    %4254 = vmatpush2.msra.mxu0 0.0
    %4255 = vmatprep.subr.mxu0 0.0
    %4256 = vmatpush2.msra.mxu0 0.0
    %4257 = vmatprep.subr.mxu0 0.0
    %4258 = vmatpush2.msra.mxu0 0.0
    %4259 = vmatprep.subr.mxu0 0.0
    %4260 = vmatpush2.msra.mxu0 0.0
    %4261 = vmatprep.subr.mxu0 0.0
    %4262 = vmatpush2.msra.mxu0 0.0
    %4263 = vmatprep.subr.mxu0 0.0
    %4264 = vmatpush2.msra.mxu0 0.0
    %4265 = vmatprep.subr.mxu0 0.0
    %4266 = vmatpush2.msra.mxu0 0.0
    %4267 = vmatprep.subr.mxu0 0.0
    %4268 = vmatpush2.msra.mxu0 0.0
    %4269 = vmatprep.subr.mxu0 0.0
    %4270 = vmatpush2.msra.mxu0 0.0
    %4271 = vmatprep.subr.mxu0 0.0
    %4272 = vmatpush2.msra.mxu0 0.0
    %4273 = vmatprep.subr.mxu0 0.0
    %4274 = vmatpush2.msra.mxu0 0.0
    %4275 = vmatprep.subr.mxu0 0.0
    %4276 = vmatpush2.msra.mxu0 0.0
    %4277 = vmatprep.subr.mxu0 0.0
    %4278 = vmatpush2.msra.mxu0 0.0
    %4279 = vmatprep.subr.mxu0 0.0
    %4280 = vmatpush2.msra.mxu0 0.0
    %4281 = vmatprep.mubr.f32.mxu0 0.0
    %4282 = vmatmul.mubr.f32.gmra.mxu0 %v4212
    %v4283 = vpop.f32.mrf.mxu0
    %v4284 = vadd.f32 0.0, %v4283
    %v4285 = vpop.f32.mrf.mxu0
    %4286 = vmatprep.mubr.f32.mxu0 0.0
    %4287 = vmatmul.mubr.f32.gmra.mxu0 %v4215
    %v4288 = vpop.f32.mrf.mxu0
    %v4289 = vadd.f32 0.0, %v4288
    %v4290 = vpop.f32.mrf.mxu0
    %4291 = vdwg.mxu0
    %v4293 = vsel %vm317, %v3545, 0
    %v4296 = vsel %vm317, %v3618, 0
    %4298 = vmatprep.subr.mxu0 0.0
    %4299 = vmatpush1.msra.mxu0 0.0
    %4300 = vmatprep.subr.mxu0 0.0
    %4301 = vmatpush1.msra.mxu0 0.0
    %4302 = vmatprep.subr.mxu0 0.0
    %4303 = vmatpush1.msra.mxu0 0.0
    %4304 = vmatprep.subr.mxu0 0.0
    %4305 = vmatpush1.msra.mxu0 0.0
    %4306 = vmatprep.subr.mxu0 0.0
    %4307 = vmatpush1.msra.mxu0 0.0
    %4308 = vmatprep.subr.mxu0 0.0
    %4309 = vmatpush1.msra.mxu0 0.0
    %4310 = vmatprep.subr.mxu0 0.0
    %4311 = vmatpush1.msra.mxu0 0.0
    %4312 = vmatprep.subr.mxu0 0.0
    %4313 = vmatpush1.msra.mxu0 0.0
    %4314 = vmatprep.subr.mxu0 0.0
    %4315 = vmatpush1.msra.mxu0 0.0
    %4316 = vmatprep.subr.mxu0 0.0
    %4317 = vmatpush1.msra.mxu0 0.0
    %4318 = vmatprep.subr.mxu0 0.0
    %4319 = vmatpush1.msra.mxu0 0.0
    %4320 = vmatprep.subr.mxu0 0.0
    %4321 = vmatpush1.msra.mxu0 0.0
    %4322 = vmatprep.subr.mxu0 0.0
    %4323 = vmatpush1.msra.mxu0 0.0
    %4324 = vmatprep.subr.mxu0 0.0
    %4325 = vmatpush1.msra.mxu0 0.0
    %4326 = vmatprep.subr.mxu0 0.0
    %4327 = vmatpush1.msra.mxu0 0.0
    %4328 = vmatprep.subr.mxu0 0.0
    %4329 = vmatpush1.msra.mxu0 %v3622
    %4330 = vmatprep.subr.mxu0 0.0
    %4331 = vmatpush2.msra.mxu0 0.0
    %4332 = vmatprep.subr.mxu0 0.0
    %4333 = vmatpush2.msra.mxu0 0.0
    %4334 = vmatprep.subr.mxu0 0.0
    %4335 = vmatpush2.msra.mxu0 0.0
    %4336 = vmatprep.subr.mxu0 0.0
    %4337 = vmatpush2.msra.mxu0 0.0
    %4338 = vmatprep.subr.mxu0 0.0
    %4339 = vmatpush2.msra.mxu0 0.0
    %4340 = vmatprep.subr.mxu0 0.0
    %4341 = vmatpush2.msra.mxu0 0.0
    %4342 = vmatprep.subr.mxu0 0.0
    %4343 = vmatpush2.msra.mxu0 0.0
    %4344 = vmatprep.subr.mxu0 0.0
    %4345 = vmatpush2.msra.mxu0 0.0
    %4346 = vmatprep.subr.mxu0 0.0
    %4347 = vmatpush2.msra.mxu0 0.0
    %4348 = vmatprep.subr.mxu0 0.0
    %4349 = vmatpush2.msra.mxu0 0.0
    %4350 = vmatprep.subr.mxu0 0.0
    %4351 = vmatpush2.msra.mxu0 0.0
    %4352 = vmatprep.subr.mxu0 0.0
    %4353 = vmatpush2.msra.mxu0 0.0
    %4354 = vmatprep.subr.mxu0 0.0
    %4355 = vmatpush2.msra.mxu0 0.0
    %4356 = vmatprep.subr.mxu0 0.0
    %4357 = vmatpush2.msra.mxu0 0.0
    %4358 = vmatprep.subr.mxu0 0.0
    %4359 = vmatpush2.msra.mxu0 0.0
    %4360 = vmatprep.subr.mxu0 0.0
    %4361 = vmatpush2.msra.mxu0 0.0
    %4362 = vmatprep.mubr.f32.mxu0 0.0
    %4363 = vmatmul.mubr.f32.gmra.mxu0 %v4293
    %v4364 = vpop.f32.mrf.mxu0
    %v4365 = vadd.f32 %v4284, %v4364
    %v4366 = vpop.f32.mrf.mxu0
    %4367 = vmatprep.mubr.f32.mxu0 0.0
    %4368 = vmatmul.mubr.f32.gmra.mxu0 %v4296
    %v4369 = vpop.f32.mrf.mxu0
    %v4370 = vadd.f32 %v4289, %v4369
    %v4371 = vpop.f32.mrf.mxu0
    %4372 = vdwg.mxu0
    %s4373 = scalar_lea.vmem %s2, 448
    %v4374 = vld [vmem:[%s4373] sm:$0xff]
    %v4375 = vld [vmem:[%s4373 + $0x8] sm:$0xff]
    %v4376 = vld [vmem:[%s4373 + $0x10] sm:$0xff]
    %v4377 = vld [vmem:[%s4373 + $0x18] sm:$0xff]
    %s4378 = scalar_lea.vmem %s3, 14
    %v4379 = vld [vmem:[%s4378] sm:$0x1]
    %v4381 = vlaneseq
    %v4382 = vshrl.u32 %v4381, 7
    %v4383 = vsub.s32 0, %v4382
    %v4384 = vrot.slane %v4379, %v4383
    %4386 = vmatprep.subr.mxu0 0.0
    %4387 = vmatpush1.msra.mxu0 0.0
    %4388 = vmatprep.subr.mxu0 0.0
    %4389 = vmatpush1.msra.mxu0 0.0
    %4390 = vmatprep.subr.mxu0 0.0
    %4391 = vmatpush1.msra.mxu0 0.0
    %4392 = vmatprep.subr.mxu0 0.0
    %4393 = vmatpush1.msra.mxu0 0.0
    %4394 = vmatprep.subr.mxu0 0.0
    %4395 = vmatpush1.msra.mxu0 0.0
    %4396 = vmatprep.subr.mxu0 0.0
    %4397 = vmatpush1.msra.mxu0 0.0
    %4398 = vmatprep.subr.mxu0 0.0
    %4399 = vmatpush1.msra.mxu0 0.0
    %4400 = vmatprep.subr.mxu0 0.0
    %4401 = vmatpush1.msra.mxu0 0.0
    %4402 = vmatprep.subr.mxu0 0.0
    %4403 = vmatpush1.msra.mxu0 0.0
    %4404 = vmatprep.subr.mxu0 0.0
    %4405 = vmatpush1.msra.mxu0 0.0
    %4406 = vmatprep.subr.mxu0 0.0
    %4407 = vmatpush1.msra.mxu0 0.0
    %4408 = vmatprep.subr.mxu0 0.0
    %4409 = vmatpush1.msra.mxu0 0.0
    %4410 = vmatprep.subr.mxu0 0.0
    %4411 = vmatpush1.msra.mxu0 %v4377
    %4412 = vmatprep.subr.mxu0 0.0
    %4413 = vmatpush1.msra.mxu0 %v4376
    %4414 = vmatprep.subr.mxu0 0.0
    %4415 = vmatpush1.msra.mxu0 %v4375
    %4416 = vmatprep.subr.mxu0 0.0
    %4417 = vmatpush1.msra.mxu0 %v4374
    %4418 = vmatprep.subr.mxu0 0.0
    %4419 = vmatpush2.msra.mxu0 0.0
    %4420 = vmatprep.subr.mxu0 0.0
    %4421 = vmatpush2.msra.mxu0 0.0
    %4422 = vmatprep.subr.mxu0 0.0
    %4423 = vmatpush2.msra.mxu0 0.0
    %4424 = vmatprep.subr.mxu0 0.0
    %4425 = vmatpush2.msra.mxu0 0.0
    %4426 = vmatprep.subr.mxu0 0.0
    %4427 = vmatpush2.msra.mxu0 0.0
    %4428 = vmatprep.subr.mxu0 0.0
    %4429 = vmatpush2.msra.mxu0 0.0
    %4430 = vmatprep.subr.mxu0 0.0
    %4431 = vmatpush2.msra.mxu0 0.0
    %4432 = vmatprep.subr.mxu0 0.0
    %4433 = vmatpush2.msra.mxu0 0.0
    %4434 = vmatprep.subr.mxu0 0.0
    %4435 = vmatpush2.msra.mxu0 0.0
    %4436 = vmatprep.subr.mxu0 0.0
    %4437 = vmatpush2.msra.mxu0 0.0
    %4438 = vmatprep.subr.mxu0 0.0
    %4439 = vmatpush2.msra.mxu0 0.0
    %4440 = vmatprep.subr.mxu0 0.0
    %4441 = vmatpush2.msra.mxu0 0.0
    %4442 = vmatprep.subr.mxu0 0.0
    %4443 = vmatpush2.msra.mxu0 0.0
    %4444 = vmatprep.subr.mxu0 0.0
    %4445 = vmatpush2.msra.mxu0 0.0
    %4446 = vmatprep.subr.mxu0 0.0
    %4447 = vmatpush2.msra.mxu0 0.0
    %4448 = vmatprep.subr.mxu0 0.0
    %4449 = vmatpush2.msra.mxu0 0.0
    %4450 = vmatprep.mubr.f32.mxu0 0.0
    %4451 = vmatmul.mubr.f32.gmra.mxu0 %v3043
    %v4452 = vpop.f32.mrf.mxu0
    %v4453 = vadd.f32 %v4384, %v4452
    %v4454 = vpop.f32.mrf.mxu0
    %4455 = vmatprep.mubr.f32.mxu0 0.0
    %4456 = vmatmul.mubr.f32.gmra.mxu0 %v3046
    %v4457 = vpop.f32.mrf.mxu0
    %v4458 = vadd.f32 %v4384, %v4457
    %v4459 = vpop.f32.mrf.mxu0
    %4460 = vdwg.mxu0
    %v4461 = vmul.f32 %v4453, 0.35355338
    %v4462 = vmul.f32 %v4458, 0.35355338
    %s4463 = scalar_lea.vmem %s2, 576
    %v4464 = vld [vmem:[%s4463] sm:$0xff]
    %v4465 = vld [vmem:[%s4463 + $0x8] sm:$0xff]
    %v4466 = vld [vmem:[%s4463 + $0x10] sm:$0xff]
    %v4467 = vld [vmem:[%s4463 + $0x18] sm:$0xff]
    %s4468 = scalar_lea.vmem %s3, 18
    %v4469 = vld [vmem:[%s4468] sm:$0x1]
    %v4471 = vlaneseq
    %v4472 = vshrl.u32 %v4471, 7
    %v4473 = vsub.s32 0, %v4472
    %v4474 = vrot.slane %v4469, %v4473
    %4476 = vmatprep.subr.mxu0 0.0
    %4477 = vmatpush1.msra.mxu0 0.0
    %4478 = vmatprep.subr.mxu0 0.0
    %4479 = vmatpush1.msra.mxu0 0.0
    %4480 = vmatprep.subr.mxu0 0.0
    %4481 = vmatpush1.msra.mxu0 0.0
    %4482 = vmatprep.subr.mxu0 0.0
    %4483 = vmatpush1.msra.mxu0 0.0
    %4484 = vmatprep.subr.mxu0 0.0
    %4485 = vmatpush1.msra.mxu0 0.0
    %4486 = vmatprep.subr.mxu0 0.0
    %4487 = vmatpush1.msra.mxu0 0.0
    %4488 = vmatprep.subr.mxu0 0.0
    %4489 = vmatpush1.msra.mxu0 0.0
    %4490 = vmatprep.subr.mxu0 0.0
    %4491 = vmatpush1.msra.mxu0 0.0
    %4492 = vmatprep.subr.mxu0 0.0
    %4493 = vmatpush1.msra.mxu0 0.0
    %4494 = vmatprep.subr.mxu0 0.0
    %4495 = vmatpush1.msra.mxu0 0.0
    %4496 = vmatprep.subr.mxu0 0.0
    %4497 = vmatpush1.msra.mxu0 0.0
    %4498 = vmatprep.subr.mxu0 0.0
    %4499 = vmatpush1.msra.mxu0 0.0
    %4500 = vmatprep.subr.mxu0 0.0
    %4501 = vmatpush1.msra.mxu0 %v4467
    %4502 = vmatprep.subr.mxu0 0.0
    %4503 = vmatpush1.msra.mxu0 %v4466
    %4504 = vmatprep.subr.mxu0 0.0
    %4505 = vmatpush1.msra.mxu0 %v4465
    %4506 = vmatprep.subr.mxu0 0.0
    %4507 = vmatpush1.msra.mxu0 %v4464
    %4508 = vmatprep.subr.mxu0 0.0
    %4509 = vmatpush2.msra.mxu0 0.0
    %4510 = vmatprep.subr.mxu0 0.0
    %4511 = vmatpush2.msra.mxu0 0.0
    %4512 = vmatprep.subr.mxu0 0.0
    %4513 = vmatpush2.msra.mxu0 0.0
    %4514 = vmatprep.subr.mxu0 0.0
    %4515 = vmatpush2.msra.mxu0 0.0
    %4516 = vmatprep.subr.mxu0 0.0
    %4517 = vmatpush2.msra.mxu0 0.0
    %4518 = vmatprep.subr.mxu0 0.0
    %4519 = vmatpush2.msra.mxu0 0.0
    %4520 = vmatprep.subr.mxu0 0.0
    %4521 = vmatpush2.msra.mxu0 0.0
    %4522 = vmatprep.subr.mxu0 0.0
    %4523 = vmatpush2.msra.mxu0 0.0
    %4524 = vmatprep.subr.mxu0 0.0
    %4525 = vmatpush2.msra.mxu0 0.0
    %4526 = vmatprep.subr.mxu0 0.0
    %4527 = vmatpush2.msra.mxu0 0.0
    %4528 = vmatprep.subr.mxu0 0.0
    %4529 = vmatpush2.msra.mxu0 0.0
    %4530 = vmatprep.subr.mxu0 0.0
    %4531 = vmatpush2.msra.mxu0 0.0
    %4532 = vmatprep.subr.mxu0 0.0
    %4533 = vmatpush2.msra.mxu0 0.0
    %4534 = vmatprep.subr.mxu0 0.0
    %4535 = vmatpush2.msra.mxu0 0.0
    %4536 = vmatprep.subr.mxu0 0.0
    %4537 = vmatpush2.msra.mxu0 0.0
    %4538 = vmatprep.subr.mxu0 0.0
    %4539 = vmatpush2.msra.mxu0 0.0
    %4540 = vmatprep.mubr.f32.mxu0 0.0
    %4541 = vmatmul.mubr.f32.gmra.mxu0 %v3043
    %v4542 = vpop.f32.mrf.mxu0
    %v4543 = vadd.f32 %v4474, %v4542
    %v4544 = vpop.f32.mrf.mxu0
    %4545 = vmatprep.mubr.f32.mxu0 0.0
    %4546 = vmatmul.mubr.f32.gmra.mxu0 %v3046
    %v4547 = vpop.f32.mrf.mxu0
    %v4548 = vadd.f32 %v4474, %v4547
    %v4549 = vpop.f32.mrf.mxu0
    %4550 = vdwg.mxu0
    %s4551 = scalar_lea.vmem %s2, 704
    %v4552 = vld [vmem:[%s4551] sm:$0xff]
    %v4553 = vld [vmem:[%s4551 + $0x8] sm:$0xff]
    %v4554 = vld [vmem:[%s4551 + $0x10] sm:$0xff]
    %v4555 = vld [vmem:[%s4551 + $0x18] sm:$0xff]
    %s4556 = scalar_lea.vmem %s3, 22
    %v4557 = vld [vmem:[%s4556] sm:$0x1]
    %v4559 = vlaneseq
    %v4560 = vshrl.u32 %v4559, 7
    %v4561 = vsub.s32 0, %v4560
    %v4562 = vrot.slane %v4557, %v4561
    %4564 = vmatprep.subr.mxu0 0.0
    %4565 = vmatpush1.msra.mxu0 0.0
    %4566 = vmatprep.subr.mxu0 0.0
    %4567 = vmatpush1.msra.mxu0 0.0
    %4568 = vmatprep.subr.mxu0 0.0
    %4569 = vmatpush1.msra.mxu0 0.0
    %4570 = vmatprep.subr.mxu0 0.0
    %4571 = vmatpush1.msra.mxu0 0.0
    %4572 = vmatprep.subr.mxu0 0.0
    %4573 = vmatpush1.msra.mxu0 0.0
    %4574 = vmatprep.subr.mxu0 0.0
    %4575 = vmatpush1.msra.mxu0 0.0
    %4576 = vmatprep.subr.mxu0 0.0
    %4577 = vmatpush1.msra.mxu0 0.0
    %4578 = vmatprep.subr.mxu0 0.0
    %4579 = vmatpush1.msra.mxu0 0.0
    %4580 = vmatprep.subr.mxu0 0.0
    %4581 = vmatpush1.msra.mxu0 0.0
    %4582 = vmatprep.subr.mxu0 0.0
    %4583 = vmatpush1.msra.mxu0 0.0
    %4584 = vmatprep.subr.mxu0 0.0
    %4585 = vmatpush1.msra.mxu0 0.0
    %4586 = vmatprep.subr.mxu0 0.0
    %4587 = vmatpush1.msra.mxu0 0.0
    %4588 = vmatprep.subr.mxu0 0.0
    %4589 = vmatpush1.msra.mxu0 %v4555
    %4590 = vmatprep.subr.mxu0 0.0
    %4591 = vmatpush1.msra.mxu0 %v4554
    %4592 = vmatprep.subr.mxu0 0.0
    %4593 = vmatpush1.msra.mxu0 %v4553
    %4594 = vmatprep.subr.mxu0 0.0
    %4595 = vmatpush1.msra.mxu0 %v4552
    %4596 = vmatprep.subr.mxu0 0.0
    %4597 = vmatpush2.msra.mxu0 0.0
    %4598 = vmatprep.subr.mxu0 0.0
    %4599 = vmatpush2.msra.mxu0 0.0
    %4600 = vmatprep.subr.mxu0 0.0
    %4601 = vmatpush2.msra.mxu0 0.0
    %4602 = vmatprep.subr.mxu0 0.0
    %4603 = vmatpush2.msra.mxu0 0.0
    %4604 = vmatprep.subr.mxu0 0.0
    %4605 = vmatpush2.msra.mxu0 0.0
    %4606 = vmatprep.subr.mxu0 0.0
    %4607 = vmatpush2.msra.mxu0 0.0
    %4608 = vmatprep.subr.mxu0 0.0
    %4609 = vmatpush2.msra.mxu0 0.0
    %4610 = vmatprep.subr.mxu0 0.0
    %4611 = vmatpush2.msra.mxu0 0.0
    %4612 = vmatprep.subr.mxu0 0.0
    %4613 = vmatpush2.msra.mxu0 0.0
    %4614 = vmatprep.subr.mxu0 0.0
    %4615 = vmatpush2.msra.mxu0 0.0
    %4616 = vmatprep.subr.mxu0 0.0
    %4617 = vmatpush2.msra.mxu0 0.0
    %4618 = vmatprep.subr.mxu0 0.0
    %4619 = vmatpush2.msra.mxu0 0.0
    %4620 = vmatprep.subr.mxu0 0.0
    %4621 = vmatpush2.msra.mxu0 0.0
    %4622 = vmatprep.subr.mxu0 0.0
    %4623 = vmatpush2.msra.mxu0 0.0
    %4624 = vmatprep.subr.mxu0 0.0
    %4625 = vmatpush2.msra.mxu0 0.0
    %4626 = vmatprep.subr.mxu0 0.0
    %4627 = vmatpush2.msra.mxu0 0.0
    %4628 = vmatprep.mubr.f32.mxu0 0.0
    %4629 = vmatmul.mubr.f32.gmra.mxu0 %v3043
    %v4630 = vpop.f32.mrf.mxu0
    %v4631 = vadd.f32 %v4562, %v4630
    %v4632 = vpop.f32.mrf.mxu0
    %4633 = vmatprep.mubr.f32.mxu0 0.0
    %4634 = vmatmul.mubr.f32.gmra.mxu0 %v3046
    %v4635 = vpop.f32.mrf.mxu0
    %v4636 = vadd.f32 %v4562, %v4635
    %v4637 = vpop.f32.mrf.mxu0
    %4638 = vdwg.mxu0
    %v4640 = vsel %vm317, %v4461, 0
    %v4643 = vsel %vm317, %v4543, 0
    %4645 = vmatprep.subr.mxu0 0.0
    %4646 = vmatpush1.xpose.msra.mxu0 0.0
    %4647 = vmatprep.subr.mxu0 0.0
    %4648 = vmatpush1.xpose.msra.mxu0 0.0
    %4649 = vmatprep.subr.mxu0 0.0
    %4650 = vmatpush1.xpose.msra.mxu0 0.0
    %4651 = vmatprep.subr.mxu0 0.0
    %4652 = vmatpush1.xpose.msra.mxu0 0.0
    %4653 = vmatprep.subr.mxu0 0.0
    %4654 = vmatpush1.xpose.msra.mxu0 0.0
    %4655 = vmatprep.subr.mxu0 0.0
    %4656 = vmatpush1.xpose.msra.mxu0 0.0
    %4657 = vmatprep.subr.mxu0 0.0
    %4658 = vmatpush1.xpose.msra.mxu0 0.0
    %4659 = vmatprep.subr.mxu0 0.0
    %4660 = vmatpush1.xpose.msra.mxu0 0.0
    %4661 = vmatprep.subr.mxu0 0.0
    %4662 = vmatpush1.xpose.msra.mxu0 0.0
    %4663 = vmatprep.subr.mxu0 0.0
    %4664 = vmatpush1.xpose.msra.mxu0 0.0
    %4665 = vmatprep.subr.mxu0 0.0
    %4666 = vmatpush1.xpose.msra.mxu0 0.0
    %4667 = vmatprep.subr.mxu0 0.0
    %4668 = vmatpush1.xpose.msra.mxu0 0.0
    %4669 = vmatprep.subr.mxu0 0.0
    %4670 = vmatpush1.xpose.msra.mxu0 0.0
    %4671 = vmatprep.subr.mxu0 0.0
    %4672 = vmatpush1.xpose.msra.mxu0 0.0
    %4673 = vmatprep.subr.mxu0 0.0
    %4674 = vmatpush1.xpose.msra.mxu0 0.0
    %4675 = vmatprep.subr.mxu0 0.0
    %4676 = vmatpush1.xpose.msra.mxu0 %v4643
    %4677 = vmatprep.subr.mxu0 0.0
    %4678 = vmatpush2.xpose.msra.mxu0 0.0
    %4679 = vmatprep.subr.mxu0 0.0
    %4680 = vmatpush2.xpose.msra.mxu0 0.0
    %4681 = vmatprep.subr.mxu0 0.0
    %4682 = vmatpush2.xpose.msra.mxu0 0.0
    %4683 = vmatprep.subr.mxu0 0.0
    %4684 = vmatpush2.xpose.msra.mxu0 0.0
    %4685 = vmatprep.subr.mxu0 0.0
    %4686 = vmatpush2.xpose.msra.mxu0 0.0
    %4687 = vmatprep.subr.mxu0 0.0
    %4688 = vmatpush2.xpose.msra.mxu0 0.0
    %4689 = vmatprep.subr.mxu0 0.0
    %4690 = vmatpush2.xpose.msra.mxu0 0.0
    %4691 = vmatprep.subr.mxu0 0.0
    %4692 = vmatpush2.xpose.msra.mxu0 0.0
    %4693 = vmatprep.subr.mxu0 0.0
    %4694 = vmatpush2.xpose.msra.mxu0 0.0
    %4695 = vmatprep.subr.mxu0 0.0
    %4696 = vmatpush2.xpose.msra.mxu0 0.0
    %4697 = vmatprep.subr.mxu0 0.0
    %4698 = vmatpush2.xpose.msra.mxu0 0.0
    %4699 = vmatprep.subr.mxu0 0.0
    %4700 = vmatpush2.xpose.msra.mxu0 0.0
    %4701 = vmatprep.subr.mxu0 0.0
    %4702 = vmatpush2.xpose.msra.mxu0 0.0
    %4703 = vmatprep.subr.mxu0 0.0
    %4704 = vmatpush2.xpose.msra.mxu0 0.0
    %4705 = vmatprep.subr.mxu0 0.0
    %4706 = vmatpush2.xpose.msra.mxu0 0.0
    %4707 = vmatprep.subr.mxu0 0.0
    %4708 = vmatpush2.xpose.msra.mxu0 0.0
    %4709 = vmatprep.mubr.f32.mxu0 0.0
    %4710 = vmatmul.mubr.f32.gmra.mxu0 %v4640
    %v4711 = vpop.f32.mrf.mxu0
    %v4712 = vadd.f32 0.0, %v4711
    %v4713 = vpop.f32.mrf.mxu0
    %4714 = vdwg.mxu0
    %v4716 = vsel %vm317, %v4462, 0
    %v4719 = vsel %vm317, %v4548, 0
    %4721 = vmatprep.subr.mxu0 0.0
    %4722 = vmatpush1.xpose.msra.mxu0 0.0
    %4723 = vmatprep.subr.mxu0 0.0
    %4724 = vmatpush1.xpose.msra.mxu0 0.0
    %4725 = vmatprep.subr.mxu0 0.0
    %4726 = vmatpush1.xpose.msra.mxu0 0.0
    %4727 = vmatprep.subr.mxu0 0.0
    %4728 = vmatpush1.xpose.msra.mxu0 0.0
    %4729 = vmatprep.subr.mxu0 0.0
    %4730 = vmatpush1.xpose.msra.mxu0 0.0
    %4731 = vmatprep.subr.mxu0 0.0
    %4732 = vmatpush1.xpose.msra.mxu0 0.0
    %4733 = vmatprep.subr.mxu0 0.0
    %4734 = vmatpush1.xpose.msra.mxu0 0.0
    %4735 = vmatprep.subr.mxu0 0.0
    %4736 = vmatpush1.xpose.msra.mxu0 0.0
    %4737 = vmatprep.subr.mxu0 0.0
    %4738 = vmatpush1.xpose.msra.mxu0 0.0
    %4739 = vmatprep.subr.mxu0 0.0
    %4740 = vmatpush1.xpose.msra.mxu0 0.0
    %4741 = vmatprep.subr.mxu0 0.0
    %4742 = vmatpush1.xpose.msra.mxu0 0.0
    %4743 = vmatprep.subr.mxu0 0.0
    %4744 = vmatpush1.xpose.msra.mxu0 0.0
    %4745 = vmatprep.subr.mxu0 0.0
    %4746 = vmatpush1.xpose.msra.mxu0 0.0
    %4747 = vmatprep.subr.mxu0 0.0
    %4748 = vmatpush1.xpose.msra.mxu0 0.0
    %4749 = vmatprep.subr.mxu0 0.0
    %4750 = vmatpush1.xpose.msra.mxu0 0.0
    %4751 = vmatprep.subr.mxu0 0.0
    %4752 = vmatpush1.xpose.msra.mxu0 %v4719
    %4753 = vmatprep.subr.mxu0 0.0
    %4754 = vmatpush2.xpose.msra.mxu0 0.0
    %4755 = vmatprep.subr.mxu0 0.0
    %4756 = vmatpush2.xpose.msra.mxu0 0.0
    %4757 = vmatprep.subr.mxu0 0.0
    %4758 = vmatpush2.xpose.msra.mxu0 0.0
    %4759 = vmatprep.subr.mxu0 0.0
    %4760 = vmatpush2.xpose.msra.mxu0 0.0
    %4761 = vmatprep.subr.mxu0 0.0
    %4762 = vmatpush2.xpose.msra.mxu0 0.0
    %4763 = vmatprep.subr.mxu0 0.0
    %4764 = vmatpush2.xpose.msra.mxu0 0.0
    %4765 = vmatprep.subr.mxu0 0.0
    %4766 = vmatpush2.xpose.msra.mxu0 0.0
    %4767 = vmatprep.subr.mxu0 0.0
    %4768 = vmatpush2.xpose.msra.mxu0 0.0
    %4769 = vmatprep.subr.mxu0 0.0
    %4770 = vmatpush2.xpose.msra.mxu0 0.0
    %4771 = vmatprep.subr.mxu0 0.0
    %4772 = vmatpush2.xpose.msra.mxu0 0.0
    %4773 = vmatprep.subr.mxu0 0.0
    %4774 = vmatpush2.xpose.msra.mxu0 0.0
    %4775 = vmatprep.subr.mxu0 0.0
    %4776 = vmatpush2.xpose.msra.mxu0 0.0
    %4777 = vmatprep.subr.mxu0 0.0
    %4778 = vmatpush2.xpose.msra.mxu0 0.0
    %4779 = vmatprep.subr.mxu0 0.0
    %4780 = vmatpush2.xpose.msra.mxu0 0.0
    %4781 = vmatprep.subr.mxu0 0.0
    %4782 = vmatpush2.xpose.msra.mxu0 0.0
    %4783 = vmatprep.subr.mxu0 0.0
    %4784 = vmatpush2.xpose.msra.mxu0 0.0
    %4785 = vmatprep.mubr.f32.mxu0 0.0
    %4786 = vmatmul.mubr.f32.gmra.mxu0 %v4716
    %v4787 = vpop.f32.mrf.mxu0
    %v4788 = vadd.f32 0.0, %v4787
    %v4789 = vpop.f32.mrf.mxu0
    %4790 = vdwg.mxu0
    %v4791 = vsel %vm317, %v4712, -inf
    %4792 = vmax.xlane.f32.xlu0 %v4791
    %v4793 = vpop.xlane.xlu0 %4792
    %v4794 = vsel %vm317, %v4788, -inf
    %4795 = vmax.xlane.f32.xlu0 %v4794
    %v4796 = vpop.xlane.xlu0 %4795
    %v4797 = vsub.f32 %v4712, %v4793
    %v4798 = vsub.f32 %v4788, %v4796
    %v4799 = vmul.f32 %v4797, 1.442695
    %v4800 = vpow.pop %v4799
    %v4801 = vmul.f32 %v4798, 1.442695
    %v4802 = vpow.pop %v4801
    %v4803 = vsel %vm317, %v4800, 0.0
    %4804 = vadd.xlane.f32.xlu0 %v4803
    %v4805 = vpop.xlane.xlu0 %4804
    %v4806 = vsel %vm317, %v4802, 0.0
    %4807 = vadd.xlane.f32.xlu0 %v4806
    %v4808 = vpop.xlane.xlu0 %4807
    %v4809 = vrcp.pop %v4805
    %v4810 = vmul.f32 %v4800, %v4809
    %v4811 = vrcp.pop %v4808
    %v4812 = vmul.f32 %v4802, %v4811
    %v4814 = vsel %vm317, %v4810, 0
    %4816 = vmatprep.subr.mxu0 0.0
    %4817 = vmatpush1.msra.mxu0 0.0
    %4818 = vmatprep.subr.mxu0 0.0
    %4819 = vmatpush1.msra.mxu0 0.0
    %4820 = vmatprep.subr.mxu0 0.0
    %4821 = vmatpush1.msra.mxu0 0.0
    %4822 = vmatprep.subr.mxu0 0.0
    %4823 = vmatpush1.msra.mxu0 0.0
    %4824 = vmatprep.subr.mxu0 0.0
    %4825 = vmatpush1.msra.mxu0 0.0
    %4826 = vmatprep.subr.mxu0 0.0
    %4827 = vmatpush1.msra.mxu0 0.0
    %4828 = vmatprep.subr.mxu0 0.0
    %4829 = vmatpush1.msra.mxu0 0.0
    %4830 = vmatprep.subr.mxu0 0.0
    %4831 = vmatpush1.msra.mxu0 0.0
    %4832 = vmatprep.subr.mxu0 0.0
    %4833 = vmatpush1.msra.mxu0 0.0
    %4834 = vmatprep.subr.mxu0 0.0
    %4835 = vmatpush1.msra.mxu0 0.0
    %4836 = vmatprep.subr.mxu0 0.0
    %4837 = vmatpush1.msra.mxu0 0.0
    %4838 = vmatprep.subr.mxu0 0.0
    %4839 = vmatpush1.msra.mxu0 0.0
    %4840 = vmatprep.subr.mxu0 0.0
    %4841 = vmatpush1.msra.mxu0 0.0
    %4842 = vmatprep.subr.mxu0 0.0
    %4843 = vmatpush1.msra.mxu0 0.0
    %4844 = vmatprep.subr.mxu0 0.0
    %4845 = vmatpush1.msra.mxu0 0.0
    %4846 = vmatprep.subr.mxu0 0.0
    %4847 = vmatpush1.msra.mxu0 %v4631
    %4848 = vmatprep.subr.mxu0 0.0
    %4849 = vmatpush2.msra.mxu0 0.0
    %4850 = vmatprep.subr.mxu0 0.0
    %4851 = vmatpush2.msra.mxu0 0.0
    %4852 = vmatprep.subr.mxu0 0.0
    %4853 = vmatpush2.msra.mxu0 0.0
    %4854 = vmatprep.subr.mxu0 0.0
    %4855 = vmatpush2.msra.mxu0 0.0
    %4856 = vmatprep.subr.mxu0 0.0
    %4857 = vmatpush2.msra.mxu0 0.0
    %4858 = vmatprep.subr.mxu0 0.0
    %4859 = vmatpush2.msra.mxu0 0.0
    %4860 = vmatprep.subr.mxu0 0.0
    %4861 = vmatpush2.msra.mxu0 0.0
    %4862 = vmatprep.subr.mxu0 0.0
    %4863 = vmatpush2.msra.mxu0 0.0
    %4864 = vmatprep.subr.mxu0 0.0
    %4865 = vmatpush2.msra.mxu0 0.0
    %4866 = vmatprep.subr.mxu0 0.0
    %4867 = vmatpush2.msra.mxu0 0.0
    %4868 = vmatprep.subr.mxu0 0.0
    %4869 = vmatpush2.msra.mxu0 0.0
    %4870 = vmatprep.subr.mxu0 0.0
    %4871 = vmatpush2.msra.mxu0 0.0
    %4872 = vmatprep.subr.mxu0 0.0
    %4873 = vmatpush2.msra.mxu0 0.0
    %4874 = vmatprep.subr.mxu0 0.0
    %4875 = vmatpush2.msra.mxu0 0.0
    %4876 = vmatprep.subr.mxu0 0.0
    %4877 = vmatpush2.msra.mxu0 0.0
    %4878 = vmatprep.subr.mxu0 0.0
    %4879 = vmatpush2.msra.mxu0 0.0
    %4880 = vmatprep.mubr.f32.mxu0 0.0
    %4881 = vmatmul.mubr.f32.gmra.mxu0 %v4814
    %v4882 = vpop.f32.mrf.mxu0
    %v4883 = vadd.f32 0.0, %v4882
    %v4884 = vpop.f32.mrf.mxu0
    %4885 = vdwg.mxu0
    %v4887 = vsel %vm317, %v4812, 0
    %4889 = vmatprep.subr.mxu0 0.0
    %4890 = vmatpush1.msra.mxu0 0.0
    %4891 = vmatprep.subr.mxu0 0.0
    %4892 = vmatpush1.msra.mxu0 0.0
    %4893 = vmatprep.subr.mxu0 0.0
    %4894 = vmatpush1.msra.mxu0 0.0
    %4895 = vmatprep.subr.mxu0 0.0
    %4896 = vmatpush1.msra.mxu0 0.0
    %4897 = vmatprep.subr.mxu0 0.0
    %4898 = vmatpush1.msra.mxu0 0.0
    %4899 = vmatprep.subr.mxu0 0.0
    %4900 = vmatpush1.msra.mxu0 0.0
    %4901 = vmatprep.subr.mxu0 0.0
    %4902 = vmatpush1.msra.mxu0 0.0
    %4903 = vmatprep.subr.mxu0 0.0
    %4904 = vmatpush1.msra.mxu0 0.0
    %4905 = vmatprep.subr.mxu0 0.0
    %4906 = vmatpush1.msra.mxu0 0.0
    %4907 = vmatprep.subr.mxu0 0.0
    %4908 = vmatpush1.msra.mxu0 0.0
    %4909 = vmatprep.subr.mxu0 0.0
    %4910 = vmatpush1.msra.mxu0 0.0
    %4911 = vmatprep.subr.mxu0 0.0
    %4912 = vmatpush1.msra.mxu0 0.0
    %4913 = vmatprep.subr.mxu0 0.0
    %4914 = vmatpush1.msra.mxu0 0.0
    %4915 = vmatprep.subr.mxu0 0.0
    %4916 = vmatpush1.msra.mxu0 0.0
    %4917 = vmatprep.subr.mxu0 0.0
    %4918 = vmatpush1.msra.mxu0 0.0
    %4919 = vmatprep.subr.mxu0 0.0
    %4920 = vmatpush1.msra.mxu0 %v4636
    %4921 = vmatprep.subr.mxu0 0.0
    %4922 = vmatpush2.msra.mxu0 0.0
    %4923 = vmatprep.subr.mxu0 0.0
    %4924 = vmatpush2.msra.mxu0 0.0
    %4925 = vmatprep.subr.mxu0 0.0
    %4926 = vmatpush2.msra.mxu0 0.0
    %4927 = vmatprep.subr.mxu0 0.0
    %4928 = vmatpush2.msra.mxu0 0.0
    %4929 = vmatprep.subr.mxu0 0.0
    %4930 = vmatpush2.msra.mxu0 0.0
    %4931 = vmatprep.subr.mxu0 0.0
    %4932 = vmatpush2.msra.mxu0 0.0
    %4933 = vmatprep.subr.mxu0 0.0
    %4934 = vmatpush2.msra.mxu0 0.0
    %4935 = vmatprep.subr.mxu0 0.0
    %4936 = vmatpush2.msra.mxu0 0.0
    %4937 = vmatprep.subr.mxu0 0.0
    %4938 = vmatpush2.msra.mxu0 0.0
    %4939 = vmatprep.subr.mxu0 0.0
    %4940 = vmatpush2.msra.mxu0 0.0
    %4941 = vmatprep.subr.mxu0 0.0
    %4942 = vmatpush2.msra.mxu0 0.0
    %4943 = vmatprep.subr.mxu0 0.0
    %4944 = vmatpush2.msra.mxu0 0.0
    %4945 = vmatprep.subr.mxu0 0.0
    %4946 = vmatpush2.msra.mxu0 0.0
    %4947 = vmatprep.subr.mxu0 0.0
    %4948 = vmatpush2.msra.mxu0 0.0
    %4949 = vmatprep.subr.mxu0 0.0
    %4950 = vmatpush2.msra.mxu0 0.0
    %4951 = vmatprep.subr.mxu0 0.0
    %4952 = vmatpush2.msra.mxu0 0.0
    %4953 = vmatprep.mubr.f32.mxu0 0.0
    %4954 = vmatmul.mubr.f32.gmra.mxu0 %v4887
    %v4955 = vpop.f32.mrf.mxu0
    %v4956 = vadd.f32 0.0, %v4955
    %v4957 = vpop.f32.mrf.mxu0
    %4958 = vdwg.mxu0
    %s4959 = scalar_lea.vmem %s4, 48
    %v4960 = vld [vmem:[%s4959] sm:$0xff]
    %v4962 = vsel %vm317, %v4883, 0
    %v4965 = vsel %vm317, %v4956, 0
    %4967 = vmatprep.subr.mxu0 0.0
    %4968 = vmatpush1.msra.mxu0 0.0
    %4969 = vmatprep.subr.mxu0 0.0
    %4970 = vmatpush1.msra.mxu0 0.0
    %4971 = vmatprep.subr.mxu0 0.0
    %4972 = vmatpush1.msra.mxu0 0.0
    %4973 = vmatprep.subr.mxu0 0.0
    %4974 = vmatpush1.msra.mxu0 0.0
    %4975 = vmatprep.subr.mxu0 0.0
    %4976 = vmatpush1.msra.mxu0 0.0
    %4977 = vmatprep.subr.mxu0 0.0
    %4978 = vmatpush1.msra.mxu0 0.0
    %4979 = vmatprep.subr.mxu0 0.0
    %4980 = vmatpush1.msra.mxu0 0.0
    %4981 = vmatprep.subr.mxu0 0.0
    %4982 = vmatpush1.msra.mxu0 0.0
    %4983 = vmatprep.subr.mxu0 0.0
    %4984 = vmatpush1.msra.mxu0 0.0
    %4985 = vmatprep.subr.mxu0 0.0
    %4986 = vmatpush1.msra.mxu0 0.0
    %4987 = vmatprep.subr.mxu0 0.0
    %4988 = vmatpush1.msra.mxu0 0.0
    %4989 = vmatprep.subr.mxu0 0.0
    %4990 = vmatpush1.msra.mxu0 0.0
    %4991 = vmatprep.subr.mxu0 0.0
    %4992 = vmatpush1.msra.mxu0 0.0
    %4993 = vmatprep.subr.mxu0 0.0
    %4994 = vmatpush1.msra.mxu0 0.0
    %4995 = vmatprep.subr.mxu0 0.0
    %4996 = vmatpush1.msra.mxu0 0.0
    %4997 = vmatprep.subr.mxu0 0.0
    %4998 = vmatpush1.msra.mxu0 %v4960
    %4999 = vmatprep.subr.mxu0 0.0
    %5000 = vmatpush2.msra.mxu0 0.0
    %5001 = vmatprep.subr.mxu0 0.0
    %5002 = vmatpush2.msra.mxu0 0.0
    %5003 = vmatprep.subr.mxu0 0.0
    %5004 = vmatpush2.msra.mxu0 0.0
    %5005 = vmatprep.subr.mxu0 0.0
    %5006 = vmatpush2.msra.mxu0 0.0
    %5007 = vmatprep.subr.mxu0 0.0
    %5008 = vmatpush2.msra.mxu0 0.0
    %5009 = vmatprep.subr.mxu0 0.0
    %5010 = vmatpush2.msra.mxu0 0.0
    %5011 = vmatprep.subr.mxu0 0.0
    %5012 = vmatpush2.msra.mxu0 0.0
    %5013 = vmatprep.subr.mxu0 0.0
    %5014 = vmatpush2.msra.mxu0 0.0
    %5015 = vmatprep.subr.mxu0 0.0
    %5016 = vmatpush2.msra.mxu0 0.0
    %5017 = vmatprep.subr.mxu0 0.0
    %5018 = vmatpush2.msra.mxu0 0.0
    %5019 = vmatprep.subr.mxu0 0.0
    %5020 = vmatpush2.msra.mxu0 0.0
    %5021 = vmatprep.subr.mxu0 0.0
    %5022 = vmatpush2.msra.mxu0 0.0
    %5023 = vmatprep.subr.mxu0 0.0
    %5024 = vmatpush2.msra.mxu0 0.0
    %5025 = vmatprep.subr.mxu0 0.0
    %5026 = vmatpush2.msra.mxu0 0.0
    %5027 = vmatprep.subr.mxu0 0.0
    %5028 = vmatpush2.msra.mxu0 0.0
    %5029 = vmatprep.subr.mxu0 0.0
    %5030 = vmatpush2.msra.mxu0 0.0
    %5031 = vmatprep.mubr.f32.mxu0 0.0
    %5032 = vmatmul.mubr.f32.gmra.mxu0 %v4962
    %v5033 = vpop.f32.mrf.mxu0
    %v5034 = vadd.f32 0.0, %v5033
    %v5035 = vpop.f32.mrf.mxu0
    %5036 = vmatprep.mubr.f32.mxu0 0.0
    %5037 = vmatmul.mubr.f32.gmra.mxu0 %v4965
    %v5038 = vpop.f32.mrf.mxu0
    %v5039 = vadd.f32 0.0, %v5038
    %v5040 = vpop.f32.mrf.mxu0
    %5041 = vdwg.mxu0
    %v5042 = vadd.f32 %v4365, %v5034
    %v5043 = vadd.f32 %v4370, %v5039
    %s5044 = scalar_lea.vmem %s2, 480
    %v5045 = vld [vmem:[%s5044] sm:$0xff]
    %v5046 = vld [vmem:[%s5044 + $0x8] sm:$0xff]
    %v5047 = vld [vmem:[%s5044 + $0x10] sm:$0xff]
    %v5048 = vld [vmem:[%s5044 + $0x18] sm:$0xff]
    %s5049 = scalar_lea.vmem %s3, 15
    %v5050 = vld [vmem:[%s5049] sm:$0x1]
    %v5052 = vlaneseq
    %v5053 = vshrl.u32 %v5052, 7
    %v5054 = vsub.s32 0, %v5053
    %v5055 = vrot.slane %v5050, %v5054
    %5057 = vmatprep.subr.mxu0 0.0
    %5058 = vmatpush1.msra.mxu0 0.0
    %5059 = vmatprep.subr.mxu0 0.0
    %5060 = vmatpush1.msra.mxu0 0.0
    %5061 = vmatprep.subr.mxu0 0.0
    %5062 = vmatpush1.msra.mxu0 0.0
    %5063 = vmatprep.subr.mxu0 0.0
    %5064 = vmatpush1.msra.mxu0 0.0
    %5065 = vmatprep.subr.mxu0 0.0
    %5066 = vmatpush1.msra.mxu0 0.0
    %5067 = vmatprep.subr.mxu0 0.0
    %5068 = vmatpush1.msra.mxu0 0.0
    %5069 = vmatprep.subr.mxu0 0.0
    %5070 = vmatpush1.msra.mxu0 0.0
    %5071 = vmatprep.subr.mxu0 0.0
    %5072 = vmatpush1.msra.mxu0 0.0
    %5073 = vmatprep.subr.mxu0 0.0
    %5074 = vmatpush1.msra.mxu0 0.0
    %5075 = vmatprep.subr.mxu0 0.0
    %5076 = vmatpush1.msra.mxu0 0.0
    %5077 = vmatprep.subr.mxu0 0.0
    %5078 = vmatpush1.msra.mxu0 0.0
    %5079 = vmatprep.subr.mxu0 0.0
    %5080 = vmatpush1.msra.mxu0 0.0
    %5081 = vmatprep.subr.mxu0 0.0
    %5082 = vmatpush1.msra.mxu0 %v5048
    %5083 = vmatprep.subr.mxu0 0.0
    %5084 = vmatpush1.msra.mxu0 %v5047
    %5085 = vmatprep.subr.mxu0 0.0
    %5086 = vmatpush1.msra.mxu0 %v5046
    %5087 = vmatprep.subr.mxu0 0.0
    %5088 = vmatpush1.msra.mxu0 %v5045
    %5089 = vmatprep.subr.mxu0 0.0
    %5090 = vmatpush2.msra.mxu0 0.0
    %5091 = vmatprep.subr.mxu0 0.0
    %5092 = vmatpush2.msra.mxu0 0.0
    %5093 = vmatprep.subr.mxu0 0.0
    %5094 = vmatpush2.msra.mxu0 0.0
    %5095 = vmatprep.subr.mxu0 0.0
    %5096 = vmatpush2.msra.mxu0 0.0
    %5097 = vmatprep.subr.mxu0 0.0
    %5098 = vmatpush2.msra.mxu0 0.0
    %5099 = vmatprep.subr.mxu0 0.0
    %5100 = vmatpush2.msra.mxu0 0.0
    %5101 = vmatprep.subr.mxu0 0.0
    %5102 = vmatpush2.msra.mxu0 0.0
    %5103 = vmatprep.subr.mxu0 0.0
    %5104 = vmatpush2.msra.mxu0 0.0
    %5105 = vmatprep.subr.mxu0 0.0
    %5106 = vmatpush2.msra.mxu0 0.0
    %5107 = vmatprep.subr.mxu0 0.0
    %5108 = vmatpush2.msra.mxu0 0.0
    %5109 = vmatprep.subr.mxu0 0.0
    %5110 = vmatpush2.msra.mxu0 0.0
    %5111 = vmatprep.subr.mxu0 0.0
    %5112 = vmatpush2.msra.mxu0 0.0
    %5113 = vmatprep.subr.mxu0 0.0
    %5114 = vmatpush2.msra.mxu0 0.0
    %5115 = vmatprep.subr.mxu0 0.0
    %5116 = vmatpush2.msra.mxu0 0.0
    %5117 = vmatprep.subr.mxu0 0.0
    %5118 = vmatpush2.msra.mxu0 0.0
    %5119 = vmatprep.subr.mxu0 0.0
    %5120 = vmatpush2.msra.mxu0 0.0
    %5121 = vmatprep.mubr.f32.mxu0 0.0
    %5122 = vmatmul.mubr.f32.gmra.mxu0 %v3043
    %v5123 = vpop.f32.mrf.mxu0
    %v5124 = vadd.f32 %v5055, %v5123
    %v5125 = vpop.f32.mrf.mxu0
    %5126 = vmatprep.mubr.f32.mxu0 0.0
    %5127 = vmatmul.mubr.f32.gmra.mxu0 %v3046
    %v5128 = vpop.f32.mrf.mxu0
    %v5129 = vadd.f32 %v5055, %v5128
    %v5130 = vpop.f32.mrf.mxu0
    %5131 = vdwg.mxu0
    %v5132 = vmul.f32 %v5124, 0.35355338
    %v5133 = vmul.f32 %v5129, 0.35355338
    %s5134 = scalar_lea.vmem %s2, 608
    %v5135 = vld [vmem:[%s5134] sm:$0xff]
    %v5136 = vld [vmem:[%s5134 + $0x8] sm:$0xff]
    %v5137 = vld [vmem:[%s5134 + $0x10] sm:$0xff]
    %v5138 = vld [vmem:[%s5134 + $0x18] sm:$0xff]
    %s5139 = scalar_lea.vmem %s3, 19
    %v5140 = vld [vmem:[%s5139] sm:$0x1]
    %v5142 = vlaneseq
    %v5143 = vshrl.u32 %v5142, 7
    %v5144 = vsub.s32 0, %v5143
    %v5145 = vrot.slane %v5140, %v5144
    %5147 = vmatprep.subr.mxu0 0.0
    %5148 = vmatpush1.msra.mxu0 0.0
    %5149 = vmatprep.subr.mxu0 0.0
    %5150 = vmatpush1.msra.mxu0 0.0
    %5151 = vmatprep.subr.mxu0 0.0
    %5152 = vmatpush1.msra.mxu0 0.0
    %5153 = vmatprep.subr.mxu0 0.0
    %5154 = vmatpush1.msra.mxu0 0.0
    %5155 = vmatprep.subr.mxu0 0.0
    %5156 = vmatpush1.msra.mxu0 0.0
    %5157 = vmatprep.subr.mxu0 0.0
    %5158 = vmatpush1.msra.mxu0 0.0
    %5159 = vmatprep.subr.mxu0 0.0
    %5160 = vmatpush1.msra.mxu0 0.0
    %5161 = vmatprep.subr.mxu0 0.0
    %5162 = vmatpush1.msra.mxu0 0.0
    %5163 = vmatprep.subr.mxu0 0.0
    %5164 = vmatpush1.msra.mxu0 0.0
    %5165 = vmatprep.subr.mxu0 0.0
    %5166 = vmatpush1.msra.mxu0 0.0
    %5167 = vmatprep.subr.mxu0 0.0
    %5168 = vmatpush1.msra.mxu0 0.0
    %5169 = vmatprep.subr.mxu0 0.0
    %5170 = vmatpush1.msra.mxu0 0.0
    %5171 = vmatprep.subr.mxu0 0.0
    %5172 = vmatpush1.msra.mxu0 %v5138
    %5173 = vmatprep.subr.mxu0 0.0
    %5174 = vmatpush1.msra.mxu0 %v5137
    %5175 = vmatprep.subr.mxu0 0.0
    %5176 = vmatpush1.msra.mxu0 %v5136
    %5177 = vmatprep.subr.mxu0 0.0
    %5178 = vmatpush1.msra.mxu0 %v5135
    %5179 = vmatprep.subr.mxu0 0.0
    %5180 = vmatpush2.msra.mxu0 0.0
    %5181 = vmatprep.subr.mxu0 0.0
    %5182 = vmatpush2.msra.mxu0 0.0
    %5183 = vmatprep.subr.mxu0 0.0
    %5184 = vmatpush2.msra.mxu0 0.0
    %5185 = vmatprep.subr.mxu0 0.0
    %5186 = vmatpush2.msra.mxu0 0.0
    %5187 = vmatprep.subr.mxu0 0.0
    %5188 = vmatpush2.msra.mxu0 0.0
    %5189 = vmatprep.subr.mxu0 0.0
    %5190 = vmatpush2.msra.mxu0 0.0
    %5191 = vmatprep.subr.mxu0 0.0
    %5192 = vmatpush2.msra.mxu0 0.0
    %5193 = vmatprep.subr.mxu0 0.0
    %5194 = vmatpush2.msra.mxu0 0.0
    %5195 = vmatprep.subr.mxu0 0.0
    %5196 = vmatpush2.msra.mxu0 0.0
    %5197 = vmatprep.subr.mxu0 0.0
    %5198 = vmatpush2.msra.mxu0 0.0
    %5199 = vmatprep.subr.mxu0 0.0
    %5200 = vmatpush2.msra.mxu0 0.0
    %5201 = vmatprep.subr.mxu0 0.0
    %5202 = vmatpush2.msra.mxu0 0.0
    %5203 = vmatprep.subr.mxu0 0.0
    %5204 = vmatpush2.msra.mxu0 0.0
    %5205 = vmatprep.subr.mxu0 0.0
    %5206 = vmatpush2.msra.mxu0 0.0
    %5207 = vmatprep.subr.mxu0 0.0
    %5208 = vmatpush2.msra.mxu0 0.0
    %5209 = vmatprep.subr.mxu0 0.0
    %5210 = vmatpush2.msra.mxu0 0.0
    %5211 = vmatprep.mubr.f32.mxu0 0.0
    %5212 = vmatmul.mubr.f32.gmra.mxu0 %v3043
    %v5213 = vpop.f32.mrf.mxu0
    %v5214 = vadd.f32 %v5145, %v5213
    %v5215 = vpop.f32.mrf.mxu0
    %5216 = vmatprep.mubr.f32.mxu0 0.0
    %5217 = vmatmul.mubr.f32.gmra.mxu0 %v3046
    %v5218 = vpop.f32.mrf.mxu0
    %v5219 = vadd.f32 %v5145, %v5218
    %v5220 = vpop.f32.mrf.mxu0
    %5221 = vdwg.mxu0
    %s5222 = scalar_lea.vmem %s2, 736
    %v5223 = vld [vmem:[%s5222] sm:$0xff]
    %v5224 = vld [vmem:[%s5222 + $0x8] sm:$0xff]
    %v5225 = vld [vmem:[%s5222 + $0x10] sm:$0xff]
    %v5226 = vld [vmem:[%s5222 + $0x18] sm:$0xff]
    %s5227 = scalar_lea.vmem %s3, 23
    %v5228 = vld [vmem:[%s5227] sm:$0x1]
    %v5230 = vlaneseq
    %v5231 = vshrl.u32 %v5230, 7
    %v5232 = vsub.s32 0, %v5231
    %v5233 = vrot.slane %v5228, %v5232
    %5235 = vmatprep.subr.mxu0 0.0
    %5236 = vmatpush1.msra.mxu0 0.0
    %5237 = vmatprep.subr.mxu0 0.0
    %5238 = vmatpush1.msra.mxu0 0.0
    %5239 = vmatprep.subr.mxu0 0.0
    %5240 = vmatpush1.msra.mxu0 0.0
    %5241 = vmatprep.subr.mxu0 0.0
    %5242 = vmatpush1.msra.mxu0 0.0
    %5243 = vmatprep.subr.mxu0 0.0
    %5244 = vmatpush1.msra.mxu0 0.0
    %5245 = vmatprep.subr.mxu0 0.0
    %5246 = vmatpush1.msra.mxu0 0.0
    %5247 = vmatprep.subr.mxu0 0.0
    %5248 = vmatpush1.msra.mxu0 0.0
    %5249 = vmatprep.subr.mxu0 0.0
    %5250 = vmatpush1.msra.mxu0 0.0
    %5251 = vmatprep.subr.mxu0 0.0
    %5252 = vmatpush1.msra.mxu0 0.0
    %5253 = vmatprep.subr.mxu0 0.0
    %5254 = vmatpush1.msra.mxu0 0.0
    %5255 = vmatprep.subr.mxu0 0.0
    %5256 = vmatpush1.msra.mxu0 0.0
    %5257 = vmatprep.subr.mxu0 0.0
    %5258 = vmatpush1.msra.mxu0 0.0
    %5259 = vmatprep.subr.mxu0 0.0
    %5260 = vmatpush1.msra.mxu0 %v5226
    %5261 = vmatprep.subr.mxu0 0.0
    %5262 = vmatpush1.msra.mxu0 %v5225
    %5263 = vmatprep.subr.mxu0 0.0
    %5264 = vmatpush1.msra.mxu0 %v5224
    %5265 = vmatprep.subr.mxu0 0.0
    %5266 = vmatpush1.msra.mxu0 %v5223
    %5267 = vmatprep.subr.mxu0 0.0
    %5268 = vmatpush2.msra.mxu0 0.0
    %5269 = vmatprep.subr.mxu0 0.0
    %5270 = vmatpush2.msra.mxu0 0.0
    %5271 = vmatprep.subr.mxu0 0.0
    %5272 = vmatpush2.msra.mxu0 0.0
    %5273 = vmatprep.subr.mxu0 0.0
    %5274 = vmatpush2.msra.mxu0 0.0
    %5275 = vmatprep.subr.mxu0 0.0
    %5276 = vmatpush2.msra.mxu0 0.0
    %5277 = vmatprep.subr.mxu0 0.0
    %5278 = vmatpush2.msra.mxu0 0.0
    %5279 = vmatprep.subr.mxu0 0.0
    %5280 = vmatpush2.msra.mxu0 0.0
    %5281 = vmatprep.subr.mxu0 0.0
    %5282 = vmatpush2.msra.mxu0 0.0
    %5283 = vmatprep.subr.mxu0 0.0
    %5284 = vmatpush2.msra.mxu0 0.0
    %5285 = vmatprep.subr.mxu0 0.0
    %5286 = vmatpush2.msra.mxu0 0.0
    %5287 = vmatprep.subr.mxu0 0.0
    %5288 = vmatpush2.msra.mxu0 0.0
    %5289 = vmatprep.subr.mxu0 0.0
    %5290 = vmatpush2.msra.mxu0 0.0
    %5291 = vmatprep.subr.mxu0 0.0
    %5292 = vmatpush2.msra.mxu0 0.0
    %5293 = vmatprep.subr.mxu0 0.0
    %5294 = vmatpush2.msra.mxu0 0.0
    %5295 = vmatprep.subr.mxu0 0.0
    %5296 = vmatpush2.msra.mxu0 0.0
    %5297 = vmatprep.subr.mxu0 0.0
    %5298 = vmatpush2.msra.mxu0 0.0
    %5299 = vmatprep.mubr.f32.mxu0 0.0
    %5300 = vmatmul.mubr.f32.gmra.mxu0 %v3043
    %v5301 = vpop.f32.mrf.mxu0
    %v5302 = vadd.f32 %v5233, %v5301
    %v5303 = vpop.f32.mrf.mxu0
    %5304 = vmatprep.mubr.f32.mxu0 0.0
    %5305 = vmatmul.mubr.f32.gmra.mxu0 %v3046
    %v5306 = vpop.f32.mrf.mxu0
    %v5307 = vadd.f32 %v5233, %v5306
    %v5308 = vpop.f32.mrf.mxu0
    %5309 = vdwg.mxu0
    %v5311 = vsel %vm317, %v5132, 0
    %v5314 = vsel %vm317, %v5214, 0
    %5316 = vmatprep.subr.mxu0 0.0
    %5317 = vmatpush1.xpose.msra.mxu0 0.0
    %5318 = vmatprep.subr.mxu0 0.0
    %5319 = vmatpush1.xpose.msra.mxu0 0.0
    %5320 = vmatprep.subr.mxu0 0.0
    %5321 = vmatpush1.xpose.msra.mxu0 0.0
    %5322 = vmatprep.subr.mxu0 0.0
    %5323 = vmatpush1.xpose.msra.mxu0 0.0
    %5324 = vmatprep.subr.mxu0 0.0
    %5325 = vmatpush1.xpose.msra.mxu0 0.0
    %5326 = vmatprep.subr.mxu0 0.0
    %5327 = vmatpush1.xpose.msra.mxu0 0.0
    %5328 = vmatprep.subr.mxu0 0.0
    %5329 = vmatpush1.xpose.msra.mxu0 0.0
    %5330 = vmatprep.subr.mxu0 0.0
    %5331 = vmatpush1.xpose.msra.mxu0 0.0
    %5332 = vmatprep.subr.mxu0 0.0
    %5333 = vmatpush1.xpose.msra.mxu0 0.0
    %5334 = vmatprep.subr.mxu0 0.0
    %5335 = vmatpush1.xpose.msra.mxu0 0.0
    %5336 = vmatprep.subr.mxu0 0.0
    %5337 = vmatpush1.xpose.msra.mxu0 0.0
    %5338 = vmatprep.subr.mxu0 0.0
    %5339 = vmatpush1.xpose.msra.mxu0 0.0
    %5340 = vmatprep.subr.mxu0 0.0
    %5341 = vmatpush1.xpose.msra.mxu0 0.0
    %5342 = vmatprep.subr.mxu0 0.0
    %5343 = vmatpush1.xpose.msra.mxu0 0.0
    %5344 = vmatprep.subr.mxu0 0.0
    %5345 = vmatpush1.xpose.msra.mxu0 0.0
    %5346 = vmatprep.subr.mxu0 0.0
    %5347 = vmatpush1.xpose.msra.mxu0 %v5314
    %5348 = vmatprep.subr.mxu0 0.0
    %5349 = vmatpush2.xpose.msra.mxu0 0.0
    %5350 = vmatprep.subr.mxu0 0.0
    %5351 = vmatpush2.xpose.msra.mxu0 0.0
    %5352 = vmatprep.subr.mxu0 0.0
    %5353 = vmatpush2.xpose.msra.mxu0 0.0
    %5354 = vmatprep.subr.mxu0 0.0
    %5355 = vmatpush2.xpose.msra.mxu0 0.0
    %5356 = vmatprep.subr.mxu0 0.0
    %5357 = vmatpush2.xpose.msra.mxu0 0.0
    %5358 = vmatprep.subr.mxu0 0.0
    %5359 = vmatpush2.xpose.msra.mxu0 0.0
    %5360 = vmatprep.subr.mxu0 0.0
    %5361 = vmatpush2.xpose.msra.mxu0 0.0
    %5362 = vmatprep.subr.mxu0 0.0
    %5363 = vmatpush2.xpose.msra.mxu0 0.0
    %5364 = vmatprep.subr.mxu0 0.0
    %5365 = vmatpush2.xpose.msra.mxu0 0.0
    %5366 = vmatprep.subr.mxu0 0.0
    %5367 = vmatpush2.xpose.msra.mxu0 0.0
    %5368 = vmatprep.subr.mxu0 0.0
    %5369 = vmatpush2.xpose.msra.mxu0 0.0
    %5370 = vmatprep.subr.mxu0 0.0
    %5371 = vmatpush2.xpose.msra.mxu0 0.0
    %5372 = vmatprep.subr.mxu0 0.0
    %5373 = vmatpush2.xpose.msra.mxu0 0.0
    %5374 = vmatprep.subr.mxu0 0.0
    %5375 = vmatpush2.xpose.msra.mxu0 0.0
    %5376 = vmatprep.subr.mxu0 0.0
    %5377 = vmatpush2.xpose.msra.mxu0 0.0
    %5378 = vmatprep.subr.mxu0 0.0
    %5379 = vmatpush2.xpose.msra.mxu0 0.0
    %5380 = vmatprep.mubr.f32.mxu0 0.0
    %5381 = vmatmul.mubr.f32.gmra.mxu0 %v5311
    %v5382 = vpop.f32.mrf.mxu0
    %v5383 = vadd.f32 0.0, %v5382
    %v5384 = vpop.f32.mrf.mxu0
    %5385 = vdwg.mxu0
    %v5387 = vsel %vm317, %v5133, 0
    %v5390 = vsel %vm317, %v5219, 0
    %5392 = vmatprep.subr.mxu0 0.0
    %5393 = vmatpush1.xpose.msra.mxu0 0.0
    %5394 = vmatprep.subr.mxu0 0.0
    %5395 = vmatpush1.xpose.msra.mxu0 0.0
    %5396 = vmatprep.subr.mxu0 0.0
    %5397 = vmatpush1.xpose.msra.mxu0 0.0
    %5398 = vmatprep.subr.mxu0 0.0
    %5399 = vmatpush1.xpose.msra.mxu0 0.0
    %5400 = vmatprep.subr.mxu0 0.0
    %5401 = vmatpush1.xpose.msra.mxu0 0.0
    %5402 = vmatprep.subr.mxu0 0.0
    %5403 = vmatpush1.xpose.msra.mxu0 0.0
    %5404 = vmatprep.subr.mxu0 0.0
    %5405 = vmatpush1.xpose.msra.mxu0 0.0
    %5406 = vmatprep.subr.mxu0 0.0
    %5407 = vmatpush1.xpose.msra.mxu0 0.0
    %5408 = vmatprep.subr.mxu0 0.0
    %5409 = vmatpush1.xpose.msra.mxu0 0.0
    %5410 = vmatprep.subr.mxu0 0.0
    %5411 = vmatpush1.xpose.msra.mxu0 0.0
    %5412 = vmatprep.subr.mxu0 0.0
    %5413 = vmatpush1.xpose.msra.mxu0 0.0
    %5414 = vmatprep.subr.mxu0 0.0
    %5415 = vmatpush1.xpose.msra.mxu0 0.0
    %5416 = vmatprep.subr.mxu0 0.0
    %5417 = vmatpush1.xpose.msra.mxu0 0.0
    %5418 = vmatprep.subr.mxu0 0.0
    %5419 = vmatpush1.xpose.msra.mxu0 0.0
    %5420 = vmatprep.subr.mxu0 0.0
    %5421 = vmatpush1.xpose.msra.mxu0 0.0
    %5422 = vmatprep.subr.mxu0 0.0
    %5423 = vmatpush1.xpose.msra.mxu0 %v5390
    %5424 = vmatprep.subr.mxu0 0.0
    %5425 = vmatpush2.xpose.msra.mxu0 0.0
    %5426 = vmatprep.subr.mxu0 0.0
    %5427 = vmatpush2.xpose.msra.mxu0 0.0
    %5428 = vmatprep.subr.mxu0 0.0
    %5429 = vmatpush2.xpose.msra.mxu0 0.0
    %5430 = vmatprep.subr.mxu0 0.0
    %5431 = vmatpush2.xpose.msra.mxu0 0.0
    %5432 = vmatprep.subr.mxu0 0.0
    %5433 = vmatpush2.xpose.msra.mxu0 0.0
    %5434 = vmatprep.subr.mxu0 0.0
    %5435 = vmatpush2.xpose.msra.mxu0 0.0
    %5436 = vmatprep.subr.mxu0 0.0
    %5437 = vmatpush2.xpose.msra.mxu0 0.0
    %5438 = vmatprep.subr.mxu0 0.0
    %5439 = vmatpush2.xpose.msra.mxu0 0.0
    %5440 = vmatprep.subr.mxu0 0.0
    %5441 = vmatpush2.xpose.msra.mxu0 0.0
    %5442 = vmatprep.subr.mxu0 0.0
    %5443 = vmatpush2.xpose.msra.mxu0 0.0
    %5444 = vmatprep.subr.mxu0 0.0
    %5445 = vmatpush2.xpose.msra.mxu0 0.0
    %5446 = vmatprep.subr.mxu0 0.0
    %5447 = vmatpush2.xpose.msra.mxu0 0.0
    %5448 = vmatprep.subr.mxu0 0.0
    %5449 = vmatpush2.xpose.msra.mxu0 0.0
    %5450 = vmatprep.subr.mxu0 0.0
    %5451 = vmatpush2.xpose.msra.mxu0 0.0
    %5452 = vmatprep.subr.mxu0 0.0
    %5453 = vmatpush2.xpose.msra.mxu0 0.0
    %5454 = vmatprep.subr.mxu0 0.0
    %5455 = vmatpush2.xpose.msra.mxu0 0.0
    %5456 = vmatprep.mubr.f32.mxu0 0.0
    %5457 = vmatmul.mubr.f32.gmra.mxu0 %v5387
    %v5458 = vpop.f32.mrf.mxu0
    %v5459 = vadd.f32 0.0, %v5458
    %v5460 = vpop.f32.mrf.mxu0
    %5461 = vdwg.mxu0
    %v5462 = vsel %vm317, %v5383, -inf
    %5463 = vmax.xlane.f32.xlu0 %v5462
    %v5464 = vpop.xlane.xlu0 %5463
    %v5465 = vsel %vm317, %v5459, -inf
    %5466 = vmax.xlane.f32.xlu0 %v5465
    %v5467 = vpop.xlane.xlu0 %5466
    %v5468 = vsub.f32 %v5383, %v5464
    %v5469 = vsub.f32 %v5459, %v5467
    %v5470 = vmul.f32 %v5468, 1.442695
    %v5471 = vpow.pop %v5470
    %v5472 = vmul.f32 %v5469, 1.442695
    %v5473 = vpow.pop %v5472
    %v5474 = vsel %vm317, %v5471, 0.0
    %5475 = vadd.xlane.f32.xlu0 %v5474
    %v5476 = vpop.xlane.xlu0 %5475
    %v5477 = vsel %vm317, %v5473, 0.0
    %5478 = vadd.xlane.f32.xlu0 %v5477
    %v5479 = vpop.xlane.xlu0 %5478
    %v5480 = vrcp.pop %v5476
    %v5481 = vmul.f32 %v5471, %v5480
    %v5482 = vrcp.pop %v5479
    %v5483 = vmul.f32 %v5473, %v5482
    %v5485 = vsel %vm317, %v5481, 0
    %5487 = vmatprep.subr.mxu0 0.0
    %5488 = vmatpush1.msra.mxu0 0.0
    %5489 = vmatprep.subr.mxu0 0.0
    %5490 = vmatpush1.msra.mxu0 0.0
    %5491 = vmatprep.subr.mxu0 0.0
    %5492 = vmatpush1.msra.mxu0 0.0
    %5493 = vmatprep.subr.mxu0 0.0
    %5494 = vmatpush1.msra.mxu0 0.0
    %5495 = vmatprep.subr.mxu0 0.0
    %5496 = vmatpush1.msra.mxu0 0.0
    %5497 = vmatprep.subr.mxu0 0.0
    %5498 = vmatpush1.msra.mxu0 0.0
    %5499 = vmatprep.subr.mxu0 0.0
    %5500 = vmatpush1.msra.mxu0 0.0
    %5501 = vmatprep.subr.mxu0 0.0
    %5502 = vmatpush1.msra.mxu0 0.0
    %5503 = vmatprep.subr.mxu0 0.0
    %5504 = vmatpush1.msra.mxu0 0.0
    %5505 = vmatprep.subr.mxu0 0.0
    %5506 = vmatpush1.msra.mxu0 0.0
    %5507 = vmatprep.subr.mxu0 0.0
    %5508 = vmatpush1.msra.mxu0 0.0
    %5509 = vmatprep.subr.mxu0 0.0
    %5510 = vmatpush1.msra.mxu0 0.0
    %5511 = vmatprep.subr.mxu0 0.0
    %5512 = vmatpush1.msra.mxu0 0.0
    %5513 = vmatprep.subr.mxu0 0.0
    %5514 = vmatpush1.msra.mxu0 0.0
    %5515 = vmatprep.subr.mxu0 0.0
    %5516 = vmatpush1.msra.mxu0 0.0
    %5517 = vmatprep.subr.mxu0 0.0
    %5518 = vmatpush1.msra.mxu0 %v5302
    %5519 = vmatprep.subr.mxu0 0.0
    %5520 = vmatpush2.msra.mxu0 0.0
    %5521 = vmatprep.subr.mxu0 0.0
    %5522 = vmatpush2.msra.mxu0 0.0
    %5523 = vmatprep.subr.mxu0 0.0
    %5524 = vmatpush2.msra.mxu0 0.0
    %5525 = vmatprep.subr.mxu0 0.0
    %5526 = vmatpush2.msra.mxu0 0.0
    %5527 = vmatprep.subr.mxu0 0.0
    %5528 = vmatpush2.msra.mxu0 0.0
    %5529 = vmatprep.subr.mxu0 0.0
    %5530 = vmatpush2.msra.mxu0 0.0
    %5531 = vmatprep.subr.mxu0 0.0
    %5532 = vmatpush2.msra.mxu0 0.0
    %5533 = vmatprep.subr.mxu0 0.0
    %5534 = vmatpush2.msra.mxu0 0.0
    %5535 = vmatprep.subr.mxu0 0.0
    %5536 = vmatpush2.msra.mxu0 0.0
    %5537 = vmatprep.subr.mxu0 0.0
    %5538 = vmatpush2.msra.mxu0 0.0
    %5539 = vmatprep.subr.mxu0 0.0
    %5540 = vmatpush2.msra.mxu0 0.0
    %5541 = vmatprep.subr.mxu0 0.0
    %5542 = vmatpush2.msra.mxu0 0.0
    %5543 = vmatprep.subr.mxu0 0.0
    %5544 = vmatpush2.msra.mxu0 0.0
    %5545 = vmatprep.subr.mxu0 0.0
    %5546 = vmatpush2.msra.mxu0 0.0
    %5547 = vmatprep.subr.mxu0 0.0
    %5548 = vmatpush2.msra.mxu0 0.0
    %5549 = vmatprep.subr.mxu0 0.0
    %5550 = vmatpush2.msra.mxu0 0.0
    %5551 = vmatprep.mubr.f32.mxu0 0.0
    %5552 = vmatmul.mubr.f32.gmra.mxu0 %v5485
    %v5553 = vpop.f32.mrf.mxu0
    %v5554 = vadd.f32 0.0, %v5553
    %v5555 = vpop.f32.mrf.mxu0
    %5556 = vdwg.mxu0
    %v5558 = vsel %vm317, %v5483, 0
    %5560 = vmatprep.subr.mxu0 0.0
    %5561 = vmatpush1.msra.mxu0 0.0
    %5562 = vmatprep.subr.mxu0 0.0
    %5563 = vmatpush1.msra.mxu0 0.0
    %5564 = vmatprep.subr.mxu0 0.0
    %5565 = vmatpush1.msra.mxu0 0.0
    %5566 = vmatprep.subr.mxu0 0.0
    %5567 = vmatpush1.msra.mxu0 0.0
    %5568 = vmatprep.subr.mxu0 0.0
    %5569 = vmatpush1.msra.mxu0 0.0
    %5570 = vmatprep.subr.mxu0 0.0
    %5571 = vmatpush1.msra.mxu0 0.0
    %5572 = vmatprep.subr.mxu0 0.0
    %5573 = vmatpush1.msra.mxu0 0.0
    %5574 = vmatprep.subr.mxu0 0.0
    %5575 = vmatpush1.msra.mxu0 0.0
    %5576 = vmatprep.subr.mxu0 0.0
    %5577 = vmatpush1.msra.mxu0 0.0
    %5578 = vmatprep.subr.mxu0 0.0
    %5579 = vmatpush1.msra.mxu0 0.0
    %5580 = vmatprep.subr.mxu0 0.0
    %5581 = vmatpush1.msra.mxu0 0.0
    %5582 = vmatprep.subr.mxu0 0.0
    %5583 = vmatpush1.msra.mxu0 0.0
    %5584 = vmatprep.subr.mxu0 0.0
    %5585 = vmatpush1.msra.mxu0 0.0
    %5586 = vmatprep.subr.mxu0 0.0
    %5587 = vmatpush1.msra.mxu0 0.0
    %5588 = vmatprep.subr.mxu0 0.0
    %5589 = vmatpush1.msra.mxu0 0.0
    %5590 = vmatprep.subr.mxu0 0.0
    %5591 = vmatpush1.msra.mxu0 %v5307
    %5592 = vmatprep.subr.mxu0 0.0
    %5593 = vmatpush2.msra.mxu0 0.0
    %5594 = vmatprep.subr.mxu0 0.0
    %5595 = vmatpush2.msra.mxu0 0.0
    %5596 = vmatprep.subr.mxu0 0.0
    %5597 = vmatpush2.msra.mxu0 0.0
    %5598 = vmatprep.subr.mxu0 0.0
    %5599 = vmatpush2.msra.mxu0 0.0
    %5600 = vmatprep.subr.mxu0 0.0
    %5601 = vmatpush2.msra.mxu0 0.0
    %5602 = vmatprep.subr.mxu0 0.0
    %5603 = vmatpush2.msra.mxu0 0.0
    %5604 = vmatprep.subr.mxu0 0.0
    %5605 = vmatpush2.msra.mxu0 0.0
    %5606 = vmatprep.subr.mxu0 0.0
    %5607 = vmatpush2.msra.mxu0 0.0
    %5608 = vmatprep.subr.mxu0 0.0
    %5609 = vmatpush2.msra.mxu0 0.0
    %5610 = vmatprep.subr.mxu0 0.0
    %5611 = vmatpush2.msra.mxu0 0.0
    %5612 = vmatprep.subr.mxu0 0.0
    %5613 = vmatpush2.msra.mxu0 0.0
    %5614 = vmatprep.subr.mxu0 0.0
    %5615 = vmatpush2.msra.mxu0 0.0
    %5616 = vmatprep.subr.mxu0 0.0
    %5617 = vmatpush2.msra.mxu0 0.0
    %5618 = vmatprep.subr.mxu0 0.0
    %5619 = vmatpush2.msra.mxu0 0.0
    %5620 = vmatprep.subr.mxu0 0.0
    %5621 = vmatpush2.msra.mxu0 0.0
    %5622 = vmatprep.subr.mxu0 0.0
    %5623 = vmatpush2.msra.mxu0 0.0
    %5624 = vmatprep.mubr.f32.mxu0 0.0
    %5625 = vmatmul.mubr.f32.gmra.mxu0 %v5558
    %v5626 = vpop.f32.mrf.mxu0
    %v5627 = vadd.f32 0.0, %v5626
    %v5628 = vpop.f32.mrf.mxu0
    %5629 = vdwg.mxu0
    %s5630 = scalar_lea.vmem %s4, 56
    %v5631 = vld [vmem:[%s5630] sm:$0xff]
    %v5633 = vsel %vm317, %v5554, 0
    %v5636 = vsel %vm317, %v5627, 0
    %5638 = vmatprep.subr.mxu0 0.0
    %5639 = vmatpush1.msra.mxu0 0.0
    %5640 = vmatprep.subr.mxu0 0.0
    %5641 = vmatpush1.msra.mxu0 0.0
    %5642 = vmatprep.subr.mxu0 0.0
    %5643 = vmatpush1.msra.mxu0 0.0
    %5644 = vmatprep.subr.mxu0 0.0
    %5645 = vmatpush1.msra.mxu0 0.0
    %5646 = vmatprep.subr.mxu0 0.0
    %5647 = vmatpush1.msra.mxu0 0.0
    %5648 = vmatprep.subr.mxu0 0.0
    %5649 = vmatpush1.msra.mxu0 0.0
    %5650 = vmatprep.subr.mxu0 0.0
    %5651 = vmatpush1.msra.mxu0 0.0
    %5652 = vmatprep.subr.mxu0 0.0
    %5653 = vmatpush1.msra.mxu0 0.0
    %5654 = vmatprep.subr.mxu0 0.0
    %5655 = vmatpush1.msra.mxu0 0.0
    %5656 = vmatprep.subr.mxu0 0.0
    %5657 = vmatpush1.msra.mxu0 0.0
    %5658 = vmatprep.subr.mxu0 0.0
    %5659 = vmatpush1.msra.mxu0 0.0
    %5660 = vmatprep.subr.mxu0 0.0
    %5661 = vmatpush1.msra.mxu0 0.0
    %5662 = vmatprep.subr.mxu0 0.0
    %5663 = vmatpush1.msra.mxu0 0.0
    %5664 = vmatprep.subr.mxu0 0.0
    %5665 = vmatpush1.msra.mxu0 0.0
    %5666 = vmatprep.subr.mxu0 0.0
    %5667 = vmatpush1.msra.mxu0 0.0
    %5668 = vmatprep.subr.mxu0 0.0
    %5669 = vmatpush1.msra.mxu0 %v5631
    %5670 = vmatprep.subr.mxu0 0.0
    %5671 = vmatpush2.msra.mxu0 0.0
    %5672 = vmatprep.subr.mxu0 0.0
    %5673 = vmatpush2.msra.mxu0 0.0
    %5674 = vmatprep.subr.mxu0 0.0
    %5675 = vmatpush2.msra.mxu0 0.0
    %5676 = vmatprep.subr.mxu0 0.0
    %5677 = vmatpush2.msra.mxu0 0.0
    %5678 = vmatprep.subr.mxu0 0.0
    %5679 = vmatpush2.msra.mxu0 0.0
    %5680 = vmatprep.subr.mxu0 0.0
    %5681 = vmatpush2.msra.mxu0 0.0
    %5682 = vmatprep.subr.mxu0 0.0
    %5683 = vmatpush2.msra.mxu0 0.0
    %5684 = vmatprep.subr.mxu0 0.0
    %5685 = vmatpush2.msra.mxu0 0.0
    %5686 = vmatprep.subr.mxu0 0.0
    %5687 = vmatpush2.msra.mxu0 0.0
    %5688 = vmatprep.subr.mxu0 0.0
    %5689 = vmatpush2.msra.mxu0 0.0
    %5690 = vmatprep.subr.mxu0 0.0
    %5691 = vmatpush2.msra.mxu0 0.0
    %5692 = vmatprep.subr.mxu0 0.0
    %5693 = vmatpush2.msra.mxu0 0.0
    %5694 = vmatprep.subr.mxu0 0.0
    %5695 = vmatpush2.msra.mxu0 0.0
    %5696 = vmatprep.subr.mxu0 0.0
    %5697 = vmatpush2.msra.mxu0 0.0
    %5698 = vmatprep.subr.mxu0 0.0
    %5699 = vmatpush2.msra.mxu0 0.0
    %5700 = vmatprep.subr.mxu0 0.0
    %5701 = vmatpush2.msra.mxu0 0.0
    %5702 = vmatprep.mubr.f32.mxu0 0.0
    %5703 = vmatmul.mubr.f32.gmra.mxu0 %v5633
    %v5704 = vpop.f32.mrf.mxu0
    %v5705 = vadd.f32 0.0, %v5704
    %v5706 = vpop.f32.mrf.mxu0
    %5707 = vmatprep.mubr.f32.mxu0 0.0
    %5708 = vmatmul.mubr.f32.gmra.mxu0 %v5636
    %v5709 = vpop.f32.mrf.mxu0
    %v5710 = vadd.f32 0.0, %v5709
    %v5711 = vpop.f32.mrf.mxu0
    %5712 = vdwg.mxu0
    %v5713 = vadd.f32 %v5042, %v5705
    %v5714 = vadd.f32 %v5043, %v5710
    %s5715 = scalar_lea.vmem %s5, 6
    %v5716 = vld [vmem:[%s5715] sm:$0x1]
    %s5717 = scalar_lea.vmem %s5, 7
    %v5718 = vld [vmem:[%s5717] sm:$0x1]
    %s5719 = scalar_lea.vmem %s5, 8
    %v5720 = vld [vmem:[%s5719] sm:$0x1]
    %s5721 = scalar_lea.vmem %s5, 9
    %v5722 = vld [vmem:[%s5721] sm:$0x1]
    %s5723 = scalar_lea.vmem %s5, 10
    %v5724 = vld [vmem:[%s5723] sm:$0x1]
    %s5725 = scalar_lea.vmem %s5, 11
    %v5726 = vld [vmem:[%s5725] sm:$0x1]
    %v5728 = vlaneseq
    %v5729 = vshrl.u32 %v5728, 7
    %v5730 = vsub.s32 0, %v5729
    %v5731 = vrot.slane %v5716, %v5730
    %v5733 = vadd.f32 %v5713, %v5731
    %v5734 = vadd.f32 %v5714, %v5731
    %v5735 = vadd.f32 %v3027, %v5733
    %v5736 = vadd.f32 %v3028, %v5734
    %v5737 = vsel %vm57, %v5735, 0.0
    %5738 = vadd.xlane.f32.xlu0 %v5737
    %v5739 = vpop.xlane.xlu0 %5738
    %v5740 = vsel %vm57, %v5736, 0.0
    %5741 = vadd.xlane.f32.xlu0 %v5740
    %v5742 = vpop.xlane.xlu0 %5741
    %v5743 = vmul.f32 %v5739, %v2758
    %v5744 = vmul.f32 %v5742, %v2758
    %v5745 = vsub.f32 %v5735, %v5743
    %v5746 = vsub.f32 %v5736, %v5744
    %v5747 = vmul.f32 %v5745, %v5745
    %v5748 = vmul.f32 %v5746, %v5746
    %v5749 = vsel %vm57, %v5747, 0.0
    %5750 = vadd.xlane.f32.xlu0 %v5749
    %v5751 = vpop.xlane.xlu0 %5750
    %v5752 = vsel %vm57, %v5748, 0.0
    %5753 = vadd.xlane.f32.xlu0 %v5752
    %v5754 = vpop.xlane.xlu0 %5753
    %v5755 = vmul.f32 %v5751, %v2758
    %v5756 = vmul.f32 %v5754, %v2758
    %v5757 = vadd.f32 %v5755, 1e-05
    %v5758 = vadd.f32 %v5756, 1e-05
    %v5759 = vrsqrt.pop %v5757
    %v5760 = vrsqrt.pop %v5758
    %v5761 = vmul.f32 %v5745, %v5759
    %v5762 = vmul.f32 %v5746, %v5760
    %v5764 = vlaneseq
    %v5765 = vshrl.u32 %v5764, 7
    %v5766 = vsub.s32 0, %v5765
    %v5767 = vrot.slane %v5718, %v5766
    %v5769 = vmul.f32 %v5761, %v5767
    %v5770 = vmul.f32 %v5762, %v5767
    %v5772 = vlaneseq
    %v5773 = vshrl.u32 %v5772, 7
    %v5774 = vsub.s32 0, %v5773
    %v5775 = vrot.slane %v5720, %v5774
    %v5777 = vadd.f32 %v5769, %v5775
    %v5778 = vadd.f32 %v5770, %v5775
    %s5779 = scalar_lea.vmem %s6, 32
    %v5780 = vld [vmem:[%s5779] sm:$0xff]
    %v5781 = vld [vmem:[%s5779 + $0x8] sm:$0xff]
    %v5782 = vld [vmem:[%s5779 + $0x10] sm:$0xff]
    %v5783 = vld [vmem:[%s5779 + $0x18] sm:$0xff]
    %s5784 = scalar_lea.vmem %s7, 1
    %v5785 = vld [vmem:[%s5784] sm:$0x1]
    %v5787 = vlaneseq
    %v5788 = vshrl.u32 %v5787, 7
    %v5789 = vsub.s32 0, %v5788
    %v5790 = vrot.slane %v5785, %v5789
    %v5793 = vsel %vm57, %v5777, 0
    %v5796 = vsel %vm57, %v5778, 0
    %5798 = vmatprep.subr.mxu0 0.0
    %5799 = vmatpush1.msra.mxu0 0.0
    %5800 = vmatprep.subr.mxu0 0.0
    %5801 = vmatpush1.msra.mxu0 0.0
    %5802 = vmatprep.subr.mxu0 0.0
    %5803 = vmatpush1.msra.mxu0 0.0
    %5804 = vmatprep.subr.mxu0 0.0
    %5805 = vmatpush1.msra.mxu0 0.0
    %5806 = vmatprep.subr.mxu0 0.0
    %5807 = vmatpush1.msra.mxu0 0.0
    %5808 = vmatprep.subr.mxu0 0.0
    %5809 = vmatpush1.msra.mxu0 0.0
    %5810 = vmatprep.subr.mxu0 0.0
    %5811 = vmatpush1.msra.mxu0 0.0
    %5812 = vmatprep.subr.mxu0 0.0
    %5813 = vmatpush1.msra.mxu0 0.0
    %5814 = vmatprep.subr.mxu0 0.0
    %5815 = vmatpush1.msra.mxu0 0.0
    %5816 = vmatprep.subr.mxu0 0.0
    %5817 = vmatpush1.msra.mxu0 0.0
    %5818 = vmatprep.subr.mxu0 0.0
    %5819 = vmatpush1.msra.mxu0 0.0
    %5820 = vmatprep.subr.mxu0 0.0
    %5821 = vmatpush1.msra.mxu0 0.0
    %5822 = vmatprep.subr.mxu0 0.0
    %5823 = vmatpush1.msra.mxu0 %v5783
    %5824 = vmatprep.subr.mxu0 0.0
    %5825 = vmatpush1.msra.mxu0 %v5782
    %5826 = vmatprep.subr.mxu0 0.0
    %5827 = vmatpush1.msra.mxu0 %v5781
    %5828 = vmatprep.subr.mxu0 0.0
    %5829 = vmatpush1.msra.mxu0 %v5780
    %5830 = vmatprep.subr.mxu0 0.0
    %5831 = vmatpush2.msra.mxu0 0.0
    %5832 = vmatprep.subr.mxu0 0.0
    %5833 = vmatpush2.msra.mxu0 0.0
    %5834 = vmatprep.subr.mxu0 0.0
    %5835 = vmatpush2.msra.mxu0 0.0
    %5836 = vmatprep.subr.mxu0 0.0
    %5837 = vmatpush2.msra.mxu0 0.0
    %5838 = vmatprep.subr.mxu0 0.0
    %5839 = vmatpush2.msra.mxu0 0.0
    %5840 = vmatprep.subr.mxu0 0.0
    %5841 = vmatpush2.msra.mxu0 0.0
    %5842 = vmatprep.subr.mxu0 0.0
    %5843 = vmatpush2.msra.mxu0 0.0
    %5844 = vmatprep.subr.mxu0 0.0
    %5845 = vmatpush2.msra.mxu0 0.0
    %5846 = vmatprep.subr.mxu0 0.0
    %5847 = vmatpush2.msra.mxu0 0.0
    %5848 = vmatprep.subr.mxu0 0.0
    %5849 = vmatpush2.msra.mxu0 0.0
    %5850 = vmatprep.subr.mxu0 0.0
    %5851 = vmatpush2.msra.mxu0 0.0
    %5852 = vmatprep.subr.mxu0 0.0
    %5853 = vmatpush2.msra.mxu0 0.0
    %5854 = vmatprep.subr.mxu0 0.0
    %5855 = vmatpush2.msra.mxu0 0.0
    %5856 = vmatprep.subr.mxu0 0.0
    %5857 = vmatpush2.msra.mxu0 0.0
    %5858 = vmatprep.subr.mxu0 0.0
    %5859 = vmatpush2.msra.mxu0 0.0
    %5860 = vmatprep.subr.mxu0 0.0
    %5861 = vmatpush2.msra.mxu0 0.0
    %5862 = vmatprep.mubr.f32.mxu0 0.0
    %5863 = vmatmul.mubr.f32.gmra.mxu0 %v5793
    %v5864 = vpop.f32.mrf.mxu0
    %v5865 = vadd.f32 %v5790, %v5864
    %v5866 = vpop.f32.mrf.mxu0
    %5867 = vmatprep.mubr.f32.mxu0 0.0
    %5868 = vmatmul.mubr.f32.gmra.mxu0 %v5796
    %v5869 = vpop.f32.mrf.mxu0
    %v5870 = vadd.f32 %v5790, %v5869
    %v5871 = vpop.f32.mrf.mxu0
    %5872 = vdwg.mxu0
    %v5873 = vmax.f32 %v5865, 0.0
    %v5874 = vmax.f32 %v5870, 0.0
    %s5875 = scalar_lea.vmem %s8, 64
    %v5876 = vld [vmem:[%s5875] sm:$0xff]
    %v5877 = vld [vmem:[%s5875 + $0x8] sm:$0xff]
    %v5878 = vld [vmem:[%s5875 + $0x10] sm:$0xff]
    %v5879 = vld [vmem:[%s5875 + $0x18] sm:$0xff]
    %v5880 = vld [vmem:[%s5875 + $0x20] sm:$0xff]
    %v5881 = vld [vmem:[%s5875 + $0x28] sm:$0xff]
    %v5882 = vld [vmem:[%s5875 + $0x30] sm:$0xff]
    %v5883 = vld [vmem:[%s5875 + $0x38] sm:$0xff]
    %v5885 = vlaneseq
    %v5886 = vshrl.u32 %v5885, 7
    %v5887 = vsub.s32 0, %v5886
    %v5888 = vrot.slane %v5722, %v5887
    %v5891 = vsel %vm2903, %v5873, 0
    %v5894 = vsel %vm2903, %v5874, 0
    %5896 = vmatprep.subr.mxu0 0.0
    %5897 = vmatpush1.msra.mxu0 0.0
    %5898 = vmatprep.subr.mxu0 0.0
    %5899 = vmatpush1.msra.mxu0 0.0
    %5900 = vmatprep.subr.mxu0 0.0
    %5901 = vmatpush1.msra.mxu0 0.0
    %5902 = vmatprep.subr.mxu0 0.0
    %5903 = vmatpush1.msra.mxu0 0.0
    %5904 = vmatprep.subr.mxu0 0.0
    %5905 = vmatpush1.msra.mxu0 0.0
    %5906 = vmatprep.subr.mxu0 0.0
    %5907 = vmatpush1.msra.mxu0 0.0
    %5908 = vmatprep.subr.mxu0 0.0
    %5909 = vmatpush1.msra.mxu0 0.0
    %5910 = vmatprep.subr.mxu0 0.0
    %5911 = vmatpush1.msra.mxu0 0.0
    %5912 = vmatprep.subr.mxu0 0.0
    %5913 = vmatpush1.msra.mxu0 %v5883
    %5914 = vmatprep.subr.mxu0 0.0
    %5915 = vmatpush1.msra.mxu0 %v5882
    %5916 = vmatprep.subr.mxu0 0.0
    %5917 = vmatpush1.msra.mxu0 %v5881
    %5918 = vmatprep.subr.mxu0 0.0
    %5919 = vmatpush1.msra.mxu0 %v5880
    %5920 = vmatprep.subr.mxu0 0.0
    %5921 = vmatpush1.msra.mxu0 %v5879
    %5922 = vmatprep.subr.mxu0 0.0
    %5923 = vmatpush1.msra.mxu0 %v5878
    %5924 = vmatprep.subr.mxu0 0.0
    %5925 = vmatpush1.msra.mxu0 %v5877
    %5926 = vmatprep.subr.mxu0 0.0
    %5927 = vmatpush1.msra.mxu0 %v5876
    %5928 = vmatprep.subr.mxu0 0.0
    %5929 = vmatpush2.msra.mxu0 0.0
    %5930 = vmatprep.subr.mxu0 0.0
    %5931 = vmatpush2.msra.mxu0 0.0
    %5932 = vmatprep.subr.mxu0 0.0
    %5933 = vmatpush2.msra.mxu0 0.0
    %5934 = vmatprep.subr.mxu0 0.0
    %5935 = vmatpush2.msra.mxu0 0.0
    %5936 = vmatprep.subr.mxu0 0.0
    %5937 = vmatpush2.msra.mxu0 0.0
    %5938 = vmatprep.subr.mxu0 0.0
    %5939 = vmatpush2.msra.mxu0 0.0
    %5940 = vmatprep.subr.mxu0 0.0
    %5941 = vmatpush2.msra.mxu0 0.0
    %5942 = vmatprep.subr.mxu0 0.0
    %5943 = vmatpush2.msra.mxu0 0.0
    %5944 = vmatprep.subr.mxu0 0.0
    %5945 = vmatpush2.msra.mxu0 0.0
    %5946 = vmatprep.subr.mxu0 0.0
    %5947 = vmatpush2.msra.mxu0 0.0
    %5948 = vmatprep.subr.mxu0 0.0
    %5949 = vmatpush2.msra.mxu0 0.0
    %5950 = vmatprep.subr.mxu0 0.0
    %5951 = vmatpush2.msra.mxu0 0.0
    %5952 = vmatprep.subr.mxu0 0.0
    %5953 = vmatpush2.msra.mxu0 0.0
    %5954 = vmatprep.subr.mxu0 0.0
    %5955 = vmatpush2.msra.mxu0 0.0
    %5956 = vmatprep.subr.mxu0 0.0
    %5957 = vmatpush2.msra.mxu0 0.0
    %5958 = vmatprep.subr.mxu0 0.0
    %5959 = vmatpush2.msra.mxu0 0.0
    %5960 = vmatprep.mubr.f32.mxu0 0.0
    %5961 = vmatmul.mubr.f32.gmra.mxu0 %v5891
    %v5962 = vpop.f32.mrf.mxu0
    %v5963 = vadd.f32 %v5888, %v5962
    %v5964 = vpop.f32.mrf.mxu0
    %5965 = vmatprep.mubr.f32.mxu0 0.0
    %5966 = vmatmul.mubr.f32.gmra.mxu0 %v5894
    %v5967 = vpop.f32.mrf.mxu0
    %v5968 = vadd.f32 %v5888, %v5967
    %v5969 = vpop.f32.mrf.mxu0
    %5970 = vdwg.mxu0
    %v5971 = vadd.f32 %v5777, %v5963
    %v5972 = vadd.f32 %v5778, %v5968
    %v5973 = vsel %vm57, %v5971, 0.0
    %5974 = vadd.xlane.f32.xlu0 %v5973
    %v5975 = vpop.xlane.xlu0 %5974
    %v5976 = vsel %vm57, %v5972, 0.0
    %5977 = vadd.xlane.f32.xlu0 %v5976
    %v5978 = vpop.xlane.xlu0 %5977
    %v5979 = vmul.f32 %v5975, %v2758
    %v5980 = vmul.f32 %v5978, %v2758
    %v5981 = vsub.f32 %v5971, %v5979
    %v5982 = vsub.f32 %v5972, %v5980
    %v5983 = vmul.f32 %v5981, %v5981
    %v5984 = vmul.f32 %v5982, %v5982
    %v5985 = vsel %vm57, %v5983, 0.0
    %5986 = vadd.xlane.f32.xlu0 %v5985
    %v5987 = vpop.xlane.xlu0 %5986
    %v5988 = vsel %vm57, %v5984, 0.0
    %5989 = vadd.xlane.f32.xlu0 %v5988
    %v5990 = vpop.xlane.xlu0 %5989
    %v5991 = vmul.f32 %v5987, %v2758
    %v5992 = vmul.f32 %v5990, %v2758
    %v5993 = vadd.f32 %v5991, 1e-05
    %v5994 = vadd.f32 %v5992, 1e-05
    %v5995 = vrsqrt.pop %v5993
    %v5996 = vrsqrt.pop %v5994
    %v5997 = vmul.f32 %v5981, %v5995
    %v5998 = vmul.f32 %v5982, %v5996
    %v6000 = vlaneseq
    %v6001 = vshrl.u32 %v6000, 7
    %v6002 = vsub.s32 0, %v6001
    %v6003 = vrot.slane %v5724, %v6002
    %v6005 = vmul.f32 %v5997, %v6003
    %v6006 = vmul.f32 %v5998, %v6003
    %v6008 = vlaneseq
    %v6009 = vshrl.u32 %v6008, 7
    %v6010 = vsub.s32 0, %v6009
    %v6011 = vrot.slane %v5726, %v6010
    %v6013 = vadd.f32 %v6005, %v6011
    %v6014 = vadd.f32 %v6006, %v6011
    %v6015 = vld [vmem:[%s9] sm:$0xff]
    %v6016 = vld [vmem:[%s9 + $0x8] sm:$0xff]
    %v6017 = vld [vmem:[%s9 + $0x10] sm:$0xff]
    %v6018 = vld [vmem:[%s9 + $0x18] sm:$0xff]
    %v6019 = vld [vmem:[%s10] sm:$0x1]
    %v6021 = vlaneseq
    %v6022 = vshrl.u32 %v6021, 7
    %v6023 = vsub.s32 0, %v6022
    %v6024 = vrot.slane %v6019, %v6023
    %v6027 = vsel %vm57, %v6013, 0
    %v6030 = vsel %vm57, %v6014, 0
    %6032 = vmatprep.subr.mxu0 0.0
    %6033 = vmatpush1.msra.mxu0 0.0
    %6034 = vmatprep.subr.mxu0 0.0
    %6035 = vmatpush1.msra.mxu0 0.0
    %6036 = vmatprep.subr.mxu0 0.0
    %6037 = vmatpush1.msra.mxu0 0.0
    %6038 = vmatprep.subr.mxu0 0.0
    %6039 = vmatpush1.msra.mxu0 0.0
    %6040 = vmatprep.subr.mxu0 0.0
    %6041 = vmatpush1.msra.mxu0 0.0
    %6042 = vmatprep.subr.mxu0 0.0
    %6043 = vmatpush1.msra.mxu0 0.0
    %6044 = vmatprep.subr.mxu0 0.0
    %6045 = vmatpush1.msra.mxu0 0.0
    %6046 = vmatprep.subr.mxu0 0.0
    %6047 = vmatpush1.msra.mxu0 0.0
    %6048 = vmatprep.subr.mxu0 0.0
    %6049 = vmatpush1.msra.mxu0 0.0
    %6050 = vmatprep.subr.mxu0 0.0
    %6051 = vmatpush1.msra.mxu0 0.0
    %6052 = vmatprep.subr.mxu0 0.0
    %6053 = vmatpush1.msra.mxu0 0.0
    %6054 = vmatprep.subr.mxu0 0.0
    %6055 = vmatpush1.msra.mxu0 0.0
    %6056 = vmatprep.subr.mxu0 0.0
    %6057 = vmatpush1.msra.mxu0 %v6018
    %6058 = vmatprep.subr.mxu0 0.0
    %6059 = vmatpush1.msra.mxu0 %v6017
    %6060 = vmatprep.subr.mxu0 0.0
    %6061 = vmatpush1.msra.mxu0 %v6016
    %6062 = vmatprep.subr.mxu0 0.0
    %6063 = vmatpush1.msra.mxu0 %v6015
    %6064 = vmatprep.subr.mxu0 0.0
    %6065 = vmatpush2.msra.mxu0 0.0
    %6066 = vmatprep.subr.mxu0 0.0
    %6067 = vmatpush2.msra.mxu0 0.0
    %6068 = vmatprep.subr.mxu0 0.0
    %6069 = vmatpush2.msra.mxu0 0.0
    %6070 = vmatprep.subr.mxu0 0.0
    %6071 = vmatpush2.msra.mxu0 0.0
    %6072 = vmatprep.subr.mxu0 0.0
    %6073 = vmatpush2.msra.mxu0 0.0
    %6074 = vmatprep.subr.mxu0 0.0
    %6075 = vmatpush2.msra.mxu0 0.0
    %6076 = vmatprep.subr.mxu0 0.0
    %6077 = vmatpush2.msra.mxu0 0.0
    %6078 = vmatprep.subr.mxu0 0.0
    %6079 = vmatpush2.msra.mxu0 0.0
    %6080 = vmatprep.subr.mxu0 0.0
    %6081 = vmatpush2.msra.mxu0 0.0
    %6082 = vmatprep.subr.mxu0 0.0
    %6083 = vmatpush2.msra.mxu0 0.0
    %6084 = vmatprep.subr.mxu0 0.0
    %6085 = vmatpush2.msra.mxu0 0.0
    %6086 = vmatprep.subr.mxu0 0.0
    %6087 = vmatpush2.msra.mxu0 0.0
    %6088 = vmatprep.subr.mxu0 0.0
    %6089 = vmatpush2.msra.mxu0 0.0
    %6090 = vmatprep.subr.mxu0 0.0
    %6091 = vmatpush2.msra.mxu0 0.0
    %6092 = vmatprep.subr.mxu0 0.0
    %6093 = vmatpush2.msra.mxu0 0.0
    %6094 = vmatprep.subr.mxu0 0.0
    %6095 = vmatpush2.msra.mxu0 0.0
    %6096 = vmatprep.mubr.f32.mxu0 0.0
    %6097 = vmatmul.mubr.f32.gmra.mxu0 %v6027
    %v6098 = vpop.f32.mrf.mxu0
    %v6099 = vadd.f32 %v6024, %v6098
    %v6100 = vpop.f32.mrf.mxu0
    %6101 = vmatprep.mubr.f32.mxu0 0.0
    %6102 = vmatmul.mubr.f32.gmra.mxu0 %v6030
    %v6103 = vpop.f32.mrf.mxu0
    %v6104 = vadd.f32 %v6024, %v6103
    %v6105 = vpop.f32.mrf.mxu0
    %6106 = vdwg.mxu0
    %v6107 = vld [vmem:[%s11] sm:$0xff]
    %v6108 = vld [vmem:[%s1] sm:$0x3]
    %v6109 = vld [vmem:[%s1 + $0x2] sm:$0x3]
    %v6110 = vld [vmem:[%s1 + $0x4] sm:$0x3]
    %v6111 = vld [vmem:[%s1 + $0x6] sm:$0x3]
    %v6112 = vld [vmem:[%s1 + $0x8] sm:$0x3]
    %v6113 = vld [vmem:[%s1 + $0xa] sm:$0x3]
    %v6114 = vld [vmem:[%s1 + $0xc] sm:$0x3]
    %v6115 = vld [vmem:[%s1 + $0xe] sm:$0x3]
    %v6116 = vsub.f32 1.0, %v6109
    %v6117 = vsub.f32 1.0, %v6110
    %v6118 = vsub.f32 1.0, %v6111
    %v6119 = vsub.f32 1.0, %v6112
    %v6120 = vsub.f32 1.0, %v6113
    %v6121 = vsub.f32 1.0, %v6114
    %v6122 = vsub.f32 1.0, %v6115
    %vm6123 = vcmask 1024
    %v6124 = vsel %vm6123, %v6108, 0.0
    %v6125 = vsel %vm6123, %v6109, 0.0
    %v6126 = vadd.f32 %v6124, %v6125
    %v6127 = vsel %vm6123, %v6110, 0.0
    %v6128 = vadd.f32 %v6126, %v6127
    %v6129 = vsel %vm6123, %v6111, 0.0
    %v6130 = vadd.f32 %v6128, %v6129
    %v6131 = vsel %vm6123, %v6112, 0.0
    %v6132 = vadd.f32 %v6130, %v6131
    %v6133 = vsel %vm6123, %v6113, 0.0
    %v6134 = vadd.f32 %v6132, %v6133
    %v6135 = vsel %vm6123, %v6114, 0.0
    %v6136 = vadd.f32 %v6134, %v6135
    %v6137 = vsel %vm6123, %v6115, 0.0
    %v6138 = vadd.f32 %v6136, %v6137
    %v6139 = vcvt.f32.s32.to.zero.pseudo %v6138
    %v6140 = vlaneseq
    %v6141 = vand.u32 %v6140, 127
    %v6142 = vlaneseq
    %v6143 = vshrl.u32 %v6142, 7
    %v6144 = vsub.s32 6, %v6143
    %v6145 = vrot.slane %v6107, %v6144
    %v6148 = vrot.slane %v6104, 7
    %vm6149 = vcmask 1041409
    %v6150 = vsel %vm6149, %v6148, %v6099
    %v6152 = vadd.f32 %v6145, %v6150
    %v6155 = vunpack.c.l.s4 1966171168
    %v6156 = vunpack.c.0.s8 %v6155
    %v6157 = vlaneseq
    %v6158 = vshrl.u32 %v6157, 7
    %v6159 = vsub.s32 %v6156, %v6158
    %v6160 = vrot.slane %v6152, %v6159
    %v6161 = vcombine.high %v6160, %v6160
    %v6163 = vunpack.c.l.s4 1966171168
    %v6164 = vunpack.c.0.s8 %v6163
    %v6165 = vlaneseq
    %v6166 = vshrl.u32 %v6165, 7
    %v6167 = vsub.s32 %v6164, %v6166
    %v6168 = vrot.slane %v6160, %v6167
    %v6170 = vunpack.c.l.s4 1966171168
    %v6171 = vunpack.c.0.s8 %v6170
    %v6172 = vlaneseq
    %v6173 = vshrl.u32 %v6172, 7
    %v6174 = vsub.s32 %v6171, %v6173
    %v6175 = vrot.slane %v6161, %v6174
    %v6176 = vlaneseq
    %v6177 = vshrl.u32 %v6176, 7
    %v6178 = vsub.s32 0, %v6177
    %v6179 = vrot.slane %v6168, %v6178
    %v6180 = vlaneseq
    %v6181 = vshrl.u32 %v6180, 7
    %v6182 = vsub.s32 0, %v6181
    %v6183 = vrot.slane %v6175, %v6182
    %v6186 = vadd.f32 %v6179, %v6107
    %v6187 = vadd.f32 %v6183, %v6107
    %vm6188 = vcmask 46080
    %v6189 = vsel %vm6188, %v6186, -inf
    %6190 = vmax.xlane.f32.xlu0 %v6189
    %v6191 = vpop.xlane.xlu0 %6190
    %v6192 = vsel %vm6188, %v6187, -inf
    %6193 = vmax.xlane.f32.xlu0 %v6192
    %v6194 = vpop.xlane.xlu0 %6193
    %vm6195 = vcmp.eq.f32.partialorder %v6186, %v6191
    %vm6196 = vcmp.eq.f32.partialorder %v6187, %v6194
    %v6197 = vsel %vm6195, %v6141, 6
    %v6198 = vsel %vm6196, %v6141, 6
    %v6199 = vsel %vm6188, %v6197, 2147483647
    %v6200 = vand.u32 %v6199, 65535
    %v6201 = vshra.s32 %v6199, 16
    %v6202 = vcvt.s32.f32 %v6200
    %v6203 = vcvt.s32.f32 %v6201
    %6204 = vmin.xlane.f32.xlu0 %v6203
    %v6205 = vpop.xlane.xlu0 %6204
    %vm6206 = vcmp.eq.f32.partialorder %v6203, %v6205
    %v6207 = vsel %vm6206, %v6202, inf
    %6208 = vmin.xlane.f32.xlu0 %v6207
    %v6209 = vpop.xlane.xlu0 %6208
    %v6210 = vcvt.f32.s32 %v6209
    %v6211 = vcvt.f32.s32 %v6205
    %v6212 = vshll.u32 %v6211, 16
    %v6213 = vadd.s32 %v6212, %v6210
    %v6214 = vsel %vm6188, %v6198, 2147483647
    %v6215 = vand.u32 %v6214, 65535
    %v6216 = vshra.s32 %v6214, 16
    %v6217 = vcvt.s32.f32 %v6215
    %v6218 = vcvt.s32.f32 %v6216
    %6219 = vmin.xlane.f32.xlu0 %v6218
    %v6220 = vpop.xlane.xlu0 %6219
    %vm6221 = vcmp.eq.f32.partialorder %v6218, %v6220
    %v6222 = vsel %vm6221, %v6217, inf
    %6223 = vmin.xlane.f32.xlu0 %v6222
    %v6224 = vpop.xlane.xlu0 %6223
    %v6225 = vcvt.f32.s32 %v6224
    %v6226 = vcvt.f32.s32 %v6220
    %v6227 = vshll.u32 %v6226, 16
    %v6228 = vadd.s32 %v6227, %v6225
    %v6229 = vlaneseq
    %v6230 = vshrl.u32 %v6229, 7
    %v6231 = vsub.s32 1, %v6230
    %v6232 = vrot.slane %v6099, %v6231
    %6234 = vbcast.lane.b32.xlu0 %v6232, 256
    %v6235 = vpop.permute.xlu0 %6234
    %v6236 = vlaneseq
    %v6237 = vshrl.u32 %v6236, 7
    %v6238 = vsub.s32 1, %v6237
    %v6239 = vrot.slane %v6104, %v6238
    %6241 = vbcast.lane.b32.xlu0 %v6239, 256
    %v6242 = vpop.permute.xlu0 %6241
    %v6245 = vadd.f32 %v6191, %v6235
    %v6246 = vadd.f32 %v6194, %v6242
    %6248 = vset.pattern.permute.xlu0 0
    %6249 = vperm.xlu0 %6248, %v6109
    %v6250 = vpop.permute.xlu0 %6249
    %6254 = vset.pattern.permute.xlu0 0
    %6255 = vperm.xlu0 %6254, %v6245
    %v6256 = vpop.permute.xlu0 %6255
    %6257 = vset.pattern.permute.xlu0 0
    %6258 = vperm.xlu0 %6257, %v6246
    %v6259 = vpop.permute.xlu0 %6258
    %v6260 = vlaneseq
    %v6261 = vshrl.u32 %v6260, 7
    %v6262 = vsub.s32 %v6141, %v6261
    %v6263 = vrot.slane %v6256, %v6262
    %v6264 = vlaneseq
    %v6265 = vshrl.u32 %v6264, 7
    %v6266 = vsub.s32 %v6141, %v6265
    %v6267 = vrot.slane %v6259, %v6266
    %v6268 = vsel %vm6149, %v6267, %v6263
    %v6270 = vmul.f32 %v6250, %v6268
    %6272 = vset.pattern.permute.xlu0 0
    %6273 = vperm.xlu0 %6272, %v6116
    %v6274 = vpop.permute.xlu0 %6273
    %v6276 = vmul.f32 %v6274, %v6152
    %v6277 = vadd.f32 %v6270, %v6276
    %v6280 = vunpack.c.l.s4 1966171168
    %v6281 = vunpack.c.0.s8 %v6280
    %v6282 = vlaneseq
    %v6283 = vshrl.u32 %v6282, 7
    %v6284 = vsub.s32 %v6281, %v6283
    %v6285 = vrot.slane %v6277, %v6284
    %v6286 = vcombine.high %v6285, %v6285
    %v6288 = vunpack.c.l.s4 1966171168
    %v6289 = vunpack.c.0.s8 %v6288
    %v6290 = vlaneseq
    %v6291 = vshrl.u32 %v6290, 7
    %v6292 = vsub.s32 %v6289, %v6291
    %v6293 = vrot.slane %v6285, %v6292
    %v6295 = vunpack.c.l.s4 1966171168
    %v6296 = vunpack.c.0.s8 %v6295
    %v6297 = vlaneseq
    %v6298 = vshrl.u32 %v6297, 7
    %v6299 = vsub.s32 %v6296, %v6298
    %v6300 = vrot.slane %v6286, %v6299
    %v6301 = vlaneseq
    %v6302 = vshrl.u32 %v6301, 7
    %v6303 = vsub.s32 0, %v6302
    %v6304 = vrot.slane %v6293, %v6303
    %v6305 = vlaneseq
    %v6306 = vshrl.u32 %v6305, 7
    %v6307 = vsub.s32 0, %v6306
    %v6308 = vrot.slane %v6300, %v6307
    %v6311 = vadd.f32 %v6304, %v6107
    %v6312 = vadd.f32 %v6308, %v6107
    %v6313 = vsel %vm6188, %v6311, -inf
    %6314 = vmax.xlane.f32.xlu0 %v6313
    %v6315 = vpop.xlane.xlu0 %6314
    %v6316 = vsel %vm6188, %v6312, -inf
    %6317 = vmax.xlane.f32.xlu0 %v6316
    %v6318 = vpop.xlane.xlu0 %6317
    %vm6319 = vcmp.eq.f32.partialorder %v6311, %v6315
    %vm6320 = vcmp.eq.f32.partialorder %v6312, %v6318
    %v6321 = vsel %vm6319, %v6141, 6
    %v6322 = vsel %vm6320, %v6141, 6
    %v6323 = vsel %vm6188, %v6321, 2147483647
    %v6324 = vand.u32 %v6323, 65535
    %v6325 = vshra.s32 %v6323, 16
    %v6326 = vcvt.s32.f32 %v6324
    %v6327 = vcvt.s32.f32 %v6325
    %6328 = vmin.xlane.f32.xlu0 %v6327
    %v6329 = vpop.xlane.xlu0 %6328
    %vm6330 = vcmp.eq.f32.partialorder %v6327, %v6329
    %v6331 = vsel %vm6330, %v6326, inf
    %6332 = vmin.xlane.f32.xlu0 %v6331
    %v6333 = vpop.xlane.xlu0 %6332
    %v6334 = vcvt.f32.s32 %v6333
    %v6335 = vcvt.f32.s32 %v6329
    %v6336 = vshll.u32 %v6335, 16
    %v6337 = vadd.s32 %v6336, %v6334
    %v6338 = vsel %vm6188, %v6322, 2147483647
    %v6339 = vand.u32 %v6338, 65535
    %v6340 = vshra.s32 %v6338, 16
    %v6341 = vcvt.s32.f32 %v6339
    %v6342 = vcvt.s32.f32 %v6340
    %6343 = vmin.xlane.f32.xlu0 %v6342
    %v6344 = vpop.xlane.xlu0 %6343
    %vm6345 = vcmp.eq.f32.partialorder %v6342, %v6344
    %v6346 = vsel %vm6345, %v6341, inf
    %6347 = vmin.xlane.f32.xlu0 %v6346
    %v6348 = vpop.xlane.xlu0 %6347
    %v6349 = vcvt.f32.s32 %v6348
    %v6350 = vcvt.f32.s32 %v6344
    %v6351 = vshll.u32 %v6350, 16
    %v6352 = vadd.s32 %v6351, %v6349
    %v6353 = vlaneseq
    %v6354 = vshrl.u32 %v6353, 7
    %v6355 = vsub.s32 2, %v6354
    %v6356 = vrot.slane %v6099, %v6355
    %6358 = vbcast.lane.b32.xlu0 %v6356, 256
    %v6359 = vpop.permute.xlu0 %6358
    %v6360 = vlaneseq
    %v6361 = vshrl.u32 %v6360, 7
    %v6362 = vsub.s32 2, %v6361
    %v6363 = vrot.slane %v6104, %v6362
    %6365 = vbcast.lane.b32.xlu0 %v6363, 256
    %v6366 = vpop.permute.xlu0 %6365
    %v6369 = vadd.f32 %v6315, %v6359
    %v6370 = vadd.f32 %v6318, %v6366
    %6372 = vset.pattern.permute.xlu0 0
    %6373 = vperm.xlu0 %6372, %v6110
    %v6374 = vpop.permute.xlu0 %6373
    %6378 = vset.pattern.permute.xlu0 0
    %6379 = vperm.xlu0 %6378, %v6369
    %v6380 = vpop.permute.xlu0 %6379
    %6381 = vset.pattern.permute.xlu0 0
    %6382 = vperm.xlu0 %6381, %v6370
    %v6383 = vpop.permute.xlu0 %6382
    %v6384 = vlaneseq
    %v6385 = vshrl.u32 %v6384, 7
    %v6386 = vsub.s32 %v6141, %v6385
    %v6387 = vrot.slane %v6380, %v6386
    %v6388 = vlaneseq
    %v6389 = vshrl.u32 %v6388, 7
    %v6390 = vsub.s32 %v6141, %v6389
    %v6391 = vrot.slane %v6383, %v6390
    %v6392 = vsel %vm6149, %v6391, %v6387
    %v6394 = vmul.f32 %v6374, %v6392
    %6396 = vset.pattern.permute.xlu0 0
    %6397 = vperm.xlu0 %6396, %v6117
    %v6398 = vpop.permute.xlu0 %6397
    %v6400 = vmul.f32 %v6398, %v6277
    %v6401 = vadd.f32 %v6394, %v6400
    %v6404 = vunpack.c.l.s4 1966171168
    %v6405 = vunpack.c.0.s8 %v6404
    %v6406 = vlaneseq
    %v6407 = vshrl.u32 %v6406, 7
    %v6408 = vsub.s32 %v6405, %v6407
    %v6409 = vrot.slane %v6401, %v6408
    %v6410 = vcombine.high %v6409, %v6409
    %v6412 = vunpack.c.l.s4 1966171168
    %v6413 = vunpack.c.0.s8 %v6412
    %v6414 = vlaneseq
    %v6415 = vshrl.u32 %v6414, 7
    %v6416 = vsub.s32 %v6413, %v6415
    %v6417 = vrot.slane %v6409, %v6416
    %v6419 = vunpack.c.l.s4 1966171168
    %v6420 = vunpack.c.0.s8 %v6419
    %v6421 = vlaneseq
    %v6422 = vshrl.u32 %v6421, 7
    %v6423 = vsub.s32 %v6420, %v6422
    %v6424 = vrot.slane %v6410, %v6423
    %v6425 = vlaneseq
    %v6426 = vshrl.u32 %v6425, 7
    %v6427 = vsub.s32 0, %v6426
    %v6428 = vrot.slane %v6417, %v6427
    %v6429 = vlaneseq
    %v6430 = vshrl.u32 %v6429, 7
    %v6431 = vsub.s32 0, %v6430
    %v6432 = vrot.slane %v6424, %v6431
    %v6435 = vadd.f32 %v6428, %v6107
    %v6436 = vadd.f32 %v6432, %v6107
    %v6437 = vsel %vm6188, %v6435, -inf
    %6438 = vmax.xlane.f32.xlu0 %v6437
    %v6439 = vpop.xlane.xlu0 %6438
    %v6440 = vsel %vm6188, %v6436, -inf
    %6441 = vmax.xlane.f32.xlu0 %v6440
    %v6442 = vpop.xlane.xlu0 %6441
    %vm6443 = vcmp.eq.f32.partialorder %v6435, %v6439
    %vm6444 = vcmp.eq.f32.partialorder %v6436, %v6442
    %v6445 = vsel %vm6443, %v6141, 6
    %v6446 = vsel %vm6444, %v6141, 6
    %v6447 = vsel %vm6188, %v6445, 2147483647
    %v6448 = vand.u32 %v6447, 65535
    %v6449 = vshra.s32 %v6447, 16
    %v6450 = vcvt.s32.f32 %v6448
    %v6451 = vcvt.s32.f32 %v6449
    %6452 = vmin.xlane.f32.xlu0 %v6451
    %v6453 = vpop.xlane.xlu0 %6452
    %vm6454 = vcmp.eq.f32.partialorder %v6451, %v6453
    %v6455 = vsel %vm6454, %v6450, inf
    %6456 = vmin.xlane.f32.xlu0 %v6455
    %v6457 = vpop.xlane.xlu0 %6456
    %v6458 = vcvt.f32.s32 %v6457
    %v6459 = vcvt.f32.s32 %v6453
    %v6460 = vshll.u32 %v6459, 16
    %v6461 = vadd.s32 %v6460, %v6458
    %v6462 = vsel %vm6188, %v6446, 2147483647
    %v6463 = vand.u32 %v6462, 65535
    %v6464 = vshra.s32 %v6462, 16
    %v6465 = vcvt.s32.f32 %v6463
    %v6466 = vcvt.s32.f32 %v6464
    %6467 = vmin.xlane.f32.xlu0 %v6466
    %v6468 = vpop.xlane.xlu0 %6467
    %vm6469 = vcmp.eq.f32.partialorder %v6466, %v6468
    %v6470 = vsel %vm6469, %v6465, inf
    %6471 = vmin.xlane.f32.xlu0 %v6470
    %v6472 = vpop.xlane.xlu0 %6471
    %v6473 = vcvt.f32.s32 %v6472
    %v6474 = vcvt.f32.s32 %v6468
    %v6475 = vshll.u32 %v6474, 16
    %v6476 = vadd.s32 %v6475, %v6473
    %v6477 = vlaneseq
    %v6478 = vshrl.u32 %v6477, 7
    %v6479 = vsub.s32 3, %v6478
    %v6480 = vrot.slane %v6099, %v6479
    %6482 = vbcast.lane.b32.xlu0 %v6480, 256
    %v6483 = vpop.permute.xlu0 %6482
    %v6484 = vlaneseq
    %v6485 = vshrl.u32 %v6484, 7
    %v6486 = vsub.s32 3, %v6485
    %v6487 = vrot.slane %v6104, %v6486
    %6489 = vbcast.lane.b32.xlu0 %v6487, 256
    %v6490 = vpop.permute.xlu0 %6489
    %v6493 = vadd.f32 %v6439, %v6483
    %v6494 = vadd.f32 %v6442, %v6490
    %6496 = vset.pattern.permute.xlu0 0
    %6497 = vperm.xlu0 %6496, %v6111
    %v6498 = vpop.permute.xlu0 %6497
    %6502 = vset.pattern.permute.xlu0 0
    %6503 = vperm.xlu0 %6502, %v6493
    %v6504 = vpop.permute.xlu0 %6503
    %6505 = vset.pattern.permute.xlu0 0
    %6506 = vperm.xlu0 %6505, %v6494
    %v6507 = vpop.permute.xlu0 %6506
    %v6508 = vlaneseq
    %v6509 = vshrl.u32 %v6508, 7
    %v6510 = vsub.s32 %v6141, %v6509
    %v6511 = vrot.slane %v6504, %v6510
    %v6512 = vlaneseq
    %v6513 = vshrl.u32 %v6512, 7
    %v6514 = vsub.s32 %v6141, %v6513
    %v6515 = vrot.slane %v6507, %v6514
    %v6516 = vsel %vm6149, %v6515, %v6511
    %v6518 = vmul.f32 %v6498, %v6516
    %6520 = vset.pattern.permute.xlu0 0
    %6521 = vperm.xlu0 %6520, %v6118
    %v6522 = vpop.permute.xlu0 %6521
    %v6524 = vmul.f32 %v6522, %v6401
    %v6525 = vadd.f32 %v6518, %v6524
    %v6528 = vunpack.c.l.s4 1966171168
    %v6529 = vunpack.c.0.s8 %v6528
    %v6530 = vlaneseq
    %v6531 = vshrl.u32 %v6530, 7
    %v6532 = vsub.s32 %v6529, %v6531
    %v6533 = vrot.slane %v6525, %v6532
    %v6534 = vcombine.high %v6533, %v6533
    %v6536 = vunpack.c.l.s4 1966171168
    %v6537 = vunpack.c.0.s8 %v6536
    %v6538 = vlaneseq
    %v6539 = vshrl.u32 %v6538, 7
    %v6540 = vsub.s32 %v6537, %v6539
    %v6541 = vrot.slane %v6533, %v6540
    %v6543 = vunpack.c.l.s4 1966171168
    %v6544 = vunpack.c.0.s8 %v6543
    %v6545 = vlaneseq
    %v6546 = vshrl.u32 %v6545, 7
    %v6547 = vsub.s32 %v6544, %v6546
    %v6548 = vrot.slane %v6534, %v6547
    %v6549 = vlaneseq
    %v6550 = vshrl.u32 %v6549, 7
    %v6551 = vsub.s32 0, %v6550
    %v6552 = vrot.slane %v6541, %v6551
    %v6553 = vlaneseq
    %v6554 = vshrl.u32 %v6553, 7
    %v6555 = vsub.s32 0, %v6554
    %v6556 = vrot.slane %v6548, %v6555
    %v6559 = vadd.f32 %v6552, %v6107
    %v6560 = vadd.f32 %v6556, %v6107
    %v6561 = vsel %vm6188, %v6559, -inf
    %6562 = vmax.xlane.f32.xlu0 %v6561
    %v6563 = vpop.xlane.xlu0 %6562
    %v6564 = vsel %vm6188, %v6560, -inf
    %6565 = vmax.xlane.f32.xlu0 %v6564
    %v6566 = vpop.xlane.xlu0 %6565
    %vm6567 = vcmp.eq.f32.partialorder %v6559, %v6563
    %vm6568 = vcmp.eq.f32.partialorder %v6560, %v6566
    %v6569 = vsel %vm6567, %v6141, 6
    %v6570 = vsel %vm6568, %v6141, 6
    %v6571 = vsel %vm6188, %v6569, 2147483647
    %v6572 = vand.u32 %v6571, 65535
    %v6573 = vshra.s32 %v6571, 16
    %v6574 = vcvt.s32.f32 %v6572
    %v6575 = vcvt.s32.f32 %v6573
    %6576 = vmin.xlane.f32.xlu0 %v6575
    %v6577 = vpop.xlane.xlu0 %6576
    %vm6578 = vcmp.eq.f32.partialorder %v6575, %v6577
    %v6579 = vsel %vm6578, %v6574, inf
    %6580 = vmin.xlane.f32.xlu0 %v6579
    %v6581 = vpop.xlane.xlu0 %6580
    %v6582 = vcvt.f32.s32 %v6581
    %v6583 = vcvt.f32.s32 %v6577
    %v6584 = vshll.u32 %v6583, 16
    %v6585 = vadd.s32 %v6584, %v6582
    %v6586 = vsel %vm6188, %v6570, 2147483647
    %v6587 = vand.u32 %v6586, 65535
    %v6588 = vshra.s32 %v6586, 16
    %v6589 = vcvt.s32.f32 %v6587
    %v6590 = vcvt.s32.f32 %v6588
    %6591 = vmin.xlane.f32.xlu0 %v6590
    %v6592 = vpop.xlane.xlu0 %6591
    %vm6593 = vcmp.eq.f32.partialorder %v6590, %v6592
    %v6594 = vsel %vm6593, %v6589, inf
    %6595 = vmin.xlane.f32.xlu0 %v6594
    %v6596 = vpop.xlane.xlu0 %6595
    %v6597 = vcvt.f32.s32 %v6596
    %v6598 = vcvt.f32.s32 %v6592
    %v6599 = vshll.u32 %v6598, 16
    %v6600 = vadd.s32 %v6599, %v6597
    %v6601 = vlaneseq
    %v6602 = vshrl.u32 %v6601, 7
    %v6603 = vsub.s32 4, %v6602
    %v6604 = vrot.slane %v6099, %v6603
    %6606 = vbcast.lane.b32.xlu0 %v6604, 256
    %v6607 = vpop.permute.xlu0 %6606
    %v6608 = vlaneseq
    %v6609 = vshrl.u32 %v6608, 7
    %v6610 = vsub.s32 4, %v6609
    %v6611 = vrot.slane %v6104, %v6610
    %6613 = vbcast.lane.b32.xlu0 %v6611, 256
    %v6614 = vpop.permute.xlu0 %6613
    %v6617 = vadd.f32 %v6563, %v6607
    %v6618 = vadd.f32 %v6566, %v6614
    %6620 = vset.pattern.permute.xlu0 0
    %6621 = vperm.xlu0 %6620, %v6112
    %v6622 = vpop.permute.xlu0 %6621
    %6626 = vset.pattern.permute.xlu0 0
    %6627 = vperm.xlu0 %6626, %v6617
    %v6628 = vpop.permute.xlu0 %6627
    %6629 = vset.pattern.permute.xlu0 0
    %6630 = vperm.xlu0 %6629, %v6618
    %v6631 = vpop.permute.xlu0 %6630
    %v6632 = vlaneseq
    %v6633 = vshrl.u32 %v6632, 7
    %v6634 = vsub.s32 %v6141, %v6633
    %v6635 = vrot.slane %v6628, %v6634
    %v6636 = vlaneseq
    %v6637 = vshrl.u32 %v6636, 7
    %v6638 = vsub.s32 %v6141, %v6637
    %v6639 = vrot.slane %v6631, %v6638
    %v6640 = vsel %vm6149, %v6639, %v6635
    %v6642 = vmul.f32 %v6622, %v6640
    %6644 = vset.pattern.permute.xlu0 0
    %6645 = vperm.xlu0 %6644, %v6119
    %v6646 = vpop.permute.xlu0 %6645
    %v6648 = vmul.f32 %v6646, %v6525
    %v6649 = vadd.f32 %v6642, %v6648
    %v6652 = vunpack.c.l.s4 1966171168
    %v6653 = vunpack.c.0.s8 %v6652
    %v6654 = vlaneseq
    %v6655 = vshrl.u32 %v6654, 7
    %v6656 = vsub.s32 %v6653, %v6655
    %v6657 = vrot.slane %v6649, %v6656
    %v6658 = vcombine.high %v6657, %v6657
    %v6660 = vunpack.c.l.s4 1966171168
    %v6661 = vunpack.c.0.s8 %v6660
    %v6662 = vlaneseq
    %v6663 = vshrl.u32 %v6662, 7
    %v6664 = vsub.s32 %v6661, %v6663
    %v6665 = vrot.slane %v6657, %v6664
    %v6667 = vunpack.c.l.s4 1966171168
    %v6668 = vunpack.c.0.s8 %v6667
    %v6669 = vlaneseq
    %v6670 = vshrl.u32 %v6669, 7
    %v6671 = vsub.s32 %v6668, %v6670
    %v6672 = vrot.slane %v6658, %v6671
    %v6673 = vlaneseq
    %v6674 = vshrl.u32 %v6673, 7
    %v6675 = vsub.s32 0, %v6674
    %v6676 = vrot.slane %v6665, %v6675
    %v6677 = vlaneseq
    %v6678 = vshrl.u32 %v6677, 7
    %v6679 = vsub.s32 0, %v6678
    %v6680 = vrot.slane %v6672, %v6679
    %v6683 = vadd.f32 %v6676, %v6107
    %v6684 = vadd.f32 %v6680, %v6107
    %v6685 = vsel %vm6188, %v6683, -inf
    %6686 = vmax.xlane.f32.xlu0 %v6685
    %v6687 = vpop.xlane.xlu0 %6686
    %v6688 = vsel %vm6188, %v6684, -inf
    %6689 = vmax.xlane.f32.xlu0 %v6688
    %v6690 = vpop.xlane.xlu0 %6689
    %vm6691 = vcmp.eq.f32.partialorder %v6683, %v6687
    %vm6692 = vcmp.eq.f32.partialorder %v6684, %v6690
    %v6693 = vsel %vm6691, %v6141, 6
    %v6694 = vsel %vm6692, %v6141, 6
    %v6695 = vsel %vm6188, %v6693, 2147483647
    %v6696 = vand.u32 %v6695, 65535
    %v6697 = vshra.s32 %v6695, 16
    %v6698 = vcvt.s32.f32 %v6696
    %v6699 = vcvt.s32.f32 %v6697
    %6700 = vmin.xlane.f32.xlu0 %v6699
    %v6701 = vpop.xlane.xlu0 %6700
    %vm6702 = vcmp.eq.f32.partialorder %v6699, %v6701
    %v6703 = vsel %vm6702, %v6698, inf
    %6704 = vmin.xlane.f32.xlu0 %v6703
    %v6705 = vpop.xlane.xlu0 %6704
    %v6706 = vcvt.f32.s32 %v6705
    %v6707 = vcvt.f32.s32 %v6701
    %v6708 = vshll.u32 %v6707, 16
    %v6709 = vadd.s32 %v6708, %v6706
    %v6710 = vsel %vm6188, %v6694, 2147483647
    %v6711 = vand.u32 %v6710, 65535
    %v6712 = vshra.s32 %v6710, 16
    %v6713 = vcvt.s32.f32 %v6711
    %v6714 = vcvt.s32.f32 %v6712
    %6715 = vmin.xlane.f32.xlu0 %v6714
    %v6716 = vpop.xlane.xlu0 %6715
    %vm6717 = vcmp.eq.f32.partialorder %v6714, %v6716
    %v6718 = vsel %vm6717, %v6713, inf
    %6719 = vmin.xlane.f32.xlu0 %v6718
    %v6720 = vpop.xlane.xlu0 %6719
    %v6721 = vcvt.f32.s32 %v6720
    %v6722 = vcvt.f32.s32 %v6716
    %v6723 = vshll.u32 %v6722, 16
    %v6724 = vadd.s32 %v6723, %v6721
    %v6725 = vlaneseq
    %v6726 = vshrl.u32 %v6725, 7
    %v6727 = vsub.s32 5, %v6726
    %v6728 = vrot.slane %v6099, %v6727
    %6730 = vbcast.lane.b32.xlu0 %v6728, 256
    %v6731 = vpop.permute.xlu0 %6730
    %v6732 = vlaneseq
    %v6733 = vshrl.u32 %v6732, 7
    %v6734 = vsub.s32 5, %v6733
    %v6735 = vrot.slane %v6104, %v6734
    %6737 = vbcast.lane.b32.xlu0 %v6735, 256
    %v6738 = vpop.permute.xlu0 %6737
    %v6741 = vadd.f32 %v6687, %v6731
    %v6742 = vadd.f32 %v6690, %v6738
    %6744 = vset.pattern.permute.xlu0 0
    %6745 = vperm.xlu0 %6744, %v6113
    %v6746 = vpop.permute.xlu0 %6745
    %6750 = vset.pattern.permute.xlu0 0
    %6751 = vperm.xlu0 %6750, %v6741
    %v6752 = vpop.permute.xlu0 %6751
    %6753 = vset.pattern.permute.xlu0 0
    %6754 = vperm.xlu0 %6753, %v6742
    %v6755 = vpop.permute.xlu0 %6754
    %v6756 = vlaneseq
    %v6757 = vshrl.u32 %v6756, 7
    %v6758 = vsub.s32 %v6141, %v6757
    %v6759 = vrot.slane %v6752, %v6758
    %v6760 = vlaneseq
    %v6761 = vshrl.u32 %v6760, 7
    %v6762 = vsub.s32 %v6141, %v6761
    %v6763 = vrot.slane %v6755, %v6762
    %v6764 = vsel %vm6149, %v6763, %v6759
    %v6766 = vmul.f32 %v6746, %v6764
    %6768 = vset.pattern.permute.xlu0 0
    %6769 = vperm.xlu0 %6768, %v6120
    %v6770 = vpop.permute.xlu0 %6769
    %v6772 = vmul.f32 %v6770, %v6649
    %v6773 = vadd.f32 %v6766, %v6772
    %v6776 = vunpack.c.l.s4 1966171168
    %v6777 = vunpack.c.0.s8 %v6776
    %v6778 = vlaneseq
    %v6779 = vshrl.u32 %v6778, 7
    %v6780 = vsub.s32 %v6777, %v6779
    %v6781 = vrot.slane %v6773, %v6780
    %v6782 = vcombine.high %v6781, %v6781
    %v6784 = vunpack.c.l.s4 1966171168
    %v6785 = vunpack.c.0.s8 %v6784
    %v6786 = vlaneseq
    %v6787 = vshrl.u32 %v6786, 7
    %v6788 = vsub.s32 %v6785, %v6787
    %v6789 = vrot.slane %v6781, %v6788
    %v6791 = vunpack.c.l.s4 1966171168
    %v6792 = vunpack.c.0.s8 %v6791
    %v6793 = vlaneseq
    %v6794 = vshrl.u32 %v6793, 7
    %v6795 = vsub.s32 %v6792, %v6794
    %v6796 = vrot.slane %v6782, %v6795
    %v6797 = vlaneseq
    %v6798 = vshrl.u32 %v6797, 7
    %v6799 = vsub.s32 0, %v6798
    %v6800 = vrot.slane %v6789, %v6799
    %v6801 = vlaneseq
    %v6802 = vshrl.u32 %v6801, 7
    %v6803 = vsub.s32 0, %v6802
    %v6804 = vrot.slane %v6796, %v6803
    %v6807 = vadd.f32 %v6800, %v6107
    %v6808 = vadd.f32 %v6804, %v6107
    %v6809 = vsel %vm6188, %v6807, -inf
    %6810 = vmax.xlane.f32.xlu0 %v6809
    %v6811 = vpop.xlane.xlu0 %6810
    %v6812 = vsel %vm6188, %v6808, -inf
    %6813 = vmax.xlane.f32.xlu0 %v6812
    %v6814 = vpop.xlane.xlu0 %6813
    %vm6815 = vcmp.eq.f32.partialorder %v6807, %v6811
    %vm6816 = vcmp.eq.f32.partialorder %v6808, %v6814
    %v6817 = vsel %vm6815, %v6141, 6
    %v6818 = vsel %vm6816, %v6141, 6
    %v6819 = vsel %vm6188, %v6817, 2147483647
    %v6820 = vand.u32 %v6819, 65535
    %v6821 = vshra.s32 %v6819, 16
    %v6822 = vcvt.s32.f32 %v6820
    %v6823 = vcvt.s32.f32 %v6821
    %6824 = vmin.xlane.f32.xlu0 %v6823
    %v6825 = vpop.xlane.xlu0 %6824
    %vm6826 = vcmp.eq.f32.partialorder %v6823, %v6825
    %v6827 = vsel %vm6826, %v6822, inf
    %6828 = vmin.xlane.f32.xlu0 %v6827
    %v6829 = vpop.xlane.xlu0 %6828
    %v6830 = vcvt.f32.s32 %v6829
    %v6831 = vcvt.f32.s32 %v6825
    %v6832 = vshll.u32 %v6831, 16
    %v6833 = vadd.s32 %v6832, %v6830
    %v6834 = vsel %vm6188, %v6818, 2147483647
    %v6835 = vand.u32 %v6834, 65535
    %v6836 = vshra.s32 %v6834, 16
    %v6837 = vcvt.s32.f32 %v6835
    %v6838 = vcvt.s32.f32 %v6836
    %6839 = vmin.xlane.f32.xlu0 %v6838
    %v6840 = vpop.xlane.xlu0 %6839
    %vm6841 = vcmp.eq.f32.partialorder %v6838, %v6840
    %v6842 = vsel %vm6841, %v6837, inf
    %6843 = vmin.xlane.f32.xlu0 %v6842
    %v6844 = vpop.xlane.xlu0 %6843
    %v6845 = vcvt.f32.s32 %v6844
    %v6846 = vcvt.f32.s32 %v6840
    %v6847 = vshll.u32 %v6846, 16
    %v6848 = vadd.s32 %v6847, %v6845
    %v6849 = vlaneseq
    %v6850 = vshrl.u32 %v6849, 7
    %v6851 = vsub.s32 6, %v6850
    %v6852 = vrot.slane %v6099, %v6851
    %6854 = vbcast.lane.b32.xlu0 %v6852, 256
    %v6855 = vpop.permute.xlu0 %6854
    %v6856 = vlaneseq
    %v6857 = vshrl.u32 %v6856, 7
    %v6858 = vsub.s32 6, %v6857
    %v6859 = vrot.slane %v6104, %v6858
    %6861 = vbcast.lane.b32.xlu0 %v6859, 256
    %v6862 = vpop.permute.xlu0 %6861
    %v6865 = vadd.f32 %v6811, %v6855
    %v6866 = vadd.f32 %v6814, %v6862
    %6868 = vset.pattern.permute.xlu0 0
    %6869 = vperm.xlu0 %6868, %v6114
    %v6870 = vpop.permute.xlu0 %6869
    %6874 = vset.pattern.permute.xlu0 0
    %6875 = vperm.xlu0 %6874, %v6865
    %v6876 = vpop.permute.xlu0 %6875
    %6877 = vset.pattern.permute.xlu0 0
    %6878 = vperm.xlu0 %6877, %v6866
    %v6879 = vpop.permute.xlu0 %6878
    %v6880 = vlaneseq
    %v6881 = vshrl.u32 %v6880, 7
    %v6882 = vsub.s32 %v6141, %v6881
    %v6883 = vrot.slane %v6876, %v6882
    %v6884 = vlaneseq
    %v6885 = vshrl.u32 %v6884, 7
    %v6886 = vsub.s32 %v6141, %v6885
    %v6887 = vrot.slane %v6879, %v6886
    %v6888 = vsel %vm6149, %v6887, %v6883
    %v6890 = vmul.f32 %v6870, %v6888
    %6892 = vset.pattern.permute.xlu0 0
    %6893 = vperm.xlu0 %6892, %v6121
    %v6894 = vpop.permute.xlu0 %6893
    %v6896 = vmul.f32 %v6894, %v6773
    %v6897 = vadd.f32 %v6890, %v6896
    %v6900 = vunpack.c.l.s4 1966171168
    %v6901 = vunpack.c.0.s8 %v6900
    %v6902 = vlaneseq
    %v6903 = vshrl.u32 %v6902, 7
    %v6904 = vsub.s32 %v6901, %v6903
    %v6905 = vrot.slane %v6897, %v6904
    %v6906 = vcombine.high %v6905, %v6905
    %v6908 = vunpack.c.l.s4 1966171168
    %v6909 = vunpack.c.0.s8 %v6908
    %v6910 = vlaneseq
    %v6911 = vshrl.u32 %v6910, 7
    %v6912 = vsub.s32 %v6909, %v6911
    %v6913 = vrot.slane %v6905, %v6912
    %v6915 = vunpack.c.l.s4 1966171168
    %v6916 = vunpack.c.0.s8 %v6915
    %v6917 = vlaneseq
    %v6918 = vshrl.u32 %v6917, 7
    %v6919 = vsub.s32 %v6916, %v6918
    %v6920 = vrot.slane %v6906, %v6919
    %v6921 = vlaneseq
    %v6922 = vshrl.u32 %v6921, 7
    %v6923 = vsub.s32 0, %v6922
    %v6924 = vrot.slane %v6913, %v6923
    %v6925 = vlaneseq
    %v6926 = vshrl.u32 %v6925, 7
    %v6927 = vsub.s32 0, %v6926
    %v6928 = vrot.slane %v6920, %v6927
    %v6931 = vadd.f32 %v6924, %v6107
    %v6932 = vadd.f32 %v6928, %v6107
    %v6933 = vsel %vm6188, %v6931, -inf
    %6934 = vmax.xlane.f32.xlu0 %v6933
    %v6935 = vpop.xlane.xlu0 %6934
    %v6936 = vsel %vm6188, %v6932, -inf
    %6937 = vmax.xlane.f32.xlu0 %v6936
    %v6938 = vpop.xlane.xlu0 %6937
    %vm6939 = vcmp.eq.f32.partialorder %v6931, %v6935
    %vm6940 = vcmp.eq.f32.partialorder %v6932, %v6938
    %v6941 = vsel %vm6939, %v6141, 6
    %v6942 = vsel %vm6940, %v6141, 6
    %v6943 = vsel %vm6188, %v6941, 2147483647
    %v6944 = vand.u32 %v6943, 65535
    %v6945 = vshra.s32 %v6943, 16
    %v6946 = vcvt.s32.f32 %v6944
    %v6947 = vcvt.s32.f32 %v6945
    %6948 = vmin.xlane.f32.xlu0 %v6947
    %v6949 = vpop.xlane.xlu0 %6948
    %vm6950 = vcmp.eq.f32.partialorder %v6947, %v6949
    %v6951 = vsel %vm6950, %v6946, inf
    %6952 = vmin.xlane.f32.xlu0 %v6951
    %v6953 = vpop.xlane.xlu0 %6952
    %v6954 = vcvt.f32.s32 %v6953
    %v6955 = vcvt.f32.s32 %v6949
    %v6956 = vshll.u32 %v6955, 16
    %v6957 = vadd.s32 %v6956, %v6954
    %v6958 = vsel %vm6188, %v6942, 2147483647
    %v6959 = vand.u32 %v6958, 65535
    %v6960 = vshra.s32 %v6958, 16
    %v6961 = vcvt.s32.f32 %v6959
    %v6962 = vcvt.s32.f32 %v6960
    %6963 = vmin.xlane.f32.xlu0 %v6962
    %v6964 = vpop.xlane.xlu0 %6963
    %vm6965 = vcmp.eq.f32.partialorder %v6962, %v6964
    %v6966 = vsel %vm6965, %v6961, inf
    %6967 = vmin.xlane.f32.xlu0 %v6966
    %v6968 = vpop.xlane.xlu0 %6967
    %v6969 = vcvt.f32.s32 %v6968
    %v6970 = vcvt.f32.s32 %v6964
    %v6971 = vshll.u32 %v6970, 16
    %v6972 = vadd.s32 %v6971, %v6969
    %v6973 = vlaneseq
    %v6974 = vshrl.u32 %v6973, 7
    %v6975 = vsub.s32 7, %v6974
    %v6976 = vrot.slane %v6099, %v6975
    %6978 = vbcast.lane.b32.xlu0 %v6976, 256
    %v6979 = vpop.permute.xlu0 %6978
    %v6980 = vlaneseq
    %v6981 = vshrl.u32 %v6980, 7
    %v6982 = vsub.s32 7, %v6981
    %v6983 = vrot.slane %v6104, %v6982
    %6985 = vbcast.lane.b32.xlu0 %v6983, 256
    %v6986 = vpop.permute.xlu0 %6985
    %v6989 = vadd.f32 %v6935, %v6979
    %v6990 = vadd.f32 %v6938, %v6986
    %6992 = vset.pattern.permute.xlu0 0
    %6993 = vperm.xlu0 %6992, %v6115
    %v6994 = vpop.permute.xlu0 %6993
    %6998 = vset.pattern.permute.xlu0 0
    %6999 = vperm.xlu0 %6998, %v6989
    %v7000 = vpop.permute.xlu0 %6999
    %7001 = vset.pattern.permute.xlu0 0
    %7002 = vperm.xlu0 %7001, %v6990
    %v7003 = vpop.permute.xlu0 %7002
    %v7004 = vlaneseq
    %v7005 = vshrl.u32 %v7004, 7
    %v7006 = vsub.s32 %v6141, %v7005
    %v7007 = vrot.slane %v7000, %v7006
    %v7008 = vlaneseq
    %v7009 = vshrl.u32 %v7008, 7
    %v7010 = vsub.s32 %v6141, %v7009
    %v7011 = vrot.slane %v7003, %v7010
    %v7012 = vsel %vm6149, %v7011, %v7007
    %v7014 = vmul.f32 %v6994, %v7012
    %7016 = vset.pattern.permute.xlu0 0
    %7017 = vperm.xlu0 %7016, %v6122
    %v7018 = vpop.permute.xlu0 %7017
    %v7020 = vmul.f32 %v7018, %v6897
    %v7021 = vadd.f32 %v7014, %v7020
    %v7022 = vlaneseq
    %v7023 = vshrl.u32 %v7022, 7
    %v7024 = vsub.s32 7, %v7023
    %v7025 = vrot.slane %v6107, %v7024
    %v7026 = vadd.f32 %v7021, %v7025
    %vm7027 = vcmask 41984
    %v7028 = vsel %vm7027, %v7026, -inf
    %7029 = vmax.xlane.f32.xlu0 %v7028
    %v7030 = vpop.xlane.xlu0 %7029
    %7031 = vst.msk [vmem:[%s12] sm:$0x3] %vm6123, %v7030
    %vm7032 = vcmp.eq.f32.partialorder %v7026, %v7030
    %v7033 = vsel %vm7032, %v6141, 6
    %v7034 = vsel %vm7027, %v7033, 2147483647
    %v7035 = vand.u32 %v7034, 65535
    %v7036 = vshra.s32 %v7034, 16
    %v7037 = vcvt.s32.f32 %v7035
    %v7038 = vcvt.s32.f32 %v7036
    %7039 = vmin.xlane.f32.xlu0 %v7038
    %v7040 = vpop.xlane.xlu0 %7039
    %vm7041 = vcmp.eq.f32.partialorder %v7038, %v7040
    %v7042 = vsel %vm7041, %v7037, inf
    %7043 = vmin.xlane.f32.xlu0 %v7042
    %v7044 = vpop.xlane.xlu0 %7043
    %v7045 = vcvt.f32.s32 %v7044
    %v7046 = vcvt.f32.s32 %v7040
    %v7047 = vshll.u32 %v7046, 16
    %v7048 = vadd.s32 %v7047, %v7045
    %vm7049 = vcmp.gt.s32.totalorder %v6139, 7
    %v7050 = vsel %vm7049, %v7048, 4294967295
    %vm7051 = vcmp.eq.s32.totalorder %v6141, 7
    %7052 = vset.pattern.permute.xlu0 0
    %7053 = vperm.xlu0 %7052, %v7050
    %v7054 = vpop.permute.xlu0 %7053
    %v7055 = vsel %vm7051, %v7054, 4294967295
    %vm7056 = vcmp.eq.s32.totalorder %v6141, %v7048
    %v7057 = vlaneseq
    %v7058 = vshrl.u32 %v7057, 7
    %v7059 = vsub.s32 %v6141, %v7058
    %v7060 = vrot.slane %v6957, %v7059
    %v7061 = vlaneseq
    %v7062 = vshrl.u32 %v7061, 7
    %v7063 = vsub.s32 %v6141, %v7062
    %v7064 = vrot.slane %v6972, %v7063
    %v7065 = vsel %vm6149, %v7064, %v7060
    %v7066 = vsel %vm7056, %v7065, 0
    %v7067 = vsel %vm7027, %v7066, 0
    %v7068 = vand.u32 %v7067, 65535
    %v7069 = vshrl.u32 %v7067, 16
    %v7070 = vcvt.s32.f32 %v7068
    %v7071 = vcvt.s32.f32 %v7069
    %7072 = vadd.xlane.f32.xlu0 %v7070
    %v7073 = vpop.xlane.xlu0 %7072
    %7074 = vadd.xlane.f32.xlu0 %v7071
    %v7075 = vpop.xlane.xlu0 %7074
    %v7076 = vcvt.f32.s32 %v7073
    %v7077 = vcvt.f32.s32 %v7075
    %v7078 = vshll.u32 %v7077, 16
    %v7079 = vadd.s32 %v7078, %v7076
    %vm7080 = vcmp.eq.s32.totalorder %v6139, 7
    %v7081 = vsel %vm7049, %v7079, %v7048
    %v7082 = vsel %vm7080, %v7048, %v7081
    %vm7083 = vcmp.gt.s32.totalorder %v6139, 6
    %v7084 = vsel %vm7083, %v7082, 4294967295
    %vm7085 = vcmp.eq.s32.totalorder %v6141, 6
    %7086 = vset.pattern.permute.xlu0 0
    %7087 = vperm.xlu0 %7086, %v7084
    %v7088 = vpop.permute.xlu0 %7087
    %v7089 = vsel %vm7085, %v7088, %v7055
    %7090 = vset.pattern.permute.xlu0 0
    %7091 = vperm.xlu0 %7090, %v7082
    %v7092 = vpop.permute.xlu0 %7091
    %vm7093 = vcmp.eq.s32.totalorder %v6141, %v7092
    %v7094 = vlaneseq
    %v7095 = vshrl.u32 %v7094, 7
    %v7096 = vsub.s32 %v6141, %v7095
    %v7097 = vrot.slane %v6833, %v7096
    %v7098 = vlaneseq
    %v7099 = vshrl.u32 %v7098, 7
    %v7100 = vsub.s32 %v6141, %v7099
    %v7101 = vrot.slane %v6848, %v7100
    %v7102 = vsel %vm6149, %v7101, %v7097
    %v7103 = vsel %vm7093, %v7102, 0
    %v7104 = vsel %vm7027, %v7103, 0
    %v7105 = vand.u32 %v7104, 65535
    %v7106 = vshrl.u32 %v7104, 16
    %v7107 = vcvt.s32.f32 %v7105
    %v7108 = vcvt.s32.f32 %v7106
    %7109 = vadd.xlane.f32.xlu0 %v7107
    %v7110 = vpop.xlane.xlu0 %7109
    %7111 = vadd.xlane.f32.xlu0 %v7108
    %v7112 = vpop.xlane.xlu0 %7111
    %v7113 = vcvt.f32.s32 %v7110
    %v7114 = vcvt.f32.s32 %v7112
    %v7115 = vshll.u32 %v7114, 16
    %v7116 = vadd.s32 %v7115, %v7113
    %vm7117 = vcmp.eq.s32.totalorder %v6139, 6
    %v7118 = vsel %vm7083, %v7116, %v7082
    %v7119 = vsel %vm7117, %v7048, %v7118
    %vm7120 = vcmp.gt.s32.totalorder %v6139, 5
    %v7121 = vsel %vm7120, %v7119, 4294967295
    %vm7122 = vcmp.eq.s32.totalorder %v6141, 5
    %7123 = vset.pattern.permute.xlu0 0
    %7124 = vperm.xlu0 %7123, %v7121
    %v7125 = vpop.permute.xlu0 %7124
    %v7126 = vsel %vm7122, %v7125, %v7089
    %7127 = vset.pattern.permute.xlu0 0
    %7128 = vperm.xlu0 %7127, %v7119
    %v7129 = vpop.permute.xlu0 %7128
    %vm7130 = vcmp.eq.s32.totalorder %v6141, %v7129
    %v7131 = vlaneseq
    %v7132 = vshrl.u32 %v7131, 7
    %v7133 = vsub.s32 %v6141, %v7132
    %v7134 = vrot.slane %v6709, %v7133
    %v7135 = vlaneseq
    %v7136 = vshrl.u32 %v7135, 7
    %v7137 = vsub.s32 %v6141, %v7136
    %v7138 = vrot.slane %v6724, %v7137
    %v7139 = vsel %vm6149, %v7138, %v7134
    %v7140 = vsel %vm7130, %v7139, 0
    %v7141 = vsel %vm7027, %v7140, 0
    %v7142 = vand.u32 %v7141, 65535
    %v7143 = vshrl.u32 %v7141, 16
    %v7144 = vcvt.s32.f32 %v7142
    %v7145 = vcvt.s32.f32 %v7143
    %7146 = vadd.xlane.f32.xlu0 %v7144
    %v7147 = vpop.xlane.xlu0 %7146
    %7148 = vadd.xlane.f32.xlu0 %v7145
    %v7149 = vpop.xlane.xlu0 %7148
    %v7150 = vcvt.f32.s32 %v7147
    %v7151 = vcvt.f32.s32 %v7149
    %v7152 = vshll.u32 %v7151, 16
    %v7153 = vadd.s32 %v7152, %v7150
    %vm7154 = vcmp.eq.s32.totalorder %v6139, 5
    %v7155 = vsel %vm7120, %v7153, %v7119
    %v7156 = vsel %vm7154, %v7048, %v7155
    %vm7157 = vcmp.gt.s32.totalorder %v6139, 4
    %v7158 = vsel %vm7157, %v7156, 4294967295
    %vm7159 = vcmp.eq.s32.totalorder %v6141, 4
    %7160 = vset.pattern.permute.xlu0 0
    %7161 = vperm.xlu0 %7160, %v7158
    %v7162 = vpop.permute.xlu0 %7161
    %v7163 = vsel %vm7159, %v7162, %v7126
    %7164 = vset.pattern.permute.xlu0 0
    %7165 = vperm.xlu0 %7164, %v7156
    %v7166 = vpop.permute.xlu0 %7165
    %vm7167 = vcmp.eq.s32.totalorder %v6141, %v7166
    %v7168 = vlaneseq
    %v7169 = vshrl.u32 %v7168, 7
    %v7170 = vsub.s32 %v6141, %v7169
    %v7171 = vrot.slane %v6585, %v7170
    %v7172 = vlaneseq
    %v7173 = vshrl.u32 %v7172, 7
    %v7174 = vsub.s32 %v6141, %v7173
    %v7175 = vrot.slane %v6600, %v7174
    %v7176 = vsel %vm6149, %v7175, %v7171
    %v7177 = vsel %vm7167, %v7176, 0
    %v7178 = vsel %vm7027, %v7177, 0
    %v7179 = vand.u32 %v7178, 65535
    %v7180 = vshrl.u32 %v7178, 16
    %v7181 = vcvt.s32.f32 %v7179
    %v7182 = vcvt.s32.f32 %v7180
    %7183 = vadd.xlane.f32.xlu0 %v7181
    %v7184 = vpop.xlane.xlu0 %7183
    %7185 = vadd.xlane.f32.xlu0 %v7182
    %v7186 = vpop.xlane.xlu0 %7185
    %v7187 = vcvt.f32.s32 %v7184
    %v7188 = vcvt.f32.s32 %v7186
    %v7189 = vshll.u32 %v7188, 16
    %v7190 = vadd.s32 %v7189, %v7187
    %vm7191 = vcmp.eq.s32.totalorder %v6139, 4
    %v7192 = vsel %vm7157, %v7190, %v7156
    %v7193 = vsel %vm7191, %v7048, %v7192
    %vm7194 = vcmp.gt.s32.totalorder %v6139, 3
    %v7195 = vsel %vm7194, %v7193, 4294967295
    %vm7196 = vcmp.eq.s32.totalorder %v6141, 3
    %7197 = vset.pattern.permute.xlu0 0
    %7198 = vperm.xlu0 %7197, %v7195
    %v7199 = vpop.permute.xlu0 %7198
    %v7200 = vsel %vm7196, %v7199, %v7163
    %7201 = vset.pattern.permute.xlu0 0
    %7202 = vperm.xlu0 %7201, %v7193
    %v7203 = vpop.permute.xlu0 %7202
    %vm7204 = vcmp.eq.s32.totalorder %v6141, %v7203
    %v7205 = vlaneseq
    %v7206 = vshrl.u32 %v7205, 7
    %v7207 = vsub.s32 %v6141, %v7206
    %v7208 = vrot.slane %v6461, %v7207
    %v7209 = vlaneseq
    %v7210 = vshrl.u32 %v7209, 7
    %v7211 = vsub.s32 %v6141, %v7210
    %v7212 = vrot.slane %v6476, %v7211
    %v7213 = vsel %vm6149, %v7212, %v7208
    %v7214 = vsel %vm7204, %v7213, 0
    %v7215 = vsel %vm7027, %v7214, 0
    %v7216 = vand.u32 %v7215, 65535
    %v7217 = vshrl.u32 %v7215, 16
    %v7218 = vcvt.s32.f32 %v7216
    %v7219 = vcvt.s32.f32 %v7217
    %7220 = vadd.xlane.f32.xlu0 %v7218
    %v7221 = vpop.xlane.xlu0 %7220
    %7222 = vadd.xlane.f32.xlu0 %v7219
    %v7223 = vpop.xlane.xlu0 %7222
    %v7224 = vcvt.f32.s32 %v7221
    %v7225 = vcvt.f32.s32 %v7223
    %v7226 = vshll.u32 %v7225, 16
    %v7227 = vadd.s32 %v7226, %v7224
    %vm7228 = vcmp.eq.s32.totalorder %v6139, 3
    %v7229 = vsel %vm7194, %v7227, %v7193
    %v7230 = vsel %vm7228, %v7048, %v7229
    %vm7231 = vcmp.gt.s32.totalorder %v6139, 2
    %v7232 = vsel %vm7231, %v7230, 4294967295
    %vm7233 = vcmp.eq.s32.totalorder %v6141, 2
    %7234 = vset.pattern.permute.xlu0 0
    %7235 = vperm.xlu0 %7234, %v7232
    %v7236 = vpop.permute.xlu0 %7235
    %v7237 = vsel %vm7233, %v7236, %v7200
    %7238 = vset.pattern.permute.xlu0 0
    %7239 = vperm.xlu0 %7238, %v7230
    %v7240 = vpop.permute.xlu0 %7239
    %vm7241 = vcmp.eq.s32.totalorder %v6141, %v7240
    %v7242 = vlaneseq
    %v7243 = vshrl.u32 %v7242, 7
    %v7244 = vsub.s32 %v6141, %v7243
    %v7245 = vrot.slane %v6337, %v7244
    %v7246 = vlaneseq
    %v7247 = vshrl.u32 %v7246, 7
    %v7248 = vsub.s32 %v6141, %v7247
    %v7249 = vrot.slane %v6352, %v7248
    %v7250 = vsel %vm6149, %v7249, %v7245
    %v7251 = vsel %vm7241, %v7250, 0
    %v7252 = vsel %vm7027, %v7251, 0
    %v7253 = vand.u32 %v7252, 65535
    %v7254 = vshrl.u32 %v7252, 16
    %v7255 = vcvt.s32.f32 %v7253
    %v7256 = vcvt.s32.f32 %v7254
    %7257 = vadd.xlane.f32.xlu0 %v7255
    %v7258 = vpop.xlane.xlu0 %7257
    %7259 = vadd.xlane.f32.xlu0 %v7256
    %v7260 = vpop.xlane.xlu0 %7259
    %v7261 = vcvt.f32.s32 %v7258
    %v7262 = vcvt.f32.s32 %v7260
    %v7263 = vshll.u32 %v7262, 16
    %v7264 = vadd.s32 %v7263, %v7261
    %vm7265 = vcmp.eq.s32.totalorder %v6139, 2
    %v7266 = vsel %vm7231, %v7264, %v7230
    %v7267 = vsel %vm7265, %v7048, %v7266
    %vm7268 = vcmp.gt.s32.totalorder %v6139, 1
    %v7269 = vsel %vm7268, %v7267, 4294967295
    %vm7270 = vcmp.eq.s32.totalorder %v6141, 1
    %7271 = vset.pattern.permute.xlu0 0
    %7272 = vperm.xlu0 %7271, %v7269
    %v7273 = vpop.permute.xlu0 %7272
    %v7274 = vsel %vm7270, %v7273, %v7237
    %7275 = vset.pattern.permute.xlu0 0
    %7276 = vperm.xlu0 %7275, %v7267
    %v7277 = vpop.permute.xlu0 %7276
    %vm7278 = vcmp.eq.s32.totalorder %v6141, %v7277
    %v7279 = vlaneseq
    %v7280 = vshrl.u32 %v7279, 7
    %v7281 = vsub.s32 %v6141, %v7280
    %v7282 = vrot.slane %v6213, %v7281
    %v7283 = vlaneseq
    %v7284 = vshrl.u32 %v7283, 7
    %v7285 = vsub.s32 %v6141, %v7284
    %v7286 = vrot.slane %v6228, %v7285
    %v7287 = vsel %vm6149, %v7286, %v7282
    %v7288 = vsel %vm7278, %v7287, 0
    %v7289 = vsel %vm7027, %v7288, 0
    %v7290 = vand.u32 %v7289, 65535
    %v7291 = vshrl.u32 %v7289, 16
    %v7292 = vcvt.s32.f32 %v7290
    %v7293 = vcvt.s32.f32 %v7291
    %7294 = vadd.xlane.f32.xlu0 %v7292
    %v7295 = vpop.xlane.xlu0 %7294
    %7296 = vadd.xlane.f32.xlu0 %v7293
    %v7297 = vpop.xlane.xlu0 %7296
    %v7298 = vcvt.f32.s32 %v7295
    %v7299 = vcvt.f32.s32 %v7297
    %v7300 = vshll.u32 %v7299, 16
    %v7301 = vadd.s32 %v7300, %v7298
    %vm7302 = vcmp.eq.s32.totalorder %v6139, 1
    %v7303 = vsel %vm7268, %v7301, %v7267
    %v7304 = vsel %vm7302, %v7048, %v7303
    %vm7305 = vcmp.gt.s32.totalorder %v6139, 0
    %v7306 = vsel %vm7305, %v7304, 4294967295
    %vm7307 = vcmp.eq.s32.totalorder %v6141, 0
    %7308 = vset.pattern.permute.xlu0 0
    %7309 = vperm.xlu0 %7308, %v7306
    %v7310 = vpop.permute.xlu0 %7309
    %v7311 = vsel %vm7307, %v7310, %v7274
    %vm7312 = vcmask 58368
    %7313 = vst.msk [vmem:[#allocation2] sm:$0x3] %vm7312, %v7311
    // Predicated region
    $region50: #{transformer_crf_forward.1} parent=1 // pred_check
      _
    $region51: #{transformer_crf_forward.1} parent=1 // pred_check_branch
      %7315 = sbr.rel (0) target = $region53
    $region52: #{transformer_crf_forward.1} parent=1 // pred_region
      _
    $region53: #{transformer_crf_forward.1} parent=1 // pred_fallthru
      _
    // Predicated region
    $region54: #{transformer_crf_forward.1} parent=1 // pred_check
      _
    $region55: #{transformer_crf_forward.1} parent=1 // pred_check_branch
      %7317 = sbr.rel (0) target = $region57
    $region56: #{transformer_crf_forward.1} parent=1 // pred_region
      %s7319 = ssub.s32 32, 32
      %7320 = vsyncadd [#allocation3], %s7319
      %s7322 = sshll.u32 [#allocation2], 4
      %s7323 = int_to_ptr.vmem [resolvable:$true] %s7322
      %7325 = dma.vmem_to_hbm [thread:$0]  %s7323, 32, %s13, [#allocation3]
    $region57: #{transformer_crf_forward.1} parent=1 // pred_fallthru
      _
    // Predicated region
    $region58: #{transformer_crf_forward.1} parent=1 // pred_check
      _
    $region59: #{transformer_crf_forward.1} parent=1 // pred_check_branch
      %7327 = sbr.rel (0) target = $region61
    $region60: #{transformer_crf_forward.1} parent=1 // pred_region
      _
    $region61: #{transformer_crf_forward.1} parent=1 // pred_fallthru
      _
    // Predicated region
    $region62: #{transformer_crf_forward.1} parent=1 // pred_check
      _
    $region63: #{transformer_crf_forward.1} parent=1 // pred_check_branch
      %7329 = sbr.rel (0) target = $region65
    $region64: #{transformer_crf_forward.1} parent=1 // pred_region
      %7330 = dma.done [#allocation3], 32
    $region65: #{transformer_crf_forward.1} parent=1 // pred_fallthru
      _
    %7331 = vsyncpa [#allocation3], 1

</llo_original>
